<compile_context>
chip_gen: v5e
topology: v5e:2x2
jax: 0.10.0
libtpu: 0.0.40
codegen_flags: <defaults>
</compile_context>

<pallas_src>
import jax
import jax.numpy as jnp
from jax import lax
from jax.experimental import pallas as pl
from jax.experimental.pallas import tpu as pltpu

EPS = 1e-5  # nn.BatchNorm2d default


def _conv3x3_accumulate(src_ref, w_ref, acc_ref, H, W):
    """acc_ref[(N*H*W, Cout)] = sum over 9 taps of shifted-slab @ w[kh, kw].

    src_ref: (N, H+2, W+2, Cin) zero-padded activations (VMEM ref)
    w_ref  : (3, 3, Cin, Cout)
    """
    N = src_ref.shape[0]
    Cin = src_ref.shape[-1]
    M = N * H * W
    first = True
    for kh in range(3):
        for kw in range(3):
            # Shifted slab, flattened so the MXU sees a large-M matmul.
            slab = src_ref[:, kh:kh + H, kw:kw + W, :].reshape(M, Cin)
            contrib = jnp.dot(slab, w_ref[kh, kw],
                              preferred_element_type=jnp.float32)
            if first:
                acc_ref[...] = contrib
                first = False
            else:
                acc_ref[...] += contrib


def basic_block_kernel(x_ref, w1_ref, g1_ref, b1_ref, w2_ref, g2_ref, b2_ref,
                       out_ref, pad1_ref, acc_ref):
    """Fused BasicBlock forward.

    x_ref   : (N, H+2, W+2, C)  zero-padded input (padding done in wrapper)
    w*_ref  : (3, 3, C, C)      conv weights (HWIO)
    g*/b*   : (1, C)            BN gamma / beta
    out_ref : (N, H, W, C)
    pad1_ref: (N, H+2, W+2, C)  scratch: padded conv1/bn1/relu activation
    acc_ref : (N*H*W, C)        scratch: shared f32 conv accumulator
    """
    N, Hp2, Wp2, C = x_ref.shape
    H, W = Hp2 - 2, Wp2 - 2
    M = N * H * W
    inv_nhw = 1.0 / float(M)

    # ---- conv1: 9 per-tap whole-tensor matmuls ----------------------------
    _conv3x3_accumulate(x_ref, w1_ref, acc_ref, H, W)

    # ---- bn1 (training-mode batch stats, two-pass centered variance) + relu
    a1 = acc_ref[...]
    mean1 = jnp.sum(a1, axis=0, keepdims=True) * inv_nhw
    d1 = a1 - mean1
    var1 = jnp.sum(d1 * d1, axis=0, keepdims=True) * inv_nhw
    scale1 = g1_ref[...] * lax.rsqrt(var1 + EPS)
    act1 = jnp.maximum(d1 * scale1 + b1_ref[...], 0.0)

    # Stash act1 inside a zero-padded scratch so conv2 sees zero padding.
    pad1_ref[...] = jnp.zeros_like(pad1_ref)
    pad1_ref[:, 1:H + 1, 1:W + 1, :] = act1.reshape(N, H, W, C)

    # ---- conv2: 9 per-tap whole-tensor matmuls ----------------------------
    _conv3x3_accumulate(pad1_ref, w2_ref, acc_ref, H, W)

    # ---- bn2 + identity residual + relu ------------------------------------
    a2 = acc_ref[...]
    mean2 = jnp.sum(a2, axis=0, keepdims=True) * inv_nhw
    d2 = a2 - mean2
    var2 = jnp.sum(d2 * d2, axis=0, keepdims=True) * inv_nhw
    scale2 = g2_ref[...] * lax.rsqrt(var2 + EPS)
    y2 = d2 * scale2 + b2_ref[...]

    identity = x_ref[:, 1:H + 1, 1:W + 1, :].reshape(M, C).astype(jnp.float32)
    out = jnp.maximum(y2 + identity, 0.0)
    out_ref[...] = out.reshape(N, H, W, C).astype(out_ref.dtype)


def basic_block(x, w1, g1, b1, w2, g2, b2):
    """x: (N, H, W, C) NHWC. Returns (N, H, W, C)."""
    N, H, W, C = x.shape
    Cout = w1.shape[-1]
    assert Cout == C, "identity shortcut requires inplanes == planes"
    M = N * H * W

    # Spatial zero-pad (glue) so the kernel only does shifted whole-slab reads.
    x_pad = jnp.pad(x, ((0, 0), (1, 1), (1, 1), (0, 0)))

    def full(shape):
        zeros = (0,) * len(shape)
        return pl.BlockSpec(shape, lambda i, _z=zeros: _z)

    flops = 2 * (2 * 9 * M * C * Cout)  # two 3x3 convs as 9 taps each
    bytes_accessed = 4 * (x_pad.size + w1.size + w2.size + 4 * Cout
                          + N * H * W * Cout)
    cost = pl.CostEstimate(flops=flops, transcendentals=2 * Cout,
                           bytes_accessed=int(bytes_accessed))

    out = pl.pallas_call(
        basic_block_kernel,
        out_shape=jax.ShapeDtypeStruct((N, H, W, Cout), x.dtype),
        grid=(1,),
        in_specs=[
            full(x_pad.shape),
            full(w1.shape), full((1, Cout)), full((1, Cout)),
            full(w2.shape), full((1, Cout)), full((1, Cout)),
        ],
        out_specs=full((N, H, W, Cout)),
        scratch_shapes=[
            pltpu.VMEM((N, H + 2, W + 2, Cout), jnp.float32),  # padded act1
            pltpu.VMEM((M, Cout), jnp.float32),                # conv accumulator
        ],
        compiler_params=pltpu.CompilerParams(
            dimension_semantics=("arbitrary",)),
        cost_estimate=cost,
    )(x_pad,
      w1, g1.reshape(1, Cout).astype(jnp.float32),
      b1.reshape(1, Cout).astype(jnp.float32),
      w2, g2.reshape(1, Cout).astype(jnp.float32),
      b2.reshape(1, Cout).astype(jnp.float32))
    return out


def basic_block_reference(x, w1, g1, b1, w2, g2, b2):
    """Pure-JAX reference mirroring the PyTorch forward (training-mode BN)."""
    def conv(v, w):
        return lax.conv_general_dilated(
            v, w, window_strides=(1, 1), padding=((1, 1), (1, 1)),
            dimension_numbers=("NHWC", "HWIO", "NHWC"))

    def bn(v, g, b):
        mean = jnp.mean(v, axis=(0, 1, 2))
        var = jnp.var(v, axis=(0, 1, 2))  # biased, like PyTorch training-mode BN
        return (v - mean) * lax.rsqrt(var + EPS) * g + b

    out = jax.nn.relu(bn(conv(x, w1), g1, b1))
    out = bn(conv(out, w2), g2, b2)
    return jax.nn.relu(out + x)


if __name__ == "__main__":
    # NHWC; PyTorch NCHW equivalent: x of shape (2, 128, 16, 16).
    # C = 128 so the channel (lane) axis is fully dense on the TPU.
    N, H, W, C = 2, 16, 16, 128
    key = jax.random.PRNGKey(0)
    kx, kw1, kw2, kg1, kb1, kg2, kb2 = jax.random.split(key, 7)

    x = jax.random.normal(kx, (N, H, W, C), jnp.float32)
    w1 = jax.random.normal(kw1, (3, 3, C, C), jnp.float32) * 0.1
    w2 = jax.random.normal(kw2, (3, 3, C, C), jnp.float32) * 0.1
    g1 = 1.0 + 0.1 * jax.random.normal(kg1, (C,), jnp.float32)
    b1 = 0.1 * jax.random.normal(kb1, (C,), jnp.float32)
    g2 = 1.0 + 0.1 * jax.random.normal(kg2, (C,), jnp.float32)
    b2 = 0.1 * jax.random.normal(kb2, (C,), jnp.float32)

    out = jax.block_until_ready(basic_block(x, w1, g1, b1, w2, g2, b2))

    ref = basic_block_reference(x, w1, g1, b1, w2, g2, b2)
    assert out.shape == (N, H, W, C)
    max_err = float(jnp.max(jnp.abs(out - ref)))
    assert jnp.allclose(out, ref, atol=2e-3, rtol=2e-3), max_err

    print("KERNEL_OK")
</pallas_src>

<mosaic_0001>
module attributes {stable_mosaic.version = 11 : i64} {
  func.func @basic_block_kernel(%arg0: i32, %arg1: memref<2x18x18x128xf32, #tpu.memory_space<vmem>>, %arg2: memref<3x3x128x128xf32, #tpu.memory_space<vmem>>, %arg3: memref<1x128xf32, #tpu.memory_space<vmem>>, %arg4: memref<1x128xf32, #tpu.memory_space<vmem>>, %arg5: memref<3x3x128x128xf32, #tpu.memory_space<vmem>>, %arg6: memref<1x128xf32, #tpu.memory_space<vmem>>, %arg7: memref<1x128xf32, #tpu.memory_space<vmem>>, %arg8: memref<2x16x16x128xf32, #tpu.memory_space<vmem>>, %arg9: memref<2x18x18x128xf32, #tpu.memory_space<vmem>>, %arg10: memref<512x128xf32, #tpu.memory_space<vmem>>) attributes {dimension_semantics = [#tpu.dimension_semantics<arbitrary>], iteration_bounds = array<i64: 1>, scalar_prefetch = 0 : i64, scratch_operands = 2 : i64, tpu.core_type = #tpu.core_type<tc>, window_params = [{pipeline_mode = #tpu.pipeline_mode<synchronous>, transform_indices = @transform_0, window_bounds = array<i64: 2, 18, 18, 128>}, {pipeline_mode = #tpu.pipeline_mode<synchronous>, transform_indices = @transform_1, window_bounds = array<i64: 3, 3, 128, 128>}, {pipeline_mode = #tpu.pipeline_mode<synchronous>, transform_indices = @transform_2, window_bounds = array<i64: 1, 128>}, {pipeline_mode = #tpu.pipeline_mode<synchronous>, transform_indices = @transform_3, window_bounds = array<i64: 1, 128>}, {pipeline_mode = #tpu.pipeline_mode<synchronous>, transform_indices = @transform_4, window_bounds = array<i64: 3, 3, 128, 128>}, {pipeline_mode = #tpu.pipeline_mode<synchronous>, transform_indices = @transform_5, window_bounds = array<i64: 1, 128>}, {pipeline_mode = #tpu.pipeline_mode<synchronous>, transform_indices = @transform_6, window_bounds = array<i64: 1, 128>}, {pipeline_mode = #tpu.pipeline_mode<synchronous>, transform_indices = @transform_7, window_bounds = array<i64: 2, 16, 16, 128>}]} {
    %c0 = arith.constant 0 : index
    %c0_0 = arith.constant 0 : index
    %c0_1 = arith.constant 0 : index
    %c0_2 = arith.constant 0 : index
    %0 = vector.load %arg1[%c0, %c0_0, %c0_1, %c0_2] : memref<2x18x18x128xf32, #tpu.memory_space<vmem>>, vector<2x16x16x128xf32>
    %1 = vector.shape_cast %0 : vector<2x16x16x128xf32> to vector<512x128xf32>
    %c0_3 = arith.constant 0 : index
    %c0_4 = arith.constant 0 : index
    %c0_5 = arith.constant 0 : index
    %c0_6 = arith.constant 0 : index
    %2 = vector.load %arg2[%c0_3, %c0_4, %c0_5, %c0_6] : memref<3x3x128x128xf32, #tpu.memory_space<vmem>>, vector<1x1x128x128xf32>
    %3 = vector.shape_cast %2 : vector<1x1x128x128xf32> to vector<128x128xf32>
    %cst = arith.constant dense<0.000000e+00> : vector<512x128xf32>
    %4 = tpu.matmul %1, %3, %cst {dimension_numbers = #tpu.dot_dimension_numbers<[1], [0], [0], [1], [0, 0, 1, 1], [], []>} : vector<512x128xf32>, vector<128x128xf32>, vector<512x128xf32> -> vector<512x128xf32>
    %c0_7 = arith.constant 0 : index
    %c0_8 = arith.constant 0 : index
    %5 = vector.load %arg10[%c0_7, %c0_8] : memref<512x128xf32, #tpu.memory_space<vmem>>, vector<512x128xf32>
    tpu.vector_store %arg10[%c0_7, %c0_8], %4 {strides = array<i32>} : memref<512x128xf32, #tpu.memory_space<vmem>>, vector<512x128xf32>,
    %c0_9 = arith.constant 0 : index
    %c0_10 = arith.constant 0 : index
    %c1 = arith.constant 1 : index
    %c0_11 = arith.constant 0 : index
    %6 = vector.load %arg1[%c0_9, %c0_10, %c1, %c0_11] : memref<2x18x18x128xf32, #tpu.memory_space<vmem>>, vector<2x16x16x128xf32>
    %7 = vector.shape_cast %6 : vector<2x16x16x128xf32> to vector<512x128xf32>
    %c0_12 = arith.constant 0 : index
    %c1_13 = arith.constant 1 : index
    %c0_14 = arith.constant 0 : index
    %c0_15 = arith.constant 0 : index
    %8 = vector.load %arg2[%c0_12, %c1_13, %c0_14, %c0_15] : memref<3x3x128x128xf32, #tpu.memory_space<vmem>>, vector<1x1x128x128xf32>
    %9 = vector.shape_cast %8 : vector<1x1x128x128xf32> to vector<128x128xf32>
    %cst_16 = arith.constant dense<0.000000e+00> : vector<512x128xf32>
    %10 = tpu.matmul %7, %9, %cst_16 {dimension_numbers = #tpu.dot_dimension_numbers<[1], [0], [0], [1], [0, 0, 1, 1], [], []>} : vector<512x128xf32>, vector<128x128xf32>, vector<512x128xf32> -> vector<512x128xf32>
    %c0_17 = arith.constant 0 : index
    %c0_18 = arith.constant 0 : index
    %11 = vector.load %arg10[%c0_17, %c0_18] : memref<512x128xf32, #tpu.memory_space<vmem>>, vector<512x128xf32>
    %12 = arith.addf %11, %10 : vector<512x128xf32>
    %c0_19 = arith.constant 0 : index
    %c0_20 = arith.constant 0 : index
    %13 = vector.load %arg10[%c0_19, %c0_20] : memref<512x128xf32, #tpu.memory_space<vmem>>, vector<512x128xf32>
    tpu.vector_store %arg10[%c0_19, %c0_20], %12 {strides = array<i32>} : memref<512x128xf32, #tpu.memory_space<vmem>>, vector<512x128xf32>,
    %c0_21 = arith.constant 0 : index
    %c0_22 = arith.constant 0 : index
    %c2 = arith.constant 2 : index
    %c0_23 = arith.constant 0 : index
    %14 = vector.load %arg1[%c0_21, %c0_22, %c2, %c0_23] : memref<2x18x18x128xf32, #tpu.memory_space<vmem>>, vector<2x16x16x128xf32>
    %15 = vector.shape_cast %14 : vector<2x16x16x128xf32> to vector<512x128xf32>
    %c0_24 = arith.constant 0 : index
    %c2_25 = arith.constant 2 : index
    %c0_26 = arith.constant 0 : index
    %c0_27 = arith.constant 0 : index
    %16 = vector.load %arg2[%c0_24, %c2_25, %c0_26, %c0_27] : memref<3x3x128x128xf32, #tpu.memory_space<vmem>>, vector<1x1x128x128xf32>
    %17 = vector.shape_cast %16 : vector<1x1x128x128xf32> to vector<128x128xf32>
    %cst_28 = arith.constant dense<0.000000e+00> : vector<512x128xf32>
    %18 = tpu.matmul %15, %17, %cst_28 {dimension_numbers = #tpu.dot_dimension_numbers<[1], [0], [0], [1], [0, 0, 1, 1], [], []>} : vector<512x128xf32>, vector<128x128xf32>, vector<512x128xf32> -> vector<512x128xf32>
    %c0_29 = arith.constant 0 : index
    %c0_30 = arith.constant 0 : index
    %19 = vector.load %arg10[%c0_29, %c0_30] : memref<512x128xf32, #tpu.memory_space<vmem>>, vector<512x128xf32>
    %20 = arith.addf %19, %18 : vector<512x128xf32>
    %c0_31 = arith.constant 0 : index
    %c0_32 = arith.constant 0 : index
    %21 = vector.load %arg10[%c0_31, %c0_32] : memref<512x128xf32, #tpu.memory_space<vmem>>, vector<512x128xf32>
    tpu.vector_store %arg10[%c0_31, %c0_32], %20 {strides = array<i32>} : memref<512x128xf32, #tpu.memory_space<vmem>>, vector<512x128xf32>,
    %c0_33 = arith.constant 0 : index
    %c1_34 = arith.constant 1 : index
    %c0_35 = arith.constant 0 : index
    %c0_36 = arith.constant 0 : index
    %22 = vector.load %arg1[%c0_33, %c1_34, %c0_35, %c0_36] : memref<2x18x18x128xf32, #tpu.memory_space<vmem>>, vector<2x16x16x128xf32>
    %23 = vector.shape_cast %22 : vector<2x16x16x128xf32> to vector<512x128xf32>
    %c1_37 = arith.constant 1 : index
    %c0_38 = arith.constant 0 : index
    %c0_39 = arith.constant 0 : index
    %c0_40 = arith.constant 0 : index
    %24 = vector.load %arg2[%c1_37, %c0_38, %c0_39, %c0_40] : memref<3x3x128x128xf32, #tpu.memory_space<vmem>>, vector<1x1x128x128xf32>
    %25 = vector.shape_cast %24 : vector<1x1x128x128xf32> to vector<128x128xf32>
    %cst_41 = arith.constant dense<0.000000e+00> : vector<512x128xf32>
    %26 = tpu.matmul %23, %25, %cst_41 {dimension_numbers = #tpu.dot_dimension_numbers<[1], [0], [0], [1], [0, 0, 1, 1], [], []>} : vector<512x128xf32>, vector<128x128xf32>, vector<512x128xf32> -> vector<512x128xf32>
    %c0_42 = arith.constant 0 : index
    %c0_43 = arith.constant 0 : index
    %27 = vector.load %arg10[%c0_42, %c0_43] : memref<512x128xf32, #tpu.memory_space<vmem>>, vector<512x128xf32>
    %28 = arith.addf %27, %26 : vector<512x128xf32>
    %c0_44 = arith.constant 0 : index
    %c0_45 = arith.constant 0 : index
    %29 = vector.load %arg10[%c0_44, %c0_45] : memref<512x128xf32, #tpu.memory_space<vmem>>, vector<512x128xf32>
    tpu.vector_store %arg10[%c0_44, %c0_45], %28 {strides = array<i32>} : memref<512x128xf32, #tpu.memory_space<vmem>>, vector<512x128xf32>,
    %c0_46 = arith.constant 0 : index
    %c1_47 = arith.constant 1 : index
    %c1_48 = arith.constant 1 : index
    %c0_49 = arith.constant 0 : index
    %30 = vector.load %arg1[%c0_46, %c1_47, %c1_48, %c0_49] : memref<2x18x18x128xf32, #tpu.memory_space<vmem>>, vector<2x16x16x128xf32>
    %31 = vector.shape_cast %30 : vector<2x16x16x128xf32> to vector<512x128xf32>
    %c1_50 = arith.constant 1 : index
    %c1_51 = arith.constant 1 : index
    %c0_52 = arith.constant 0 : index
    %c0_53 = arith.constant 0 : index
    %32 = vector.load %arg2[%c1_50, %c1_51, %c0_52, %c0_53] : memref<3x3x128x128xf32, #tpu.memory_space<vmem>>, vector<1x1x128x128xf32>
    %33 = vector.shape_cast %32 : vector<1x1x128x128xf32> to vector<128x128xf32>
    %cst_54 = arith.constant dense<0.000000e+00> : vector<512x128xf32>
    %34 = tpu.matmul %31, %33, %cst_54 {dimension_numbers = #tpu.dot_dimension_numbers<[1], [0], [0], [1], [0, 0, 1, 1], [], []>} : vector<512x128xf32>, vector<128x128xf32>, vector<512x128xf32> -> vector<512x128xf32>
    %c0_55 = arith.constant 0 : index
    %c0_56 = arith.constant 0 : index
    %35 = vector.load %arg10[%c0_55, %c0_56] : memref<512x128xf32, #tpu.memory_space<vmem>>, vector<512x128xf32>
    %36 = arith.addf %35, %34 : vector<512x128xf32>
    %c0_57 = arith.constant 0 : index
    %c0_58 = arith.constant 0 : index
    %37 = vector.load %arg10[%c0_57, %c0_58] : memref<512x128xf32, #tpu.memory_space<vmem>>, vector<512x128xf32>
    tpu.vector_store %arg10[%c0_57, %c0_58], %36 {strides = array<i32>} : memref<512x128xf32, #tpu.memory_space<vmem>>, vector<512x128xf32>,
    %c0_59 = arith.constant 0 : index
    %c1_60 = arith.constant 1 : index
    %c2_61 = arith.constant 2 : index
    %c0_62 = arith.constant 0 : index
    %38 = vector.load %arg1[%c0_59, %c1_60, %c2_61, %c0_62] : memref<2x18x18x128xf32, #tpu.memory_space<vmem>>, vector<2x16x16x128xf32>
    %39 = vector.shape_cast %38 : vector<2x16x16x128xf32> to vector<512x128xf32>
    %c1_63 = arith.constant 1 : index
    %c2_64 = arith.constant 2 : index
    %c0_65 = arith.constant 0 : index
    %c0_66 = arith.constant 0 : index
    %40 = vector.load %arg2[%c1_63, %c2_64, %c0_65, %c0_66] : memref<3x3x128x128xf32, #tpu.memory_space<vmem>>, vector<1x1x128x128xf32>
    %41 = vector.shape_cast %40 : vector<1x1x128x128xf32> to vector<128x128xf32>
    %cst_67 = arith.constant dense<0.000000e+00> : vector<512x128xf32>
    %42 = tpu.matmul %39, %41, %cst_67 {dimension_numbers = #tpu.dot_dimension_numbers<[1], [0], [0], [1], [0, 0, 1, 1], [], []>} : vector<512x128xf32>, vector<128x128xf32>, vector<512x128xf32> -> vector<512x128xf32>
    %c0_68 = arith.constant 0 : index
    %c0_69 = arith.constant 0 : index
    %43 = vector.load %arg10[%c0_68, %c0_69] : memref<512x128xf32, #tpu.memory_space<vmem>>, vector<512x128xf32>
    %44 = arith.addf %43, %42 : vector<512x128xf32>
    %c0_70 = arith.constant 0 : index
    %c0_71 = arith.constant 0 : index
    %45 = vector.load %arg10[%c0_70, %c0_71] : memref<512x128xf32, #tpu.memory_space<vmem>>, vector<512x128xf32>
    tpu.vector_store %arg10[%c0_70, %c0_71], %44 {strides = array<i32>} : memref<512x128xf32, #tpu.memory_space<vmem>>, vector<512x128xf32>,
    %c0_72 = arith.constant 0 : index
    %c2_73 = arith.constant 2 : index
    %c0_74 = arith.constant 0 : index
    %c0_75 = arith.constant 0 : index
    %46 = vector.load %arg1[%c0_72, %c2_73, %c0_74, %c0_75] : memref<2x18x18x128xf32, #tpu.memory_space<vmem>>, vector<2x16x16x128xf32>
    %47 = vector.shape_cast %46 : vector<2x16x16x128xf32> to vector<512x128xf32>
    %c2_76 = arith.constant 2 : index
    %c0_77 = arith.constant 0 : index
    %c0_78 = arith.constant 0 : index
    %c0_79 = arith.constant 0 : index
    %48 = vector.load %arg2[%c2_76, %c0_77, %c0_78, %c0_79] : memref<3x3x128x128xf32, #tpu.memory_space<vmem>>, vector<1x1x128x128xf32>
    %49 = vector.shape_cast %48 : vector<1x1x128x128xf32> to vector<128x128xf32>
    %cst_80 = arith.constant dense<0.000000e+00> : vector<512x128xf32>
    %50 = tpu.matmul %47, %49, %cst_80 {dimension_numbers = #tpu.dot_dimension_numbers<[1], [0], [0], [1], [0, 0, 1, 1], [], []>} : vector<512x128xf32>, vector<128x128xf32>, vector<512x128xf32> -> vector<512x128xf32>
    %c0_81 = arith.constant 0 : index
    %c0_82 = arith.constant 0 : index
    %51 = vector.load %arg10[%c0_81, %c0_82] : memref<512x128xf32, #tpu.memory_space<vmem>>, vector<512x128xf32>
    %52 = arith.addf %51, %50 : vector<512x128xf32>
    %c0_83 = arith.constant 0 : index
    %c0_84 = arith.constant 0 : index
    %53 = vector.load %arg10[%c0_83, %c0_84] : memref<512x128xf32, #tpu.memory_space<vmem>>, vector<512x128xf32>
    tpu.vector_store %arg10[%c0_83, %c0_84], %52 {strides = array<i32>} : memref<512x128xf32, #tpu.memory_space<vmem>>, vector<512x128xf32>,
    %c0_85 = arith.constant 0 : index
    %c2_86 = arith.constant 2 : index
    %c1_87 = arith.constant 1 : index
    %c0_88 = arith.constant 0 : index
    %54 = vector.load %arg1[%c0_85, %c2_86, %c1_87, %c0_88] : memref<2x18x18x128xf32, #tpu.memory_space<vmem>>, vector<2x16x16x128xf32>
    %55 = vector.shape_cast %54 : vector<2x16x16x128xf32> to vector<512x128xf32>
    %c2_89 = arith.constant 2 : index
    %c1_90 = arith.constant 1 : index
    %c0_91 = arith.constant 0 : index
    %c0_92 = arith.constant 0 : index
    %56 = vector.load %arg2[%c2_89, %c1_90, %c0_91, %c0_92] : memref<3x3x128x128xf32, #tpu.memory_space<vmem>>, vector<1x1x128x128xf32>
    %57 = vector.shape_cast %56 : vector<1x1x128x128xf32> to vector<128x128xf32>
    %cst_93 = arith.constant dense<0.000000e+00> : vector<512x128xf32>
    %58 = tpu.matmul %55, %57, %cst_93 {dimension_numbers = #tpu.dot_dimension_numbers<[1], [0], [0], [1], [0, 0, 1, 1], [], []>} : vector<512x128xf32>, vector<128x128xf32>, vector<512x128xf32> -> vector<512x128xf32>
    %c0_94 = arith.constant 0 : index
    %c0_95 = arith.constant 0 : index
    %59 = vector.load %arg10[%c0_94, %c0_95] : memref<512x128xf32, #tpu.memory_space<vmem>>, vector<512x128xf32>
    %60 = arith.addf %59, %58 : vector<512x128xf32>
    %c0_96 = arith.constant 0 : index
    %c0_97 = arith.constant 0 : index
    %61 = vector.load %arg10[%c0_96, %c0_97] : memref<512x128xf32, #tpu.memory_space<vmem>>, vector<512x128xf32>
    tpu.vector_store %arg10[%c0_96, %c0_97], %60 {strides = array<i32>} : memref<512x128xf32, #tpu.memory_space<vmem>>, vector<512x128xf32>,
    %c0_98 = arith.constant 0 : index
    %c2_99 = arith.constant 2 : index
    %c2_100 = arith.constant 2 : index
    %c0_101 = arith.constant 0 : index
    %62 = vector.load %arg1[%c0_98, %c2_99, %c2_100, %c0_101] : memref<2x18x18x128xf32, #tpu.memory_space<vmem>>, vector<2x16x16x128xf32>
    %63 = vector.shape_cast %62 : vector<2x16x16x128xf32> to vector<512x128xf32>
    %c2_102 = arith.constant 2 : index
    %c2_103 = arith.constant 2 : index
    %c0_104 = arith.constant 0 : index
    %c0_105 = arith.constant 0 : index
    %64 = vector.load %arg2[%c2_102, %c2_103, %c0_104, %c0_105] : memref<3x3x128x128xf32, #tpu.memory_space<vmem>>, vector<1x1x128x128xf32>
    %65 = vector.shape_cast %64 : vector<1x1x128x128xf32> to vector<128x128xf32>
    %cst_106 = arith.constant dense<0.000000e+00> : vector<512x128xf32>
    %66 = tpu.matmul %63, %65, %cst_106 {dimension_numbers = #tpu.dot_dimension_numbers<[1], [0], [0], [1], [0, 0, 1, 1], [], []>} : vector<512x128xf32>, vector<128x128xf32>, vector<512x128xf32> -> vector<512x128xf32>
    %c0_107 = arith.constant 0 : index
    %c0_108 = arith.constant 0 : index
    %67 = vector.load %arg10[%c0_107, %c0_108] : memref<512x128xf32, #tpu.memory_space<vmem>>, vector<512x128xf32>
    %68 = arith.addf %67, %66 : vector<512x128xf32>
    %c0_109 = arith.constant 0 : index
    %c0_110 = arith.constant 0 : index
    %69 = vector.load %arg10[%c0_109, %c0_110] : memref<512x128xf32, #tpu.memory_space<vmem>>, vector<512x128xf32>
    tpu.vector_store %arg10[%c0_109, %c0_110], %68 {strides = array<i32>} : memref<512x128xf32, #tpu.memory_space<vmem>>, vector<512x128xf32>,
    %c0_111 = arith.constant 0 : index
    %c0_112 = arith.constant 0 : index
    %70 = vector.load %arg10[%c0_111, %c0_112] : memref<512x128xf32, #tpu.memory_space<vmem>>, vector<512x128xf32>
    %cst_113 = arith.constant dense<0.000000e+00> : vector<128xf32>
    %71 = vector.multi_reduction <add>, %70, %cst_113 [0] : vector<512x128xf32> to vector<128xf32>
    %72 = vector.shape_cast %71 : vector<128xf32> to vector<1x128xf32>
    %cst_114 = arith.constant 0.001953125 : f32
    %73 = vector.broadcast %cst_114 : f32 to vector<1x128xf32>
    %74 = arith.mulf %72, %73 : vector<1x128xf32>
    %75 = vector.broadcast %74 : vector<1x128xf32> to vector<512x128xf32>
    %76 = arith.subf %70, %75 : vector<512x128xf32>
    %77 = arith.mulf %76, %76 : vector<512x128xf32>
    %cst_115 = arith.constant dense<0.000000e+00> : vector<128xf32>
    %78 = vector.multi_reduction <add>, %77, %cst_115 [0] : vector<512x128xf32> to vector<128xf32>
    %79 = vector.shape_cast %78 : vector<128xf32> to vector<1x128xf32>
    %cst_116 = arith.constant 0.001953125 : f32
    %80 = vector.broadcast %cst_116 : f32 to vector<1x128xf32>
    %81 = arith.mulf %79, %80 : vector<1x128xf32>
    %c0_117 = arith.constant 0 : index
    %c0_118 = arith.constant 0 : index
    %82 = vector.load %arg3[%c0_117, %c0_118] : memref<1x128xf32, #tpu.memory_space<vmem>>, vector<1x128xf32>
    %cst_119 = arith.constant 9.99999974E-6 : f32
    %83 = vector.broadcast %cst_119 : f32 to vector<1x128xf32>
    %84 = arith.addf %81, %83 : vector<1x128xf32>
    %85 = math.rsqrt %84 : vector<1x128xf32>
    %86 = arith.mulf %82, %85 : vector<1x128xf32>
    %87 = vector.broadcast %86 : vector<1x128xf32> to vector<512x128xf32>
    %88 = arith.mulf %76, %87 : vector<512x128xf32>
    %c0_120 = arith.constant 0 : index
    %c0_121 = arith.constant 0 : index
    %89 = vector.load %arg4[%c0_120, %c0_121] : memref<1x128xf32, #tpu.memory_space<vmem>>, vector<1x128xf32>
    %90 = vector.broadcast %89 : vector<1x128xf32> to vector<512x128xf32>
    %91 = arith.addf %88, %90 : vector<512x128xf32>
    %cst_122 = arith.constant 0.000000e+00 : f32
    %92 = vector.broadcast %cst_122 : f32 to vector<512x128xf32>
    %93 = arith.maximumf %91, %92 : vector<512x128xf32>
    %cst_123 = arith.constant 0.000000e+00 : f32
    %94 = vector.broadcast %cst_123 : f32 to vector<2x18x18x128xf32>
    %c0_124 = arith.constant 0 : index
    %c0_125 = arith.constant 0 : index
    %c0_126 = arith.constant 0 : index
    %c0_127 = arith.constant 0 : index
    %95 = vector.load %arg9[%c0_124, %c0_125, %c0_126, %c0_127] : memref<2x18x18x128xf32, #tpu.memory_space<vmem>>, vector<2x18x18x128xf32>
    tpu.vector_store %arg9[%c0_124, %c0_125, %c0_126, %c0_127], %94 {strides = array<i32>} : memref<2x18x18x128xf32, #tpu.memory_space<vmem>>, vector<2x18x18x128xf32>,
    %96 = vector.shape_cast %93 : vector<512x128xf32> to vector<2x16x16x128xf32>
    %c0_128 = arith.constant 0 : index
    %c1_129 = arith.constant 1 : index
    %c1_130 = arith.constant 1 : index
    %c0_131 = arith.constant 0 : index
    %97 = vector.load %arg9[%c0_128, %c1_129, %c1_130, %c0_131] : memref<2x18x18x128xf32, #tpu.memory_space<vmem>>, vector<2x16x16x128xf32>
    tpu.vector_store %arg9[%c0_128, %c1_129, %c1_130, %c0_131], %96 {strides = array<i32>} : memref<2x18x18x128xf32, #tpu.memory_space<vmem>>, vector<2x16x16x128xf32>,
    %c0_132 = arith.constant 0 : index
    %c0_133 = arith.constant 0 : index
    %c0_134 = arith.constant 0 : index
    %c0_135 = arith.constant 0 : index
    %98 = vector.load %arg9[%c0_132, %c0_133, %c0_134, %c0_135] : memref<2x18x18x128xf32, #tpu.memory_space<vmem>>, vector<2x16x16x128xf32>
    %99 = vector.shape_cast %98 : vector<2x16x16x128xf32> to vector<512x128xf32>
    %c0_136 = arith.constant 0 : index
    %c0_137 = arith.constant 0 : index
    %c0_138 = arith.constant 0 : index
    %c0_139 = arith.constant 0 : index
    %100 = vector.load %arg5[%c0_136, %c0_137, %c0_138, %c0_139] : memref<3x3x128x128xf32, #tpu.memory_space<vmem>>, vector<1x1x128x128xf32>
    %101 = vector.shape_cast %100 : vector<1x1x128x128xf32> to vector<128x128xf32>
    %cst_140 = arith.constant dense<0.000000e+00> : vector<512x128xf32>
    %102 = tpu.matmul %99, %101, %cst_140 {dimension_numbers = #tpu.dot_dimension_numbers<[1], [0], [0], [1], [0, 0, 1, 1], [], []>} : vector<512x128xf32>, vector<128x128xf32>, vector<512x128xf32> -> vector<512x128xf32>
    %c0_141 = arith.constant 0 : index
    %c0_142 = arith.constant 0 : index
    %103 = vector.load %arg10[%c0_141, %c0_142] : memref<512x128xf32, #tpu.memory_space<vmem>>, vector<512x128xf32>
    tpu.vector_store %arg10[%c0_141, %c0_142], %102 {strides = array<i32>} : memref<512x128xf32, #tpu.memory_space<vmem>>, vector<512x128xf32>,
    %c0_143 = arith.constant 0 : index
    %c0_144 = arith.constant 0 : index
    %c1_145 = arith.constant 1 : index
    %c0_146 = arith.constant 0 : index
    %104 = vector.load %arg9[%c0_143, %c0_144, %c1_145, %c0_146] : memref<2x18x18x128xf32, #tpu.memory_space<vmem>>, vector<2x16x16x128xf32>
    %105 = vector.shape_cast %104 : vector<2x16x16x128xf32> to vector<512x128xf32>
    %c0_147 = arith.constant 0 : index
    %c1_148 = arith.constant 1 : index
    %c0_149 = arith.constant 0 : index
    %c0_150 = arith.constant 0 : index
    %106 = vector.load %arg5[%c0_147, %c1_148, %c0_149, %c0_150] : memref<3x3x128x128xf32, #tpu.memory_space<vmem>>, vector<1x1x128x128xf32>
    %107 = vector.shape_cast %106 : vector<1x1x128x128xf32> to vector<128x128xf32>
    %cst_151 = arith.constant dense<0.000000e+00> : vector<512x128xf32>
    %108 = tpu.matmul %105, %107, %cst_151 {dimension_numbers = #tpu.dot_dimension_numbers<[1], [0], [0], [1], [0, 0, 1, 1], [], []>} : vector<512x128xf32>, vector<128x128xf32>, vector<512x128xf32> -> vector<512x128xf32>
    %c0_152 = arith.constant 0 : index
    %c0_153 = arith.constant 0 : index
    %109 = vector.load %arg10[%c0_152, %c0_153] : memref<512x128xf32, #tpu.memory_space<vmem>>, vector<512x128xf32>
    %110 = arith.addf %109, %108 : vector<512x128xf32>
    %c0_154 = arith.constant 0 : index
    %c0_155 = arith.constant 0 : index
    %111 = vector.load %arg10[%c0_154, %c0_155] : memref<512x128xf32, #tpu.memory_space<vmem>>, vector<512x128xf32>
    tpu.vector_store %arg10[%c0_154, %c0_155], %110 {strides = array<i32>} : memref<512x128xf32, #tpu.memory_space<vmem>>, vector<512x128xf32>,
    %c0_156 = arith.constant 0 : index
    %c0_157 = arith.constant 0 : index
    %c2_158 = arith.constant 2 : index
    %c0_159 = arith.constant 0 : index
    %112 = vector.load %arg9[%c0_156, %c0_157, %c2_158, %c0_159] : memref<2x18x18x128xf32, #tpu.memory_space<vmem>>, vector<2x16x16x128xf32>
    %113 = vector.shape_cast %112 : vector<2x16x16x128xf32> to vector<512x128xf32>
    %c0_160 = arith.constant 0 : index
    %c2_161 = arith.constant 2 : index
    %c0_162 = arith.constant 0 : index
    %c0_163 = arith.constant 0 : index
    %114 = vector.load %arg5[%c0_160, %c2_161, %c0_162, %c0_163] : memref<3x3x128x128xf32, #tpu.memory_space<vmem>>, vector<1x1x128x128xf32>
    %115 = vector.shape_cast %114 : vector<1x1x128x128xf32> to vector<128x128xf32>
    %cst_164 = arith.constant dense<0.000000e+00> : vector<512x128xf32>
    %116 = tpu.matmul %113, %115, %cst_164 {dimension_numbers = #tpu.dot_dimension_numbers<[1], [0], [0], [1], [0, 0, 1, 1], [], []>} : vector<512x128xf32>, vector<128x128xf32>, vector<512x128xf32> -> vector<512x128xf32>
    %c0_165 = arith.constant 0 : index
    %c0_166 = arith.constant 0 : index
    %117 = vector.load %arg10[%c0_165, %c0_166] : memref<512x128xf32, #tpu.memory_space<vmem>>, vector<512x128xf32>
    %118 = arith.addf %117, %116 : vector<512x128xf32>
    %c0_167 = arith.constant 0 : index
    %c0_168 = arith.constant 0 : index
    %119 = vector.load %arg10[%c0_167, %c0_168] : memref<512x128xf32, #tpu.memory_space<vmem>>, vector<512x128xf32>
    tpu.vector_store %arg10[%c0_167, %c0_168], %118 {strides = array<i32>} : memref<512x128xf32, #tpu.memory_space<vmem>>, vector<512x128xf32>,
    %c0_169 = arith.constant 0 : index
    %c1_170 = arith.constant 1 : index
    %c0_171 = arith.constant 0 : index
    %c0_172 = arith.constant 0 : index
    %120 = vector.load %arg9[%c0_169, %c1_170, %c0_171, %c0_172] : memref<2x18x18x128xf32, #tpu.memory_space<vmem>>, vector<2x16x16x128xf32>
    %121 = vector.shape_cast %120 : vector<2x16x16x128xf32> to vector<512x128xf32>
    %c1_173 = arith.constant 1 : index
    %c0_174 = arith.constant 0 : index
    %c0_175 = arith.constant 0 : index
    %c0_176 = arith.constant 0 : index
    %122 = vector.load %arg5[%c1_173, %c0_174, %c0_175, %c0_176] : memref<3x3x128x128xf32, #tpu.memory_space<vmem>>, vector<1x1x128x128xf32>
    %123 = vector.shape_cast %122 : vector<1x1x128x128xf32> to vector<128x128xf32>
    %cst_177 = arith.constant dense<0.000000e+00> : vector<512x128xf32>
    %124 = tpu.matmul %121, %123, %cst_177 {dimension_numbers = #tpu.dot_dimension_numbers<[1], [0], [0], [1], [0, 0, 1, 1], [], []>} : vector<512x128xf32>, vector<128x128xf32>, vector<512x128xf32> -> vector<512x128xf32>
    %c0_178 = arith.constant 0 : index
    %c0_179 = arith.constant 0 : index
    %125 = vector.load %arg10[%c0_178, %c0_179] : memref<512x128xf32, #tpu.memory_space<vmem>>, vector<512x128xf32>
    %126 = arith.addf %125, %124 : vector<512x128xf32>
    %c0_180 = arith.constant 0 : index
    %c0_181 = arith.constant 0 : index
    %127 = vector.load %arg10[%c0_180, %c0_181] : memref<512x128xf32, #tpu.memory_space<vmem>>, vector<512x128xf32>
    tpu.vector_store %arg10[%c0_180, %c0_181], %126 {strides = array<i32>} : memref<512x128xf32, #tpu.memory_space<vmem>>, vector<512x128xf32>,
    %c0_182 = arith.constant 0 : index
    %c1_183 = arith.constant 1 : index
    %c1_184 = arith.constant 1 : index
    %c0_185 = arith.constant 0 : index
    %128 = vector.load %arg9[%c0_182, %c1_183, %c1_184, %c0_185] : memref<2x18x18x128xf32, #tpu.memory_space<vmem>>, vector<2x16x16x128xf32>
    %129 = vector.shape_cast %128 : vector<2x16x16x128xf32> to vector<512x128xf32>
    %c1_186 = arith.constant 1 : index
    %c1_187 = arith.constant 1 : index
    %c0_188 = arith.constant 0 : index
    %c0_189 = arith.constant 0 : index
    %130 = vector.load %arg5[%c1_186, %c1_187, %c0_188, %c0_189] : memref<3x3x128x128xf32, #tpu.memory_space<vmem>>, vector<1x1x128x128xf32>
    %131 = vector.shape_cast %130 : vector<1x1x128x128xf32> to vector<128x128xf32>
    %cst_190 = arith.constant dense<0.000000e+00> : vector<512x128xf32>
    %132 = tpu.matmul %129, %131, %cst_190 {dimension_numbers = #tpu.dot_dimension_numbers<[1], [0], [0], [1], [0, 0, 1, 1], [], []>} : vector<512x128xf32>, vector<128x128xf32>, vector<512x128xf32> -> vector<512x128xf32>
    %c0_191 = arith.constant 0 : index
    %c0_192 = arith.constant 0 : index
    %133 = vector.load %arg10[%c0_191, %c0_192] : memref<512x128xf32, #tpu.memory_space<vmem>>, vector<512x128xf32>
    %134 = arith.addf %133, %132 : vector<512x128xf32>
    %c0_193 = arith.constant 0 : index
    %c0_194 = arith.constant 0 : index
    %135 = vector.load %arg10[%c0_193, %c0_194] : memref<512x128xf32, #tpu.memory_space<vmem>>, vector<512x128xf32>
    tpu.vector_store %arg10[%c0_193, %c0_194], %134 {strides = array<i32>} : memref<512x128xf32, #tpu.memory_space<vmem>>, vector<512x128xf32>,
    %c0_195 = arith.constant 0 : index
    %c1_196 = arith.constant 1 : index
    %c2_197 = arith.constant 2 : index
    %c0_198 = arith.constant 0 : index
    %136 = vector.load %arg9[%c0_195, %c1_196, %c2_197, %c0_198] : memref<2x18x18x128xf32, #tpu.memory_space<vmem>>, vector<2x16x16x128xf32>
    %137 = vector.shape_cast %136 : vector<2x16x16x128xf32> to vector<512x128xf32>
    %c1_199 = arith.constant 1 : index
    %c2_200 = arith.constant 2 : index
    %c0_201 = arith.constant 0 : index
    %c0_202 = arith.constant 0 : index
    %138 = vector.load %arg5[%c1_199, %c2_200, %c0_201, %c0_202] : memref<3x3x128x128xf32, #tpu.memory_space<vmem>>, vector<1x1x128x128xf32>
    %139 = vector.shape_cast %138 : vector<1x1x128x128xf32> to vector<128x128xf32>
    %cst_203 = arith.constant dense<0.000000e+00> : vector<512x128xf32>
    %140 = tpu.matmul %137, %139, %cst_203 {dimension_numbers = #tpu.dot_dimension_numbers<[1], [0], [0], [1], [0, 0, 1, 1], [], []>} : vector<512x128xf32>, vector<128x128xf32>, vector<512x128xf32> -> vector<512x128xf32>
    %c0_204 = arith.constant 0 : index
    %c0_205 = arith.constant 0 : index
    %141 = vector.load %arg10[%c0_204, %c0_205] : memref<512x128xf32, #tpu.memory_space<vmem>>, vector<512x128xf32>
    %142 = arith.addf %141, %140 : vector<512x128xf32>
    %c0_206 = arith.constant 0 : index
    %c0_207 = arith.constant 0 : index
    %143 = vector.load %arg10[%c0_206, %c0_207] : memref<512x128xf32, #tpu.memory_space<vmem>>, vector<512x128xf32>
    tpu.vector_store %arg10[%c0_206, %c0_207], %142 {strides = array<i32>} : memref<512x128xf32, #tpu.memory_space<vmem>>, vector<512x128xf32>,
    %c0_208 = arith.constant 0 : index
    %c2_209 = arith.constant 2 : index
    %c0_210 = arith.constant 0 : index
    %c0_211 = arith.constant 0 : index
    %144 = vector.load %arg9[%c0_208, %c2_209, %c0_210, %c0_211] : memref<2x18x18x128xf32, #tpu.memory_space<vmem>>, vector<2x16x16x128xf32>
    %145 = vector.shape_cast %144 : vector<2x16x16x128xf32> to vector<512x128xf32>
    %c2_212 = arith.constant 2 : index
    %c0_213 = arith.constant 0 : index
    %c0_214 = arith.constant 0 : index
    %c0_215 = arith.constant 0 : index
    %146 = vector.load %arg5[%c2_212, %c0_213, %c0_214, %c0_215] : memref<3x3x128x128xf32, #tpu.memory_space<vmem>>, vector<1x1x128x128xf32>
    %147 = vector.shape_cast %146 : vector<1x1x128x128xf32> to vector<128x128xf32>
    %cst_216 = arith.constant dense<0.000000e+00> : vector<512x128xf32>
    %148 = tpu.matmul %145, %147, %cst_216 {dimension_numbers = #tpu.dot_dimension_numbers<[1], [0], [0], [1], [0, 0, 1, 1], [], []>} : vector<512x128xf32>, vector<128x128xf32>, vector<512x128xf32> -> vector<512x128xf32>
    %c0_217 = arith.constant 0 : index
    %c0_218 = arith.constant 0 : index
    %149 = vector.load %arg10[%c0_217, %c0_218] : memref<512x128xf32, #tpu.memory_space<vmem>>, vector<512x128xf32>
    %150 = arith.addf %149, %148 : vector<512x128xf32>
    %c0_219 = arith.constant 0 : index
    %c0_220 = arith.constant 0 : index
    %151 = vector.load %arg10[%c0_219, %c0_220] : memref<512x128xf32, #tpu.memory_space<vmem>>, vector<512x128xf32>
    tpu.vector_store %arg10[%c0_219, %c0_220], %150 {strides = array<i32>} : memref<512x128xf32, #tpu.memory_space<vmem>>, vector<512x128xf32>,
    %c0_221 = arith.constant 0 : index
    %c2_222 = arith.constant 2 : index
    %c1_223 = arith.constant 1 : index
    %c0_224 = arith.constant 0 : index
    %152 = vector.load %arg9[%c0_221, %c2_222, %c1_223, %c0_224] : memref<2x18x18x128xf32, #tpu.memory_space<vmem>>, vector<2x16x16x128xf32>
    %153 = vector.shape_cast %152 : vector<2x16x16x128xf32> to vector<512x128xf32>
    %c2_225 = arith.constant 2 : index
    %c1_226 = arith.constant 1 : index
    %c0_227 = arith.constant 0 : index
    %c0_228 = arith.constant 0 : index
    %154 = vector.load %arg5[%c2_225, %c1_226, %c0_227, %c0_228] : memref<3x3x128x128xf32, #tpu.memory_space<vmem>>, vector<1x1x128x128xf32>
    %155 = vector.shape_cast %154 : vector<1x1x128x128xf32> to vector<128x128xf32>
    %cst_229 = arith.constant dense<0.000000e+00> : vector<512x128xf32>
    %156 = tpu.matmul %153, %155, %cst_229 {dimension_numbers = #tpu.dot_dimension_numbers<[1], [0], [0], [1], [0, 0, 1, 1], [], []>} : vector<512x128xf32>, vector<128x128xf32>, vector<512x128xf32> -> vector<512x128xf32>
    %c0_230 = arith.constant 0 : index
    %c0_231 = arith.constant 0 : index
    %157 = vector.load %arg10[%c0_230, %c0_231] : memref<512x128xf32, #tpu.memory_space<vmem>>, vector<512x128xf32>
    %158 = arith.addf %157, %156 : vector<512x128xf32>
    %c0_232 = arith.constant 0 : index
    %c0_233 = arith.constant 0 : index
    %159 = vector.load %arg10[%c0_232, %c0_233] : memref<512x128xf32, #tpu.memory_space<vmem>>, vector<512x128xf32>
    tpu.vector_store %arg10[%c0_232, %c0_233], %158 {strides = array<i32>} : memref<512x128xf32, #tpu.memory_space<vmem>>, vector<512x128xf32>,
    %c0_234 = arith.constant 0 : index
    %c2_235 = arith.constant 2 : index
    %c2_236 = arith.constant 2 : index
    %c0_237 = arith.constant 0 : index
    %160 = vector.load %arg9[%c0_234, %c2_235, %c2_236, %c0_237] : memref<2x18x18x128xf32, #tpu.memory_space<vmem>>, vector<2x16x16x128xf32>
    %161 = vector.shape_cast %160 : vector<2x16x16x128xf32> to vector<512x128xf32>
    %c2_238 = arith.constant 2 : index
    %c2_239 = arith.constant 2 : index
    %c0_240 = arith.constant 0 : index
    %c0_241 = arith.constant 0 : index
    %162 = vector.load %arg5[%c2_238, %c2_239, %c0_240, %c0_241] : memref<3x3x128x128xf32, #tpu.memory_space<vmem>>, vector<1x1x128x128xf32>
    %163 = vector.shape_cast %162 : vector<1x1x128x128xf32> to vector<128x128xf32>
    %cst_242 = arith.constant dense<0.000000e+00> : vector<512x128xf32>
    %164 = tpu.matmul %161, %163, %cst_242 {dimension_numbers = #tpu.dot_dimension_numbers<[1], [0], [0], [1], [0, 0, 1, 1], [], []>} : vector<512x128xf32>, vector<128x128xf32>, vector<512x128xf32> -> vector<512x128xf32>
    %c0_243 = arith.constant 0 : index
    %c0_244 = arith.constant 0 : index
    %165 = vector.load %arg10[%c0_243, %c0_244] : memref<512x128xf32, #tpu.memory_space<vmem>>, vector<512x128xf32>
    %166 = arith.addf %165, %164 : vector<512x128xf32>
    %c0_245 = arith.constant 0 : index
    %c0_246 = arith.constant 0 : index
    %167 = vector.load %arg10[%c0_245, %c0_246] : memref<512x128xf32, #tpu.memory_space<vmem>>, vector<512x128xf32>
    tpu.vector_store %arg10[%c0_245, %c0_246], %166 {strides = array<i32>} : memref<512x128xf32, #tpu.memory_space<vmem>>, vector<512x128xf32>,
    %c0_247 = arith.constant 0 : index
    %c0_248 = arith.constant 0 : index
    %168 = vector.load %arg10[%c0_247, %c0_248] : memref<512x128xf32, #tpu.memory_space<vmem>>, vector<512x128xf32>
    %cst_249 = arith.constant dense<0.000000e+00> : vector<128xf32>
    %169 = vector.multi_reduction <add>, %168, %cst_249 [0] : vector<512x128xf32> to vector<128xf32>
    %170 = vector.shape_cast %169 : vector<128xf32> to vector<1x128xf32>
    %cst_250 = arith.constant 0.001953125 : f32
    %171 = vector.broadcast %cst_250 : f32 to vector<1x128xf32>
    %172 = arith.mulf %170, %171 : vector<1x128xf32>
    %173 = vector.broadcast %172 : vector<1x128xf32> to vector<512x128xf32>
    %174 = arith.subf %168, %173 : vector<512x128xf32>
    %175 = arith.mulf %174, %174 : vector<512x128xf32>
    %cst_251 = arith.constant dense<0.000000e+00> : vector<128xf32>
    %176 = vector.multi_reduction <add>, %175, %cst_251 [0] : vector<512x128xf32> to vector<128xf32>
    %177 = vector.shape_cast %176 : vector<128xf32> to vector<1x128xf32>
    %cst_252 = arith.constant 0.001953125 : f32
    %178 = vector.broadcast %cst_252 : f32 to vector<1x128xf32>
    %179 = arith.mulf %177, %178 : vector<1x128xf32>
    %c0_253 = arith.constant 0 : index
    %c0_254 = arith.constant 0 : index
    %180 = vector.load %arg6[%c0_253, %c0_254] : memref<1x128xf32, #tpu.memory_space<vmem>>, vector<1x128xf32>
    %cst_255 = arith.constant 9.99999974E-6 : f32
    %181 = vector.broadcast %cst_255 : f32 to vector<1x128xf32>
    %182 = arith.addf %179, %181 : vector<1x128xf32>
    %183 = math.rsqrt %182 : vector<1x128xf32>
    %184 = arith.mulf %180, %183 : vector<1x128xf32>
    %185 = vector.broadcast %184 : vector<1x128xf32> to vector<512x128xf32>
    %186 = arith.mulf %174, %185 : vector<512x128xf32>
    %c0_256 = arith.constant 0 : index
    %c0_257 = arith.constant 0 : index
    %187 = vector.load %arg7[%c0_256, %c0_257] : memref<1x128xf32, #tpu.memory_space<vmem>>, vector<1x128xf32>
    %188 = vector.broadcast %187 : vector<1x128xf32> to vector<512x128xf32>
    %189 = arith.addf %186, %188 : vector<512x128xf32>
    %c0_258 = arith.constant 0 : index
    %c1_259 = arith.constant 1 : index
    %c1_260 = arith.constant 1 : index
    %c0_261 = arith.constant 0 : index
    %190 = vector.load %arg1[%c0_258, %c1_259, %c1_260, %c0_261] : memref<2x18x18x128xf32, #tpu.memory_space<vmem>>, vector<2x16x16x128xf32>
    %191 = vector.shape_cast %190 : vector<2x16x16x128xf32> to vector<512x128xf32>
    %192 = arith.addf %189, %191 : vector<512x128xf32>
    %cst_262 = arith.constant 0.000000e+00 : f32
    %193 = vector.broadcast %cst_262 : f32 to vector<512x128xf32>
    %194 = arith.maximumf %192, %193 : vector<512x128xf32>
    %195 = vector.shape_cast %194 : vector<512x128xf32> to vector<2x16x16x128xf32>
    %c0_263 = arith.constant 0 : index
    %c0_264 = arith.constant 0 : index
    %c0_265 = arith.constant 0 : index
    %c0_266 = arith.constant 0 : index
    %196 = vector.load %arg8[%c0_263, %c0_264, %c0_265, %c0_266] : memref<2x16x16x128xf32, #tpu.memory_space<vmem>>, vector<2x16x16x128xf32>
    tpu.vector_store %arg8[%c0_263, %c0_264, %c0_265, %c0_266], %195 {strides = array<i32>} : memref<2x16x16x128xf32, #tpu.memory_space<vmem>>, vector<2x16x16x128xf32>,
    return
  }
  func.func @transform_0(%arg0: i32) -> (i32, i32, i32, i32) {
    %c0_i32 = arith.constant 0 : i32
    %c0_i32_0 = arith.constant 0 : i32
    %c0_i32_1 = arith.constant 0 : i32
    %c0_i32_2 = arith.constant 0 : i32
    %c0_i32_3 = arith.constant 0 : i32
    return %c0_i32, %c0_i32_0, %c0_i32_1, %c0_i32_2 : i32, i32, i32, i32
  }
  func.func @transform_1(%arg0: i32) -> (i32, i32, i32, i32) {
    %c0_i32 = arith.constant 0 : i32
    %c0_i32_0 = arith.constant 0 : i32
    %c0_i32_1 = arith.constant 0 : i32
    %c0_i32_2 = arith.constant 0 : i32
    %c0_i32_3 = arith.constant 0 : i32
    return %c0_i32, %c0_i32_0, %c0_i32_1, %c0_i32_2 : i32, i32, i32, i32
  }
  func.func @transform_2(%arg0: i32) -> (i32, i32) {
    %c0_i32 = arith.constant 0 : i32
    %c0_i32_0 = arith.constant 0 : i32
    %c0_i32_1 = arith.constant 0 : i32
    return %c0_i32, %c0_i32_0 : i32, i32
  }
  func.func @transform_3(%arg0: i32) -> (i32, i32) {
    %c0_i32 = arith.constant 0 : i32
    %c0_i32_0 = arith.constant 0 : i32
    %c0_i32_1 = arith.constant 0 : i32
    return %c0_i32, %c0_i32_0 : i32, i32
  }
  func.func @transform_4(%arg0: i32) -> (i32, i32, i32, i32) {
    %c0_i32 = arith.constant 0 : i32
    %c0_i32_0 = arith.constant 0 : i32
    %c0_i32_1 = arith.constant 0 : i32
    %c0_i32_2 = arith.constant 0 : i32
    %c0_i32_3 = arith.constant 0 : i32
    return %c0_i32, %c0_i32_0, %c0_i32_1, %c0_i32_2 : i32, i32, i32, i32
  }
  func.func @transform_5(%arg0: i32) -> (i32, i32) {
    %c0_i32 = arith.constant 0 : i32
    %c0_i32_0 = arith.constant 0 : i32
    %c0_i32_1 = arith.constant 0 : i32
    return %c0_i32, %c0_i32_0 : i32, i32
  }
  func.func @transform_6(%arg0: i32) -> (i32, i32) {
    %c0_i32 = arith.constant 0 : i32
    %c0_i32_0 = arith.constant 0 : i32
    %c0_i32_1 = arith.constant 0 : i32
    return %c0_i32, %c0_i32_0 : i32, i32
  }
  func.func @transform_7(%arg0: i32) -> (i32, i32, i32, i32) {
    %c0_i32 = arith.constant 0 : i32
    %c0_i32_0 = arith.constant 0 : i32
    %c0_i32_1 = arith.constant 0 : i32
    %c0_i32_2 = arith.constant 0 : i32
    %c0_i32_3 = arith.constant 0 : i32
    return %c0_i32, %c0_i32_0, %c0_i32_1, %c0_i32_2 : i32, i32, i32, i32
  }
}

</mosaic_0001>

<llo_original>
// kernel: tpu_custom_call.1
$region0: #{tpu_custom_call.1}
  #allocation0 [shape = 'u32[]', space=smem, size = 0x4, offset = 0x4, fixed_abs, tag = 'smem constant byte address 0x4 - core index']
  #allocation1 [shape = 'u32[72,128]{1,0:T(1,128)}', space=vmem, size = 0x9000, scoped, tag = 'internal scratch']
  #allocation2 [shape = 'f32[2,18,18,128]{3,2,1,0:T(8,128)}', space=vmem, size = 0x6c000, scoped, tag = 'scratch operand']
  #allocation3 [shape = 'f32[512,128]{1,0:T(8,128)}', space=vmem, size = 0x40000, scoped, tag = 'scratch operand']
  %s0 = inlined_call_operand.vmem [shape: f32[2,18,18,128], index: 0, kind: input, shape index: {}]
  %s1 = inlined_call_operand.vmem [shape: f32[3,3,128,128], index: 1, kind: input, shape index: {}]
  %s2 = inlined_call_operand.vmem [shape: f32[1,128], index: 2, kind: input, shape index: {}]
  %s3 = inlined_call_operand.vmem [shape: f32[1,128], index: 3, kind: input, shape index: {}]
  %s4 = inlined_call_operand.hbm [shape: f32[3,3,128,128], index: 4, kind: input, shape index: {}]
  %s5 = inlined_call_operand.vmem [shape: f32[1,128], index: 5, kind: input, shape index: {}]
  %s6 = inlined_call_operand.vmem [shape: f32[1,128], index: 6, kind: input, shape index: {}]
  %s7 = inlined_call_operand.hbm [shape: f32[2,16,16,128], index: 7, kind: output, shape index: {}]
  %s8 = sld [smem:[#allocation0]]
  $region42: #{tpu_custom_call.1} parent=0
    _
  %s10 = ssub.s32 1, %s8
  %s11 = scalar_select 0, %s10, %s8
  $region1: #{tpu_custom_call.1} parent=0
    #allocation4 [shape = 'u8[589824]{0}', space=vmem, size = 0x90000, scoped, tag = 'input window, operand 4, single buffered']
    #allocation5 [shape = 's32[1]{0}', space=sflag, size = 0x4, scoped, tag = 'scoped memory for tpu_custom_call.1']
    #allocation6 [shape = 's32[1]{0}', space=sflag, size = 0x4, scoped, tag = 'scoped memory for tpu_custom_call.1']
    #allocation7 [shape = 'u8[262144]{0}', space=vmem, size = 0x40000, scoped, tag = 'output window, operand 0, single buffered']
    %12 = vsyncpa [#allocation5], 0
    %13 = vsyncpa [#allocation6], 0
    // Predicated region
    $region2: #{tpu_custom_call.1} parent=1 // pred_check
      _
    $region3: #{tpu_custom_call.1} parent=1 // pred_check_branch
      %15 = sbr.rel (0) target = $region5
    $region4: #{tpu_custom_call.1} parent=1 // pred_region
      _
    $region5: #{tpu_custom_call.1} parent=1 // pred_fallthru
      _
    // Predicated region
    $region6: #{tpu_custom_call.1} parent=1 // pred_check
      _
    $region7: #{tpu_custom_call.1} parent=1 // pred_check_branch
      %17 = sbr.rel (0) target = $region9
    $region8: #{tpu_custom_call.1} parent=1 // pred_region
      _
    $region9: #{tpu_custom_call.1} parent=1 // pred_fallthru
      _
    // Predicated region
    $region10: #{tpu_custom_call.1} parent=1 // pred_check
      _
    $region11: #{tpu_custom_call.1} parent=1 // pred_check_branch
      %19 = sbr.rel (0) target = $region13
    $region12: #{tpu_custom_call.1} parent=1 // pred_region
      _
    $region13: #{tpu_custom_call.1} parent=1 // pred_fallthru
      _
    // Predicated region
    $region14: #{tpu_custom_call.1} parent=1 // pred_check
      _
    $region15: #{tpu_custom_call.1} parent=1 // pred_check_branch
      %21 = sbr.rel (0) target = $region17
    $region16: #{tpu_custom_call.1} parent=1 // pred_region
      _
    $region17: #{tpu_custom_call.1} parent=1 // pred_fallthru
      _
    // Predicated region
    $region18: #{tpu_custom_call.1} parent=1 // pred_check
      _
    $region19: #{tpu_custom_call.1} parent=1 // pred_check_branch
      %23 = sbr.rel (0) target = $region21
    $region20: #{tpu_custom_call.1} parent=1 // pred_region
      %25 = vsyncadd [#allocation5], 0
      %s26 = sshll.u32 %s4, 4
      %s27 = int_to_ptr.hbm [resolvable:$true] %s26
      %s28 = sshll.u32 [#allocation4], 4
      %s29 = int_to_ptr.vmem [resolvable:$true] %s28
      %34 = dma.hbm_to_vmem [thread:$0]  %s27, 18432, %s29, [#allocation5], 128, 128, 8
    $region21: #{tpu_custom_call.1} parent=1 // pred_fallthru
      _
    // Predicated region
    $region22: #{tpu_custom_call.1} parent=1 // pred_check
      _
    $region23: #{tpu_custom_call.1} parent=1 // pred_check_branch
      %36 = sbr.rel (0) target = $region25
    $region24: #{tpu_custom_call.1} parent=1 // pred_region
      _
    $region25: #{tpu_custom_call.1} parent=1 // pred_fallthru
      _
    // Predicated region
    $region26: #{tpu_custom_call.1} parent=1 // pred_check
      _
    $region27: #{tpu_custom_call.1} parent=1 // pred_check_branch
      %38 = sbr.rel (0) target = $region29
    $region28: #{tpu_custom_call.1} parent=1 // pred_region
      _
    $region29: #{tpu_custom_call.1} parent=1 // pred_fallthru
      _
    // Predicated region
    $region30: #{tpu_custom_call.1} parent=1 // pred_check
      _
    $region31: #{tpu_custom_call.1} parent=1 // pred_check_branch
      %40 = sbr.rel (0) target = $region33
    $region32: #{tpu_custom_call.1} parent=1 // pred_region
      %42 = dma.done [#allocation5], 18432
    $region33: #{tpu_custom_call.1} parent=1 // pred_fallthru
      _
    %v43 = vld [vmem:[%s0] sm:$0xff]
    %v44 = vld [vmem:[%s0 + $0x8] sm:$0xff]
    %v45 = vld [vmem:[%s0 + $0x18] sm:$0xff]
    %v46 = vld [vmem:[%s0 + $0x20] sm:$0xff]
    %v47 = vld [vmem:[%s0 + $0x30] sm:$0xff]
    %v48 = vld [vmem:[%s0 + $0x38] sm:$0xff]
    %v49 = vld [vmem:[%s0 + $0x48] sm:$0xff]
    %v50 = vld [vmem:[%s0 + $0x50] sm:$0xff]
    %v51 = vld [vmem:[%s0 + $0x60] sm:$0xff]
    %v52 = vld [vmem:[%s0 + $0x68] sm:$0xff]
    %v53 = vld [vmem:[%s0 + $0x78] sm:$0xff]
    %v54 = vld [vmem:[%s0 + $0x80] sm:$0xff]
    %v55 = vld [vmem:[%s0 + $0x90] sm:$0xff]
    %v56 = vld [vmem:[%s0 + $0x98] sm:$0xff]
    %v57 = vld [vmem:[%s0 + $0xa8] sm:$0xff]
    %v58 = vld [vmem:[%s0 + $0xb0] sm:$0xff]
    %v59 = vld [vmem:[%s0 + $0xc0] sm:$0xff]
    %v60 = vld [vmem:[%s0 + $0xc8] sm:$0xff]
    %v61 = vld [vmem:[%s0 + $0xd8] sm:$0xff]
    %v62 = vld [vmem:[%s0 + $0xe0] sm:$0xff]
    %v63 = vld [vmem:[%s0 + $0xf0] sm:$0xff]
    %v64 = vld [vmem:[%s0 + $0xf8] sm:$0xff]
    %v65 = vld [vmem:[%s0 + $0x108] sm:$0xff]
    %v66 = vld [vmem:[%s0 + $0x110] sm:$0xff]
    %v67 = vld [vmem:[%s0 + $0x120] sm:$0xff]
    %v68 = vld [vmem:[%s0 + $0x128] sm:$0xff]
    %v69 = vld [vmem:[%s0 + $0x138] sm:$0xff]
    %v70 = vld [vmem:[%s0 + $0x140] sm:$0xff]
    %v71 = vld [vmem:[%s0 + $0x150] sm:$0xff]
    %v72 = vld [vmem:[%s0 + $0x158] sm:$0xff]
    %v73 = vld [vmem:[%s0 + $0x168] sm:$0xff]
    %v74 = vld [vmem:[%s0 + $0x170] sm:$0xff]
    %v75 = vld [vmem:[%s0 + $0x1b0] sm:$0xff]
    %v76 = vld [vmem:[%s0 + $0x1b8] sm:$0xff]
    %v77 = vld [vmem:[%s0 + $0x1c8] sm:$0xff]
    %v78 = vld [vmem:[%s0 + $0x1d0] sm:$0xff]
    %v79 = vld [vmem:[%s0 + $0x1e0] sm:$0xff]
    %v80 = vld [vmem:[%s0 + $0x1e8] sm:$0xff]
    %v81 = vld [vmem:[%s0 + $0x1f8] sm:$0xff]
    %v82 = vld [vmem:[%s0 + $0x200] sm:$0xff]
    %v83 = vld [vmem:[%s0 + $0x210] sm:$0xff]
    %v84 = vld [vmem:[%s0 + $0x218] sm:$0xff]
    %v85 = vld [vmem:[%s0 + $0x228] sm:$0xff]
    %v86 = vld [vmem:[%s0 + $0x230] sm:$0xff]
    %v87 = vld [vmem:[%s0 + $0x240] sm:$0xff]
    %v88 = vld [vmem:[%s0 + $0x248] sm:$0xff]
    %v89 = vld [vmem:[%s0 + $0x258] sm:$0xff]
    %v90 = vld [vmem:[%s0 + $0x260] sm:$0xff]
    %v91 = vld [vmem:[%s0 + $0x270] sm:$0xff]
    %v92 = vld [vmem:[%s0 + $0x278] sm:$0xff]
    %v93 = vld [vmem:[%s0 + $0x288] sm:$0xff]
    %v94 = vld [vmem:[%s0 + $0x290] sm:$0xff]
    %v95 = vld [vmem:[%s0 + $0x2a0] sm:$0xff]
    %v96 = vld [vmem:[%s0 + $0x2a8] sm:$0xff]
    %v97 = vld [vmem:[%s0 + $0x2b8] sm:$0xff]
    %v98 = vld [vmem:[%s0 + $0x2c0] sm:$0xff]
    %v99 = vld [vmem:[%s0 + $0x2d0] sm:$0xff]
    %v100 = vld [vmem:[%s0 + $0x2d8] sm:$0xff]
    %v101 = vld [vmem:[%s0 + $0x2e8] sm:$0xff]
    %v102 = vld [vmem:[%s0 + $0x2f0] sm:$0xff]
    %v103 = vld [vmem:[%s0 + $0x300] sm:$0xff]
    %v104 = vld [vmem:[%s0 + $0x308] sm:$0xff]
    %v105 = vld [vmem:[%s0 + $0x318] sm:$0xff]
    %v106 = vld [vmem:[%s0 + $0x320] sm:$0xff]
    %v107 = vld [vmem:[%s1] sm:$0xff]
    %v108 = vld [vmem:[%s1 + $0x8] sm:$0xff]
    %v109 = vld [vmem:[%s1 + $0x10] sm:$0xff]
    %v110 = vld [vmem:[%s1 + $0x18] sm:$0xff]
    %v111 = vld [vmem:[%s1 + $0x20] sm:$0xff]
    %v112 = vld [vmem:[%s1 + $0x28] sm:$0xff]
    %v113 = vld [vmem:[%s1 + $0x30] sm:$0xff]
    %v114 = vld [vmem:[%s1 + $0x38] sm:$0xff]
    %v115 = vld [vmem:[%s1 + $0x40] sm:$0xff]
    %v116 = vld [vmem:[%s1 + $0x48] sm:$0xff]
    %v117 = vld [vmem:[%s1 + $0x50] sm:$0xff]
    %v118 = vld [vmem:[%s1 + $0x58] sm:$0xff]
    %v119 = vld [vmem:[%s1 + $0x60] sm:$0xff]
    %v120 = vld [vmem:[%s1 + $0x68] sm:$0xff]
    %v121 = vld [vmem:[%s1 + $0x70] sm:$0xff]
    %v122 = vld [vmem:[%s1 + $0x78] sm:$0xff]
    %123 = vmatpush.msra.mxu0 %v122
    %124 = vmatpush.msra.mxu0 %v121
    %125 = vmatpush.msra.mxu0 %v120
    %126 = vmatpush.msra.mxu0 %v119
    %127 = vmatpush.msra.mxu0 %v118
    %128 = vmatpush.msra.mxu0 %v117
    %129 = vmatpush.msra.mxu0 %v116
    %130 = vmatpush.msra.mxu0 %v115
    %131 = vmatpush.msra.mxu0 %v114
    %132 = vmatpush.msra.mxu0 %v113
    %133 = vmatpush.msra.mxu0 %v112
    %134 = vmatpush.msra.mxu0 %v111
    %135 = vmatpush.msra.mxu0 %v110
    %136 = vmatpush.msra.mxu0 %v109
    %137 = vmatpush.msra.mxu0 %v108
    %138 = vmatpush.msra.mxu0 %v107
    %139 = vmatmul.f32.gmra.mxu0 %v43
    %v140 = vpop.f32.mrf.mxu0
    %v141 = vadd.f32 0.0, %v140
    %142 = vmatmul.f32.gmra.mxu0 %v44
    %v143 = vpop.f32.mrf.mxu0
    %v144 = vadd.f32 0.0, %v143
    %145 = vmatmul.f32.gmra.mxu0 %v45
    %v146 = vpop.f32.mrf.mxu0
    %v147 = vadd.f32 0.0, %v146
    %148 = vmatmul.f32.gmra.mxu0 %v46
    %v149 = vpop.f32.mrf.mxu0
    %v150 = vadd.f32 0.0, %v149
    %151 = vmatmul.f32.gmra.mxu0 %v47
    %v152 = vpop.f32.mrf.mxu0
    %v153 = vadd.f32 0.0, %v152
    %154 = vmatmul.f32.gmra.mxu0 %v48
    %v155 = vpop.f32.mrf.mxu0
    %v156 = vadd.f32 0.0, %v155
    %157 = vmatmul.f32.gmra.mxu0 %v49
    %v158 = vpop.f32.mrf.mxu0
    %v159 = vadd.f32 0.0, %v158
    %160 = vmatmul.f32.gmra.mxu0 %v50
    %v161 = vpop.f32.mrf.mxu0
    %v162 = vadd.f32 0.0, %v161
    %163 = vmatmul.f32.gmra.mxu0 %v51
    %v164 = vpop.f32.mrf.mxu0
    %v165 = vadd.f32 0.0, %v164
    %166 = vmatmul.f32.gmra.mxu0 %v52
    %v167 = vpop.f32.mrf.mxu0
    %v168 = vadd.f32 0.0, %v167
    %169 = vmatmul.f32.gmra.mxu0 %v53
    %v170 = vpop.f32.mrf.mxu0
    %v171 = vadd.f32 0.0, %v170
    %172 = vmatmul.f32.gmra.mxu0 %v54
    %v173 = vpop.f32.mrf.mxu0
    %v174 = vadd.f32 0.0, %v173
    %175 = vmatmul.f32.gmra.mxu0 %v55
    %v176 = vpop.f32.mrf.mxu0
    %v177 = vadd.f32 0.0, %v176
    %178 = vmatmul.f32.gmra.mxu0 %v56
    %v179 = vpop.f32.mrf.mxu0
    %v180 = vadd.f32 0.0, %v179
    %181 = vmatmul.f32.gmra.mxu0 %v57
    %v182 = vpop.f32.mrf.mxu0
    %v183 = vadd.f32 0.0, %v182
    %184 = vmatmul.f32.gmra.mxu0 %v58
    %v185 = vpop.f32.mrf.mxu0
    %v186 = vadd.f32 0.0, %v185
    %187 = vmatmul.f32.gmra.mxu0 %v59
    %v188 = vpop.f32.mrf.mxu0
    %v189 = vadd.f32 0.0, %v188
    %190 = vmatmul.f32.gmra.mxu0 %v60
    %v191 = vpop.f32.mrf.mxu0
    %v192 = vadd.f32 0.0, %v191
    %193 = vmatmul.f32.gmra.mxu0 %v61
    %v194 = vpop.f32.mrf.mxu0
    %v195 = vadd.f32 0.0, %v194
    %196 = vmatmul.f32.gmra.mxu0 %v62
    %v197 = vpop.f32.mrf.mxu0
    %v198 = vadd.f32 0.0, %v197
    %199 = vmatmul.f32.gmra.mxu0 %v63
    %v200 = vpop.f32.mrf.mxu0
    %v201 = vadd.f32 0.0, %v200
    %202 = vmatmul.f32.gmra.mxu0 %v64
    %v203 = vpop.f32.mrf.mxu0
    %v204 = vadd.f32 0.0, %v203
    %205 = vmatmul.f32.gmra.mxu0 %v65
    %v206 = vpop.f32.mrf.mxu0
    %v207 = vadd.f32 0.0, %v206
    %208 = vmatmul.f32.gmra.mxu0 %v66
    %v209 = vpop.f32.mrf.mxu0
    %v210 = vadd.f32 0.0, %v209
    %211 = vmatmul.f32.gmra.mxu0 %v67
    %v212 = vpop.f32.mrf.mxu0
    %v213 = vadd.f32 0.0, %v212
    %214 = vmatmul.f32.gmra.mxu0 %v68
    %v215 = vpop.f32.mrf.mxu0
    %v216 = vadd.f32 0.0, %v215
    %217 = vmatmul.f32.gmra.mxu0 %v69
    %v218 = vpop.f32.mrf.mxu0
    %v219 = vadd.f32 0.0, %v218
    %220 = vmatmul.f32.gmra.mxu0 %v70
    %v221 = vpop.f32.mrf.mxu0
    %v222 = vadd.f32 0.0, %v221
    %223 = vmatmul.f32.gmra.mxu0 %v71
    %v224 = vpop.f32.mrf.mxu0
    %v225 = vadd.f32 0.0, %v224
    %226 = vmatmul.f32.gmra.mxu0 %v72
    %v227 = vpop.f32.mrf.mxu0
    %v228 = vadd.f32 0.0, %v227
    %229 = vmatmul.f32.gmra.mxu0 %v73
    %v230 = vpop.f32.mrf.mxu0
    %v231 = vadd.f32 0.0, %v230
    %232 = vmatmul.f32.gmra.mxu0 %v74
    %v233 = vpop.f32.mrf.mxu0
    %v234 = vadd.f32 0.0, %v233
    %235 = vmatmul.f32.gmra.mxu0 %v75
    %v236 = vpop.f32.mrf.mxu0
    %v237 = vadd.f32 0.0, %v236
    %238 = vmatmul.f32.gmra.mxu0 %v76
    %v239 = vpop.f32.mrf.mxu0
    %v240 = vadd.f32 0.0, %v239
    %241 = vmatmul.f32.gmra.mxu0 %v77
    %v242 = vpop.f32.mrf.mxu0
    %v243 = vadd.f32 0.0, %v242
    %244 = vmatmul.f32.gmra.mxu0 %v78
    %v245 = vpop.f32.mrf.mxu0
    %v246 = vadd.f32 0.0, %v245
    %247 = vmatmul.f32.gmra.mxu0 %v79
    %v248 = vpop.f32.mrf.mxu0
    %v249 = vadd.f32 0.0, %v248
    %250 = vmatmul.f32.gmra.mxu0 %v80
    %v251 = vpop.f32.mrf.mxu0
    %v252 = vadd.f32 0.0, %v251
    %253 = vmatmul.f32.gmra.mxu0 %v81
    %v254 = vpop.f32.mrf.mxu0
    %v255 = vadd.f32 0.0, %v254
    %256 = vmatmul.f32.gmra.mxu0 %v82
    %v257 = vpop.f32.mrf.mxu0
    %v258 = vadd.f32 0.0, %v257
    %259 = vmatmul.f32.gmra.mxu0 %v83
    %v260 = vpop.f32.mrf.mxu0
    %v261 = vadd.f32 0.0, %v260
    %262 = vmatmul.f32.gmra.mxu0 %v84
    %v263 = vpop.f32.mrf.mxu0
    %v264 = vadd.f32 0.0, %v263
    %265 = vmatmul.f32.gmra.mxu0 %v85
    %v266 = vpop.f32.mrf.mxu0
    %v267 = vadd.f32 0.0, %v266
    %268 = vmatmul.f32.gmra.mxu0 %v86
    %v269 = vpop.f32.mrf.mxu0
    %v270 = vadd.f32 0.0, %v269
    %271 = vmatmul.f32.gmra.mxu0 %v87
    %v272 = vpop.f32.mrf.mxu0
    %v273 = vadd.f32 0.0, %v272
    %274 = vmatmul.f32.gmra.mxu0 %v88
    %v275 = vpop.f32.mrf.mxu0
    %v276 = vadd.f32 0.0, %v275
    %277 = vmatmul.f32.gmra.mxu0 %v89
    %v278 = vpop.f32.mrf.mxu0
    %v279 = vadd.f32 0.0, %v278
    %280 = vmatmul.f32.gmra.mxu0 %v90
    %v281 = vpop.f32.mrf.mxu0
    %v282 = vadd.f32 0.0, %v281
    %283 = vmatmul.f32.gmra.mxu0 %v91
    %v284 = vpop.f32.mrf.mxu0
    %v285 = vadd.f32 0.0, %v284
    %286 = vmatmul.f32.gmra.mxu0 %v92
    %v287 = vpop.f32.mrf.mxu0
    %v288 = vadd.f32 0.0, %v287
    %289 = vmatmul.f32.gmra.mxu0 %v93
    %v290 = vpop.f32.mrf.mxu0
    %v291 = vadd.f32 0.0, %v290
    %292 = vmatmul.f32.gmra.mxu0 %v94
    %v293 = vpop.f32.mrf.mxu0
    %v294 = vadd.f32 0.0, %v293
    %295 = vmatmul.f32.gmra.mxu0 %v95
    %v296 = vpop.f32.mrf.mxu0
    %v297 = vadd.f32 0.0, %v296
    %298 = vmatmul.f32.gmra.mxu0 %v96
    %v299 = vpop.f32.mrf.mxu0
    %v300 = vadd.f32 0.0, %v299
    %301 = vmatmul.f32.gmra.mxu0 %v97
    %v302 = vpop.f32.mrf.mxu0
    %v303 = vadd.f32 0.0, %v302
    %304 = vmatmul.f32.gmra.mxu0 %v98
    %v305 = vpop.f32.mrf.mxu0
    %v306 = vadd.f32 0.0, %v305
    %307 = vmatmul.f32.gmra.mxu0 %v99
    %v308 = vpop.f32.mrf.mxu0
    %v309 = vadd.f32 0.0, %v308
    %310 = vmatmul.f32.gmra.mxu0 %v100
    %v311 = vpop.f32.mrf.mxu0
    %v312 = vadd.f32 0.0, %v311
    %313 = vmatmul.f32.gmra.mxu0 %v101
    %v314 = vpop.f32.mrf.mxu0
    %v315 = vadd.f32 0.0, %v314
    %316 = vmatmul.f32.gmra.mxu0 %v102
    %v317 = vpop.f32.mrf.mxu0
    %v318 = vadd.f32 0.0, %v317
    %319 = vmatmul.f32.gmra.mxu0 %v103
    %v320 = vpop.f32.mrf.mxu0
    %v321 = vadd.f32 0.0, %v320
    %322 = vmatmul.f32.gmra.mxu0 %v104
    %v323 = vpop.f32.mrf.mxu0
    %v324 = vadd.f32 0.0, %v323
    %325 = vmatmul.f32.gmra.mxu0 %v105
    %v326 = vpop.f32.mrf.mxu0
    %v327 = vadd.f32 0.0, %v326
    %328 = vmatmul.f32.gmra.mxu0 %v106
    %v329 = vpop.f32.mrf.mxu0
    %v330 = vadd.f32 0.0, %v329
    %331 = vdwg.mxu0
    %332 = vst [vmem:[#allocation3] sm:$0xff] %v141
    %333 = vst [vmem:[#allocation3 + $0x8] sm:$0xff] %v144
    %334 = vst [vmem:[#allocation3 + $0x10] sm:$0xff] %v147
    %335 = vst [vmem:[#allocation3 + $0x18] sm:$0xff] %v150
    %336 = vst [vmem:[#allocation3 + $0x20] sm:$0xff] %v153
    %337 = vst [vmem:[#allocation3 + $0x28] sm:$0xff] %v156
    %338 = vst [vmem:[#allocation3 + $0x30] sm:$0xff] %v159
    %339 = vst [vmem:[#allocation3 + $0x38] sm:$0xff] %v162
    %340 = vst [vmem:[#allocation3 + $0x40] sm:$0xff] %v165
    %341 = vst [vmem:[#allocation3 + $0x48] sm:$0xff] %v168
    %342 = vst [vmem:[#allocation3 + $0x50] sm:$0xff] %v171
    %343 = vst [vmem:[#allocation3 + $0x58] sm:$0xff] %v174
    %344 = vst [vmem:[#allocation3 + $0x60] sm:$0xff] %v177
    %345 = vst [vmem:[#allocation3 + $0x68] sm:$0xff] %v180
    %346 = vst [vmem:[#allocation3 + $0x70] sm:$0xff] %v183
    %347 = vst [vmem:[#allocation3 + $0x78] sm:$0xff] %v186
    %348 = vst [vmem:[#allocation3 + $0x80] sm:$0xff] %v189
    %349 = vst [vmem:[#allocation3 + $0x88] sm:$0xff] %v192
    %350 = vst [vmem:[#allocation3 + $0x90] sm:$0xff] %v195
    %351 = vst [vmem:[#allocation3 + $0x98] sm:$0xff] %v198
    %352 = vst [vmem:[#allocation3 + $0xa0] sm:$0xff] %v201
    %353 = vst [vmem:[#allocation3 + $0xa8] sm:$0xff] %v204
    %354 = vst [vmem:[#allocation3 + $0xb0] sm:$0xff] %v207
    %355 = vst [vmem:[#allocation3 + $0xb8] sm:$0xff] %v210
    %356 = vst [vmem:[#allocation3 + $0xc0] sm:$0xff] %v213
    %357 = vst [vmem:[#allocation3 + $0xc8] sm:$0xff] %v216
    %358 = vst [vmem:[#allocation3 + $0xd0] sm:$0xff] %v219
    %359 = vst [vmem:[#allocation3 + $0xd8] sm:$0xff] %v222
    %360 = vst [vmem:[#allocation3 + $0xe0] sm:$0xff] %v225
    %361 = vst [vmem:[#allocation3 + $0xe8] sm:$0xff] %v228
    %362 = vst [vmem:[#allocation3 + $0xf0] sm:$0xff] %v231
    %363 = vst [vmem:[#allocation3 + $0xf8] sm:$0xff] %v234
    %364 = vst [vmem:[#allocation3 + $0x100] sm:$0xff] %v237
    %365 = vst [vmem:[#allocation3 + $0x108] sm:$0xff] %v240
    %366 = vst [vmem:[#allocation3 + $0x110] sm:$0xff] %v243
    %367 = vst [vmem:[#allocation3 + $0x118] sm:$0xff] %v246
    %368 = vst [vmem:[#allocation3 + $0x120] sm:$0xff] %v249
    %369 = vst [vmem:[#allocation3 + $0x128] sm:$0xff] %v252
    %370 = vst [vmem:[#allocation3 + $0x130] sm:$0xff] %v255
    %371 = vst [vmem:[#allocation3 + $0x138] sm:$0xff] %v258
    %372 = vst [vmem:[#allocation3 + $0x140] sm:$0xff] %v261
    %373 = vst [vmem:[#allocation3 + $0x148] sm:$0xff] %v264
    %374 = vst [vmem:[#allocation3 + $0x150] sm:$0xff] %v267
    %375 = vst [vmem:[#allocation3 + $0x158] sm:$0xff] %v270
    %376 = vst [vmem:[#allocation3 + $0x160] sm:$0xff] %v273
    %377 = vst [vmem:[#allocation3 + $0x168] sm:$0xff] %v276
    %378 = vst [vmem:[#allocation3 + $0x170] sm:$0xff] %v279
    %379 = vst [vmem:[#allocation3 + $0x178] sm:$0xff] %v282
    %380 = vst [vmem:[#allocation3 + $0x180] sm:$0xff] %v285
    %381 = vst [vmem:[#allocation3 + $0x188] sm:$0xff] %v288
    %382 = vst [vmem:[#allocation3 + $0x190] sm:$0xff] %v291
    %383 = vst [vmem:[#allocation3 + $0x198] sm:$0xff] %v294
    %384 = vst [vmem:[#allocation3 + $0x1a0] sm:$0xff] %v297
    %385 = vst [vmem:[#allocation3 + $0x1a8] sm:$0xff] %v300
    %386 = vst [vmem:[#allocation3 + $0x1b0] sm:$0xff] %v303
    %387 = vst [vmem:[#allocation3 + $0x1b8] sm:$0xff] %v306
    %388 = vst [vmem:[#allocation3 + $0x1c0] sm:$0xff] %v309
    %389 = vst [vmem:[#allocation3 + $0x1c8] sm:$0xff] %v312
    %390 = vst [vmem:[#allocation3 + $0x1d0] sm:$0xff] %v315
    %391 = vst [vmem:[#allocation3 + $0x1d8] sm:$0xff] %v318
    %392 = vst [vmem:[#allocation3 + $0x1e0] sm:$0xff] %v321
    %393 = vst [vmem:[#allocation3 + $0x1e8] sm:$0xff] %v324
    %394 = vst [vmem:[#allocation3 + $0x1f0] sm:$0xff] %v327
    %395 = vst [vmem:[#allocation3 + $0x1f8] sm:$0xff] %v330
    %v396 = vld [vmem:[%s0 + $0x1] sm:$0xff]
    %v397 = vld [vmem:[%s0 + $0x9] sm:$0xff]
    %v398 = vld [vmem:[%s0 + $0x19] sm:$0xff]
    %v399 = vld [vmem:[%s0 + $0x21] sm:$0xff]
    %v400 = vld [vmem:[%s0 + $0x31] sm:$0xff]
    %v401 = vld [vmem:[%s0 + $0x39] sm:$0xff]
    %v402 = vld [vmem:[%s0 + $0x49] sm:$0xff]
    %v403 = vld [vmem:[%s0 + $0x51] sm:$0xff]
    %v404 = vld [vmem:[%s0 + $0x61] sm:$0xff]
    %v405 = vld [vmem:[%s0 + $0x69] sm:$0xff]
    %v406 = vld [vmem:[%s0 + $0x79] sm:$0xff]
    %v407 = vld [vmem:[%s0 + $0x81] sm:$0xff]
    %v408 = vld [vmem:[%s0 + $0x91] sm:$0xff]
    %v409 = vld [vmem:[%s0 + $0x99] sm:$0xff]
    %v410 = vld [vmem:[%s0 + $0xa9] sm:$0xff]
    %v411 = vld [vmem:[%s0 + $0xb1] sm:$0xff]
    %v412 = vld [vmem:[%s0 + $0xc1] sm:$0xff]
    %v413 = vld [vmem:[%s0 + $0xc9] sm:$0xff]
    %v414 = vld [vmem:[%s0 + $0xd9] sm:$0xff]
    %v415 = vld [vmem:[%s0 + $0xe1] sm:$0xff]
    %v416 = vld [vmem:[%s0 + $0xf1] sm:$0xff]
    %v417 = vld [vmem:[%s0 + $0xf9] sm:$0xff]
    %v418 = vld [vmem:[%s0 + $0x109] sm:$0xff]
    %v419 = vld [vmem:[%s0 + $0x111] sm:$0xff]
    %v420 = vld [vmem:[%s0 + $0x121] sm:$0xff]
    %v421 = vld [vmem:[%s0 + $0x129] sm:$0xff]
    %v422 = vld [vmem:[%s0 + $0x139] sm:$0xff]
    %v423 = vld [vmem:[%s0 + $0x141] sm:$0xff]
    %v424 = vld [vmem:[%s0 + $0x151] sm:$0xff]
    %v425 = vld [vmem:[%s0 + $0x159] sm:$0xff]
    %v426 = vld [vmem:[%s0 + $0x169] sm:$0xff]
    %v427 = vld [vmem:[%s0 + $0x171] sm:$0xff]
    %v428 = vld [vmem:[%s0 + $0x1b1] sm:$0xff]
    %v429 = vld [vmem:[%s0 + $0x1b9] sm:$0xff]
    %v430 = vld [vmem:[%s0 + $0x1c9] sm:$0xff]
    %v431 = vld [vmem:[%s0 + $0x1d1] sm:$0xff]
    %v432 = vld [vmem:[%s0 + $0x1e1] sm:$0xff]
    %v433 = vld [vmem:[%s0 + $0x1e9] sm:$0xff]
    %v434 = vld [vmem:[%s0 + $0x1f9] sm:$0xff]
    %v435 = vld [vmem:[%s0 + $0x201] sm:$0xff]
    %v436 = vld [vmem:[%s0 + $0x211] sm:$0xff]
    %v437 = vld [vmem:[%s0 + $0x219] sm:$0xff]
    %v438 = vld [vmem:[%s0 + $0x229] sm:$0xff]
    %v439 = vld [vmem:[%s0 + $0x231] sm:$0xff]
    %v440 = vld [vmem:[%s0 + $0x241] sm:$0xff]
    %v441 = vld [vmem:[%s0 + $0x249] sm:$0xff]
    %v442 = vld [vmem:[%s0 + $0x259] sm:$0xff]
    %v443 = vld [vmem:[%s0 + $0x261] sm:$0xff]
    %v444 = vld [vmem:[%s0 + $0x271] sm:$0xff]
    %v445 = vld [vmem:[%s0 + $0x279] sm:$0xff]
    %v446 = vld [vmem:[%s0 + $0x289] sm:$0xff]
    %v447 = vld [vmem:[%s0 + $0x291] sm:$0xff]
    %v448 = vld [vmem:[%s0 + $0x2a1] sm:$0xff]
    %v449 = vld [vmem:[%s0 + $0x2a9] sm:$0xff]
    %v450 = vld [vmem:[%s0 + $0x2b9] sm:$0xff]
    %v451 = vld [vmem:[%s0 + $0x2c1] sm:$0xff]
    %v452 = vld [vmem:[%s0 + $0x2d1] sm:$0xff]
    %v453 = vld [vmem:[%s0 + $0x2d9] sm:$0xff]
    %v454 = vld [vmem:[%s0 + $0x2e9] sm:$0xff]
    %v455 = vld [vmem:[%s0 + $0x2f1] sm:$0xff]
    %v456 = vld [vmem:[%s0 + $0x301] sm:$0xff]
    %v457 = vld [vmem:[%s0 + $0x309] sm:$0xff]
    %v458 = vld [vmem:[%s0 + $0x319] sm:$0xff]
    %v459 = vld [vmem:[%s0 + $0x321] sm:$0xff]
    %s460 = scalar_lea.vmem %s1, 128
    %v461 = vld [vmem:[%s460] sm:$0xff]
    %v462 = vld [vmem:[%s460 + $0x8] sm:$0xff]
    %v463 = vld [vmem:[%s460 + $0x10] sm:$0xff]
    %v464 = vld [vmem:[%s460 + $0x18] sm:$0xff]
    %v465 = vld [vmem:[%s460 + $0x20] sm:$0xff]
    %v466 = vld [vmem:[%s460 + $0x28] sm:$0xff]
    %v467 = vld [vmem:[%s460 + $0x30] sm:$0xff]
    %v468 = vld [vmem:[%s460 + $0x38] sm:$0xff]
    %v469 = vld [vmem:[%s460 + $0x40] sm:$0xff]
    %v470 = vld [vmem:[%s460 + $0x48] sm:$0xff]
    %v471 = vld [vmem:[%s460 + $0x50] sm:$0xff]
    %v472 = vld [vmem:[%s460 + $0x58] sm:$0xff]
    %v473 = vld [vmem:[%s460 + $0x60] sm:$0xff]
    %v474 = vld [vmem:[%s460 + $0x68] sm:$0xff]
    %v475 = vld [vmem:[%s460 + $0x70] sm:$0xff]
    %v476 = vld [vmem:[%s460 + $0x78] sm:$0xff]
    %477 = vmatpush.msra.mxu0 %v476
    %478 = vmatpush.msra.mxu0 %v475
    %479 = vmatpush.msra.mxu0 %v474
    %480 = vmatpush.msra.mxu0 %v473
    %481 = vmatpush.msra.mxu0 %v472
    %482 = vmatpush.msra.mxu0 %v471
    %483 = vmatpush.msra.mxu0 %v470
    %484 = vmatpush.msra.mxu0 %v469
    %485 = vmatpush.msra.mxu0 %v468
    %486 = vmatpush.msra.mxu0 %v467
    %487 = vmatpush.msra.mxu0 %v466
    %488 = vmatpush.msra.mxu0 %v465
    %489 = vmatpush.msra.mxu0 %v464
    %490 = vmatpush.msra.mxu0 %v463
    %491 = vmatpush.msra.mxu0 %v462
    %492 = vmatpush.msra.mxu0 %v461
    %493 = vmatmul.f32.gmra.mxu0 %v396
    %v494 = vpop.f32.mrf.mxu0
    %v495 = vadd.f32 0.0, %v494
    %496 = vmatmul.f32.gmra.mxu0 %v397
    %v497 = vpop.f32.mrf.mxu0
    %v498 = vadd.f32 0.0, %v497
    %499 = vmatmul.f32.gmra.mxu0 %v398
    %v500 = vpop.f32.mrf.mxu0
    %v501 = vadd.f32 0.0, %v500
    %502 = vmatmul.f32.gmra.mxu0 %v399
    %v503 = vpop.f32.mrf.mxu0
    %v504 = vadd.f32 0.0, %v503
    %505 = vmatmul.f32.gmra.mxu0 %v400
    %v506 = vpop.f32.mrf.mxu0
    %v507 = vadd.f32 0.0, %v506
    %508 = vmatmul.f32.gmra.mxu0 %v401
    %v509 = vpop.f32.mrf.mxu0
    %v510 = vadd.f32 0.0, %v509
    %511 = vmatmul.f32.gmra.mxu0 %v402
    %v512 = vpop.f32.mrf.mxu0
    %v513 = vadd.f32 0.0, %v512
    %514 = vmatmul.f32.gmra.mxu0 %v403
    %v515 = vpop.f32.mrf.mxu0
    %v516 = vadd.f32 0.0, %v515
    %517 = vmatmul.f32.gmra.mxu0 %v404
    %v518 = vpop.f32.mrf.mxu0
    %v519 = vadd.f32 0.0, %v518
    %520 = vmatmul.f32.gmra.mxu0 %v405
    %v521 = vpop.f32.mrf.mxu0
    %v522 = vadd.f32 0.0, %v521
    %523 = vmatmul.f32.gmra.mxu0 %v406
    %v524 = vpop.f32.mrf.mxu0
    %v525 = vadd.f32 0.0, %v524
    %526 = vmatmul.f32.gmra.mxu0 %v407
    %v527 = vpop.f32.mrf.mxu0
    %v528 = vadd.f32 0.0, %v527
    %529 = vmatmul.f32.gmra.mxu0 %v408
    %v530 = vpop.f32.mrf.mxu0
    %v531 = vadd.f32 0.0, %v530
    %532 = vmatmul.f32.gmra.mxu0 %v409
    %v533 = vpop.f32.mrf.mxu0
    %v534 = vadd.f32 0.0, %v533
    %535 = vmatmul.f32.gmra.mxu0 %v410
    %v536 = vpop.f32.mrf.mxu0
    %v537 = vadd.f32 0.0, %v536
    %538 = vmatmul.f32.gmra.mxu0 %v411
    %v539 = vpop.f32.mrf.mxu0
    %v540 = vadd.f32 0.0, %v539
    %541 = vmatmul.f32.gmra.mxu0 %v412
    %v542 = vpop.f32.mrf.mxu0
    %v543 = vadd.f32 0.0, %v542
    %544 = vmatmul.f32.gmra.mxu0 %v413
    %v545 = vpop.f32.mrf.mxu0
    %v546 = vadd.f32 0.0, %v545
    %547 = vmatmul.f32.gmra.mxu0 %v414
    %v548 = vpop.f32.mrf.mxu0
    %v549 = vadd.f32 0.0, %v548
    %550 = vmatmul.f32.gmra.mxu0 %v415
    %v551 = vpop.f32.mrf.mxu0
    %v552 = vadd.f32 0.0, %v551
    %553 = vmatmul.f32.gmra.mxu0 %v416
    %v554 = vpop.f32.mrf.mxu0
    %v555 = vadd.f32 0.0, %v554
    %556 = vmatmul.f32.gmra.mxu0 %v417
    %v557 = vpop.f32.mrf.mxu0
    %v558 = vadd.f32 0.0, %v557
    %559 = vmatmul.f32.gmra.mxu0 %v418
    %v560 = vpop.f32.mrf.mxu0
    %v561 = vadd.f32 0.0, %v560
    %562 = vmatmul.f32.gmra.mxu0 %v419
    %v563 = vpop.f32.mrf.mxu0
    %v564 = vadd.f32 0.0, %v563
    %565 = vmatmul.f32.gmra.mxu0 %v420
    %v566 = vpop.f32.mrf.mxu0
    %v567 = vadd.f32 0.0, %v566
    %568 = vmatmul.f32.gmra.mxu0 %v421
    %v569 = vpop.f32.mrf.mxu0
    %v570 = vadd.f32 0.0, %v569
    %571 = vmatmul.f32.gmra.mxu0 %v422
    %v572 = vpop.f32.mrf.mxu0
    %v573 = vadd.f32 0.0, %v572
    %574 = vmatmul.f32.gmra.mxu0 %v423
    %v575 = vpop.f32.mrf.mxu0
    %v576 = vadd.f32 0.0, %v575
    %577 = vmatmul.f32.gmra.mxu0 %v424
    %v578 = vpop.f32.mrf.mxu0
    %v579 = vadd.f32 0.0, %v578
    %580 = vmatmul.f32.gmra.mxu0 %v425
    %v581 = vpop.f32.mrf.mxu0
    %v582 = vadd.f32 0.0, %v581
    %583 = vmatmul.f32.gmra.mxu0 %v426
    %v584 = vpop.f32.mrf.mxu0
    %v585 = vadd.f32 0.0, %v584
    %586 = vmatmul.f32.gmra.mxu0 %v427
    %v587 = vpop.f32.mrf.mxu0
    %v588 = vadd.f32 0.0, %v587
    %589 = vmatmul.f32.gmra.mxu0 %v428
    %v590 = vpop.f32.mrf.mxu0
    %v591 = vadd.f32 0.0, %v590
    %592 = vmatmul.f32.gmra.mxu0 %v429
    %v593 = vpop.f32.mrf.mxu0
    %v594 = vadd.f32 0.0, %v593
    %595 = vmatmul.f32.gmra.mxu0 %v430
    %v596 = vpop.f32.mrf.mxu0
    %v597 = vadd.f32 0.0, %v596
    %598 = vmatmul.f32.gmra.mxu0 %v431
    %v599 = vpop.f32.mrf.mxu0
    %v600 = vadd.f32 0.0, %v599
    %601 = vmatmul.f32.gmra.mxu0 %v432
    %v602 = vpop.f32.mrf.mxu0
    %v603 = vadd.f32 0.0, %v602
    %604 = vmatmul.f32.gmra.mxu0 %v433
    %v605 = vpop.f32.mrf.mxu0
    %v606 = vadd.f32 0.0, %v605
    %607 = vmatmul.f32.gmra.mxu0 %v434
    %v608 = vpop.f32.mrf.mxu0
    %v609 = vadd.f32 0.0, %v608
    %610 = vmatmul.f32.gmra.mxu0 %v435
    %v611 = vpop.f32.mrf.mxu0
    %v612 = vadd.f32 0.0, %v611
    %613 = vmatmul.f32.gmra.mxu0 %v436
    %v614 = vpop.f32.mrf.mxu0
    %v615 = vadd.f32 0.0, %v614
    %616 = vmatmul.f32.gmra.mxu0 %v437
    %v617 = vpop.f32.mrf.mxu0
    %v618 = vadd.f32 0.0, %v617
    %619 = vmatmul.f32.gmra.mxu0 %v438
    %v620 = vpop.f32.mrf.mxu0
    %v621 = vadd.f32 0.0, %v620
    %622 = vmatmul.f32.gmra.mxu0 %v439
    %v623 = vpop.f32.mrf.mxu0
    %v624 = vadd.f32 0.0, %v623
    %625 = vmatmul.f32.gmra.mxu0 %v440
    %v626 = vpop.f32.mrf.mxu0
    %v627 = vadd.f32 0.0, %v626
    %628 = vmatmul.f32.gmra.mxu0 %v441
    %v629 = vpop.f32.mrf.mxu0
    %v630 = vadd.f32 0.0, %v629
    %631 = vmatmul.f32.gmra.mxu0 %v442
    %v632 = vpop.f32.mrf.mxu0
    %v633 = vadd.f32 0.0, %v632
    %634 = vmatmul.f32.gmra.mxu0 %v443
    %v635 = vpop.f32.mrf.mxu0
    %v636 = vadd.f32 0.0, %v635
    %637 = vmatmul.f32.gmra.mxu0 %v444
    %v638 = vpop.f32.mrf.mxu0
    %v639 = vadd.f32 0.0, %v638
    %640 = vmatmul.f32.gmra.mxu0 %v445
    %v641 = vpop.f32.mrf.mxu0
    %v642 = vadd.f32 0.0, %v641
    %643 = vmatmul.f32.gmra.mxu0 %v446
    %v644 = vpop.f32.mrf.mxu0
    %v645 = vadd.f32 0.0, %v644
    %646 = vmatmul.f32.gmra.mxu0 %v447
    %v647 = vpop.f32.mrf.mxu0
    %v648 = vadd.f32 0.0, %v647
    %649 = vmatmul.f32.gmra.mxu0 %v448
    %v650 = vpop.f32.mrf.mxu0
    %v651 = vadd.f32 0.0, %v650
    %652 = vmatmul.f32.gmra.mxu0 %v449
    %v653 = vpop.f32.mrf.mxu0
    %v654 = vadd.f32 0.0, %v653
    %655 = vmatmul.f32.gmra.mxu0 %v450
    %v656 = vpop.f32.mrf.mxu0
    %v657 = vadd.f32 0.0, %v656
    %658 = vmatmul.f32.gmra.mxu0 %v451
    %v659 = vpop.f32.mrf.mxu0
    %v660 = vadd.f32 0.0, %v659
    %661 = vmatmul.f32.gmra.mxu0 %v452
    %v662 = vpop.f32.mrf.mxu0
    %v663 = vadd.f32 0.0, %v662
    %664 = vmatmul.f32.gmra.mxu0 %v453
    %v665 = vpop.f32.mrf.mxu0
    %v666 = vadd.f32 0.0, %v665
    %667 = vmatmul.f32.gmra.mxu0 %v454
    %v668 = vpop.f32.mrf.mxu0
    %v669 = vadd.f32 0.0, %v668
    %670 = vmatmul.f32.gmra.mxu0 %v455
    %v671 = vpop.f32.mrf.mxu0
    %v672 = vadd.f32 0.0, %v671
    %673 = vmatmul.f32.gmra.mxu0 %v456
    %v674 = vpop.f32.mrf.mxu0
    %v675 = vadd.f32 0.0, %v674
    %676 = vmatmul.f32.gmra.mxu0 %v457
    %v677 = vpop.f32.mrf.mxu0
    %v678 = vadd.f32 0.0, %v677
    %679 = vmatmul.f32.gmra.mxu0 %v458
    %v680 = vpop.f32.mrf.mxu0
    %v681 = vadd.f32 0.0, %v680
    %682 = vmatmul.f32.gmra.mxu0 %v459
    %v683 = vpop.f32.mrf.mxu0
    %v684 = vadd.f32 0.0, %v683
    %685 = vdwg.mxu0
    %v686 = vld [vmem:[#allocation3] sm:$0xff]
    %v687 = vld [vmem:[#allocation3 + $0x8] sm:$0xff]
    %v688 = vld [vmem:[#allocation3 + $0x10] sm:$0xff]
    %v689 = vld [vmem:[#allocation3 + $0x18] sm:$0xff]
    %v690 = vld [vmem:[#allocation3 + $0x20] sm:$0xff]
    %v691 = vld [vmem:[#allocation3 + $0x28] sm:$0xff]
    %v692 = vld [vmem:[#allocation3 + $0x30] sm:$0xff]
    %v693 = vld [vmem:[#allocation3 + $0x38] sm:$0xff]
    %v694 = vld [vmem:[#allocation3 + $0x40] sm:$0xff]
    %v695 = vld [vmem:[#allocation3 + $0x48] sm:$0xff]
    %v696 = vld [vmem:[#allocation3 + $0x50] sm:$0xff]
    %v697 = vld [vmem:[#allocation3 + $0x58] sm:$0xff]
    %v698 = vld [vmem:[#allocation3 + $0x60] sm:$0xff]
    %v699 = vld [vmem:[#allocation3 + $0x68] sm:$0xff]
    %v700 = vld [vmem:[#allocation3 + $0x70] sm:$0xff]
    %v701 = vld [vmem:[#allocation3 + $0x78] sm:$0xff]
    %v702 = vld [vmem:[#allocation3 + $0x80] sm:$0xff]
    %v703 = vld [vmem:[#allocation3 + $0x88] sm:$0xff]
    %v704 = vld [vmem:[#allocation3 + $0x90] sm:$0xff]
    %v705 = vld [vmem:[#allocation3 + $0x98] sm:$0xff]
    %v706 = vld [vmem:[#allocation3 + $0xa0] sm:$0xff]
    %v707 = vld [vmem:[#allocation3 + $0xa8] sm:$0xff]
    %v708 = vld [vmem:[#allocation3 + $0xb0] sm:$0xff]
    %v709 = vld [vmem:[#allocation3 + $0xb8] sm:$0xff]
    %v710 = vld [vmem:[#allocation3 + $0xc0] sm:$0xff]
    %v711 = vld [vmem:[#allocation3 + $0xc8] sm:$0xff]
    %v712 = vld [vmem:[#allocation3 + $0xd0] sm:$0xff]
    %v713 = vld [vmem:[#allocation3 + $0xd8] sm:$0xff]
    %v714 = vld [vmem:[#allocation3 + $0xe0] sm:$0xff]
    %v715 = vld [vmem:[#allocation3 + $0xe8] sm:$0xff]
    %v716 = vld [vmem:[#allocation3 + $0xf0] sm:$0xff]
    %v717 = vld [vmem:[#allocation3 + $0xf8] sm:$0xff]
    %v718 = vld [vmem:[#allocation3 + $0x100] sm:$0xff]
    %v719 = vld [vmem:[#allocation3 + $0x108] sm:$0xff]
    %v720 = vld [vmem:[#allocation3 + $0x110] sm:$0xff]
    %v721 = vld [vmem:[#allocation3 + $0x118] sm:$0xff]
    %v722 = vld [vmem:[#allocation3 + $0x120] sm:$0xff]
    %v723 = vld [vmem:[#allocation3 + $0x128] sm:$0xff]
    %v724 = vld [vmem:[#allocation3 + $0x130] sm:$0xff]
    %v725 = vld [vmem:[#allocation3 + $0x138] sm:$0xff]
    %v726 = vld [vmem:[#allocation3 + $0x140] sm:$0xff]
    %v727 = vld [vmem:[#allocation3 + $0x148] sm:$0xff]
    %v728 = vld [vmem:[#allocation3 + $0x150] sm:$0xff]
    %v729 = vld [vmem:[#allocation3 + $0x158] sm:$0xff]
    %v730 = vld [vmem:[#allocation3 + $0x160] sm:$0xff]
    %v731 = vld [vmem:[#allocation3 + $0x168] sm:$0xff]
    %v732 = vld [vmem:[#allocation3 + $0x170] sm:$0xff]
    %v733 = vld [vmem:[#allocation3 + $0x178] sm:$0xff]
    %v734 = vld [vmem:[#allocation3 + $0x180] sm:$0xff]
    %v735 = vld [vmem:[#allocation3 + $0x188] sm:$0xff]
    %v736 = vld [vmem:[#allocation3 + $0x190] sm:$0xff]
    %v737 = vld [vmem:[#allocation3 + $0x198] sm:$0xff]
    %v738 = vld [vmem:[#allocation3 + $0x1a0] sm:$0xff]
    %v739 = vld [vmem:[#allocation3 + $0x1a8] sm:$0xff]
    %v740 = vld [vmem:[#allocation3 + $0x1b0] sm:$0xff]
    %v741 = vld [vmem:[#allocation3 + $0x1b8] sm:$0xff]
    %v742 = vld [vmem:[#allocation3 + $0x1c0] sm:$0xff]
    %v743 = vld [vmem:[#allocation3 + $0x1c8] sm:$0xff]
    %v744 = vld [vmem:[#allocation3 + $0x1d0] sm:$0xff]
    %v745 = vld [vmem:[#allocation3 + $0x1d8] sm:$0xff]
    %v746 = vld [vmem:[#allocation3 + $0x1e0] sm:$0xff]
    %v747 = vld [vmem:[#allocation3 + $0x1e8] sm:$0xff]
    %v748 = vld [vmem:[#allocation3 + $0x1f0] sm:$0xff]
    %v749 = vld [vmem:[#allocation3 + $0x1f8] sm:$0xff]
    %v750 = vadd.f32 %v686, %v495
    %v751 = vadd.f32 %v687, %v498
    %v752 = vadd.f32 %v688, %v501
    %v753 = vadd.f32 %v689, %v504
    %v754 = vadd.f32 %v690, %v507
    %v755 = vadd.f32 %v691, %v510
    %v756 = vadd.f32 %v692, %v513
    %v757 = vadd.f32 %v693, %v516
    %v758 = vadd.f32 %v694, %v519
    %v759 = vadd.f32 %v695, %v522
    %v760 = vadd.f32 %v696, %v525
    %v761 = vadd.f32 %v697, %v528
    %v762 = vadd.f32 %v698, %v531
    %v763 = vadd.f32 %v699, %v534
    %v764 = vadd.f32 %v700, %v537
    %v765 = vadd.f32 %v701, %v540
    %v766 = vadd.f32 %v702, %v543
    %v767 = vadd.f32 %v703, %v546
    %v768 = vadd.f32 %v704, %v549
    %v769 = vadd.f32 %v705, %v552
    %v770 = vadd.f32 %v706, %v555
    %v771 = vadd.f32 %v707, %v558
    %v772 = vadd.f32 %v708, %v561
    %v773 = vadd.f32 %v709, %v564
    %v774 = vadd.f32 %v710, %v567
    %v775 = vadd.f32 %v711, %v570
    %v776 = vadd.f32 %v712, %v573
    %v777 = vadd.f32 %v713, %v576
    %v778 = vadd.f32 %v714, %v579
    %v779 = vadd.f32 %v715, %v582
    %v780 = vadd.f32 %v716, %v585
    %v781 = vadd.f32 %v717, %v588
    %v782 = vadd.f32 %v718, %v591
    %v783 = vadd.f32 %v719, %v594
    %v784 = vadd.f32 %v720, %v597
    %v785 = vadd.f32 %v721, %v600
    %v786 = vadd.f32 %v722, %v603
    %v787 = vadd.f32 %v723, %v606
    %v788 = vadd.f32 %v724, %v609
    %v789 = vadd.f32 %v725, %v612
    %v790 = vadd.f32 %v726, %v615
    %v791 = vadd.f32 %v727, %v618
    %v792 = vadd.f32 %v728, %v621
    %v793 = vadd.f32 %v729, %v624
    %v794 = vadd.f32 %v730, %v627
    %v795 = vadd.f32 %v731, %v630
    %v796 = vadd.f32 %v732, %v633
    %v797 = vadd.f32 %v733, %v636
    %v798 = vadd.f32 %v734, %v639
    %v799 = vadd.f32 %v735, %v642
    %v800 = vadd.f32 %v736, %v645
    %v801 = vadd.f32 %v737, %v648
    %v802 = vadd.f32 %v738, %v651
    %v803 = vadd.f32 %v739, %v654
    %v804 = vadd.f32 %v740, %v657
    %v805 = vadd.f32 %v741, %v660
    %v806 = vadd.f32 %v742, %v663
    %v807 = vadd.f32 %v743, %v666
    %v808 = vadd.f32 %v744, %v669
    %v809 = vadd.f32 %v745, %v672
    %v810 = vadd.f32 %v746, %v675
    %v811 = vadd.f32 %v747, %v678
    %v812 = vadd.f32 %v748, %v681
    %v813 = vadd.f32 %v749, %v684
    %814 = vst [vmem:[#allocation3] sm:$0xff] %v750
    %815 = vst [vmem:[#allocation3 + $0x8] sm:$0xff] %v751
    %816 = vst [vmem:[#allocation3 + $0x10] sm:$0xff] %v752
    %817 = vst [vmem:[#allocation3 + $0x18] sm:$0xff] %v753
    %818 = vst [vmem:[#allocation3 + $0x20] sm:$0xff] %v754
    %819 = vst [vmem:[#allocation3 + $0x28] sm:$0xff] %v755
    %820 = vst [vmem:[#allocation3 + $0x30] sm:$0xff] %v756
    %821 = vst [vmem:[#allocation3 + $0x38] sm:$0xff] %v757
    %822 = vst [vmem:[#allocation3 + $0x40] sm:$0xff] %v758
    %823 = vst [vmem:[#allocation3 + $0x48] sm:$0xff] %v759
    %824 = vst [vmem:[#allocation3 + $0x50] sm:$0xff] %v760
    %825 = vst [vmem:[#allocation3 + $0x58] sm:$0xff] %v761
    %826 = vst [vmem:[#allocation3 + $0x60] sm:$0xff] %v762
    %827 = vst [vmem:[#allocation3 + $0x68] sm:$0xff] %v763
    %828 = vst [vmem:[#allocation3 + $0x70] sm:$0xff] %v764
    %829 = vst [vmem:[#allocation3 + $0x78] sm:$0xff] %v765
    %830 = vst [vmem:[#allocation3 + $0x80] sm:$0xff] %v766
    %831 = vst [vmem:[#allocation3 + $0x88] sm:$0xff] %v767
    %832 = vst [vmem:[#allocation3 + $0x90] sm:$0xff] %v768
    %833 = vst [vmem:[#allocation3 + $0x98] sm:$0xff] %v769
    %834 = vst [vmem:[#allocation3 + $0xa0] sm:$0xff] %v770
    %835 = vst [vmem:[#allocation3 + $0xa8] sm:$0xff] %v771
    %836 = vst [vmem:[#allocation3 + $0xb0] sm:$0xff] %v772
    %837 = vst [vmem:[#allocation3 + $0xb8] sm:$0xff] %v773
    %838 = vst [vmem:[#allocation3 + $0xc0] sm:$0xff] %v774
    %839 = vst [vmem:[#allocation3 + $0xc8] sm:$0xff] %v775
    %840 = vst [vmem:[#allocation3 + $0xd0] sm:$0xff] %v776
    %841 = vst [vmem:[#allocation3 + $0xd8] sm:$0xff] %v777
    %842 = vst [vmem:[#allocation3 + $0xe0] sm:$0xff] %v778
    %843 = vst [vmem:[#allocation3 + $0xe8] sm:$0xff] %v779
    %844 = vst [vmem:[#allocation3 + $0xf0] sm:$0xff] %v780
    %845 = vst [vmem:[#allocation3 + $0xf8] sm:$0xff] %v781
    %846 = vst [vmem:[#allocation3 + $0x100] sm:$0xff] %v782
    %847 = vst [vmem:[#allocation3 + $0x108] sm:$0xff] %v783
    %848 = vst [vmem:[#allocation3 + $0x110] sm:$0xff] %v784
    %849 = vst [vmem:[#allocation3 + $0x118] sm:$0xff] %v785
    %850 = vst [vmem:[#allocation3 + $0x120] sm:$0xff] %v786
    %851 = vst [vmem:[#allocation3 + $0x128] sm:$0xff] %v787
    %852 = vst [vmem:[#allocation3 + $0x130] sm:$0xff] %v788
    %853 = vst [vmem:[#allocation3 + $0x138] sm:$0xff] %v789
    %854 = vst [vmem:[#allocation3 + $0x140] sm:$0xff] %v790
    %855 = vst [vmem:[#allocation3 + $0x148] sm:$0xff] %v791
    %856 = vst [vmem:[#allocation3 + $0x150] sm:$0xff] %v792
    %857 = vst [vmem:[#allocation3 + $0x158] sm:$0xff] %v793
    %858 = vst [vmem:[#allocation3 + $0x160] sm:$0xff] %v794
    %859 = vst [vmem:[#allocation3 + $0x168] sm:$0xff] %v795
    %860 = vst [vmem:[#allocation3 + $0x170] sm:$0xff] %v796
    %861 = vst [vmem:[#allocation3 + $0x178] sm:$0xff] %v797
    %862 = vst [vmem:[#allocation3 + $0x180] sm:$0xff] %v798
    %863 = vst [vmem:[#allocation3 + $0x188] sm:$0xff] %v799
    %864 = vst [vmem:[#allocation3 + $0x190] sm:$0xff] %v800
    %865 = vst [vmem:[#allocation3 + $0x198] sm:$0xff] %v801
    %866 = vst [vmem:[#allocation3 + $0x1a0] sm:$0xff] %v802
    %867 = vst [vmem:[#allocation3 + $0x1a8] sm:$0xff] %v803
    %868 = vst [vmem:[#allocation3 + $0x1b0] sm:$0xff] %v804
    %869 = vst [vmem:[#allocation3 + $0x1b8] sm:$0xff] %v805
    %870 = vst [vmem:[#allocation3 + $0x1c0] sm:$0xff] %v806
    %871 = vst [vmem:[#allocation3 + $0x1c8] sm:$0xff] %v807
    %872 = vst [vmem:[#allocation3 + $0x1d0] sm:$0xff] %v808
    %873 = vst [vmem:[#allocation3 + $0x1d8] sm:$0xff] %v809
    %874 = vst [vmem:[#allocation3 + $0x1e0] sm:$0xff] %v810
    %875 = vst [vmem:[#allocation3 + $0x1e8] sm:$0xff] %v811
    %876 = vst [vmem:[#allocation3 + $0x1f0] sm:$0xff] %v812
    %877 = vst [vmem:[#allocation3 + $0x1f8] sm:$0xff] %v813
    %v878 = vld [vmem:[%s0 + $0x2] sm:$0xff]
    %v879 = vld [vmem:[%s0 + $0xa] sm:$0xff]
    %v880 = vld [vmem:[%s0 + $0x1a] sm:$0xff]
    %v881 = vld [vmem:[%s0 + $0x22] sm:$0xff]
    %v882 = vld [vmem:[%s0 + $0x32] sm:$0xff]
    %v883 = vld [vmem:[%s0 + $0x3a] sm:$0xff]
    %v884 = vld [vmem:[%s0 + $0x4a] sm:$0xff]
    %v885 = vld [vmem:[%s0 + $0x52] sm:$0xff]
    %v886 = vld [vmem:[%s0 + $0x62] sm:$0xff]
    %v887 = vld [vmem:[%s0 + $0x6a] sm:$0xff]
    %v888 = vld [vmem:[%s0 + $0x7a] sm:$0xff]
    %v889 = vld [vmem:[%s0 + $0x82] sm:$0xff]
    %v890 = vld [vmem:[%s0 + $0x92] sm:$0xff]
    %v891 = vld [vmem:[%s0 + $0x9a] sm:$0xff]
    %v892 = vld [vmem:[%s0 + $0xaa] sm:$0xff]
    %v893 = vld [vmem:[%s0 + $0xb2] sm:$0xff]
    %v894 = vld [vmem:[%s0 + $0xc2] sm:$0xff]
    %v895 = vld [vmem:[%s0 + $0xca] sm:$0xff]
    %v896 = vld [vmem:[%s0 + $0xda] sm:$0xff]
    %v897 = vld [vmem:[%s0 + $0xe2] sm:$0xff]
    %v898 = vld [vmem:[%s0 + $0xf2] sm:$0xff]
    %v899 = vld [vmem:[%s0 + $0xfa] sm:$0xff]
    %v900 = vld [vmem:[%s0 + $0x10a] sm:$0xff]
    %v901 = vld [vmem:[%s0 + $0x112] sm:$0xff]
    %v902 = vld [vmem:[%s0 + $0x122] sm:$0xff]
    %v903 = vld [vmem:[%s0 + $0x12a] sm:$0xff]
    %v904 = vld [vmem:[%s0 + $0x13a] sm:$0xff]
    %v905 = vld [vmem:[%s0 + $0x142] sm:$0xff]
    %v906 = vld [vmem:[%s0 + $0x152] sm:$0xff]
    %v907 = vld [vmem:[%s0 + $0x15a] sm:$0xff]
    %v908 = vld [vmem:[%s0 + $0x16a] sm:$0xff]
    %v909 = vld [vmem:[%s0 + $0x172] sm:$0xff]
    %v910 = vld [vmem:[%s0 + $0x1b2] sm:$0xff]
    %v911 = vld [vmem:[%s0 + $0x1ba] sm:$0xff]
    %v912 = vld [vmem:[%s0 + $0x1ca] sm:$0xff]
    %v913 = vld [vmem:[%s0 + $0x1d2] sm:$0xff]
    %v914 = vld [vmem:[%s0 + $0x1e2] sm:$0xff]
    %v915 = vld [vmem:[%s0 + $0x1ea] sm:$0xff]
    %v916 = vld [vmem:[%s0 + $0x1fa] sm:$0xff]
    %v917 = vld [vmem:[%s0 + $0x202] sm:$0xff]
    %v918 = vld [vmem:[%s0 + $0x212] sm:$0xff]
    %v919 = vld [vmem:[%s0 + $0x21a] sm:$0xff]
    %v920 = vld [vmem:[%s0 + $0x22a] sm:$0xff]
    %v921 = vld [vmem:[%s0 + $0x232] sm:$0xff]
    %v922 = vld [vmem:[%s0 + $0x242] sm:$0xff]
    %v923 = vld [vmem:[%s0 + $0x24a] sm:$0xff]
    %v924 = vld [vmem:[%s0 + $0x25a] sm:$0xff]
    %v925 = vld [vmem:[%s0 + $0x262] sm:$0xff]
    %v926 = vld [vmem:[%s0 + $0x272] sm:$0xff]
    %v927 = vld [vmem:[%s0 + $0x27a] sm:$0xff]
    %v928 = vld [vmem:[%s0 + $0x28a] sm:$0xff]
    %v929 = vld [vmem:[%s0 + $0x292] sm:$0xff]
    %v930 = vld [vmem:[%s0 + $0x2a2] sm:$0xff]
    %v931 = vld [vmem:[%s0 + $0x2aa] sm:$0xff]
    %v932 = vld [vmem:[%s0 + $0x2ba] sm:$0xff]
    %v933 = vld [vmem:[%s0 + $0x2c2] sm:$0xff]
    %v934 = vld [vmem:[%s0 + $0x2d2] sm:$0xff]
    %v935 = vld [vmem:[%s0 + $0x2da] sm:$0xff]
    %v936 = vld [vmem:[%s0 + $0x2ea] sm:$0xff]
    %v937 = vld [vmem:[%s0 + $0x2f2] sm:$0xff]
    %v938 = vld [vmem:[%s0 + $0x302] sm:$0xff]
    %v939 = vld [vmem:[%s0 + $0x30a] sm:$0xff]
    %v940 = vld [vmem:[%s0 + $0x31a] sm:$0xff]
    %v941 = vld [vmem:[%s0 + $0x322] sm:$0xff]
    %s942 = scalar_lea.vmem %s1, 256
    %v943 = vld [vmem:[%s942] sm:$0xff]
    %v944 = vld [vmem:[%s942 + $0x8] sm:$0xff]
    %v945 = vld [vmem:[%s942 + $0x10] sm:$0xff]
    %v946 = vld [vmem:[%s942 + $0x18] sm:$0xff]
    %v947 = vld [vmem:[%s942 + $0x20] sm:$0xff]
    %v948 = vld [vmem:[%s942 + $0x28] sm:$0xff]
    %v949 = vld [vmem:[%s942 + $0x30] sm:$0xff]
    %v950 = vld [vmem:[%s942 + $0x38] sm:$0xff]
    %v951 = vld [vmem:[%s942 + $0x40] sm:$0xff]
    %v952 = vld [vmem:[%s942 + $0x48] sm:$0xff]
    %v953 = vld [vmem:[%s942 + $0x50] sm:$0xff]
    %v954 = vld [vmem:[%s942 + $0x58] sm:$0xff]
    %v955 = vld [vmem:[%s942 + $0x60] sm:$0xff]
    %v956 = vld [vmem:[%s942 + $0x68] sm:$0xff]
    %v957 = vld [vmem:[%s942 + $0x70] sm:$0xff]
    %v958 = vld [vmem:[%s942 + $0x78] sm:$0xff]
    %959 = vmatpush.msra.mxu0 %v958
    %960 = vmatpush.msra.mxu0 %v957
    %961 = vmatpush.msra.mxu0 %v956
    %962 = vmatpush.msra.mxu0 %v955
    %963 = vmatpush.msra.mxu0 %v954
    %964 = vmatpush.msra.mxu0 %v953
    %965 = vmatpush.msra.mxu0 %v952
    %966 = vmatpush.msra.mxu0 %v951
    %967 = vmatpush.msra.mxu0 %v950
    %968 = vmatpush.msra.mxu0 %v949
    %969 = vmatpush.msra.mxu0 %v948
    %970 = vmatpush.msra.mxu0 %v947
    %971 = vmatpush.msra.mxu0 %v946
    %972 = vmatpush.msra.mxu0 %v945
    %973 = vmatpush.msra.mxu0 %v944
    %974 = vmatpush.msra.mxu0 %v943
    %975 = vmatmul.f32.gmra.mxu0 %v878
    %v976 = vpop.f32.mrf.mxu0
    %v977 = vadd.f32 0.0, %v976
    %978 = vmatmul.f32.gmra.mxu0 %v879
    %v979 = vpop.f32.mrf.mxu0
    %v980 = vadd.f32 0.0, %v979
    %981 = vmatmul.f32.gmra.mxu0 %v880
    %v982 = vpop.f32.mrf.mxu0
    %v983 = vadd.f32 0.0, %v982
    %984 = vmatmul.f32.gmra.mxu0 %v881
    %v985 = vpop.f32.mrf.mxu0
    %v986 = vadd.f32 0.0, %v985
    %987 = vmatmul.f32.gmra.mxu0 %v882
    %v988 = vpop.f32.mrf.mxu0
    %v989 = vadd.f32 0.0, %v988
    %990 = vmatmul.f32.gmra.mxu0 %v883
    %v991 = vpop.f32.mrf.mxu0
    %v992 = vadd.f32 0.0, %v991
    %993 = vmatmul.f32.gmra.mxu0 %v884
    %v994 = vpop.f32.mrf.mxu0
    %v995 = vadd.f32 0.0, %v994
    %996 = vmatmul.f32.gmra.mxu0 %v885
    %v997 = vpop.f32.mrf.mxu0
    %v998 = vadd.f32 0.0, %v997
    %999 = vmatmul.f32.gmra.mxu0 %v886
    %v1000 = vpop.f32.mrf.mxu0
    %v1001 = vadd.f32 0.0, %v1000
    %1002 = vmatmul.f32.gmra.mxu0 %v887
    %v1003 = vpop.f32.mrf.mxu0
    %v1004 = vadd.f32 0.0, %v1003
    %1005 = vmatmul.f32.gmra.mxu0 %v888
    %v1006 = vpop.f32.mrf.mxu0
    %v1007 = vadd.f32 0.0, %v1006
    %1008 = vmatmul.f32.gmra.mxu0 %v889
    %v1009 = vpop.f32.mrf.mxu0
    %v1010 = vadd.f32 0.0, %v1009
    %1011 = vmatmul.f32.gmra.mxu0 %v890
    %v1012 = vpop.f32.mrf.mxu0
    %v1013 = vadd.f32 0.0, %v1012
    %1014 = vmatmul.f32.gmra.mxu0 %v891
    %v1015 = vpop.f32.mrf.mxu0
    %v1016 = vadd.f32 0.0, %v1015
    %1017 = vmatmul.f32.gmra.mxu0 %v892
    %v1018 = vpop.f32.mrf.mxu0
    %v1019 = vadd.f32 0.0, %v1018
    %1020 = vmatmul.f32.gmra.mxu0 %v893
    %v1021 = vpop.f32.mrf.mxu0
    %v1022 = vadd.f32 0.0, %v1021
    %1023 = vmatmul.f32.gmra.mxu0 %v894
    %v1024 = vpop.f32.mrf.mxu0
    %v1025 = vadd.f32 0.0, %v1024
    %1026 = vmatmul.f32.gmra.mxu0 %v895
    %v1027 = vpop.f32.mrf.mxu0
    %v1028 = vadd.f32 0.0, %v1027
    %1029 = vmatmul.f32.gmra.mxu0 %v896
    %v1030 = vpop.f32.mrf.mxu0
    %v1031 = vadd.f32 0.0, %v1030
    %1032 = vmatmul.f32.gmra.mxu0 %v897
    %v1033 = vpop.f32.mrf.mxu0
    %v1034 = vadd.f32 0.0, %v1033
    %1035 = vmatmul.f32.gmra.mxu0 %v898
    %v1036 = vpop.f32.mrf.mxu0
    %v1037 = vadd.f32 0.0, %v1036
    %1038 = vmatmul.f32.gmra.mxu0 %v899
    %v1039 = vpop.f32.mrf.mxu0
    %v1040 = vadd.f32 0.0, %v1039
    %1041 = vmatmul.f32.gmra.mxu0 %v900
    %v1042 = vpop.f32.mrf.mxu0
    %v1043 = vadd.f32 0.0, %v1042
    %1044 = vmatmul.f32.gmra.mxu0 %v901
    %v1045 = vpop.f32.mrf.mxu0
    %v1046 = vadd.f32 0.0, %v1045
    %1047 = vmatmul.f32.gmra.mxu0 %v902
    %v1048 = vpop.f32.mrf.mxu0
    %v1049 = vadd.f32 0.0, %v1048
    %1050 = vmatmul.f32.gmra.mxu0 %v903
    %v1051 = vpop.f32.mrf.mxu0
    %v1052 = vadd.f32 0.0, %v1051
    %1053 = vmatmul.f32.gmra.mxu0 %v904
    %v1054 = vpop.f32.mrf.mxu0
    %v1055 = vadd.f32 0.0, %v1054
    %1056 = vmatmul.f32.gmra.mxu0 %v905
    %v1057 = vpop.f32.mrf.mxu0
    %v1058 = vadd.f32 0.0, %v1057
    %1059 = vmatmul.f32.gmra.mxu0 %v906
    %v1060 = vpop.f32.mrf.mxu0
    %v1061 = vadd.f32 0.0, %v1060
    %1062 = vmatmul.f32.gmra.mxu0 %v907
    %v1063 = vpop.f32.mrf.mxu0
    %v1064 = vadd.f32 0.0, %v1063
    %1065 = vmatmul.f32.gmra.mxu0 %v908
    %v1066 = vpop.f32.mrf.mxu0
    %v1067 = vadd.f32 0.0, %v1066
    %1068 = vmatmul.f32.gmra.mxu0 %v909
    %v1069 = vpop.f32.mrf.mxu0
    %v1070 = vadd.f32 0.0, %v1069
    %1071 = vmatmul.f32.gmra.mxu0 %v910
    %v1072 = vpop.f32.mrf.mxu0
    %v1073 = vadd.f32 0.0, %v1072
    %1074 = vmatmul.f32.gmra.mxu0 %v911
    %v1075 = vpop.f32.mrf.mxu0
    %v1076 = vadd.f32 0.0, %v1075
    %1077 = vmatmul.f32.gmra.mxu0 %v912
    %v1078 = vpop.f32.mrf.mxu0
    %v1079 = vadd.f32 0.0, %v1078
    %1080 = vmatmul.f32.gmra.mxu0 %v913
    %v1081 = vpop.f32.mrf.mxu0
    %v1082 = vadd.f32 0.0, %v1081
    %1083 = vmatmul.f32.gmra.mxu0 %v914
    %v1084 = vpop.f32.mrf.mxu0
    %v1085 = vadd.f32 0.0, %v1084
    %1086 = vmatmul.f32.gmra.mxu0 %v915
    %v1087 = vpop.f32.mrf.mxu0
    %v1088 = vadd.f32 0.0, %v1087
    %1089 = vmatmul.f32.gmra.mxu0 %v916
    %v1090 = vpop.f32.mrf.mxu0
    %v1091 = vadd.f32 0.0, %v1090
    %1092 = vmatmul.f32.gmra.mxu0 %v917
    %v1093 = vpop.f32.mrf.mxu0
    %v1094 = vadd.f32 0.0, %v1093
    %1095 = vmatmul.f32.gmra.mxu0 %v918
    %v1096 = vpop.f32.mrf.mxu0
    %v1097 = vadd.f32 0.0, %v1096
    %1098 = vmatmul.f32.gmra.mxu0 %v919
    %v1099 = vpop.f32.mrf.mxu0
    %v1100 = vadd.f32 0.0, %v1099
    %1101 = vmatmul.f32.gmra.mxu0 %v920
    %v1102 = vpop.f32.mrf.mxu0
    %v1103 = vadd.f32 0.0, %v1102
    %1104 = vmatmul.f32.gmra.mxu0 %v921
    %v1105 = vpop.f32.mrf.mxu0
    %v1106 = vadd.f32 0.0, %v1105
    %1107 = vmatmul.f32.gmra.mxu0 %v922
    %v1108 = vpop.f32.mrf.mxu0
    %v1109 = vadd.f32 0.0, %v1108
    %1110 = vmatmul.f32.gmra.mxu0 %v923
    %v1111 = vpop.f32.mrf.mxu0
    %v1112 = vadd.f32 0.0, %v1111
    %1113 = vmatmul.f32.gmra.mxu0 %v924
    %v1114 = vpop.f32.mrf.mxu0
    %v1115 = vadd.f32 0.0, %v1114
    %1116 = vmatmul.f32.gmra.mxu0 %v925
    %v1117 = vpop.f32.mrf.mxu0
    %v1118 = vadd.f32 0.0, %v1117
    %1119 = vmatmul.f32.gmra.mxu0 %v926
    %v1120 = vpop.f32.mrf.mxu0
    %v1121 = vadd.f32 0.0, %v1120
    %1122 = vmatmul.f32.gmra.mxu0 %v927
    %v1123 = vpop.f32.mrf.mxu0
    %v1124 = vadd.f32 0.0, %v1123
    %1125 = vmatmul.f32.gmra.mxu0 %v928
    %v1126 = vpop.f32.mrf.mxu0
    %v1127 = vadd.f32 0.0, %v1126
    %1128 = vmatmul.f32.gmra.mxu0 %v929
    %v1129 = vpop.f32.mrf.mxu0
    %v1130 = vadd.f32 0.0, %v1129
    %1131 = vmatmul.f32.gmra.mxu0 %v930
    %v1132 = vpop.f32.mrf.mxu0
    %v1133 = vadd.f32 0.0, %v1132
    %1134 = vmatmul.f32.gmra.mxu0 %v931
    %v1135 = vpop.f32.mrf.mxu0
    %v1136 = vadd.f32 0.0, %v1135
    %1137 = vmatmul.f32.gmra.mxu0 %v932
    %v1138 = vpop.f32.mrf.mxu0
    %v1139 = vadd.f32 0.0, %v1138
    %1140 = vmatmul.f32.gmra.mxu0 %v933
    %v1141 = vpop.f32.mrf.mxu0
    %v1142 = vadd.f32 0.0, %v1141
    %1143 = vmatmul.f32.gmra.mxu0 %v934
    %v1144 = vpop.f32.mrf.mxu0
    %v1145 = vadd.f32 0.0, %v1144
    %1146 = vmatmul.f32.gmra.mxu0 %v935
    %v1147 = vpop.f32.mrf.mxu0
    %v1148 = vadd.f32 0.0, %v1147
    %1149 = vmatmul.f32.gmra.mxu0 %v936
    %v1150 = vpop.f32.mrf.mxu0
    %v1151 = vadd.f32 0.0, %v1150
    %1152 = vmatmul.f32.gmra.mxu0 %v937
    %v1153 = vpop.f32.mrf.mxu0
    %v1154 = vadd.f32 0.0, %v1153
    %1155 = vmatmul.f32.gmra.mxu0 %v938
    %v1156 = vpop.f32.mrf.mxu0
    %v1157 = vadd.f32 0.0, %v1156
    %1158 = vmatmul.f32.gmra.mxu0 %v939
    %v1159 = vpop.f32.mrf.mxu0
    %v1160 = vadd.f32 0.0, %v1159
    %1161 = vmatmul.f32.gmra.mxu0 %v940
    %v1162 = vpop.f32.mrf.mxu0
    %v1163 = vadd.f32 0.0, %v1162
    %1164 = vmatmul.f32.gmra.mxu0 %v941
    %v1165 = vpop.f32.mrf.mxu0
    %v1166 = vadd.f32 0.0, %v1165
    %1167 = vdwg.mxu0
    %v1168 = vld [vmem:[#allocation3] sm:$0xff]
    %v1169 = vld [vmem:[#allocation3 + $0x8] sm:$0xff]
    %v1170 = vld [vmem:[#allocation3 + $0x10] sm:$0xff]
    %v1171 = vld [vmem:[#allocation3 + $0x18] sm:$0xff]
    %v1172 = vld [vmem:[#allocation3 + $0x20] sm:$0xff]
    %v1173 = vld [vmem:[#allocation3 + $0x28] sm:$0xff]
    %v1174 = vld [vmem:[#allocation3 + $0x30] sm:$0xff]
    %v1175 = vld [vmem:[#allocation3 + $0x38] sm:$0xff]
    %v1176 = vld [vmem:[#allocation3 + $0x40] sm:$0xff]
    %v1177 = vld [vmem:[#allocation3 + $0x48] sm:$0xff]
    %v1178 = vld [vmem:[#allocation3 + $0x50] sm:$0xff]
    %v1179 = vld [vmem:[#allocation3 + $0x58] sm:$0xff]
    %v1180 = vld [vmem:[#allocation3 + $0x60] sm:$0xff]
    %v1181 = vld [vmem:[#allocation3 + $0x68] sm:$0xff]
    %v1182 = vld [vmem:[#allocation3 + $0x70] sm:$0xff]
    %v1183 = vld [vmem:[#allocation3 + $0x78] sm:$0xff]
    %v1184 = vld [vmem:[#allocation3 + $0x80] sm:$0xff]
    %v1185 = vld [vmem:[#allocation3 + $0x88] sm:$0xff]
    %v1186 = vld [vmem:[#allocation3 + $0x90] sm:$0xff]
    %v1187 = vld [vmem:[#allocation3 + $0x98] sm:$0xff]
    %v1188 = vld [vmem:[#allocation3 + $0xa0] sm:$0xff]
    %v1189 = vld [vmem:[#allocation3 + $0xa8] sm:$0xff]
    %v1190 = vld [vmem:[#allocation3 + $0xb0] sm:$0xff]
    %v1191 = vld [vmem:[#allocation3 + $0xb8] sm:$0xff]
    %v1192 = vld [vmem:[#allocation3 + $0xc0] sm:$0xff]
    %v1193 = vld [vmem:[#allocation3 + $0xc8] sm:$0xff]
    %v1194 = vld [vmem:[#allocation3 + $0xd0] sm:$0xff]
    %v1195 = vld [vmem:[#allocation3 + $0xd8] sm:$0xff]
    %v1196 = vld [vmem:[#allocation3 + $0xe0] sm:$0xff]
    %v1197 = vld [vmem:[#allocation3 + $0xe8] sm:$0xff]
    %v1198 = vld [vmem:[#allocation3 + $0xf0] sm:$0xff]
    %v1199 = vld [vmem:[#allocation3 + $0xf8] sm:$0xff]
    %v1200 = vld [vmem:[#allocation3 + $0x100] sm:$0xff]
    %v1201 = vld [vmem:[#allocation3 + $0x108] sm:$0xff]
    %v1202 = vld [vmem:[#allocation3 + $0x110] sm:$0xff]
    %v1203 = vld [vmem:[#allocation3 + $0x118] sm:$0xff]
    %v1204 = vld [vmem:[#allocation3 + $0x120] sm:$0xff]
    %v1205 = vld [vmem:[#allocation3 + $0x128] sm:$0xff]
    %v1206 = vld [vmem:[#allocation3 + $0x130] sm:$0xff]
    %v1207 = vld [vmem:[#allocation3 + $0x138] sm:$0xff]
    %v1208 = vld [vmem:[#allocation3 + $0x140] sm:$0xff]
    %v1209 = vld [vmem:[#allocation3 + $0x148] sm:$0xff]
    %v1210 = vld [vmem:[#allocation3 + $0x150] sm:$0xff]
    %v1211 = vld [vmem:[#allocation3 + $0x158] sm:$0xff]
    %v1212 = vld [vmem:[#allocation3 + $0x160] sm:$0xff]
    %v1213 = vld [vmem:[#allocation3 + $0x168] sm:$0xff]
    %v1214 = vld [vmem:[#allocation3 + $0x170] sm:$0xff]
    %v1215 = vld [vmem:[#allocation3 + $0x178] sm:$0xff]
    %v1216 = vld [vmem:[#allocation3 + $0x180] sm:$0xff]
    %v1217 = vld [vmem:[#allocation3 + $0x188] sm:$0xff]
    %v1218 = vld [vmem:[#allocation3 + $0x190] sm:$0xff]
    %v1219 = vld [vmem:[#allocation3 + $0x198] sm:$0xff]
    %v1220 = vld [vmem:[#allocation3 + $0x1a0] sm:$0xff]
    %v1221 = vld [vmem:[#allocation3 + $0x1a8] sm:$0xff]
    %v1222 = vld [vmem:[#allocation3 + $0x1b0] sm:$0xff]
    %v1223 = vld [vmem:[#allocation3 + $0x1b8] sm:$0xff]
    %v1224 = vld [vmem:[#allocation3 + $0x1c0] sm:$0xff]
    %v1225 = vld [vmem:[#allocation3 + $0x1c8] sm:$0xff]
    %v1226 = vld [vmem:[#allocation3 + $0x1d0] sm:$0xff]
    %v1227 = vld [vmem:[#allocation3 + $0x1d8] sm:$0xff]
    %v1228 = vld [vmem:[#allocation3 + $0x1e0] sm:$0xff]
    %v1229 = vld [vmem:[#allocation3 + $0x1e8] sm:$0xff]
    %v1230 = vld [vmem:[#allocation3 + $0x1f0] sm:$0xff]
    %v1231 = vld [vmem:[#allocation3 + $0x1f8] sm:$0xff]
    %v1232 = vadd.f32 %v1168, %v977
    %v1233 = vadd.f32 %v1169, %v980
    %v1234 = vadd.f32 %v1170, %v983
    %v1235 = vadd.f32 %v1171, %v986
    %v1236 = vadd.f32 %v1172, %v989
    %v1237 = vadd.f32 %v1173, %v992
    %v1238 = vadd.f32 %v1174, %v995
    %v1239 = vadd.f32 %v1175, %v998
    %v1240 = vadd.f32 %v1176, %v1001
    %v1241 = vadd.f32 %v1177, %v1004
    %v1242 = vadd.f32 %v1178, %v1007
    %v1243 = vadd.f32 %v1179, %v1010
    %v1244 = vadd.f32 %v1180, %v1013
    %v1245 = vadd.f32 %v1181, %v1016
    %v1246 = vadd.f32 %v1182, %v1019
    %v1247 = vadd.f32 %v1183, %v1022
    %v1248 = vadd.f32 %v1184, %v1025
    %v1249 = vadd.f32 %v1185, %v1028
    %v1250 = vadd.f32 %v1186, %v1031
    %v1251 = vadd.f32 %v1187, %v1034
    %v1252 = vadd.f32 %v1188, %v1037
    %v1253 = vadd.f32 %v1189, %v1040
    %v1254 = vadd.f32 %v1190, %v1043
    %v1255 = vadd.f32 %v1191, %v1046
    %v1256 = vadd.f32 %v1192, %v1049
    %v1257 = vadd.f32 %v1193, %v1052
    %v1258 = vadd.f32 %v1194, %v1055
    %v1259 = vadd.f32 %v1195, %v1058
    %v1260 = vadd.f32 %v1196, %v1061
    %v1261 = vadd.f32 %v1197, %v1064
    %v1262 = vadd.f32 %v1198, %v1067
    %v1263 = vadd.f32 %v1199, %v1070
    %v1264 = vadd.f32 %v1200, %v1073
    %v1265 = vadd.f32 %v1201, %v1076
    %v1266 = vadd.f32 %v1202, %v1079
    %v1267 = vadd.f32 %v1203, %v1082
    %v1268 = vadd.f32 %v1204, %v1085
    %v1269 = vadd.f32 %v1205, %v1088
    %v1270 = vadd.f32 %v1206, %v1091
    %v1271 = vadd.f32 %v1207, %v1094
    %v1272 = vadd.f32 %v1208, %v1097
    %v1273 = vadd.f32 %v1209, %v1100
    %v1274 = vadd.f32 %v1210, %v1103
    %v1275 = vadd.f32 %v1211, %v1106
    %v1276 = vadd.f32 %v1212, %v1109
    %v1277 = vadd.f32 %v1213, %v1112
    %v1278 = vadd.f32 %v1214, %v1115
    %v1279 = vadd.f32 %v1215, %v1118
    %v1280 = vadd.f32 %v1216, %v1121
    %v1281 = vadd.f32 %v1217, %v1124
    %v1282 = vadd.f32 %v1218, %v1127
    %v1283 = vadd.f32 %v1219, %v1130
    %v1284 = vadd.f32 %v1220, %v1133
    %v1285 = vadd.f32 %v1221, %v1136
    %v1286 = vadd.f32 %v1222, %v1139
    %v1287 = vadd.f32 %v1223, %v1142
    %v1288 = vadd.f32 %v1224, %v1145
    %v1289 = vadd.f32 %v1225, %v1148
    %v1290 = vadd.f32 %v1226, %v1151
    %v1291 = vadd.f32 %v1227, %v1154
    %v1292 = vadd.f32 %v1228, %v1157
    %v1293 = vadd.f32 %v1229, %v1160
    %v1294 = vadd.f32 %v1230, %v1163
    %v1295 = vadd.f32 %v1231, %v1166
    %1296 = vst [vmem:[#allocation3] sm:$0xff] %v1232
    %1297 = vst [vmem:[#allocation3 + $0x8] sm:$0xff] %v1233
    %1298 = vst [vmem:[#allocation3 + $0x10] sm:$0xff] %v1234
    %1299 = vst [vmem:[#allocation3 + $0x18] sm:$0xff] %v1235
    %1300 = vst [vmem:[#allocation3 + $0x20] sm:$0xff] %v1236
    %1301 = vst [vmem:[#allocation3 + $0x28] sm:$0xff] %v1237
    %1302 = vst [vmem:[#allocation3 + $0x30] sm:$0xff] %v1238
    %1303 = vst [vmem:[#allocation3 + $0x38] sm:$0xff] %v1239
    %1304 = vst [vmem:[#allocation3 + $0x40] sm:$0xff] %v1240
    %1305 = vst [vmem:[#allocation3 + $0x48] sm:$0xff] %v1241
    %1306 = vst [vmem:[#allocation3 + $0x50] sm:$0xff] %v1242
    %1307 = vst [vmem:[#allocation3 + $0x58] sm:$0xff] %v1243
    %1308 = vst [vmem:[#allocation3 + $0x60] sm:$0xff] %v1244
    %1309 = vst [vmem:[#allocation3 + $0x68] sm:$0xff] %v1245
    %1310 = vst [vmem:[#allocation3 + $0x70] sm:$0xff] %v1246
    %1311 = vst [vmem:[#allocation3 + $0x78] sm:$0xff] %v1247
    %1312 = vst [vmem:[#allocation3 + $0x80] sm:$0xff] %v1248
    %1313 = vst [vmem:[#allocation3 + $0x88] sm:$0xff] %v1249
    %1314 = vst [vmem:[#allocation3 + $0x90] sm:$0xff] %v1250
    %1315 = vst [vmem:[#allocation3 + $0x98] sm:$0xff] %v1251
    %1316 = vst [vmem:[#allocation3 + $0xa0] sm:$0xff] %v1252
    %1317 = vst [vmem:[#allocation3 + $0xa8] sm:$0xff] %v1253
    %1318 = vst [vmem:[#allocation3 + $0xb0] sm:$0xff] %v1254
    %1319 = vst [vmem:[#allocation3 + $0xb8] sm:$0xff] %v1255
    %1320 = vst [vmem:[#allocation3 + $0xc0] sm:$0xff] %v1256
    %1321 = vst [vmem:[#allocation3 + $0xc8] sm:$0xff] %v1257
    %1322 = vst [vmem:[#allocation3 + $0xd0] sm:$0xff] %v1258
    %1323 = vst [vmem:[#allocation3 + $0xd8] sm:$0xff] %v1259
    %1324 = vst [vmem:[#allocation3 + $0xe0] sm:$0xff] %v1260
    %1325 = vst [vmem:[#allocation3 + $0xe8] sm:$0xff] %v1261
    %1326 = vst [vmem:[#allocation3 + $0xf0] sm:$0xff] %v1262
    %1327 = vst [vmem:[#allocation3 + $0xf8] sm:$0xff] %v1263
    %1328 = vst [vmem:[#allocation3 + $0x100] sm:$0xff] %v1264
    %1329 = vst [vmem:[#allocation3 + $0x108] sm:$0xff] %v1265
    %1330 = vst [vmem:[#allocation3 + $0x110] sm:$0xff] %v1266
    %1331 = vst [vmem:[#allocation3 + $0x118] sm:$0xff] %v1267
    %1332 = vst [vmem:[#allocation3 + $0x120] sm:$0xff] %v1268
    %1333 = vst [vmem:[#allocation3 + $0x128] sm:$0xff] %v1269
    %1334 = vst [vmem:[#allocation3 + $0x130] sm:$0xff] %v1270
    %1335 = vst [vmem:[#allocation3 + $0x138] sm:$0xff] %v1271
    %1336 = vst [vmem:[#allocation3 + $0x140] sm:$0xff] %v1272
    %1337 = vst [vmem:[#allocation3 + $0x148] sm:$0xff] %v1273
    %1338 = vst [vmem:[#allocation3 + $0x150] sm:$0xff] %v1274
    %1339 = vst [vmem:[#allocation3 + $0x158] sm:$0xff] %v1275
    %1340 = vst [vmem:[#allocation3 + $0x160] sm:$0xff] %v1276
    %1341 = vst [vmem:[#allocation3 + $0x168] sm:$0xff] %v1277
    %1342 = vst [vmem:[#allocation3 + $0x170] sm:$0xff] %v1278
    %1343 = vst [vmem:[#allocation3 + $0x178] sm:$0xff] %v1279
    %1344 = vst [vmem:[#allocation3 + $0x180] sm:$0xff] %v1280
    %1345 = vst [vmem:[#allocation3 + $0x188] sm:$0xff] %v1281
    %1346 = vst [vmem:[#allocation3 + $0x190] sm:$0xff] %v1282
    %1347 = vst [vmem:[#allocation3 + $0x198] sm:$0xff] %v1283
    %1348 = vst [vmem:[#allocation3 + $0x1a0] sm:$0xff] %v1284
    %1349 = vst [vmem:[#allocation3 + $0x1a8] sm:$0xff] %v1285
    %1350 = vst [vmem:[#allocation3 + $0x1b0] sm:$0xff] %v1286
    %1351 = vst [vmem:[#allocation3 + $0x1b8] sm:$0xff] %v1287
    %1352 = vst [vmem:[#allocation3 + $0x1c0] sm:$0xff] %v1288
    %1353 = vst [vmem:[#allocation3 + $0x1c8] sm:$0xff] %v1289
    %1354 = vst [vmem:[#allocation3 + $0x1d0] sm:$0xff] %v1290
    %1355 = vst [vmem:[#allocation3 + $0x1d8] sm:$0xff] %v1291
    %1356 = vst [vmem:[#allocation3 + $0x1e0] sm:$0xff] %v1292
    %1357 = vst [vmem:[#allocation3 + $0x1e8] sm:$0xff] %v1293
    %1358 = vst [vmem:[#allocation3 + $0x1f0] sm:$0xff] %v1294
    %1359 = vst [vmem:[#allocation3 + $0x1f8] sm:$0xff] %v1295
    %s1360 = scalar_lea.vmem %s0, 24
    %v1361 = vld [vmem:[%s1360] sm:$0xff]
    %v1362 = vld [vmem:[%s1360 + $0x8] sm:$0xff]
    %v1363 = vld [vmem:[%s1360 + $0x18] sm:$0xff]
    %v1364 = vld [vmem:[%s1360 + $0x20] sm:$0xff]
    %v1365 = vld [vmem:[%s1360 + $0x30] sm:$0xff]
    %v1366 = vld [vmem:[%s1360 + $0x38] sm:$0xff]
    %v1367 = vld [vmem:[%s1360 + $0x48] sm:$0xff]
    %v1368 = vld [vmem:[%s1360 + $0x50] sm:$0xff]
    %v1369 = vld [vmem:[%s1360 + $0x60] sm:$0xff]
    %v1370 = vld [vmem:[%s1360 + $0x68] sm:$0xff]
    %v1371 = vld [vmem:[%s1360 + $0x78] sm:$0xff]
    %v1372 = vld [vmem:[%s1360 + $0x80] sm:$0xff]
    %v1373 = vld [vmem:[%s1360 + $0x90] sm:$0xff]
    %v1374 = vld [vmem:[%s1360 + $0x98] sm:$0xff]
    %v1375 = vld [vmem:[%s1360 + $0xa8] sm:$0xff]
    %v1376 = vld [vmem:[%s1360 + $0xb0] sm:$0xff]
    %v1377 = vld [vmem:[%s1360 + $0xc0] sm:$0xff]
    %v1378 = vld [vmem:[%s1360 + $0xc8] sm:$0xff]
    %v1379 = vld [vmem:[%s1360 + $0xd8] sm:$0xff]
    %v1380 = vld [vmem:[%s1360 + $0xe0] sm:$0xff]
    %v1381 = vld [vmem:[%s1360 + $0xf0] sm:$0xff]
    %v1382 = vld [vmem:[%s1360 + $0xf8] sm:$0xff]
    %v1383 = vld [vmem:[%s1360 + $0x108] sm:$0xff]
    %v1384 = vld [vmem:[%s1360 + $0x110] sm:$0xff]
    %v1385 = vld [vmem:[%s1360 + $0x120] sm:$0xff]
    %v1386 = vld [vmem:[%s1360 + $0x128] sm:$0xff]
    %v1387 = vld [vmem:[%s1360 + $0x138] sm:$0xff]
    %v1388 = vld [vmem:[%s1360 + $0x140] sm:$0xff]
    %v1389 = vld [vmem:[%s1360 + $0x150] sm:$0xff]
    %v1390 = vld [vmem:[%s1360 + $0x158] sm:$0xff]
    %v1391 = vld [vmem:[%s1360 + $0x168] sm:$0xff]
    %v1392 = vld [vmem:[%s1360 + $0x170] sm:$0xff]
    %v1393 = vld [vmem:[%s1360 + $0x1b0] sm:$0xff]
    %v1394 = vld [vmem:[%s1360 + $0x1b8] sm:$0xff]
    %v1395 = vld [vmem:[%s1360 + $0x1c8] sm:$0xff]
    %v1396 = vld [vmem:[%s1360 + $0x1d0] sm:$0xff]
    %v1397 = vld [vmem:[%s1360 + $0x1e0] sm:$0xff]
    %v1398 = vld [vmem:[%s1360 + $0x1e8] sm:$0xff]
    %v1399 = vld [vmem:[%s1360 + $0x1f8] sm:$0xff]
    %v1400 = vld [vmem:[%s1360 + $0x200] sm:$0xff]
    %v1401 = vld [vmem:[%s1360 + $0x210] sm:$0xff]
    %v1402 = vld [vmem:[%s1360 + $0x218] sm:$0xff]
    %v1403 = vld [vmem:[%s1360 + $0x228] sm:$0xff]
    %v1404 = vld [vmem:[%s1360 + $0x230] sm:$0xff]
    %v1405 = vld [vmem:[%s1360 + $0x240] sm:$0xff]
    %v1406 = vld [vmem:[%s1360 + $0x248] sm:$0xff]
    %v1407 = vld [vmem:[%s1360 + $0x258] sm:$0xff]
    %v1408 = vld [vmem:[%s1360 + $0x260] sm:$0xff]
    %v1409 = vld [vmem:[%s1360 + $0x270] sm:$0xff]
    %v1410 = vld [vmem:[%s1360 + $0x278] sm:$0xff]
    %v1411 = vld [vmem:[%s1360 + $0x288] sm:$0xff]
    %v1412 = vld [vmem:[%s1360 + $0x290] sm:$0xff]
    %v1413 = vld [vmem:[%s1360 + $0x2a0] sm:$0xff]
    %v1414 = vld [vmem:[%s1360 + $0x2a8] sm:$0xff]
    %v1415 = vld [vmem:[%s1360 + $0x2b8] sm:$0xff]
    %v1416 = vld [vmem:[%s1360 + $0x2c0] sm:$0xff]
    %v1417 = vld [vmem:[%s1360 + $0x2d0] sm:$0xff]
    %v1418 = vld [vmem:[%s1360 + $0x2d8] sm:$0xff]
    %v1419 = vld [vmem:[%s1360 + $0x2e8] sm:$0xff]
    %v1420 = vld [vmem:[%s1360 + $0x2f0] sm:$0xff]
    %v1421 = vld [vmem:[%s1360 + $0x300] sm:$0xff]
    %v1422 = vld [vmem:[%s1360 + $0x308] sm:$0xff]
    %v1423 = vld [vmem:[%s1360 + $0x318] sm:$0xff]
    %v1424 = vld [vmem:[%s1360 + $0x320] sm:$0xff]
    %s1425 = scalar_lea.vmem %s1, 384
    %v1426 = vld [vmem:[%s1425] sm:$0xff]
    %v1427 = vld [vmem:[%s1425 + $0x8] sm:$0xff]
    %v1428 = vld [vmem:[%s1425 + $0x10] sm:$0xff]
    %v1429 = vld [vmem:[%s1425 + $0x18] sm:$0xff]
    %v1430 = vld [vmem:[%s1425 + $0x20] sm:$0xff]
    %v1431 = vld [vmem:[%s1425 + $0x28] sm:$0xff]
    %v1432 = vld [vmem:[%s1425 + $0x30] sm:$0xff]
    %v1433 = vld [vmem:[%s1425 + $0x38] sm:$0xff]
    %v1434 = vld [vmem:[%s1425 + $0x40] sm:$0xff]
    %v1435 = vld [vmem:[%s1425 + $0x48] sm:$0xff]
    %v1436 = vld [vmem:[%s1425 + $0x50] sm:$0xff]
    %v1437 = vld [vmem:[%s1425 + $0x58] sm:$0xff]
    %v1438 = vld [vmem:[%s1425 + $0x60] sm:$0xff]
    %v1439 = vld [vmem:[%s1425 + $0x68] sm:$0xff]
    %v1440 = vld [vmem:[%s1425 + $0x70] sm:$0xff]
    %v1441 = vld [vmem:[%s1425 + $0x78] sm:$0xff]
    %1442 = vmatpush.msra.mxu0 %v1441
    %1443 = vmatpush.msra.mxu0 %v1440
    %1444 = vmatpush.msra.mxu0 %v1439
    %1445 = vmatpush.msra.mxu0 %v1438
    %1446 = vmatpush.msra.mxu0 %v1437
    %1447 = vmatpush.msra.mxu0 %v1436
    %1448 = vmatpush.msra.mxu0 %v1435
    %1449 = vmatpush.msra.mxu0 %v1434
    %1450 = vmatpush.msra.mxu0 %v1433
    %1451 = vmatpush.msra.mxu0 %v1432
    %1452 = vmatpush.msra.mxu0 %v1431
    %1453 = vmatpush.msra.mxu0 %v1430
    %1454 = vmatpush.msra.mxu0 %v1429
    %1455 = vmatpush.msra.mxu0 %v1428
    %1456 = vmatpush.msra.mxu0 %v1427
    %1457 = vmatpush.msra.mxu0 %v1426
    %1458 = vmatmul.f32.gmra.mxu0 %v1361
    %v1459 = vpop.f32.mrf.mxu0
    %v1460 = vadd.f32 0.0, %v1459
    %1461 = vmatmul.f32.gmra.mxu0 %v1362
    %v1462 = vpop.f32.mrf.mxu0
    %v1463 = vadd.f32 0.0, %v1462
    %1464 = vmatmul.f32.gmra.mxu0 %v1363
    %v1465 = vpop.f32.mrf.mxu0
    %v1466 = vadd.f32 0.0, %v1465
    %1467 = vmatmul.f32.gmra.mxu0 %v1364
    %v1468 = vpop.f32.mrf.mxu0
    %v1469 = vadd.f32 0.0, %v1468
    %1470 = vmatmul.f32.gmra.mxu0 %v1365
    %v1471 = vpop.f32.mrf.mxu0
    %v1472 = vadd.f32 0.0, %v1471
    %1473 = vmatmul.f32.gmra.mxu0 %v1366
    %v1474 = vpop.f32.mrf.mxu0
    %v1475 = vadd.f32 0.0, %v1474
    %1476 = vmatmul.f32.gmra.mxu0 %v1367
    %v1477 = vpop.f32.mrf.mxu0
    %v1478 = vadd.f32 0.0, %v1477
    %1479 = vmatmul.f32.gmra.mxu0 %v1368
    %v1480 = vpop.f32.mrf.mxu0
    %v1481 = vadd.f32 0.0, %v1480
    %1482 = vmatmul.f32.gmra.mxu0 %v1369
    %v1483 = vpop.f32.mrf.mxu0
    %v1484 = vadd.f32 0.0, %v1483
    %1485 = vmatmul.f32.gmra.mxu0 %v1370
    %v1486 = vpop.f32.mrf.mxu0
    %v1487 = vadd.f32 0.0, %v1486
    %1488 = vmatmul.f32.gmra.mxu0 %v1371
    %v1489 = vpop.f32.mrf.mxu0
    %v1490 = vadd.f32 0.0, %v1489
    %1491 = vmatmul.f32.gmra.mxu0 %v1372
    %v1492 = vpop.f32.mrf.mxu0
    %v1493 = vadd.f32 0.0, %v1492
    %1494 = vmatmul.f32.gmra.mxu0 %v1373
    %v1495 = vpop.f32.mrf.mxu0
    %v1496 = vadd.f32 0.0, %v1495
    %1497 = vmatmul.f32.gmra.mxu0 %v1374
    %v1498 = vpop.f32.mrf.mxu0
    %v1499 = vadd.f32 0.0, %v1498
    %1500 = vmatmul.f32.gmra.mxu0 %v1375
    %v1501 = vpop.f32.mrf.mxu0
    %v1502 = vadd.f32 0.0, %v1501
    %1503 = vmatmul.f32.gmra.mxu0 %v1376
    %v1504 = vpop.f32.mrf.mxu0
    %v1505 = vadd.f32 0.0, %v1504
    %1506 = vmatmul.f32.gmra.mxu0 %v1377
    %v1507 = vpop.f32.mrf.mxu0
    %v1508 = vadd.f32 0.0, %v1507
    %1509 = vmatmul.f32.gmra.mxu0 %v1378
    %v1510 = vpop.f32.mrf.mxu0
    %v1511 = vadd.f32 0.0, %v1510
    %1512 = vmatmul.f32.gmra.mxu0 %v1379
    %v1513 = vpop.f32.mrf.mxu0
    %v1514 = vadd.f32 0.0, %v1513
    %1515 = vmatmul.f32.gmra.mxu0 %v1380
    %v1516 = vpop.f32.mrf.mxu0
    %v1517 = vadd.f32 0.0, %v1516
    %1518 = vmatmul.f32.gmra.mxu0 %v1381
    %v1519 = vpop.f32.mrf.mxu0
    %v1520 = vadd.f32 0.0, %v1519
    %1521 = vmatmul.f32.gmra.mxu0 %v1382
    %v1522 = vpop.f32.mrf.mxu0
    %v1523 = vadd.f32 0.0, %v1522
    %1524 = vmatmul.f32.gmra.mxu0 %v1383
    %v1525 = vpop.f32.mrf.mxu0
    %v1526 = vadd.f32 0.0, %v1525
    %1527 = vmatmul.f32.gmra.mxu0 %v1384
    %v1528 = vpop.f32.mrf.mxu0
    %v1529 = vadd.f32 0.0, %v1528
    %1530 = vmatmul.f32.gmra.mxu0 %v1385
    %v1531 = vpop.f32.mrf.mxu0
    %v1532 = vadd.f32 0.0, %v1531
    %1533 = vmatmul.f32.gmra.mxu0 %v1386
    %v1534 = vpop.f32.mrf.mxu0
    %v1535 = vadd.f32 0.0, %v1534
    %1536 = vmatmul.f32.gmra.mxu0 %v1387
    %v1537 = vpop.f32.mrf.mxu0
    %v1538 = vadd.f32 0.0, %v1537
    %1539 = vmatmul.f32.gmra.mxu0 %v1388
    %v1540 = vpop.f32.mrf.mxu0
    %v1541 = vadd.f32 0.0, %v1540
    %1542 = vmatmul.f32.gmra.mxu0 %v1389
    %v1543 = vpop.f32.mrf.mxu0
    %v1544 = vadd.f32 0.0, %v1543
    %1545 = vmatmul.f32.gmra.mxu0 %v1390
    %v1546 = vpop.f32.mrf.mxu0
    %v1547 = vadd.f32 0.0, %v1546
    %1548 = vmatmul.f32.gmra.mxu0 %v1391
    %v1549 = vpop.f32.mrf.mxu0
    %v1550 = vadd.f32 0.0, %v1549
    %1551 = vmatmul.f32.gmra.mxu0 %v1392
    %v1552 = vpop.f32.mrf.mxu0
    %v1553 = vadd.f32 0.0, %v1552
    %1554 = vmatmul.f32.gmra.mxu0 %v1393
    %v1555 = vpop.f32.mrf.mxu0
    %v1556 = vadd.f32 0.0, %v1555
    %1557 = vmatmul.f32.gmra.mxu0 %v1394
    %v1558 = vpop.f32.mrf.mxu0
    %v1559 = vadd.f32 0.0, %v1558
    %1560 = vmatmul.f32.gmra.mxu0 %v1395
    %v1561 = vpop.f32.mrf.mxu0
    %v1562 = vadd.f32 0.0, %v1561
    %1563 = vmatmul.f32.gmra.mxu0 %v1396
    %v1564 = vpop.f32.mrf.mxu0
    %v1565 = vadd.f32 0.0, %v1564
    %1566 = vmatmul.f32.gmra.mxu0 %v1397
    %v1567 = vpop.f32.mrf.mxu0
    %v1568 = vadd.f32 0.0, %v1567
    %1569 = vmatmul.f32.gmra.mxu0 %v1398
    %v1570 = vpop.f32.mrf.mxu0
    %v1571 = vadd.f32 0.0, %v1570
    %1572 = vmatmul.f32.gmra.mxu0 %v1399
    %v1573 = vpop.f32.mrf.mxu0
    %v1574 = vadd.f32 0.0, %v1573
    %1575 = vmatmul.f32.gmra.mxu0 %v1400
    %v1576 = vpop.f32.mrf.mxu0
    %v1577 = vadd.f32 0.0, %v1576
    %1578 = vmatmul.f32.gmra.mxu0 %v1401
    %v1579 = vpop.f32.mrf.mxu0
    %v1580 = vadd.f32 0.0, %v1579
    %1581 = vmatmul.f32.gmra.mxu0 %v1402
    %v1582 = vpop.f32.mrf.mxu0
    %v1583 = vadd.f32 0.0, %v1582
    %1584 = vmatmul.f32.gmra.mxu0 %v1403
    %v1585 = vpop.f32.mrf.mxu0
    %v1586 = vadd.f32 0.0, %v1585
    %1587 = vmatmul.f32.gmra.mxu0 %v1404
    %v1588 = vpop.f32.mrf.mxu0
    %v1589 = vadd.f32 0.0, %v1588
    %1590 = vmatmul.f32.gmra.mxu0 %v1405
    %v1591 = vpop.f32.mrf.mxu0
    %v1592 = vadd.f32 0.0, %v1591
    %1593 = vmatmul.f32.gmra.mxu0 %v1406
    %v1594 = vpop.f32.mrf.mxu0
    %v1595 = vadd.f32 0.0, %v1594
    %1596 = vmatmul.f32.gmra.mxu0 %v1407
    %v1597 = vpop.f32.mrf.mxu0
    %v1598 = vadd.f32 0.0, %v1597
    %1599 = vmatmul.f32.gmra.mxu0 %v1408
    %v1600 = vpop.f32.mrf.mxu0
    %v1601 = vadd.f32 0.0, %v1600
    %1602 = vmatmul.f32.gmra.mxu0 %v1409
    %v1603 = vpop.f32.mrf.mxu0
    %v1604 = vadd.f32 0.0, %v1603
    %1605 = vmatmul.f32.gmra.mxu0 %v1410
    %v1606 = vpop.f32.mrf.mxu0
    %v1607 = vadd.f32 0.0, %v1606
    %1608 = vmatmul.f32.gmra.mxu0 %v1411
    %v1609 = vpop.f32.mrf.mxu0
    %v1610 = vadd.f32 0.0, %v1609
    %1611 = vmatmul.f32.gmra.mxu0 %v1412
    %v1612 = vpop.f32.mrf.mxu0
    %v1613 = vadd.f32 0.0, %v1612
    %1614 = vmatmul.f32.gmra.mxu0 %v1413
    %v1615 = vpop.f32.mrf.mxu0
    %v1616 = vadd.f32 0.0, %v1615
    %1617 = vmatmul.f32.gmra.mxu0 %v1414
    %v1618 = vpop.f32.mrf.mxu0
    %v1619 = vadd.f32 0.0, %v1618
    %1620 = vmatmul.f32.gmra.mxu0 %v1415
    %v1621 = vpop.f32.mrf.mxu0
    %v1622 = vadd.f32 0.0, %v1621
    %1623 = vmatmul.f32.gmra.mxu0 %v1416
    %v1624 = vpop.f32.mrf.mxu0
    %v1625 = vadd.f32 0.0, %v1624
    %1626 = vmatmul.f32.gmra.mxu0 %v1417
    %v1627 = vpop.f32.mrf.mxu0
    %v1628 = vadd.f32 0.0, %v1627
    %1629 = vmatmul.f32.gmra.mxu0 %v1418
    %v1630 = vpop.f32.mrf.mxu0
    %v1631 = vadd.f32 0.0, %v1630
    %1632 = vmatmul.f32.gmra.mxu0 %v1419
    %v1633 = vpop.f32.mrf.mxu0
    %v1634 = vadd.f32 0.0, %v1633
    %1635 = vmatmul.f32.gmra.mxu0 %v1420
    %v1636 = vpop.f32.mrf.mxu0
    %v1637 = vadd.f32 0.0, %v1636
    %1638 = vmatmul.f32.gmra.mxu0 %v1421
    %v1639 = vpop.f32.mrf.mxu0
    %v1640 = vadd.f32 0.0, %v1639
    %1641 = vmatmul.f32.gmra.mxu0 %v1422
    %v1642 = vpop.f32.mrf.mxu0
    %v1643 = vadd.f32 0.0, %v1642
    %1644 = vmatmul.f32.gmra.mxu0 %v1423
    %v1645 = vpop.f32.mrf.mxu0
    %v1646 = vadd.f32 0.0, %v1645
    %1647 = vmatmul.f32.gmra.mxu0 %v1424
    %v1648 = vpop.f32.mrf.mxu0
    %v1649 = vadd.f32 0.0, %v1648
    %1650 = vdwg.mxu0
    %v1651 = vld [vmem:[#allocation3] sm:$0xff]
    %v1652 = vld [vmem:[#allocation3 + $0x8] sm:$0xff]
    %v1653 = vld [vmem:[#allocation3 + $0x10] sm:$0xff]
    %v1654 = vld [vmem:[#allocation3 + $0x18] sm:$0xff]
    %v1655 = vld [vmem:[#allocation3 + $0x20] sm:$0xff]
    %v1656 = vld [vmem:[#allocation3 + $0x28] sm:$0xff]
    %v1657 = vld [vmem:[#allocation3 + $0x30] sm:$0xff]
    %v1658 = vld [vmem:[#allocation3 + $0x38] sm:$0xff]
    %v1659 = vld [vmem:[#allocation3 + $0x40] sm:$0xff]
    %v1660 = vld [vmem:[#allocation3 + $0x48] sm:$0xff]
    %v1661 = vld [vmem:[#allocation3 + $0x50] sm:$0xff]
    %v1662 = vld [vmem:[#allocation3 + $0x58] sm:$0xff]
    %v1663 = vld [vmem:[#allocation3 + $0x60] sm:$0xff]
    %v1664 = vld [vmem:[#allocation3 + $0x68] sm:$0xff]
    %v1665 = vld [vmem:[#allocation3 + $0x70] sm:$0xff]
    %v1666 = vld [vmem:[#allocation3 + $0x78] sm:$0xff]
    %v1667 = vld [vmem:[#allocation3 + $0x80] sm:$0xff]
    %v1668 = vld [vmem:[#allocation3 + $0x88] sm:$0xff]
    %v1669 = vld [vmem:[#allocation3 + $0x90] sm:$0xff]
    %v1670 = vld [vmem:[#allocation3 + $0x98] sm:$0xff]
    %v1671 = vld [vmem:[#allocation3 + $0xa0] sm:$0xff]
    %v1672 = vld [vmem:[#allocation3 + $0xa8] sm:$0xff]
    %v1673 = vld [vmem:[#allocation3 + $0xb0] sm:$0xff]
    %v1674 = vld [vmem:[#allocation3 + $0xb8] sm:$0xff]
    %v1675 = vld [vmem:[#allocation3 + $0xc0] sm:$0xff]
    %v1676 = vld [vmem:[#allocation3 + $0xc8] sm:$0xff]
    %v1677 = vld [vmem:[#allocation3 + $0xd0] sm:$0xff]
    %v1678 = vld [vmem:[#allocation3 + $0xd8] sm:$0xff]
    %v1679 = vld [vmem:[#allocation3 + $0xe0] sm:$0xff]
    %v1680 = vld [vmem:[#allocation3 + $0xe8] sm:$0xff]
    %v1681 = vld [vmem:[#allocation3 + $0xf0] sm:$0xff]
    %v1682 = vld [vmem:[#allocation3 + $0xf8] sm:$0xff]
    %v1683 = vld [vmem:[#allocation3 + $0x100] sm:$0xff]
    %v1684 = vld [vmem:[#allocation3 + $0x108] sm:$0xff]
    %v1685 = vld [vmem:[#allocation3 + $0x110] sm:$0xff]
    %v1686 = vld [vmem:[#allocation3 + $0x118] sm:$0xff]
    %v1687 = vld [vmem:[#allocation3 + $0x120] sm:$0xff]
    %v1688 = vld [vmem:[#allocation3 + $0x128] sm:$0xff]
    %v1689 = vld [vmem:[#allocation3 + $0x130] sm:$0xff]
    %v1690 = vld [vmem:[#allocation3 + $0x138] sm:$0xff]
    %v1691 = vld [vmem:[#allocation3 + $0x140] sm:$0xff]
    %v1692 = vld [vmem:[#allocation3 + $0x148] sm:$0xff]
    %v1693 = vld [vmem:[#allocation3 + $0x150] sm:$0xff]
    %v1694 = vld [vmem:[#allocation3 + $0x158] sm:$0xff]
    %v1695 = vld [vmem:[#allocation3 + $0x160] sm:$0xff]
    %v1696 = vld [vmem:[#allocation3 + $0x168] sm:$0xff]
    %v1697 = vld [vmem:[#allocation3 + $0x170] sm:$0xff]
    %v1698 = vld [vmem:[#allocation3 + $0x178] sm:$0xff]
    %v1699 = vld [vmem:[#allocation3 + $0x180] sm:$0xff]
    %v1700 = vld [vmem:[#allocation3 + $0x188] sm:$0xff]
    %v1701 = vld [vmem:[#allocation3 + $0x190] sm:$0xff]
    %v1702 = vld [vmem:[#allocation3 + $0x198] sm:$0xff]
    %v1703 = vld [vmem:[#allocation3 + $0x1a0] sm:$0xff]
    %v1704 = vld [vmem:[#allocation3 + $0x1a8] sm:$0xff]
    %v1705 = vld [vmem:[#allocation3 + $0x1b0] sm:$0xff]
    %v1706 = vld [vmem:[#allocation3 + $0x1b8] sm:$0xff]
    %v1707 = vld [vmem:[#allocation3 + $0x1c0] sm:$0xff]
    %v1708 = vld [vmem:[#allocation3 + $0x1c8] sm:$0xff]
    %v1709 = vld [vmem:[#allocation3 + $0x1d0] sm:$0xff]
    %v1710 = vld [vmem:[#allocation3 + $0x1d8] sm:$0xff]
    %v1711 = vld [vmem:[#allocation3 + $0x1e0] sm:$0xff]
    %v1712 = vld [vmem:[#allocation3 + $0x1e8] sm:$0xff]
    %v1713 = vld [vmem:[#allocation3 + $0x1f0] sm:$0xff]
    %v1714 = vld [vmem:[#allocation3 + $0x1f8] sm:$0xff]
    %v1715 = vadd.f32 %v1651, %v1460
    %v1716 = vadd.f32 %v1652, %v1463
    %v1717 = vadd.f32 %v1653, %v1466
    %v1718 = vadd.f32 %v1654, %v1469
    %v1719 = vadd.f32 %v1655, %v1472
    %v1720 = vadd.f32 %v1656, %v1475
    %v1721 = vadd.f32 %v1657, %v1478
    %v1722 = vadd.f32 %v1658, %v1481
    %v1723 = vadd.f32 %v1659, %v1484
    %v1724 = vadd.f32 %v1660, %v1487
    %v1725 = vadd.f32 %v1661, %v1490
    %v1726 = vadd.f32 %v1662, %v1493
    %v1727 = vadd.f32 %v1663, %v1496
    %v1728 = vadd.f32 %v1664, %v1499
    %v1729 = vadd.f32 %v1665, %v1502
    %v1730 = vadd.f32 %v1666, %v1505
    %v1731 = vadd.f32 %v1667, %v1508
    %v1732 = vadd.f32 %v1668, %v1511
    %v1733 = vadd.f32 %v1669, %v1514
    %v1734 = vadd.f32 %v1670, %v1517
    %v1735 = vadd.f32 %v1671, %v1520
    %v1736 = vadd.f32 %v1672, %v1523
    %v1737 = vadd.f32 %v1673, %v1526
    %v1738 = vadd.f32 %v1674, %v1529
    %v1739 = vadd.f32 %v1675, %v1532
    %v1740 = vadd.f32 %v1676, %v1535
    %v1741 = vadd.f32 %v1677, %v1538
    %v1742 = vadd.f32 %v1678, %v1541
    %v1743 = vadd.f32 %v1679, %v1544
    %v1744 = vadd.f32 %v1680, %v1547
    %v1745 = vadd.f32 %v1681, %v1550
    %v1746 = vadd.f32 %v1682, %v1553
    %v1747 = vadd.f32 %v1683, %v1556
    %v1748 = vadd.f32 %v1684, %v1559
    %v1749 = vadd.f32 %v1685, %v1562
    %v1750 = vadd.f32 %v1686, %v1565
    %v1751 = vadd.f32 %v1687, %v1568
    %v1752 = vadd.f32 %v1688, %v1571
    %v1753 = vadd.f32 %v1689, %v1574
    %v1754 = vadd.f32 %v1690, %v1577
    %v1755 = vadd.f32 %v1691, %v1580
    %v1756 = vadd.f32 %v1692, %v1583
    %v1757 = vadd.f32 %v1693, %v1586
    %v1758 = vadd.f32 %v1694, %v1589
    %v1759 = vadd.f32 %v1695, %v1592
    %v1760 = vadd.f32 %v1696, %v1595
    %v1761 = vadd.f32 %v1697, %v1598
    %v1762 = vadd.f32 %v1698, %v1601
    %v1763 = vadd.f32 %v1699, %v1604
    %v1764 = vadd.f32 %v1700, %v1607
    %v1765 = vadd.f32 %v1701, %v1610
    %v1766 = vadd.f32 %v1702, %v1613
    %v1767 = vadd.f32 %v1703, %v1616
    %v1768 = vadd.f32 %v1704, %v1619
    %v1769 = vadd.f32 %v1705, %v1622
    %v1770 = vadd.f32 %v1706, %v1625
    %v1771 = vadd.f32 %v1707, %v1628
    %v1772 = vadd.f32 %v1708, %v1631
    %v1773 = vadd.f32 %v1709, %v1634
    %v1774 = vadd.f32 %v1710, %v1637
    %v1775 = vadd.f32 %v1711, %v1640
    %v1776 = vadd.f32 %v1712, %v1643
    %v1777 = vadd.f32 %v1713, %v1646
    %v1778 = vadd.f32 %v1714, %v1649
    %1779 = vst [vmem:[#allocation3] sm:$0xff] %v1715
    %1780 = vst [vmem:[#allocation3 + $0x8] sm:$0xff] %v1716
    %1781 = vst [vmem:[#allocation3 + $0x10] sm:$0xff] %v1717
    %1782 = vst [vmem:[#allocation3 + $0x18] sm:$0xff] %v1718
    %1783 = vst [vmem:[#allocation3 + $0x20] sm:$0xff] %v1719
    %1784 = vst [vmem:[#allocation3 + $0x28] sm:$0xff] %v1720
    %1785 = vst [vmem:[#allocation3 + $0x30] sm:$0xff] %v1721
    %1786 = vst [vmem:[#allocation3 + $0x38] sm:$0xff] %v1722
    %1787 = vst [vmem:[#allocation3 + $0x40] sm:$0xff] %v1723
    %1788 = vst [vmem:[#allocation3 + $0x48] sm:$0xff] %v1724
    %1789 = vst [vmem:[#allocation3 + $0x50] sm:$0xff] %v1725
    %1790 = vst [vmem:[#allocation3 + $0x58] sm:$0xff] %v1726
    %1791 = vst [vmem:[#allocation3 + $0x60] sm:$0xff] %v1727
    %1792 = vst [vmem:[#allocation3 + $0x68] sm:$0xff] %v1728
    %1793 = vst [vmem:[#allocation3 + $0x70] sm:$0xff] %v1729
    %1794 = vst [vmem:[#allocation3 + $0x78] sm:$0xff] %v1730
    %1795 = vst [vmem:[#allocation3 + $0x80] sm:$0xff] %v1731
    %1796 = vst [vmem:[#allocation3 + $0x88] sm:$0xff] %v1732
    %1797 = vst [vmem:[#allocation3 + $0x90] sm:$0xff] %v1733
    %1798 = vst [vmem:[#allocation3 + $0x98] sm:$0xff] %v1734
    %1799 = vst [vmem:[#allocation3 + $0xa0] sm:$0xff] %v1735
    %1800 = vst [vmem:[#allocation3 + $0xa8] sm:$0xff] %v1736
    %1801 = vst [vmem:[#allocation3 + $0xb0] sm:$0xff] %v1737
    %1802 = vst [vmem:[#allocation3 + $0xb8] sm:$0xff] %v1738
    %1803 = vst [vmem:[#allocation3 + $0xc0] sm:$0xff] %v1739
    %1804 = vst [vmem:[#allocation3 + $0xc8] sm:$0xff] %v1740
    %1805 = vst [vmem:[#allocation3 + $0xd0] sm:$0xff] %v1741
    %1806 = vst [vmem:[#allocation3 + $0xd8] sm:$0xff] %v1742
    %1807 = vst [vmem:[#allocation3 + $0xe0] sm:$0xff] %v1743
    %1808 = vst [vmem:[#allocation3 + $0xe8] sm:$0xff] %v1744
    %1809 = vst [vmem:[#allocation3 + $0xf0] sm:$0xff] %v1745
    %1810 = vst [vmem:[#allocation3 + $0xf8] sm:$0xff] %v1746
    %1811 = vst [vmem:[#allocation3 + $0x100] sm:$0xff] %v1747
    %1812 = vst [vmem:[#allocation3 + $0x108] sm:$0xff] %v1748
    %1813 = vst [vmem:[#allocation3 + $0x110] sm:$0xff] %v1749
    %1814 = vst [vmem:[#allocation3 + $0x118] sm:$0xff] %v1750
    %1815 = vst [vmem:[#allocation3 + $0x120] sm:$0xff] %v1751
    %1816 = vst [vmem:[#allocation3 + $0x128] sm:$0xff] %v1752
    %1817 = vst [vmem:[#allocation3 + $0x130] sm:$0xff] %v1753
    %1818 = vst [vmem:[#allocation3 + $0x138] sm:$0xff] %v1754
    %1819 = vst [vmem:[#allocation3 + $0x140] sm:$0xff] %v1755
    %1820 = vst [vmem:[#allocation3 + $0x148] sm:$0xff] %v1756
    %1821 = vst [vmem:[#allocation3 + $0x150] sm:$0xff] %v1757
    %1822 = vst [vmem:[#allocation3 + $0x158] sm:$0xff] %v1758
    %1823 = vst [vmem:[#allocation3 + $0x160] sm:$0xff] %v1759
    %1824 = vst [vmem:[#allocation3 + $0x168] sm:$0xff] %v1760
    %1825 = vst [vmem:[#allocation3 + $0x170] sm:$0xff] %v1761
    %1826 = vst [vmem:[#allocation3 + $0x178] sm:$0xff] %v1762
    %1827 = vst [vmem:[#allocation3 + $0x180] sm:$0xff] %v1763
    %1828 = vst [vmem:[#allocation3 + $0x188] sm:$0xff] %v1764
    %1829 = vst [vmem:[#allocation3 + $0x190] sm:$0xff] %v1765
    %1830 = vst [vmem:[#allocation3 + $0x198] sm:$0xff] %v1766
    %1831 = vst [vmem:[#allocation3 + $0x1a0] sm:$0xff] %v1767
    %1832 = vst [vmem:[#allocation3 + $0x1a8] sm:$0xff] %v1768
    %1833 = vst [vmem:[#allocation3 + $0x1b0] sm:$0xff] %v1769
    %1834 = vst [vmem:[#allocation3 + $0x1b8] sm:$0xff] %v1770
    %1835 = vst [vmem:[#allocation3 + $0x1c0] sm:$0xff] %v1771
    %1836 = vst [vmem:[#allocation3 + $0x1c8] sm:$0xff] %v1772
    %1837 = vst [vmem:[#allocation3 + $0x1d0] sm:$0xff] %v1773
    %1838 = vst [vmem:[#allocation3 + $0x1d8] sm:$0xff] %v1774
    %1839 = vst [vmem:[#allocation3 + $0x1e0] sm:$0xff] %v1775
    %1840 = vst [vmem:[#allocation3 + $0x1e8] sm:$0xff] %v1776
    %1841 = vst [vmem:[#allocation3 + $0x1f0] sm:$0xff] %v1777
    %1842 = vst [vmem:[#allocation3 + $0x1f8] sm:$0xff] %v1778
    %v1843 = vld [vmem:[%s1360 + $0x1] sm:$0xff]
    %v1844 = vld [vmem:[%s1360 + $0x9] sm:$0xff]
    %v1845 = vld [vmem:[%s1360 + $0x19] sm:$0xff]
    %v1846 = vld [vmem:[%s1360 + $0x21] sm:$0xff]
    %v1847 = vld [vmem:[%s1360 + $0x31] sm:$0xff]
    %v1848 = vld [vmem:[%s1360 + $0x39] sm:$0xff]
    %v1849 = vld [vmem:[%s1360 + $0x49] sm:$0xff]
    %v1850 = vld [vmem:[%s1360 + $0x51] sm:$0xff]
    %v1851 = vld [vmem:[%s1360 + $0x61] sm:$0xff]
    %v1852 = vld [vmem:[%s1360 + $0x69] sm:$0xff]
    %v1853 = vld [vmem:[%s1360 + $0x79] sm:$0xff]
    %v1854 = vld [vmem:[%s1360 + $0x81] sm:$0xff]
    %v1855 = vld [vmem:[%s1360 + $0x91] sm:$0xff]
    %v1856 = vld [vmem:[%s1360 + $0x99] sm:$0xff]
    %v1857 = vld [vmem:[%s1360 + $0xa9] sm:$0xff]
    %v1858 = vld [vmem:[%s1360 + $0xb1] sm:$0xff]
    %v1859 = vld [vmem:[%s1360 + $0xc1] sm:$0xff]
    %v1860 = vld [vmem:[%s1360 + $0xc9] sm:$0xff]
    %v1861 = vld [vmem:[%s1360 + $0xd9] sm:$0xff]
    %v1862 = vld [vmem:[%s1360 + $0xe1] sm:$0xff]
    %v1863 = vld [vmem:[%s1360 + $0xf1] sm:$0xff]
    %v1864 = vld [vmem:[%s1360 + $0xf9] sm:$0xff]
    %v1865 = vld [vmem:[%s1360 + $0x109] sm:$0xff]
    %v1866 = vld [vmem:[%s1360 + $0x111] sm:$0xff]
    %v1867 = vld [vmem:[%s1360 + $0x121] sm:$0xff]
    %v1868 = vld [vmem:[%s1360 + $0x129] sm:$0xff]
    %v1869 = vld [vmem:[%s1360 + $0x139] sm:$0xff]
    %v1870 = vld [vmem:[%s1360 + $0x141] sm:$0xff]
    %v1871 = vld [vmem:[%s1360 + $0x151] sm:$0xff]
    %v1872 = vld [vmem:[%s1360 + $0x159] sm:$0xff]
    %v1873 = vld [vmem:[%s1360 + $0x169] sm:$0xff]
    %v1874 = vld [vmem:[%s1360 + $0x171] sm:$0xff]
    %v1875 = vld [vmem:[%s1360 + $0x1b1] sm:$0xff]
    %v1876 = vld [vmem:[%s1360 + $0x1b9] sm:$0xff]
    %v1877 = vld [vmem:[%s1360 + $0x1c9] sm:$0xff]
    %v1878 = vld [vmem:[%s1360 + $0x1d1] sm:$0xff]
    %v1879 = vld [vmem:[%s1360 + $0x1e1] sm:$0xff]
    %v1880 = vld [vmem:[%s1360 + $0x1e9] sm:$0xff]
    %v1881 = vld [vmem:[%s1360 + $0x1f9] sm:$0xff]
    %v1882 = vld [vmem:[%s1360 + $0x201] sm:$0xff]
    %v1883 = vld [vmem:[%s1360 + $0x211] sm:$0xff]
    %v1884 = vld [vmem:[%s1360 + $0x219] sm:$0xff]
    %v1885 = vld [vmem:[%s1360 + $0x229] sm:$0xff]
    %v1886 = vld [vmem:[%s1360 + $0x231] sm:$0xff]
    %v1887 = vld [vmem:[%s1360 + $0x241] sm:$0xff]
    %v1888 = vld [vmem:[%s1360 + $0x249] sm:$0xff]
    %v1889 = vld [vmem:[%s1360 + $0x259] sm:$0xff]
    %v1890 = vld [vmem:[%s1360 + $0x261] sm:$0xff]
    %v1891 = vld [vmem:[%s1360 + $0x271] sm:$0xff]
    %v1892 = vld [vmem:[%s1360 + $0x279] sm:$0xff]
    %v1893 = vld [vmem:[%s1360 + $0x289] sm:$0xff]
    %v1894 = vld [vmem:[%s1360 + $0x291] sm:$0xff]
    %v1895 = vld [vmem:[%s1360 + $0x2a1] sm:$0xff]
    %v1896 = vld [vmem:[%s1360 + $0x2a9] sm:$0xff]
    %v1897 = vld [vmem:[%s1360 + $0x2b9] sm:$0xff]
    %v1898 = vld [vmem:[%s1360 + $0x2c1] sm:$0xff]
    %v1899 = vld [vmem:[%s1360 + $0x2d1] sm:$0xff]
    %v1900 = vld [vmem:[%s1360 + $0x2d9] sm:$0xff]
    %v1901 = vld [vmem:[%s1360 + $0x2e9] sm:$0xff]
    %v1902 = vld [vmem:[%s1360 + $0x2f1] sm:$0xff]
    %v1903 = vld [vmem:[%s1360 + $0x301] sm:$0xff]
    %v1904 = vld [vmem:[%s1360 + $0x309] sm:$0xff]
    %v1905 = vld [vmem:[%s1360 + $0x319] sm:$0xff]
    %v1906 = vld [vmem:[%s1360 + $0x321] sm:$0xff]
    %s1907 = scalar_lea.vmem %s1, 512
    %v1908 = vld [vmem:[%s1907] sm:$0xff]
    %v1909 = vld [vmem:[%s1907 + $0x8] sm:$0xff]
    %v1910 = vld [vmem:[%s1907 + $0x10] sm:$0xff]
    %v1911 = vld [vmem:[%s1907 + $0x18] sm:$0xff]
    %v1912 = vld [vmem:[%s1907 + $0x20] sm:$0xff]
    %v1913 = vld [vmem:[%s1907 + $0x28] sm:$0xff]
    %v1914 = vld [vmem:[%s1907 + $0x30] sm:$0xff]
    %v1915 = vld [vmem:[%s1907 + $0x38] sm:$0xff]
    %v1916 = vld [vmem:[%s1907 + $0x40] sm:$0xff]
    %v1917 = vld [vmem:[%s1907 + $0x48] sm:$0xff]
    %v1918 = vld [vmem:[%s1907 + $0x50] sm:$0xff]
    %v1919 = vld [vmem:[%s1907 + $0x58] sm:$0xff]
    %v1920 = vld [vmem:[%s1907 + $0x60] sm:$0xff]
    %v1921 = vld [vmem:[%s1907 + $0x68] sm:$0xff]
    %v1922 = vld [vmem:[%s1907 + $0x70] sm:$0xff]
    %v1923 = vld [vmem:[%s1907 + $0x78] sm:$0xff]
    %1924 = vmatpush.msra.mxu0 %v1923
    %1925 = vmatpush.msra.mxu0 %v1922
    %1926 = vmatpush.msra.mxu0 %v1921
    %1927 = vmatpush.msra.mxu0 %v1920
    %1928 = vmatpush.msra.mxu0 %v1919
    %1929 = vmatpush.msra.mxu0 %v1918
    %1930 = vmatpush.msra.mxu0 %v1917
    %1931 = vmatpush.msra.mxu0 %v1916
    %1932 = vmatpush.msra.mxu0 %v1915
    %1933 = vmatpush.msra.mxu0 %v1914
    %1934 = vmatpush.msra.mxu0 %v1913
    %1935 = vmatpush.msra.mxu0 %v1912
    %1936 = vmatpush.msra.mxu0 %v1911
    %1937 = vmatpush.msra.mxu0 %v1910
    %1938 = vmatpush.msra.mxu0 %v1909
    %1939 = vmatpush.msra.mxu0 %v1908
    %1940 = vmatmul.f32.gmra.mxu0 %v1843
    %v1941 = vpop.f32.mrf.mxu0
    %v1942 = vadd.f32 0.0, %v1941
    %1943 = vmatmul.f32.gmra.mxu0 %v1844
    %v1944 = vpop.f32.mrf.mxu0
    %v1945 = vadd.f32 0.0, %v1944
    %1946 = vmatmul.f32.gmra.mxu0 %v1845
    %v1947 = vpop.f32.mrf.mxu0
    %v1948 = vadd.f32 0.0, %v1947
    %1949 = vmatmul.f32.gmra.mxu0 %v1846
    %v1950 = vpop.f32.mrf.mxu0
    %v1951 = vadd.f32 0.0, %v1950
    %1952 = vmatmul.f32.gmra.mxu0 %v1847
    %v1953 = vpop.f32.mrf.mxu0
    %v1954 = vadd.f32 0.0, %v1953
    %1955 = vmatmul.f32.gmra.mxu0 %v1848
    %v1956 = vpop.f32.mrf.mxu0
    %v1957 = vadd.f32 0.0, %v1956
    %1958 = vmatmul.f32.gmra.mxu0 %v1849
    %v1959 = vpop.f32.mrf.mxu0
    %v1960 = vadd.f32 0.0, %v1959
    %1961 = vmatmul.f32.gmra.mxu0 %v1850
    %v1962 = vpop.f32.mrf.mxu0
    %v1963 = vadd.f32 0.0, %v1962
    %1964 = vmatmul.f32.gmra.mxu0 %v1851
    %v1965 = vpop.f32.mrf.mxu0
    %v1966 = vadd.f32 0.0, %v1965
    %1967 = vmatmul.f32.gmra.mxu0 %v1852
    %v1968 = vpop.f32.mrf.mxu0
    %v1969 = vadd.f32 0.0, %v1968
    %1970 = vmatmul.f32.gmra.mxu0 %v1853
    %v1971 = vpop.f32.mrf.mxu0
    %v1972 = vadd.f32 0.0, %v1971
    %1973 = vmatmul.f32.gmra.mxu0 %v1854
    %v1974 = vpop.f32.mrf.mxu0
    %v1975 = vadd.f32 0.0, %v1974
    %1976 = vmatmul.f32.gmra.mxu0 %v1855
    %v1977 = vpop.f32.mrf.mxu0
    %v1978 = vadd.f32 0.0, %v1977
    %1979 = vmatmul.f32.gmra.mxu0 %v1856
    %v1980 = vpop.f32.mrf.mxu0
    %v1981 = vadd.f32 0.0, %v1980
    %1982 = vmatmul.f32.gmra.mxu0 %v1857
    %v1983 = vpop.f32.mrf.mxu0
    %v1984 = vadd.f32 0.0, %v1983
    %1985 = vmatmul.f32.gmra.mxu0 %v1858
    %v1986 = vpop.f32.mrf.mxu0
    %v1987 = vadd.f32 0.0, %v1986
    %1988 = vmatmul.f32.gmra.mxu0 %v1859
    %v1989 = vpop.f32.mrf.mxu0
    %v1990 = vadd.f32 0.0, %v1989
    %1991 = vmatmul.f32.gmra.mxu0 %v1860
    %v1992 = vpop.f32.mrf.mxu0
    %v1993 = vadd.f32 0.0, %v1992
    %1994 = vmatmul.f32.gmra.mxu0 %v1861
    %v1995 = vpop.f32.mrf.mxu0
    %v1996 = vadd.f32 0.0, %v1995
    %1997 = vmatmul.f32.gmra.mxu0 %v1862
    %v1998 = vpop.f32.mrf.mxu0
    %v1999 = vadd.f32 0.0, %v1998
    %2000 = vmatmul.f32.gmra.mxu0 %v1863
    %v2001 = vpop.f32.mrf.mxu0
    %v2002 = vadd.f32 0.0, %v2001
    %2003 = vmatmul.f32.gmra.mxu0 %v1864
    %v2004 = vpop.f32.mrf.mxu0
    %v2005 = vadd.f32 0.0, %v2004
    %2006 = vmatmul.f32.gmra.mxu0 %v1865
    %v2007 = vpop.f32.mrf.mxu0
    %v2008 = vadd.f32 0.0, %v2007
    %2009 = vmatmul.f32.gmra.mxu0 %v1866
    %v2010 = vpop.f32.mrf.mxu0
    %v2011 = vadd.f32 0.0, %v2010
    %2012 = vmatmul.f32.gmra.mxu0 %v1867
    %v2013 = vpop.f32.mrf.mxu0
    %v2014 = vadd.f32 0.0, %v2013
    %2015 = vmatmul.f32.gmra.mxu0 %v1868
    %v2016 = vpop.f32.mrf.mxu0
    %v2017 = vadd.f32 0.0, %v2016
    %2018 = vmatmul.f32.gmra.mxu0 %v1869
    %v2019 = vpop.f32.mrf.mxu0
    %v2020 = vadd.f32 0.0, %v2019
    %2021 = vmatmul.f32.gmra.mxu0 %v1870
    %v2022 = vpop.f32.mrf.mxu0
    %v2023 = vadd.f32 0.0, %v2022
    %2024 = vmatmul.f32.gmra.mxu0 %v1871
    %v2025 = vpop.f32.mrf.mxu0
    %v2026 = vadd.f32 0.0, %v2025
    %2027 = vmatmul.f32.gmra.mxu0 %v1872
    %v2028 = vpop.f32.mrf.mxu0
    %v2029 = vadd.f32 0.0, %v2028
    %2030 = vmatmul.f32.gmra.mxu0 %v1873
    %v2031 = vpop.f32.mrf.mxu0
    %v2032 = vadd.f32 0.0, %v2031
    %2033 = vmatmul.f32.gmra.mxu0 %v1874
    %v2034 = vpop.f32.mrf.mxu0
    %v2035 = vadd.f32 0.0, %v2034
    %2036 = vmatmul.f32.gmra.mxu0 %v1875
    %v2037 = vpop.f32.mrf.mxu0
    %v2038 = vadd.f32 0.0, %v2037
    %2039 = vmatmul.f32.gmra.mxu0 %v1876
    %v2040 = vpop.f32.mrf.mxu0
    %v2041 = vadd.f32 0.0, %v2040
    %2042 = vmatmul.f32.gmra.mxu0 %v1877
    %v2043 = vpop.f32.mrf.mxu0
    %v2044 = vadd.f32 0.0, %v2043
    %2045 = vmatmul.f32.gmra.mxu0 %v1878
    %v2046 = vpop.f32.mrf.mxu0
    %v2047 = vadd.f32 0.0, %v2046
    %2048 = vmatmul.f32.gmra.mxu0 %v1879
    %v2049 = vpop.f32.mrf.mxu0
    %v2050 = vadd.f32 0.0, %v2049
    %2051 = vmatmul.f32.gmra.mxu0 %v1880
    %v2052 = vpop.f32.mrf.mxu0
    %v2053 = vadd.f32 0.0, %v2052
    %2054 = vmatmul.f32.gmra.mxu0 %v1881
    %v2055 = vpop.f32.mrf.mxu0
    %v2056 = vadd.f32 0.0, %v2055
    %2057 = vmatmul.f32.gmra.mxu0 %v1882
    %v2058 = vpop.f32.mrf.mxu0
    %v2059 = vadd.f32 0.0, %v2058
    %2060 = vmatmul.f32.gmra.mxu0 %v1883
    %v2061 = vpop.f32.mrf.mxu0
    %v2062 = vadd.f32 0.0, %v2061
    %2063 = vmatmul.f32.gmra.mxu0 %v1884
    %v2064 = vpop.f32.mrf.mxu0
    %v2065 = vadd.f32 0.0, %v2064
    %2066 = vmatmul.f32.gmra.mxu0 %v1885
    %v2067 = vpop.f32.mrf.mxu0
    %v2068 = vadd.f32 0.0, %v2067
    %2069 = vmatmul.f32.gmra.mxu0 %v1886
    %v2070 = vpop.f32.mrf.mxu0
    %v2071 = vadd.f32 0.0, %v2070
    %2072 = vmatmul.f32.gmra.mxu0 %v1887
    %v2073 = vpop.f32.mrf.mxu0
    %v2074 = vadd.f32 0.0, %v2073
    %2075 = vmatmul.f32.gmra.mxu0 %v1888
    %v2076 = vpop.f32.mrf.mxu0
    %v2077 = vadd.f32 0.0, %v2076
    %2078 = vmatmul.f32.gmra.mxu0 %v1889
    %v2079 = vpop.f32.mrf.mxu0
    %v2080 = vadd.f32 0.0, %v2079
    %2081 = vmatmul.f32.gmra.mxu0 %v1890
    %v2082 = vpop.f32.mrf.mxu0
    %v2083 = vadd.f32 0.0, %v2082
    %2084 = vmatmul.f32.gmra.mxu0 %v1891
    %v2085 = vpop.f32.mrf.mxu0
    %v2086 = vadd.f32 0.0, %v2085
    %2087 = vmatmul.f32.gmra.mxu0 %v1892
    %v2088 = vpop.f32.mrf.mxu0
    %v2089 = vadd.f32 0.0, %v2088
    %2090 = vmatmul.f32.gmra.mxu0 %v1893
    %v2091 = vpop.f32.mrf.mxu0
    %v2092 = vadd.f32 0.0, %v2091
    %2093 = vmatmul.f32.gmra.mxu0 %v1894
    %v2094 = vpop.f32.mrf.mxu0
    %v2095 = vadd.f32 0.0, %v2094
    %2096 = vmatmul.f32.gmra.mxu0 %v1895
    %v2097 = vpop.f32.mrf.mxu0
    %v2098 = vadd.f32 0.0, %v2097
    %2099 = vmatmul.f32.gmra.mxu0 %v1896
    %v2100 = vpop.f32.mrf.mxu0
    %v2101 = vadd.f32 0.0, %v2100
    %2102 = vmatmul.f32.gmra.mxu0 %v1897
    %v2103 = vpop.f32.mrf.mxu0
    %v2104 = vadd.f32 0.0, %v2103
    %2105 = vmatmul.f32.gmra.mxu0 %v1898
    %v2106 = vpop.f32.mrf.mxu0
    %v2107 = vadd.f32 0.0, %v2106
    %2108 = vmatmul.f32.gmra.mxu0 %v1899
    %v2109 = vpop.f32.mrf.mxu0
    %v2110 = vadd.f32 0.0, %v2109
    %2111 = vmatmul.f32.gmra.mxu0 %v1900
    %v2112 = vpop.f32.mrf.mxu0
    %v2113 = vadd.f32 0.0, %v2112
    %2114 = vmatmul.f32.gmra.mxu0 %v1901
    %v2115 = vpop.f32.mrf.mxu0
    %v2116 = vadd.f32 0.0, %v2115
    %2117 = vmatmul.f32.gmra.mxu0 %v1902
    %v2118 = vpop.f32.mrf.mxu0
    %v2119 = vadd.f32 0.0, %v2118
    %2120 = vmatmul.f32.gmra.mxu0 %v1903
    %v2121 = vpop.f32.mrf.mxu0
    %v2122 = vadd.f32 0.0, %v2121
    %2123 = vmatmul.f32.gmra.mxu0 %v1904
    %v2124 = vpop.f32.mrf.mxu0
    %v2125 = vadd.f32 0.0, %v2124
    %2126 = vmatmul.f32.gmra.mxu0 %v1905
    %v2127 = vpop.f32.mrf.mxu0
    %v2128 = vadd.f32 0.0, %v2127
    %2129 = vmatmul.f32.gmra.mxu0 %v1906
    %v2130 = vpop.f32.mrf.mxu0
    %v2131 = vadd.f32 0.0, %v2130
    %2132 = vdwg.mxu0
    %v2133 = vld [vmem:[#allocation3] sm:$0xff]
    %v2134 = vld [vmem:[#allocation3 + $0x8] sm:$0xff]
    %v2135 = vld [vmem:[#allocation3 + $0x10] sm:$0xff]
    %v2136 = vld [vmem:[#allocation3 + $0x18] sm:$0xff]
    %v2137 = vld [vmem:[#allocation3 + $0x20] sm:$0xff]
    %v2138 = vld [vmem:[#allocation3 + $0x28] sm:$0xff]
    %v2139 = vld [vmem:[#allocation3 + $0x30] sm:$0xff]
    %v2140 = vld [vmem:[#allocation3 + $0x38] sm:$0xff]
    %v2141 = vld [vmem:[#allocation3 + $0x40] sm:$0xff]
    %v2142 = vld [vmem:[#allocation3 + $0x48] sm:$0xff]
    %v2143 = vld [vmem:[#allocation3 + $0x50] sm:$0xff]
    %v2144 = vld [vmem:[#allocation3 + $0x58] sm:$0xff]
    %v2145 = vld [vmem:[#allocation3 + $0x60] sm:$0xff]
    %v2146 = vld [vmem:[#allocation3 + $0x68] sm:$0xff]
    %v2147 = vld [vmem:[#allocation3 + $0x70] sm:$0xff]
    %v2148 = vld [vmem:[#allocation3 + $0x78] sm:$0xff]
    %v2149 = vld [vmem:[#allocation3 + $0x80] sm:$0xff]
    %v2150 = vld [vmem:[#allocation3 + $0x88] sm:$0xff]
    %v2151 = vld [vmem:[#allocation3 + $0x90] sm:$0xff]
    %v2152 = vld [vmem:[#allocation3 + $0x98] sm:$0xff]
    %v2153 = vld [vmem:[#allocation3 + $0xa0] sm:$0xff]
    %v2154 = vld [vmem:[#allocation3 + $0xa8] sm:$0xff]
    %v2155 = vld [vmem:[#allocation3 + $0xb0] sm:$0xff]
    %v2156 = vld [vmem:[#allocation3 + $0xb8] sm:$0xff]
    %v2157 = vld [vmem:[#allocation3 + $0xc0] sm:$0xff]
    %v2158 = vld [vmem:[#allocation3 + $0xc8] sm:$0xff]
    %v2159 = vld [vmem:[#allocation3 + $0xd0] sm:$0xff]
    %v2160 = vld [vmem:[#allocation3 + $0xd8] sm:$0xff]
    %v2161 = vld [vmem:[#allocation3 + $0xe0] sm:$0xff]
    %v2162 = vld [vmem:[#allocation3 + $0xe8] sm:$0xff]
    %v2163 = vld [vmem:[#allocation3 + $0xf0] sm:$0xff]
    %v2164 = vld [vmem:[#allocation3 + $0xf8] sm:$0xff]
    %v2165 = vld [vmem:[#allocation3 + $0x100] sm:$0xff]
    %v2166 = vld [vmem:[#allocation3 + $0x108] sm:$0xff]
    %v2167 = vld [vmem:[#allocation3 + $0x110] sm:$0xff]
    %v2168 = vld [vmem:[#allocation3 + $0x118] sm:$0xff]
    %v2169 = vld [vmem:[#allocation3 + $0x120] sm:$0xff]
    %v2170 = vld [vmem:[#allocation3 + $0x128] sm:$0xff]
    %v2171 = vld [vmem:[#allocation3 + $0x130] sm:$0xff]
    %v2172 = vld [vmem:[#allocation3 + $0x138] sm:$0xff]
    %v2173 = vld [vmem:[#allocation3 + $0x140] sm:$0xff]
    %v2174 = vld [vmem:[#allocation3 + $0x148] sm:$0xff]
    %v2175 = vld [vmem:[#allocation3 + $0x150] sm:$0xff]
    %v2176 = vld [vmem:[#allocation3 + $0x158] sm:$0xff]
    %v2177 = vld [vmem:[#allocation3 + $0x160] sm:$0xff]
    %v2178 = vld [vmem:[#allocation3 + $0x168] sm:$0xff]
    %v2179 = vld [vmem:[#allocation3 + $0x170] sm:$0xff]
    %v2180 = vld [vmem:[#allocation3 + $0x178] sm:$0xff]
    %v2181 = vld [vmem:[#allocation3 + $0x180] sm:$0xff]
    %v2182 = vld [vmem:[#allocation3 + $0x188] sm:$0xff]
    %v2183 = vld [vmem:[#allocation3 + $0x190] sm:$0xff]
    %v2184 = vld [vmem:[#allocation3 + $0x198] sm:$0xff]
    %v2185 = vld [vmem:[#allocation3 + $0x1a0] sm:$0xff]
    %v2186 = vld [vmem:[#allocation3 + $0x1a8] sm:$0xff]
    %v2187 = vld [vmem:[#allocation3 + $0x1b0] sm:$0xff]
    %v2188 = vld [vmem:[#allocation3 + $0x1b8] sm:$0xff]
    %v2189 = vld [vmem:[#allocation3 + $0x1c0] sm:$0xff]
    %v2190 = vld [vmem:[#allocation3 + $0x1c8] sm:$0xff]
    %v2191 = vld [vmem:[#allocation3 + $0x1d0] sm:$0xff]
    %v2192 = vld [vmem:[#allocation3 + $0x1d8] sm:$0xff]
    %v2193 = vld [vmem:[#allocation3 + $0x1e0] sm:$0xff]
    %v2194 = vld [vmem:[#allocation3 + $0x1e8] sm:$0xff]
    %v2195 = vld [vmem:[#allocation3 + $0x1f0] sm:$0xff]
    %v2196 = vld [vmem:[#allocation3 + $0x1f8] sm:$0xff]
    %v2197 = vadd.f32 %v2133, %v1942
    %v2198 = vadd.f32 %v2134, %v1945
    %v2199 = vadd.f32 %v2135, %v1948
    %v2200 = vadd.f32 %v2136, %v1951
    %v2201 = vadd.f32 %v2137, %v1954
    %v2202 = vadd.f32 %v2138, %v1957
    %v2203 = vadd.f32 %v2139, %v1960
    %v2204 = vadd.f32 %v2140, %v1963
    %v2205 = vadd.f32 %v2141, %v1966
    %v2206 = vadd.f32 %v2142, %v1969
    %v2207 = vadd.f32 %v2143, %v1972
    %v2208 = vadd.f32 %v2144, %v1975
    %v2209 = vadd.f32 %v2145, %v1978
    %v2210 = vadd.f32 %v2146, %v1981
    %v2211 = vadd.f32 %v2147, %v1984
    %v2212 = vadd.f32 %v2148, %v1987
    %v2213 = vadd.f32 %v2149, %v1990
    %v2214 = vadd.f32 %v2150, %v1993
    %v2215 = vadd.f32 %v2151, %v1996
    %v2216 = vadd.f32 %v2152, %v1999
    %v2217 = vadd.f32 %v2153, %v2002
    %v2218 = vadd.f32 %v2154, %v2005
    %v2219 = vadd.f32 %v2155, %v2008
    %v2220 = vadd.f32 %v2156, %v2011
    %v2221 = vadd.f32 %v2157, %v2014
    %v2222 = vadd.f32 %v2158, %v2017
    %v2223 = vadd.f32 %v2159, %v2020
    %v2224 = vadd.f32 %v2160, %v2023
    %v2225 = vadd.f32 %v2161, %v2026
    %v2226 = vadd.f32 %v2162, %v2029
    %v2227 = vadd.f32 %v2163, %v2032
    %v2228 = vadd.f32 %v2164, %v2035
    %v2229 = vadd.f32 %v2165, %v2038
    %v2230 = vadd.f32 %v2166, %v2041
    %v2231 = vadd.f32 %v2167, %v2044
    %v2232 = vadd.f32 %v2168, %v2047
    %v2233 = vadd.f32 %v2169, %v2050
    %v2234 = vadd.f32 %v2170, %v2053
    %v2235 = vadd.f32 %v2171, %v2056
    %v2236 = vadd.f32 %v2172, %v2059
    %v2237 = vadd.f32 %v2173, %v2062
    %v2238 = vadd.f32 %v2174, %v2065
    %v2239 = vadd.f32 %v2175, %v2068
    %v2240 = vadd.f32 %v2176, %v2071
    %v2241 = vadd.f32 %v2177, %v2074
    %v2242 = vadd.f32 %v2178, %v2077
    %v2243 = vadd.f32 %v2179, %v2080
    %v2244 = vadd.f32 %v2180, %v2083
    %v2245 = vadd.f32 %v2181, %v2086
    %v2246 = vadd.f32 %v2182, %v2089
    %v2247 = vadd.f32 %v2183, %v2092
    %v2248 = vadd.f32 %v2184, %v2095
    %v2249 = vadd.f32 %v2185, %v2098
    %v2250 = vadd.f32 %v2186, %v2101
    %v2251 = vadd.f32 %v2187, %v2104
    %v2252 = vadd.f32 %v2188, %v2107
    %v2253 = vadd.f32 %v2189, %v2110
    %v2254 = vadd.f32 %v2190, %v2113
    %v2255 = vadd.f32 %v2191, %v2116
    %v2256 = vadd.f32 %v2192, %v2119
    %v2257 = vadd.f32 %v2193, %v2122
    %v2258 = vadd.f32 %v2194, %v2125
    %v2259 = vadd.f32 %v2195, %v2128
    %v2260 = vadd.f32 %v2196, %v2131
    %2261 = vst [vmem:[#allocation3] sm:$0xff] %v2197
    %2262 = vst [vmem:[#allocation3 + $0x8] sm:$0xff] %v2198
    %2263 = vst [vmem:[#allocation3 + $0x10] sm:$0xff] %v2199
    %2264 = vst [vmem:[#allocation3 + $0x18] sm:$0xff] %v2200
    %2265 = vst [vmem:[#allocation3 + $0x20] sm:$0xff] %v2201
    %2266 = vst [vmem:[#allocation3 + $0x28] sm:$0xff] %v2202
    %2267 = vst [vmem:[#allocation3 + $0x30] sm:$0xff] %v2203
    %2268 = vst [vmem:[#allocation3 + $0x38] sm:$0xff] %v2204
    %2269 = vst [vmem:[#allocation3 + $0x40] sm:$0xff] %v2205
    %2270 = vst [vmem:[#allocation3 + $0x48] sm:$0xff] %v2206
    %2271 = vst [vmem:[#allocation3 + $0x50] sm:$0xff] %v2207
    %2272 = vst [vmem:[#allocation3 + $0x58] sm:$0xff] %v2208
    %2273 = vst [vmem:[#allocation3 + $0x60] sm:$0xff] %v2209
    %2274 = vst [vmem:[#allocation3 + $0x68] sm:$0xff] %v2210
    %2275 = vst [vmem:[#allocation3 + $0x70] sm:$0xff] %v2211
    %2276 = vst [vmem:[#allocation3 + $0x78] sm:$0xff] %v2212
    %2277 = vst [vmem:[#allocation3 + $0x80] sm:$0xff] %v2213
    %2278 = vst [vmem:[#allocation3 + $0x88] sm:$0xff] %v2214
    %2279 = vst [vmem:[#allocation3 + $0x90] sm:$0xff] %v2215
    %2280 = vst [vmem:[#allocation3 + $0x98] sm:$0xff] %v2216
    %2281 = vst [vmem:[#allocation3 + $0xa0] sm:$0xff] %v2217
    %2282 = vst [vmem:[#allocation3 + $0xa8] sm:$0xff] %v2218
    %2283 = vst [vmem:[#allocation3 + $0xb0] sm:$0xff] %v2219
    %2284 = vst [vmem:[#allocation3 + $0xb8] sm:$0xff] %v2220
    %2285 = vst [vmem:[#allocation3 + $0xc0] sm:$0xff] %v2221
    %2286 = vst [vmem:[#allocation3 + $0xc8] sm:$0xff] %v2222
    %2287 = vst [vmem:[#allocation3 + $0xd0] sm:$0xff] %v2223
    %2288 = vst [vmem:[#allocation3 + $0xd8] sm:$0xff] %v2224
    %2289 = vst [vmem:[#allocation3 + $0xe0] sm:$0xff] %v2225
    %2290 = vst [vmem:[#allocation3 + $0xe8] sm:$0xff] %v2226
    %2291 = vst [vmem:[#allocation3 + $0xf0] sm:$0xff] %v2227
    %2292 = vst [vmem:[#allocation3 + $0xf8] sm:$0xff] %v2228
    %2293 = vst [vmem:[#allocation3 + $0x100] sm:$0xff] %v2229
    %2294 = vst [vmem:[#allocation3 + $0x108] sm:$0xff] %v2230
    %2295 = vst [vmem:[#allocation3 + $0x110] sm:$0xff] %v2231
    %2296 = vst [vmem:[#allocation3 + $0x118] sm:$0xff] %v2232
    %2297 = vst [vmem:[#allocation3 + $0x120] sm:$0xff] %v2233
    %2298 = vst [vmem:[#allocation3 + $0x128] sm:$0xff] %v2234
    %2299 = vst [vmem:[#allocation3 + $0x130] sm:$0xff] %v2235
    %2300 = vst [vmem:[#allocation3 + $0x138] sm:$0xff] %v2236
    %2301 = vst [vmem:[#allocation3 + $0x140] sm:$0xff] %v2237
    %2302 = vst [vmem:[#allocation3 + $0x148] sm:$0xff] %v2238
    %2303 = vst [vmem:[#allocation3 + $0x150] sm:$0xff] %v2239
    %2304 = vst [vmem:[#allocation3 + $0x158] sm:$0xff] %v2240
    %2305 = vst [vmem:[#allocation3 + $0x160] sm:$0xff] %v2241
    %2306 = vst [vmem:[#allocation3 + $0x168] sm:$0xff] %v2242
    %2307 = vst [vmem:[#allocation3 + $0x170] sm:$0xff] %v2243
    %2308 = vst [vmem:[#allocation3 + $0x178] sm:$0xff] %v2244
    %2309 = vst [vmem:[#allocation3 + $0x180] sm:$0xff] %v2245
    %2310 = vst [vmem:[#allocation3 + $0x188] sm:$0xff] %v2246
    %2311 = vst [vmem:[#allocation3 + $0x190] sm:$0xff] %v2247
    %2312 = vst [vmem:[#allocation3 + $0x198] sm:$0xff] %v2248
    %2313 = vst [vmem:[#allocation3 + $0x1a0] sm:$0xff] %v2249
    %2314 = vst [vmem:[#allocation3 + $0x1a8] sm:$0xff] %v2250
    %2315 = vst [vmem:[#allocation3 + $0x1b0] sm:$0xff] %v2251
    %2316 = vst [vmem:[#allocation3 + $0x1b8] sm:$0xff] %v2252
    %2317 = vst [vmem:[#allocation3 + $0x1c0] sm:$0xff] %v2253
    %2318 = vst [vmem:[#allocation3 + $0x1c8] sm:$0xff] %v2254
    %2319 = vst [vmem:[#allocation3 + $0x1d0] sm:$0xff] %v2255
    %2320 = vst [vmem:[#allocation3 + $0x1d8] sm:$0xff] %v2256
    %2321 = vst [vmem:[#allocation3 + $0x1e0] sm:$0xff] %v2257
    %2322 = vst [vmem:[#allocation3 + $0x1e8] sm:$0xff] %v2258
    %2323 = vst [vmem:[#allocation3 + $0x1f0] sm:$0xff] %v2259
    %2324 = vst [vmem:[#allocation3 + $0x1f8] sm:$0xff] %v2260
    %v2325 = vld [vmem:[%s1360 + $0x2] sm:$0xff]
    %v2326 = vld [vmem:[%s1360 + $0xa] sm:$0xff]
    %v2327 = vld [vmem:[%s1360 + $0x1a] sm:$0xff]
    %v2328 = vld [vmem:[%s1360 + $0x22] sm:$0xff]
    %v2329 = vld [vmem:[%s1360 + $0x32] sm:$0xff]
    %v2330 = vld [vmem:[%s1360 + $0x3a] sm:$0xff]
    %v2331 = vld [vmem:[%s1360 + $0x4a] sm:$0xff]
    %v2332 = vld [vmem:[%s1360 + $0x52] sm:$0xff]
    %v2333 = vld [vmem:[%s1360 + $0x62] sm:$0xff]
    %v2334 = vld [vmem:[%s1360 + $0x6a] sm:$0xff]
    %v2335 = vld [vmem:[%s1360 + $0x7a] sm:$0xff]
    %v2336 = vld [vmem:[%s1360 + $0x82] sm:$0xff]
    %v2337 = vld [vmem:[%s1360 + $0x92] sm:$0xff]
    %v2338 = vld [vmem:[%s1360 + $0x9a] sm:$0xff]
    %v2339 = vld [vmem:[%s1360 + $0xaa] sm:$0xff]
    %v2340 = vld [vmem:[%s1360 + $0xb2] sm:$0xff]
    %v2341 = vld [vmem:[%s1360 + $0xc2] sm:$0xff]
    %v2342 = vld [vmem:[%s1360 + $0xca] sm:$0xff]
    %v2343 = vld [vmem:[%s1360 + $0xda] sm:$0xff]
    %v2344 = vld [vmem:[%s1360 + $0xe2] sm:$0xff]
    %v2345 = vld [vmem:[%s1360 + $0xf2] sm:$0xff]
    %v2346 = vld [vmem:[%s1360 + $0xfa] sm:$0xff]
    %v2347 = vld [vmem:[%s1360 + $0x10a] sm:$0xff]
    %v2348 = vld [vmem:[%s1360 + $0x112] sm:$0xff]
    %v2349 = vld [vmem:[%s1360 + $0x122] sm:$0xff]
    %v2350 = vld [vmem:[%s1360 + $0x12a] sm:$0xff]
    %v2351 = vld [vmem:[%s1360 + $0x13a] sm:$0xff]
    %v2352 = vld [vmem:[%s1360 + $0x142] sm:$0xff]
    %v2353 = vld [vmem:[%s1360 + $0x152] sm:$0xff]
    %v2354 = vld [vmem:[%s1360 + $0x15a] sm:$0xff]
    %v2355 = vld [vmem:[%s1360 + $0x16a] sm:$0xff]
    %v2356 = vld [vmem:[%s1360 + $0x172] sm:$0xff]
    %v2357 = vld [vmem:[%s1360 + $0x1b2] sm:$0xff]
    %v2358 = vld [vmem:[%s1360 + $0x1ba] sm:$0xff]
    %v2359 = vld [vmem:[%s1360 + $0x1ca] sm:$0xff]
    %v2360 = vld [vmem:[%s1360 + $0x1d2] sm:$0xff]
    %v2361 = vld [vmem:[%s1360 + $0x1e2] sm:$0xff]
    %v2362 = vld [vmem:[%s1360 + $0x1ea] sm:$0xff]
    %v2363 = vld [vmem:[%s1360 + $0x1fa] sm:$0xff]
    %v2364 = vld [vmem:[%s1360 + $0x202] sm:$0xff]
    %v2365 = vld [vmem:[%s1360 + $0x212] sm:$0xff]
    %v2366 = vld [vmem:[%s1360 + $0x21a] sm:$0xff]
    %v2367 = vld [vmem:[%s1360 + $0x22a] sm:$0xff]
    %v2368 = vld [vmem:[%s1360 + $0x232] sm:$0xff]
    %v2369 = vld [vmem:[%s1360 + $0x242] sm:$0xff]
    %v2370 = vld [vmem:[%s1360 + $0x24a] sm:$0xff]
    %v2371 = vld [vmem:[%s1360 + $0x25a] sm:$0xff]
    %v2372 = vld [vmem:[%s1360 + $0x262] sm:$0xff]
    %v2373 = vld [vmem:[%s1360 + $0x272] sm:$0xff]
    %v2374 = vld [vmem:[%s1360 + $0x27a] sm:$0xff]
    %v2375 = vld [vmem:[%s1360 + $0x28a] sm:$0xff]
    %v2376 = vld [vmem:[%s1360 + $0x292] sm:$0xff]
    %v2377 = vld [vmem:[%s1360 + $0x2a2] sm:$0xff]
    %v2378 = vld [vmem:[%s1360 + $0x2aa] sm:$0xff]
    %v2379 = vld [vmem:[%s1360 + $0x2ba] sm:$0xff]
    %v2380 = vld [vmem:[%s1360 + $0x2c2] sm:$0xff]
    %v2381 = vld [vmem:[%s1360 + $0x2d2] sm:$0xff]
    %v2382 = vld [vmem:[%s1360 + $0x2da] sm:$0xff]
    %v2383 = vld [vmem:[%s1360 + $0x2ea] sm:$0xff]
    %v2384 = vld [vmem:[%s1360 + $0x2f2] sm:$0xff]
    %v2385 = vld [vmem:[%s1360 + $0x302] sm:$0xff]
    %v2386 = vld [vmem:[%s1360 + $0x30a] sm:$0xff]
    %v2387 = vld [vmem:[%s1360 + $0x31a] sm:$0xff]
    %v2388 = vld [vmem:[%s1360 + $0x322] sm:$0xff]
    %s2389 = scalar_lea.vmem %s1, 640
    %v2390 = vld [vmem:[%s2389] sm:$0xff]
    %v2391 = vld [vmem:[%s2389 + $0x8] sm:$0xff]
    %v2392 = vld [vmem:[%s2389 + $0x10] sm:$0xff]
    %v2393 = vld [vmem:[%s2389 + $0x18] sm:$0xff]
    %v2394 = vld [vmem:[%s2389 + $0x20] sm:$0xff]
    %v2395 = vld [vmem:[%s2389 + $0x28] sm:$0xff]
    %v2396 = vld [vmem:[%s2389 + $0x30] sm:$0xff]
    %v2397 = vld [vmem:[%s2389 + $0x38] sm:$0xff]
    %v2398 = vld [vmem:[%s2389 + $0x40] sm:$0xff]
    %v2399 = vld [vmem:[%s2389 + $0x48] sm:$0xff]
    %v2400 = vld [vmem:[%s2389 + $0x50] sm:$0xff]
    %v2401 = vld [vmem:[%s2389 + $0x58] sm:$0xff]
    %v2402 = vld [vmem:[%s2389 + $0x60] sm:$0xff]
    %v2403 = vld [vmem:[%s2389 + $0x68] sm:$0xff]
    %v2404 = vld [vmem:[%s2389 + $0x70] sm:$0xff]
    %v2405 = vld [vmem:[%s2389 + $0x78] sm:$0xff]
    %2406 = vmatpush.msra.mxu0 %v2405
    %2407 = vmatpush.msra.mxu0 %v2404
    %2408 = vmatpush.msra.mxu0 %v2403
    %2409 = vmatpush.msra.mxu0 %v2402
    %2410 = vmatpush.msra.mxu0 %v2401
    %2411 = vmatpush.msra.mxu0 %v2400
    %2412 = vmatpush.msra.mxu0 %v2399
    %2413 = vmatpush.msra.mxu0 %v2398
    %2414 = vmatpush.msra.mxu0 %v2397
    %2415 = vmatpush.msra.mxu0 %v2396
    %2416 = vmatpush.msra.mxu0 %v2395
    %2417 = vmatpush.msra.mxu0 %v2394
    %2418 = vmatpush.msra.mxu0 %v2393
    %2419 = vmatpush.msra.mxu0 %v2392
    %2420 = vmatpush.msra.mxu0 %v2391
    %2421 = vmatpush.msra.mxu0 %v2390
    %2422 = vmatmul.f32.gmra.mxu0 %v2325
    %v2423 = vpop.f32.mrf.mxu0
    %v2424 = vadd.f32 0.0, %v2423
    %2425 = vmatmul.f32.gmra.mxu0 %v2326
    %v2426 = vpop.f32.mrf.mxu0
    %v2427 = vadd.f32 0.0, %v2426
    %2428 = vmatmul.f32.gmra.mxu0 %v2327
    %v2429 = vpop.f32.mrf.mxu0
    %v2430 = vadd.f32 0.0, %v2429
    %2431 = vmatmul.f32.gmra.mxu0 %v2328
    %v2432 = vpop.f32.mrf.mxu0
    %v2433 = vadd.f32 0.0, %v2432
    %2434 = vmatmul.f32.gmra.mxu0 %v2329
    %v2435 = vpop.f32.mrf.mxu0
    %v2436 = vadd.f32 0.0, %v2435
    %2437 = vmatmul.f32.gmra.mxu0 %v2330
    %v2438 = vpop.f32.mrf.mxu0
    %v2439 = vadd.f32 0.0, %v2438
    %2440 = vmatmul.f32.gmra.mxu0 %v2331
    %v2441 = vpop.f32.mrf.mxu0
    %v2442 = vadd.f32 0.0, %v2441
    %2443 = vmatmul.f32.gmra.mxu0 %v2332
    %v2444 = vpop.f32.mrf.mxu0
    %v2445 = vadd.f32 0.0, %v2444
    %2446 = vmatmul.f32.gmra.mxu0 %v2333
    %v2447 = vpop.f32.mrf.mxu0
    %v2448 = vadd.f32 0.0, %v2447
    %2449 = vmatmul.f32.gmra.mxu0 %v2334
    %v2450 = vpop.f32.mrf.mxu0
    %v2451 = vadd.f32 0.0, %v2450
    %2452 = vmatmul.f32.gmra.mxu0 %v2335
    %v2453 = vpop.f32.mrf.mxu0
    %v2454 = vadd.f32 0.0, %v2453
    %2455 = vmatmul.f32.gmra.mxu0 %v2336
    %v2456 = vpop.f32.mrf.mxu0
    %v2457 = vadd.f32 0.0, %v2456
    %2458 = vmatmul.f32.gmra.mxu0 %v2337
    %v2459 = vpop.f32.mrf.mxu0
    %v2460 = vadd.f32 0.0, %v2459
    %2461 = vmatmul.f32.gmra.mxu0 %v2338
    %v2462 = vpop.f32.mrf.mxu0
    %v2463 = vadd.f32 0.0, %v2462
    %2464 = vmatmul.f32.gmra.mxu0 %v2339
    %v2465 = vpop.f32.mrf.mxu0
    %v2466 = vadd.f32 0.0, %v2465
    %2467 = vmatmul.f32.gmra.mxu0 %v2340
    %v2468 = vpop.f32.mrf.mxu0
    %v2469 = vadd.f32 0.0, %v2468
    %2470 = vmatmul.f32.gmra.mxu0 %v2341
    %v2471 = vpop.f32.mrf.mxu0
    %v2472 = vadd.f32 0.0, %v2471
    %2473 = vmatmul.f32.gmra.mxu0 %v2342
    %v2474 = vpop.f32.mrf.mxu0
    %v2475 = vadd.f32 0.0, %v2474
    %2476 = vmatmul.f32.gmra.mxu0 %v2343
    %v2477 = vpop.f32.mrf.mxu0
    %v2478 = vadd.f32 0.0, %v2477
    %2479 = vmatmul.f32.gmra.mxu0 %v2344
    %v2480 = vpop.f32.mrf.mxu0
    %v2481 = vadd.f32 0.0, %v2480
    %2482 = vmatmul.f32.gmra.mxu0 %v2345
    %v2483 = vpop.f32.mrf.mxu0
    %v2484 = vadd.f32 0.0, %v2483
    %2485 = vmatmul.f32.gmra.mxu0 %v2346
    %v2486 = vpop.f32.mrf.mxu0
    %v2487 = vadd.f32 0.0, %v2486
    %2488 = vmatmul.f32.gmra.mxu0 %v2347
    %v2489 = vpop.f32.mrf.mxu0
    %v2490 = vadd.f32 0.0, %v2489
    %2491 = vmatmul.f32.gmra.mxu0 %v2348
    %v2492 = vpop.f32.mrf.mxu0
    %v2493 = vadd.f32 0.0, %v2492
    %2494 = vmatmul.f32.gmra.mxu0 %v2349
    %v2495 = vpop.f32.mrf.mxu0
    %v2496 = vadd.f32 0.0, %v2495
    %2497 = vmatmul.f32.gmra.mxu0 %v2350
    %v2498 = vpop.f32.mrf.mxu0
    %v2499 = vadd.f32 0.0, %v2498
    %2500 = vmatmul.f32.gmra.mxu0 %v2351
    %v2501 = vpop.f32.mrf.mxu0
    %v2502 = vadd.f32 0.0, %v2501
    %2503 = vmatmul.f32.gmra.mxu0 %v2352
    %v2504 = vpop.f32.mrf.mxu0
    %v2505 = vadd.f32 0.0, %v2504
    %2506 = vmatmul.f32.gmra.mxu0 %v2353
    %v2507 = vpop.f32.mrf.mxu0
    %v2508 = vadd.f32 0.0, %v2507
    %2509 = vmatmul.f32.gmra.mxu0 %v2354
    %v2510 = vpop.f32.mrf.mxu0
    %v2511 = vadd.f32 0.0, %v2510
    %2512 = vmatmul.f32.gmra.mxu0 %v2355
    %v2513 = vpop.f32.mrf.mxu0
    %v2514 = vadd.f32 0.0, %v2513
    %2515 = vmatmul.f32.gmra.mxu0 %v2356
    %v2516 = vpop.f32.mrf.mxu0
    %v2517 = vadd.f32 0.0, %v2516
    %2518 = vmatmul.f32.gmra.mxu0 %v2357
    %v2519 = vpop.f32.mrf.mxu0
    %v2520 = vadd.f32 0.0, %v2519
    %2521 = vmatmul.f32.gmra.mxu0 %v2358
    %v2522 = vpop.f32.mrf.mxu0
    %v2523 = vadd.f32 0.0, %v2522
    %2524 = vmatmul.f32.gmra.mxu0 %v2359
    %v2525 = vpop.f32.mrf.mxu0
    %v2526 = vadd.f32 0.0, %v2525
    %2527 = vmatmul.f32.gmra.mxu0 %v2360
    %v2528 = vpop.f32.mrf.mxu0
    %v2529 = vadd.f32 0.0, %v2528
    %2530 = vmatmul.f32.gmra.mxu0 %v2361
    %v2531 = vpop.f32.mrf.mxu0
    %v2532 = vadd.f32 0.0, %v2531
    %2533 = vmatmul.f32.gmra.mxu0 %v2362
    %v2534 = vpop.f32.mrf.mxu0
    %v2535 = vadd.f32 0.0, %v2534
    %2536 = vmatmul.f32.gmra.mxu0 %v2363
    %v2537 = vpop.f32.mrf.mxu0
    %v2538 = vadd.f32 0.0, %v2537
    %2539 = vmatmul.f32.gmra.mxu0 %v2364
    %v2540 = vpop.f32.mrf.mxu0
    %v2541 = vadd.f32 0.0, %v2540
    %2542 = vmatmul.f32.gmra.mxu0 %v2365
    %v2543 = vpop.f32.mrf.mxu0
    %v2544 = vadd.f32 0.0, %v2543
    %2545 = vmatmul.f32.gmra.mxu0 %v2366
    %v2546 = vpop.f32.mrf.mxu0
    %v2547 = vadd.f32 0.0, %v2546
    %2548 = vmatmul.f32.gmra.mxu0 %v2367
    %v2549 = vpop.f32.mrf.mxu0
    %v2550 = vadd.f32 0.0, %v2549
    %2551 = vmatmul.f32.gmra.mxu0 %v2368
    %v2552 = vpop.f32.mrf.mxu0
    %v2553 = vadd.f32 0.0, %v2552
    %2554 = vmatmul.f32.gmra.mxu0 %v2369
    %v2555 = vpop.f32.mrf.mxu0
    %v2556 = vadd.f32 0.0, %v2555
    %2557 = vmatmul.f32.gmra.mxu0 %v2370
    %v2558 = vpop.f32.mrf.mxu0
    %v2559 = vadd.f32 0.0, %v2558
    %2560 = vmatmul.f32.gmra.mxu0 %v2371
    %v2561 = vpop.f32.mrf.mxu0
    %v2562 = vadd.f32 0.0, %v2561
    %2563 = vmatmul.f32.gmra.mxu0 %v2372
    %v2564 = vpop.f32.mrf.mxu0
    %v2565 = vadd.f32 0.0, %v2564
    %2566 = vmatmul.f32.gmra.mxu0 %v2373
    %v2567 = vpop.f32.mrf.mxu0
    %v2568 = vadd.f32 0.0, %v2567
    %2569 = vmatmul.f32.gmra.mxu0 %v2374
    %v2570 = vpop.f32.mrf.mxu0
    %v2571 = vadd.f32 0.0, %v2570
    %2572 = vmatmul.f32.gmra.mxu0 %v2375
    %v2573 = vpop.f32.mrf.mxu0
    %v2574 = vadd.f32 0.0, %v2573
    %2575 = vmatmul.f32.gmra.mxu0 %v2376
    %v2576 = vpop.f32.mrf.mxu0
    %v2577 = vadd.f32 0.0, %v2576
    %2578 = vmatmul.f32.gmra.mxu0 %v2377
    %v2579 = vpop.f32.mrf.mxu0
    %v2580 = vadd.f32 0.0, %v2579
    %2581 = vmatmul.f32.gmra.mxu0 %v2378
    %v2582 = vpop.f32.mrf.mxu0
    %v2583 = vadd.f32 0.0, %v2582
    %2584 = vmatmul.f32.gmra.mxu0 %v2379
    %v2585 = vpop.f32.mrf.mxu0
    %v2586 = vadd.f32 0.0, %v2585
    %2587 = vmatmul.f32.gmra.mxu0 %v2380
    %v2588 = vpop.f32.mrf.mxu0
    %v2589 = vadd.f32 0.0, %v2588
    %2590 = vmatmul.f32.gmra.mxu0 %v2381
    %v2591 = vpop.f32.mrf.mxu0
    %v2592 = vadd.f32 0.0, %v2591
    %2593 = vmatmul.f32.gmra.mxu0 %v2382
    %v2594 = vpop.f32.mrf.mxu0
    %v2595 = vadd.f32 0.0, %v2594
    %2596 = vmatmul.f32.gmra.mxu0 %v2383
    %v2597 = vpop.f32.mrf.mxu0
    %v2598 = vadd.f32 0.0, %v2597
    %2599 = vmatmul.f32.gmra.mxu0 %v2384
    %v2600 = vpop.f32.mrf.mxu0
    %v2601 = vadd.f32 0.0, %v2600
    %2602 = vmatmul.f32.gmra.mxu0 %v2385
    %v2603 = vpop.f32.mrf.mxu0
    %v2604 = vadd.f32 0.0, %v2603
    %2605 = vmatmul.f32.gmra.mxu0 %v2386
    %v2606 = vpop.f32.mrf.mxu0
    %v2607 = vadd.f32 0.0, %v2606
    %2608 = vmatmul.f32.gmra.mxu0 %v2387
    %v2609 = vpop.f32.mrf.mxu0
    %v2610 = vadd.f32 0.0, %v2609
    %2611 = vmatmul.f32.gmra.mxu0 %v2388
    %v2612 = vpop.f32.mrf.mxu0
    %v2613 = vadd.f32 0.0, %v2612
    %2614 = vdwg.mxu0
    %v2615 = vld [vmem:[#allocation3] sm:$0xff]
    %v2616 = vld [vmem:[#allocation3 + $0x8] sm:$0xff]
    %v2617 = vld [vmem:[#allocation3 + $0x10] sm:$0xff]
    %v2618 = vld [vmem:[#allocation3 + $0x18] sm:$0xff]
    %v2619 = vld [vmem:[#allocation3 + $0x20] sm:$0xff]
    %v2620 = vld [vmem:[#allocation3 + $0x28] sm:$0xff]
    %v2621 = vld [vmem:[#allocation3 + $0x30] sm:$0xff]
    %v2622 = vld [vmem:[#allocation3 + $0x38] sm:$0xff]
    %v2623 = vld [vmem:[#allocation3 + $0x40] sm:$0xff]
    %v2624 = vld [vmem:[#allocation3 + $0x48] sm:$0xff]
    %v2625 = vld [vmem:[#allocation3 + $0x50] sm:$0xff]
    %v2626 = vld [vmem:[#allocation3 + $0x58] sm:$0xff]
    %v2627 = vld [vmem:[#allocation3 + $0x60] sm:$0xff]
    %v2628 = vld [vmem:[#allocation3 + $0x68] sm:$0xff]
    %v2629 = vld [vmem:[#allocation3 + $0x70] sm:$0xff]
    %v2630 = vld [vmem:[#allocation3 + $0x78] sm:$0xff]
    %v2631 = vld [vmem:[#allocation3 + $0x80] sm:$0xff]
    %v2632 = vld [vmem:[#allocation3 + $0x88] sm:$0xff]
    %v2633 = vld [vmem:[#allocation3 + $0x90] sm:$0xff]
    %v2634 = vld [vmem:[#allocation3 + $0x98] sm:$0xff]
    %v2635 = vld [vmem:[#allocation3 + $0xa0] sm:$0xff]
    %v2636 = vld [vmem:[#allocation3 + $0xa8] sm:$0xff]
    %v2637 = vld [vmem:[#allocation3 + $0xb0] sm:$0xff]
    %v2638 = vld [vmem:[#allocation3 + $0xb8] sm:$0xff]
    %v2639 = vld [vmem:[#allocation3 + $0xc0] sm:$0xff]
    %v2640 = vld [vmem:[#allocation3 + $0xc8] sm:$0xff]
    %v2641 = vld [vmem:[#allocation3 + $0xd0] sm:$0xff]
    %v2642 = vld [vmem:[#allocation3 + $0xd8] sm:$0xff]
    %v2643 = vld [vmem:[#allocation3 + $0xe0] sm:$0xff]
    %v2644 = vld [vmem:[#allocation3 + $0xe8] sm:$0xff]
    %v2645 = vld [vmem:[#allocation3 + $0xf0] sm:$0xff]
    %v2646 = vld [vmem:[#allocation3 + $0xf8] sm:$0xff]
    %v2647 = vld [vmem:[#allocation3 + $0x100] sm:$0xff]
    %v2648 = vld [vmem:[#allocation3 + $0x108] sm:$0xff]
    %v2649 = vld [vmem:[#allocation3 + $0x110] sm:$0xff]
    %v2650 = vld [vmem:[#allocation3 + $0x118] sm:$0xff]
    %v2651 = vld [vmem:[#allocation3 + $0x120] sm:$0xff]
    %v2652 = vld [vmem:[#allocation3 + $0x128] sm:$0xff]
    %v2653 = vld [vmem:[#allocation3 + $0x130] sm:$0xff]
    %v2654 = vld [vmem:[#allocation3 + $0x138] sm:$0xff]
    %v2655 = vld [vmem:[#allocation3 + $0x140] sm:$0xff]
    %v2656 = vld [vmem:[#allocation3 + $0x148] sm:$0xff]
    %v2657 = vld [vmem:[#allocation3 + $0x150] sm:$0xff]
    %v2658 = vld [vmem:[#allocation3 + $0x158] sm:$0xff]
    %v2659 = vld [vmem:[#allocation3 + $0x160] sm:$0xff]
    %v2660 = vld [vmem:[#allocation3 + $0x168] sm:$0xff]
    %v2661 = vld [vmem:[#allocation3 + $0x170] sm:$0xff]
    %v2662 = vld [vmem:[#allocation3 + $0x178] sm:$0xff]
    %v2663 = vld [vmem:[#allocation3 + $0x180] sm:$0xff]
    %v2664 = vld [vmem:[#allocation3 + $0x188] sm:$0xff]
    %v2665 = vld [vmem:[#allocation3 + $0x190] sm:$0xff]
    %v2666 = vld [vmem:[#allocation3 + $0x198] sm:$0xff]
    %v2667 = vld [vmem:[#allocation3 + $0x1a0] sm:$0xff]
    %v2668 = vld [vmem:[#allocation3 + $0x1a8] sm:$0xff]
    %v2669 = vld [vmem:[#allocation3 + $0x1b0] sm:$0xff]
    %v2670 = vld [vmem:[#allocation3 + $0x1b8] sm:$0xff]
    %v2671 = vld [vmem:[#allocation3 + $0x1c0] sm:$0xff]
    %v2672 = vld [vmem:[#allocation3 + $0x1c8] sm:$0xff]
    %v2673 = vld [vmem:[#allocation3 + $0x1d0] sm:$0xff]
    %v2674 = vld [vmem:[#allocation3 + $0x1d8] sm:$0xff]
    %v2675 = vld [vmem:[#allocation3 + $0x1e0] sm:$0xff]
    %v2676 = vld [vmem:[#allocation3 + $0x1e8] sm:$0xff]
    %v2677 = vld [vmem:[#allocation3 + $0x1f0] sm:$0xff]
    %v2678 = vld [vmem:[#allocation3 + $0x1f8] sm:$0xff]
    %v2679 = vadd.f32 %v2615, %v2424
    %v2680 = vadd.f32 %v2616, %v2427
    %v2681 = vadd.f32 %v2617, %v2430
    %v2682 = vadd.f32 %v2618, %v2433
    %v2683 = vadd.f32 %v2619, %v2436
    %v2684 = vadd.f32 %v2620, %v2439
    %v2685 = vadd.f32 %v2621, %v2442
    %v2686 = vadd.f32 %v2622, %v2445
    %v2687 = vadd.f32 %v2623, %v2448
    %v2688 = vadd.f32 %v2624, %v2451
    %v2689 = vadd.f32 %v2625, %v2454
    %v2690 = vadd.f32 %v2626, %v2457
    %v2691 = vadd.f32 %v2627, %v2460
    %v2692 = vadd.f32 %v2628, %v2463
    %v2693 = vadd.f32 %v2629, %v2466
    %v2694 = vadd.f32 %v2630, %v2469
    %v2695 = vadd.f32 %v2631, %v2472
    %v2696 = vadd.f32 %v2632, %v2475
    %v2697 = vadd.f32 %v2633, %v2478
    %v2698 = vadd.f32 %v2634, %v2481
    %v2699 = vadd.f32 %v2635, %v2484
    %v2700 = vadd.f32 %v2636, %v2487
    %v2701 = vadd.f32 %v2637, %v2490
    %v2702 = vadd.f32 %v2638, %v2493
    %v2703 = vadd.f32 %v2639, %v2496
    %v2704 = vadd.f32 %v2640, %v2499
    %v2705 = vadd.f32 %v2641, %v2502
    %v2706 = vadd.f32 %v2642, %v2505
    %v2707 = vadd.f32 %v2643, %v2508
    %v2708 = vadd.f32 %v2644, %v2511
    %v2709 = vadd.f32 %v2645, %v2514
    %v2710 = vadd.f32 %v2646, %v2517
    %v2711 = vadd.f32 %v2647, %v2520
    %v2712 = vadd.f32 %v2648, %v2523
    %v2713 = vadd.f32 %v2649, %v2526
    %v2714 = vadd.f32 %v2650, %v2529
    %v2715 = vadd.f32 %v2651, %v2532
    %v2716 = vadd.f32 %v2652, %v2535
    %v2717 = vadd.f32 %v2653, %v2538
    %v2718 = vadd.f32 %v2654, %v2541
    %v2719 = vadd.f32 %v2655, %v2544
    %v2720 = vadd.f32 %v2656, %v2547
    %v2721 = vadd.f32 %v2657, %v2550
    %v2722 = vadd.f32 %v2658, %v2553
    %v2723 = vadd.f32 %v2659, %v2556
    %v2724 = vadd.f32 %v2660, %v2559
    %v2725 = vadd.f32 %v2661, %v2562
    %v2726 = vadd.f32 %v2662, %v2565
    %v2727 = vadd.f32 %v2663, %v2568
    %v2728 = vadd.f32 %v2664, %v2571
    %v2729 = vadd.f32 %v2665, %v2574
    %v2730 = vadd.f32 %v2666, %v2577
    %v2731 = vadd.f32 %v2667, %v2580
    %v2732 = vadd.f32 %v2668, %v2583
    %v2733 = vadd.f32 %v2669, %v2586
    %v2734 = vadd.f32 %v2670, %v2589
    %v2735 = vadd.f32 %v2671, %v2592
    %v2736 = vadd.f32 %v2672, %v2595
    %v2737 = vadd.f32 %v2673, %v2598
    %v2738 = vadd.f32 %v2674, %v2601
    %v2739 = vadd.f32 %v2675, %v2604
    %v2740 = vadd.f32 %v2676, %v2607
    %v2741 = vadd.f32 %v2677, %v2610
    %v2742 = vadd.f32 %v2678, %v2613
    %2743 = vst [vmem:[#allocation3] sm:$0xff] %v2679
    %2744 = vst [vmem:[#allocation3 + $0x8] sm:$0xff] %v2680
    %2745 = vst [vmem:[#allocation3 + $0x10] sm:$0xff] %v2681
    %2746 = vst [vmem:[#allocation3 + $0x18] sm:$0xff] %v2682
    %2747 = vst [vmem:[#allocation3 + $0x20] sm:$0xff] %v2683
    %2748 = vst [vmem:[#allocation3 + $0x28] sm:$0xff] %v2684
    %2749 = vst [vmem:[#allocation3 + $0x30] sm:$0xff] %v2685
    %2750 = vst [vmem:[#allocation3 + $0x38] sm:$0xff] %v2686
    %2751 = vst [vmem:[#allocation3 + $0x40] sm:$0xff] %v2687
    %2752 = vst [vmem:[#allocation3 + $0x48] sm:$0xff] %v2688
    %2753 = vst [vmem:[#allocation3 + $0x50] sm:$0xff] %v2689
    %2754 = vst [vmem:[#allocation3 + $0x58] sm:$0xff] %v2690
    %2755 = vst [vmem:[#allocation3 + $0x60] sm:$0xff] %v2691
    %2756 = vst [vmem:[#allocation3 + $0x68] sm:$0xff] %v2692
    %2757 = vst [vmem:[#allocation3 + $0x70] sm:$0xff] %v2693
    %2758 = vst [vmem:[#allocation3 + $0x78] sm:$0xff] %v2694
    %2759 = vst [vmem:[#allocation3 + $0x80] sm:$0xff] %v2695
    %2760 = vst [vmem:[#allocation3 + $0x88] sm:$0xff] %v2696
    %2761 = vst [vmem:[#allocation3 + $0x90] sm:$0xff] %v2697
    %2762 = vst [vmem:[#allocation3 + $0x98] sm:$0xff] %v2698
    %2763 = vst [vmem:[#allocation3 + $0xa0] sm:$0xff] %v2699
    %2764 = vst [vmem:[#allocation3 + $0xa8] sm:$0xff] %v2700
    %2765 = vst [vmem:[#allocation3 + $0xb0] sm:$0xff] %v2701
    %2766 = vst [vmem:[#allocation3 + $0xb8] sm:$0xff] %v2702
    %2767 = vst [vmem:[#allocation3 + $0xc0] sm:$0xff] %v2703
    %2768 = vst [vmem:[#allocation3 + $0xc8] sm:$0xff] %v2704
    %2769 = vst [vmem:[#allocation3 + $0xd0] sm:$0xff] %v2705
    %2770 = vst [vmem:[#allocation3 + $0xd8] sm:$0xff] %v2706
    %2771 = vst [vmem:[#allocation3 + $0xe0] sm:$0xff] %v2707
    %2772 = vst [vmem:[#allocation3 + $0xe8] sm:$0xff] %v2708
    %2773 = vst [vmem:[#allocation3 + $0xf0] sm:$0xff] %v2709
    %2774 = vst [vmem:[#allocation3 + $0xf8] sm:$0xff] %v2710
    %2775 = vst [vmem:[#allocation3 + $0x100] sm:$0xff] %v2711
    %2776 = vst [vmem:[#allocation3 + $0x108] sm:$0xff] %v2712
    %2777 = vst [vmem:[#allocation3 + $0x110] sm:$0xff] %v2713
    %2778 = vst [vmem:[#allocation3 + $0x118] sm:$0xff] %v2714
    %2779 = vst [vmem:[#allocation3 + $0x120] sm:$0xff] %v2715
    %2780 = vst [vmem:[#allocation3 + $0x128] sm:$0xff] %v2716
    %2781 = vst [vmem:[#allocation3 + $0x130] sm:$0xff] %v2717
    %2782 = vst [vmem:[#allocation3 + $0x138] sm:$0xff] %v2718
    %2783 = vst [vmem:[#allocation3 + $0x140] sm:$0xff] %v2719
    %2784 = vst [vmem:[#allocation3 + $0x148] sm:$0xff] %v2720
    %2785 = vst [vmem:[#allocation3 + $0x150] sm:$0xff] %v2721
    %2786 = vst [vmem:[#allocation3 + $0x158] sm:$0xff] %v2722
    %2787 = vst [vmem:[#allocation3 + $0x160] sm:$0xff] %v2723
    %2788 = vst [vmem:[#allocation3 + $0x168] sm:$0xff] %v2724
    %2789 = vst [vmem:[#allocation3 + $0x170] sm:$0xff] %v2725
    %2790 = vst [vmem:[#allocation3 + $0x178] sm:$0xff] %v2726
    %2791 = vst [vmem:[#allocation3 + $0x180] sm:$0xff] %v2727
    %2792 = vst [vmem:[#allocation3 + $0x188] sm:$0xff] %v2728
    %2793 = vst [vmem:[#allocation3 + $0x190] sm:$0xff] %v2729
    %2794 = vst [vmem:[#allocation3 + $0x198] sm:$0xff] %v2730
    %2795 = vst [vmem:[#allocation3 + $0x1a0] sm:$0xff] %v2731
    %2796 = vst [vmem:[#allocation3 + $0x1a8] sm:$0xff] %v2732
    %2797 = vst [vmem:[#allocation3 + $0x1b0] sm:$0xff] %v2733
    %2798 = vst [vmem:[#allocation3 + $0x1b8] sm:$0xff] %v2734
    %2799 = vst [vmem:[#allocation3 + $0x1c0] sm:$0xff] %v2735
    %2800 = vst [vmem:[#allocation3 + $0x1c8] sm:$0xff] %v2736
    %2801 = vst [vmem:[#allocation3 + $0x1d0] sm:$0xff] %v2737
    %2802 = vst [vmem:[#allocation3 + $0x1d8] sm:$0xff] %v2738
    %2803 = vst [vmem:[#allocation3 + $0x1e0] sm:$0xff] %v2739
    %2804 = vst [vmem:[#allocation3 + $0x1e8] sm:$0xff] %v2740
    %2805 = vst [vmem:[#allocation3 + $0x1f0] sm:$0xff] %v2741
    %2806 = vst [vmem:[#allocation3 + $0x1f8] sm:$0xff] %v2742
    %s2807 = scalar_lea.vmem %s0, 48
    %v2808 = vld [vmem:[%s2807] sm:$0xff]
    %v2809 = vld [vmem:[%s2807 + $0x8] sm:$0xff]
    %v2810 = vld [vmem:[%s2807 + $0x18] sm:$0xff]
    %v2811 = vld [vmem:[%s2807 + $0x20] sm:$0xff]
    %v2812 = vld [vmem:[%s2807 + $0x30] sm:$0xff]
    %v2813 = vld [vmem:[%s2807 + $0x38] sm:$0xff]
    %v2814 = vld [vmem:[%s2807 + $0x48] sm:$0xff]
    %v2815 = vld [vmem:[%s2807 + $0x50] sm:$0xff]
    %v2816 = vld [vmem:[%s2807 + $0x60] sm:$0xff]
    %v2817 = vld [vmem:[%s2807 + $0x68] sm:$0xff]
    %v2818 = vld [vmem:[%s2807 + $0x78] sm:$0xff]
    %v2819 = vld [vmem:[%s2807 + $0x80] sm:$0xff]
    %v2820 = vld [vmem:[%s2807 + $0x90] sm:$0xff]
    %v2821 = vld [vmem:[%s2807 + $0x98] sm:$0xff]
    %v2822 = vld [vmem:[%s2807 + $0xa8] sm:$0xff]
    %v2823 = vld [vmem:[%s2807 + $0xb0] sm:$0xff]
    %v2824 = vld [vmem:[%s2807 + $0xc0] sm:$0xff]
    %v2825 = vld [vmem:[%s2807 + $0xc8] sm:$0xff]
    %v2826 = vld [vmem:[%s2807 + $0xd8] sm:$0xff]
    %v2827 = vld [vmem:[%s2807 + $0xe0] sm:$0xff]
    %v2828 = vld [vmem:[%s2807 + $0xf0] sm:$0xff]
    %v2829 = vld [vmem:[%s2807 + $0xf8] sm:$0xff]
    %v2830 = vld [vmem:[%s2807 + $0x108] sm:$0xff]
    %v2831 = vld [vmem:[%s2807 + $0x110] sm:$0xff]
    %v2832 = vld [vmem:[%s2807 + $0x120] sm:$0xff]
    %v2833 = vld [vmem:[%s2807 + $0x128] sm:$0xff]
    %v2834 = vld [vmem:[%s2807 + $0x138] sm:$0xff]
    %v2835 = vld [vmem:[%s2807 + $0x140] sm:$0xff]
    %v2836 = vld [vmem:[%s2807 + $0x150] sm:$0xff]
    %v2837 = vld [vmem:[%s2807 + $0x158] sm:$0xff]
    %v2838 = vld [vmem:[%s2807 + $0x168] sm:$0xff]
    %v2839 = vld [vmem:[%s2807 + $0x170] sm:$0xff]
    %v2840 = vld [vmem:[%s2807 + $0x1b0] sm:$0xff]
    %v2841 = vld [vmem:[%s2807 + $0x1b8] sm:$0xff]
    %v2842 = vld [vmem:[%s2807 + $0x1c8] sm:$0xff]
    %v2843 = vld [vmem:[%s2807 + $0x1d0] sm:$0xff]
    %v2844 = vld [vmem:[%s2807 + $0x1e0] sm:$0xff]
    %v2845 = vld [vmem:[%s2807 + $0x1e8] sm:$0xff]
    %v2846 = vld [vmem:[%s2807 + $0x1f8] sm:$0xff]
    %v2847 = vld [vmem:[%s2807 + $0x200] sm:$0xff]
    %v2848 = vld [vmem:[%s2807 + $0x210] sm:$0xff]
    %v2849 = vld [vmem:[%s2807 + $0x218] sm:$0xff]
    %v2850 = vld [vmem:[%s2807 + $0x228] sm:$0xff]
    %v2851 = vld [vmem:[%s2807 + $0x230] sm:$0xff]
    %v2852 = vld [vmem:[%s2807 + $0x240] sm:$0xff]
    %v2853 = vld [vmem:[%s2807 + $0x248] sm:$0xff]
    %v2854 = vld [vmem:[%s2807 + $0x258] sm:$0xff]
    %v2855 = vld [vmem:[%s2807 + $0x260] sm:$0xff]
    %v2856 = vld [vmem:[%s2807 + $0x270] sm:$0xff]
    %v2857 = vld [vmem:[%s2807 + $0x278] sm:$0xff]
    %v2858 = vld [vmem:[%s2807 + $0x288] sm:$0xff]
    %v2859 = vld [vmem:[%s2807 + $0x290] sm:$0xff]
    %v2860 = vld [vmem:[%s2807 + $0x2a0] sm:$0xff]
    %v2861 = vld [vmem:[%s2807 + $0x2a8] sm:$0xff]
    %v2862 = vld [vmem:[%s2807 + $0x2b8] sm:$0xff]
    %v2863 = vld [vmem:[%s2807 + $0x2c0] sm:$0xff]
    %v2864 = vld [vmem:[%s2807 + $0x2d0] sm:$0xff]
    %v2865 = vld [vmem:[%s2807 + $0x2d8] sm:$0xff]
    %v2866 = vld [vmem:[%s2807 + $0x2e8] sm:$0xff]
    %v2867 = vld [vmem:[%s2807 + $0x2f0] sm:$0xff]
    %v2868 = vld [vmem:[%s2807 + $0x300] sm:$0xff]
    %v2869 = vld [vmem:[%s2807 + $0x308] sm:$0xff]
    %v2870 = vld [vmem:[%s2807 + $0x318] sm:$0xff]
    %v2871 = vld [vmem:[%s2807 + $0x320] sm:$0xff]
    %s2872 = scalar_lea.vmem %s1, 768
    %v2873 = vld [vmem:[%s2872] sm:$0xff]
    %v2874 = vld [vmem:[%s2872 + $0x8] sm:$0xff]
    %v2875 = vld [vmem:[%s2872 + $0x10] sm:$0xff]
    %v2876 = vld [vmem:[%s2872 + $0x18] sm:$0xff]
    %v2877 = vld [vmem:[%s2872 + $0x20] sm:$0xff]
    %v2878 = vld [vmem:[%s2872 + $0x28] sm:$0xff]
    %v2879 = vld [vmem:[%s2872 + $0x30] sm:$0xff]
    %v2880 = vld [vmem:[%s2872 + $0x38] sm:$0xff]
    %v2881 = vld [vmem:[%s2872 + $0x40] sm:$0xff]
    %v2882 = vld [vmem:[%s2872 + $0x48] sm:$0xff]
    %v2883 = vld [vmem:[%s2872 + $0x50] sm:$0xff]
    %v2884 = vld [vmem:[%s2872 + $0x58] sm:$0xff]
    %v2885 = vld [vmem:[%s2872 + $0x60] sm:$0xff]
    %v2886 = vld [vmem:[%s2872 + $0x68] sm:$0xff]
    %v2887 = vld [vmem:[%s2872 + $0x70] sm:$0xff]
    %v2888 = vld [vmem:[%s2872 + $0x78] sm:$0xff]
    %2889 = vmatpush.msra.mxu0 %v2888
    %2890 = vmatpush.msra.mxu0 %v2887
    %2891 = vmatpush.msra.mxu0 %v2886
    %2892 = vmatpush.msra.mxu0 %v2885
    %2893 = vmatpush.msra.mxu0 %v2884
    %2894 = vmatpush.msra.mxu0 %v2883
    %2895 = vmatpush.msra.mxu0 %v2882
    %2896 = vmatpush.msra.mxu0 %v2881
    %2897 = vmatpush.msra.mxu0 %v2880
    %2898 = vmatpush.msra.mxu0 %v2879
    %2899 = vmatpush.msra.mxu0 %v2878
    %2900 = vmatpush.msra.mxu0 %v2877
    %2901 = vmatpush.msra.mxu0 %v2876
    %2902 = vmatpush.msra.mxu0 %v2875
    %2903 = vmatpush.msra.mxu0 %v2874
    %2904 = vmatpush.msra.mxu0 %v2873
    %2905 = vmatmul.f32.gmra.mxu0 %v2808
    %v2906 = vpop.f32.mrf.mxu0
    %v2907 = vadd.f32 0.0, %v2906
    %2908 = vmatmul.f32.gmra.mxu0 %v2809
    %v2909 = vpop.f32.mrf.mxu0
    %v2910 = vadd.f32 0.0, %v2909
    %2911 = vmatmul.f32.gmra.mxu0 %v2810
    %v2912 = vpop.f32.mrf.mxu0
    %v2913 = vadd.f32 0.0, %v2912
    %2914 = vmatmul.f32.gmra.mxu0 %v2811
    %v2915 = vpop.f32.mrf.mxu0
    %v2916 = vadd.f32 0.0, %v2915
    %2917 = vmatmul.f32.gmra.mxu0 %v2812
    %v2918 = vpop.f32.mrf.mxu0
    %v2919 = vadd.f32 0.0, %v2918
    %2920 = vmatmul.f32.gmra.mxu0 %v2813
    %v2921 = vpop.f32.mrf.mxu0
    %v2922 = vadd.f32 0.0, %v2921
    %2923 = vmatmul.f32.gmra.mxu0 %v2814
    %v2924 = vpop.f32.mrf.mxu0
    %v2925 = vadd.f32 0.0, %v2924
    %2926 = vmatmul.f32.gmra.mxu0 %v2815
    %v2927 = vpop.f32.mrf.mxu0
    %v2928 = vadd.f32 0.0, %v2927
    %2929 = vmatmul.f32.gmra.mxu0 %v2816
    %v2930 = vpop.f32.mrf.mxu0
    %v2931 = vadd.f32 0.0, %v2930
    %2932 = vmatmul.f32.gmra.mxu0 %v2817
    %v2933 = vpop.f32.mrf.mxu0
    %v2934 = vadd.f32 0.0, %v2933
    %2935 = vmatmul.f32.gmra.mxu0 %v2818
    %v2936 = vpop.f32.mrf.mxu0
    %v2937 = vadd.f32 0.0, %v2936
    %2938 = vmatmul.f32.gmra.mxu0 %v2819
    %v2939 = vpop.f32.mrf.mxu0
    %v2940 = vadd.f32 0.0, %v2939
    %2941 = vmatmul.f32.gmra.mxu0 %v2820
    %v2942 = vpop.f32.mrf.mxu0
    %v2943 = vadd.f32 0.0, %v2942
    %2944 = vmatmul.f32.gmra.mxu0 %v2821
    %v2945 = vpop.f32.mrf.mxu0
    %v2946 = vadd.f32 0.0, %v2945
    %2947 = vmatmul.f32.gmra.mxu0 %v2822
    %v2948 = vpop.f32.mrf.mxu0
    %v2949 = vadd.f32 0.0, %v2948
    %2950 = vmatmul.f32.gmra.mxu0 %v2823
    %v2951 = vpop.f32.mrf.mxu0
    %v2952 = vadd.f32 0.0, %v2951
    %2953 = vmatmul.f32.gmra.mxu0 %v2824
    %v2954 = vpop.f32.mrf.mxu0
    %v2955 = vadd.f32 0.0, %v2954
    %2956 = vmatmul.f32.gmra.mxu0 %v2825
    %v2957 = vpop.f32.mrf.mxu0
    %v2958 = vadd.f32 0.0, %v2957
    %2959 = vmatmul.f32.gmra.mxu0 %v2826
    %v2960 = vpop.f32.mrf.mxu0
    %v2961 = vadd.f32 0.0, %v2960
    %2962 = vmatmul.f32.gmra.mxu0 %v2827
    %v2963 = vpop.f32.mrf.mxu0
    %v2964 = vadd.f32 0.0, %v2963
    %2965 = vmatmul.f32.gmra.mxu0 %v2828
    %v2966 = vpop.f32.mrf.mxu0
    %v2967 = vadd.f32 0.0, %v2966
    %2968 = vmatmul.f32.gmra.mxu0 %v2829
    %v2969 = vpop.f32.mrf.mxu0
    %v2970 = vadd.f32 0.0, %v2969
    %2971 = vmatmul.f32.gmra.mxu0 %v2830
    %v2972 = vpop.f32.mrf.mxu0
    %v2973 = vadd.f32 0.0, %v2972
    %2974 = vmatmul.f32.gmra.mxu0 %v2831
    %v2975 = vpop.f32.mrf.mxu0
    %v2976 = vadd.f32 0.0, %v2975
    %2977 = vmatmul.f32.gmra.mxu0 %v2832
    %v2978 = vpop.f32.mrf.mxu0
    %v2979 = vadd.f32 0.0, %v2978
    %2980 = vmatmul.f32.gmra.mxu0 %v2833
    %v2981 = vpop.f32.mrf.mxu0
    %v2982 = vadd.f32 0.0, %v2981
    %2983 = vmatmul.f32.gmra.mxu0 %v2834
    %v2984 = vpop.f32.mrf.mxu0
    %v2985 = vadd.f32 0.0, %v2984
    %2986 = vmatmul.f32.gmra.mxu0 %v2835
    %v2987 = vpop.f32.mrf.mxu0
    %v2988 = vadd.f32 0.0, %v2987
    %2989 = vmatmul.f32.gmra.mxu0 %v2836
    %v2990 = vpop.f32.mrf.mxu0
    %v2991 = vadd.f32 0.0, %v2990
    %2992 = vmatmul.f32.gmra.mxu0 %v2837
    %v2993 = vpop.f32.mrf.mxu0
    %v2994 = vadd.f32 0.0, %v2993
    %2995 = vmatmul.f32.gmra.mxu0 %v2838
    %v2996 = vpop.f32.mrf.mxu0
    %v2997 = vadd.f32 0.0, %v2996
    %2998 = vmatmul.f32.gmra.mxu0 %v2839
    %v2999 = vpop.f32.mrf.mxu0
    %v3000 = vadd.f32 0.0, %v2999
    %3001 = vmatmul.f32.gmra.mxu0 %v2840
    %v3002 = vpop.f32.mrf.mxu0
    %v3003 = vadd.f32 0.0, %v3002
    %3004 = vmatmul.f32.gmra.mxu0 %v2841
    %v3005 = vpop.f32.mrf.mxu0
    %v3006 = vadd.f32 0.0, %v3005
    %3007 = vmatmul.f32.gmra.mxu0 %v2842
    %v3008 = vpop.f32.mrf.mxu0
    %v3009 = vadd.f32 0.0, %v3008
    %3010 = vmatmul.f32.gmra.mxu0 %v2843
    %v3011 = vpop.f32.mrf.mxu0
    %v3012 = vadd.f32 0.0, %v3011
    %3013 = vmatmul.f32.gmra.mxu0 %v2844
    %v3014 = vpop.f32.mrf.mxu0
    %v3015 = vadd.f32 0.0, %v3014
    %3016 = vmatmul.f32.gmra.mxu0 %v2845
    %v3017 = vpop.f32.mrf.mxu0
    %v3018 = vadd.f32 0.0, %v3017
    %3019 = vmatmul.f32.gmra.mxu0 %v2846
    %v3020 = vpop.f32.mrf.mxu0
    %v3021 = vadd.f32 0.0, %v3020
    %3022 = vmatmul.f32.gmra.mxu0 %v2847
    %v3023 = vpop.f32.mrf.mxu0
    %v3024 = vadd.f32 0.0, %v3023
    %3025 = vmatmul.f32.gmra.mxu0 %v2848
    %v3026 = vpop.f32.mrf.mxu0
    %v3027 = vadd.f32 0.0, %v3026
    %3028 = vmatmul.f32.gmra.mxu0 %v2849
    %v3029 = vpop.f32.mrf.mxu0
    %v3030 = vadd.f32 0.0, %v3029
    %3031 = vmatmul.f32.gmra.mxu0 %v2850
    %v3032 = vpop.f32.mrf.mxu0
    %v3033 = vadd.f32 0.0, %v3032
    %3034 = vmatmul.f32.gmra.mxu0 %v2851
    %v3035 = vpop.f32.mrf.mxu0
    %v3036 = vadd.f32 0.0, %v3035
    %3037 = vmatmul.f32.gmra.mxu0 %v2852
    %v3038 = vpop.f32.mrf.mxu0
    %v3039 = vadd.f32 0.0, %v3038
    %3040 = vmatmul.f32.gmra.mxu0 %v2853
    %v3041 = vpop.f32.mrf.mxu0
    %v3042 = vadd.f32 0.0, %v3041
    %3043 = vmatmul.f32.gmra.mxu0 %v2854
    %v3044 = vpop.f32.mrf.mxu0
    %v3045 = vadd.f32 0.0, %v3044
    %3046 = vmatmul.f32.gmra.mxu0 %v2855
    %v3047 = vpop.f32.mrf.mxu0
    %v3048 = vadd.f32 0.0, %v3047
    %3049 = vmatmul.f32.gmra.mxu0 %v2856
    %v3050 = vpop.f32.mrf.mxu0
    %v3051 = vadd.f32 0.0, %v3050
    %3052 = vmatmul.f32.gmra.mxu0 %v2857
    %v3053 = vpop.f32.mrf.mxu0
    %v3054 = vadd.f32 0.0, %v3053
    %3055 = vmatmul.f32.gmra.mxu0 %v2858
    %v3056 = vpop.f32.mrf.mxu0
    %v3057 = vadd.f32 0.0, %v3056
    %3058 = vmatmul.f32.gmra.mxu0 %v2859
    %v3059 = vpop.f32.mrf.mxu0
    %v3060 = vadd.f32 0.0, %v3059
    %3061 = vmatmul.f32.gmra.mxu0 %v2860
    %v3062 = vpop.f32.mrf.mxu0
    %v3063 = vadd.f32 0.0, %v3062
    %3064 = vmatmul.f32.gmra.mxu0 %v2861
    %v3065 = vpop.f32.mrf.mxu0
    %v3066 = vadd.f32 0.0, %v3065
    %3067 = vmatmul.f32.gmra.mxu0 %v2862
    %v3068 = vpop.f32.mrf.mxu0
    %v3069 = vadd.f32 0.0, %v3068
    %3070 = vmatmul.f32.gmra.mxu0 %v2863
    %v3071 = vpop.f32.mrf.mxu0
    %v3072 = vadd.f32 0.0, %v3071
    %3073 = vmatmul.f32.gmra.mxu0 %v2864
    %v3074 = vpop.f32.mrf.mxu0
    %v3075 = vadd.f32 0.0, %v3074
    %3076 = vmatmul.f32.gmra.mxu0 %v2865
    %v3077 = vpop.f32.mrf.mxu0
    %v3078 = vadd.f32 0.0, %v3077
    %3079 = vmatmul.f32.gmra.mxu0 %v2866
    %v3080 = vpop.f32.mrf.mxu0
    %v3081 = vadd.f32 0.0, %v3080
    %3082 = vmatmul.f32.gmra.mxu0 %v2867
    %v3083 = vpop.f32.mrf.mxu0
    %v3084 = vadd.f32 0.0, %v3083
    %3085 = vmatmul.f32.gmra.mxu0 %v2868
    %v3086 = vpop.f32.mrf.mxu0
    %v3087 = vadd.f32 0.0, %v3086
    %3088 = vmatmul.f32.gmra.mxu0 %v2869
    %v3089 = vpop.f32.mrf.mxu0
    %v3090 = vadd.f32 0.0, %v3089
    %3091 = vmatmul.f32.gmra.mxu0 %v2870
    %v3092 = vpop.f32.mrf.mxu0
    %v3093 = vadd.f32 0.0, %v3092
    %3094 = vmatmul.f32.gmra.mxu0 %v2871
    %v3095 = vpop.f32.mrf.mxu0
    %v3096 = vadd.f32 0.0, %v3095
    %3097 = vdwg.mxu0
    %v3098 = vld [vmem:[#allocation3] sm:$0xff]
    %v3099 = vld [vmem:[#allocation3 + $0x8] sm:$0xff]
    %v3100 = vld [vmem:[#allocation3 + $0x10] sm:$0xff]
    %v3101 = vld [vmem:[#allocation3 + $0x18] sm:$0xff]
    %v3102 = vld [vmem:[#allocation3 + $0x20] sm:$0xff]
    %v3103 = vld [vmem:[#allocation3 + $0x28] sm:$0xff]
    %v3104 = vld [vmem:[#allocation3 + $0x30] sm:$0xff]
    %v3105 = vld [vmem:[#allocation3 + $0x38] sm:$0xff]
    %v3106 = vld [vmem:[#allocation3 + $0x40] sm:$0xff]
    %v3107 = vld [vmem:[#allocation3 + $0x48] sm:$0xff]
    %v3108 = vld [vmem:[#allocation3 + $0x50] sm:$0xff]
    %v3109 = vld [vmem:[#allocation3 + $0x58] sm:$0xff]
    %v3110 = vld [vmem:[#allocation3 + $0x60] sm:$0xff]
    %v3111 = vld [vmem:[#allocation3 + $0x68] sm:$0xff]
    %v3112 = vld [vmem:[#allocation3 + $0x70] sm:$0xff]
    %v3113 = vld [vmem:[#allocation3 + $0x78] sm:$0xff]
    %v3114 = vld [vmem:[#allocation3 + $0x80] sm:$0xff]
    %v3115 = vld [vmem:[#allocation3 + $0x88] sm:$0xff]
    %v3116 = vld [vmem:[#allocation3 + $0x90] sm:$0xff]
    %v3117 = vld [vmem:[#allocation3 + $0x98] sm:$0xff]
    %v3118 = vld [vmem:[#allocation3 + $0xa0] sm:$0xff]
    %v3119 = vld [vmem:[#allocation3 + $0xa8] sm:$0xff]
    %v3120 = vld [vmem:[#allocation3 + $0xb0] sm:$0xff]
    %v3121 = vld [vmem:[#allocation3 + $0xb8] sm:$0xff]
    %v3122 = vld [vmem:[#allocation3 + $0xc0] sm:$0xff]
    %v3123 = vld [vmem:[#allocation3 + $0xc8] sm:$0xff]
    %v3124 = vld [vmem:[#allocation3 + $0xd0] sm:$0xff]
    %v3125 = vld [vmem:[#allocation3 + $0xd8] sm:$0xff]
    %v3126 = vld [vmem:[#allocation3 + $0xe0] sm:$0xff]
    %v3127 = vld [vmem:[#allocation3 + $0xe8] sm:$0xff]
    %v3128 = vld [vmem:[#allocation3 + $0xf0] sm:$0xff]
    %v3129 = vld [vmem:[#allocation3 + $0xf8] sm:$0xff]
    %v3130 = vld [vmem:[#allocation3 + $0x100] sm:$0xff]
    %v3131 = vld [vmem:[#allocation3 + $0x108] sm:$0xff]
    %v3132 = vld [vmem:[#allocation3 + $0x110] sm:$0xff]
    %v3133 = vld [vmem:[#allocation3 + $0x118] sm:$0xff]
    %v3134 = vld [vmem:[#allocation3 + $0x120] sm:$0xff]
    %v3135 = vld [vmem:[#allocation3 + $0x128] sm:$0xff]
    %v3136 = vld [vmem:[#allocation3 + $0x130] sm:$0xff]
    %v3137 = vld [vmem:[#allocation3 + $0x138] sm:$0xff]
    %v3138 = vld [vmem:[#allocation3 + $0x140] sm:$0xff]
    %v3139 = vld [vmem:[#allocation3 + $0x148] sm:$0xff]
    %v3140 = vld [vmem:[#allocation3 + $0x150] sm:$0xff]
    %v3141 = vld [vmem:[#allocation3 + $0x158] sm:$0xff]
    %v3142 = vld [vmem:[#allocation3 + $0x160] sm:$0xff]
    %v3143 = vld [vmem:[#allocation3 + $0x168] sm:$0xff]
    %v3144 = vld [vmem:[#allocation3 + $0x170] sm:$0xff]
    %v3145 = vld [vmem:[#allocation3 + $0x178] sm:$0xff]
    %v3146 = vld [vmem:[#allocation3 + $0x180] sm:$0xff]
    %v3147 = vld [vmem:[#allocation3 + $0x188] sm:$0xff]
    %v3148 = vld [vmem:[#allocation3 + $0x190] sm:$0xff]
    %v3149 = vld [vmem:[#allocation3 + $0x198] sm:$0xff]
    %v3150 = vld [vmem:[#allocation3 + $0x1a0] sm:$0xff]
    %v3151 = vld [vmem:[#allocation3 + $0x1a8] sm:$0xff]
    %v3152 = vld [vmem:[#allocation3 + $0x1b0] sm:$0xff]
    %v3153 = vld [vmem:[#allocation3 + $0x1b8] sm:$0xff]
    %v3154 = vld [vmem:[#allocation3 + $0x1c0] sm:$0xff]
    %v3155 = vld [vmem:[#allocation3 + $0x1c8] sm:$0xff]
    %v3156 = vld [vmem:[#allocation3 + $0x1d0] sm:$0xff]
    %v3157 = vld [vmem:[#allocation3 + $0x1d8] sm:$0xff]
    %v3158 = vld [vmem:[#allocation3 + $0x1e0] sm:$0xff]
    %v3159 = vld [vmem:[#allocation3 + $0x1e8] sm:$0xff]
    %v3160 = vld [vmem:[#allocation3 + $0x1f0] sm:$0xff]
    %v3161 = vld [vmem:[#allocation3 + $0x1f8] sm:$0xff]
    %v3162 = vadd.f32 %v3098, %v2907
    %v3163 = vadd.f32 %v3099, %v2910
    %v3164 = vadd.f32 %v3100, %v2913
    %v3165 = vadd.f32 %v3101, %v2916
    %v3166 = vadd.f32 %v3102, %v2919
    %v3167 = vadd.f32 %v3103, %v2922
    %v3168 = vadd.f32 %v3104, %v2925
    %v3169 = vadd.f32 %v3105, %v2928
    %v3170 = vadd.f32 %v3106, %v2931
    %v3171 = vadd.f32 %v3107, %v2934
    %v3172 = vadd.f32 %v3108, %v2937
    %v3173 = vadd.f32 %v3109, %v2940
    %v3174 = vadd.f32 %v3110, %v2943
    %v3175 = vadd.f32 %v3111, %v2946
    %v3176 = vadd.f32 %v3112, %v2949
    %v3177 = vadd.f32 %v3113, %v2952
    %v3178 = vadd.f32 %v3114, %v2955
    %v3179 = vadd.f32 %v3115, %v2958
    %v3180 = vadd.f32 %v3116, %v2961
    %v3181 = vadd.f32 %v3117, %v2964
    %v3182 = vadd.f32 %v3118, %v2967
    %v3183 = vadd.f32 %v3119, %v2970
    %v3184 = vadd.f32 %v3120, %v2973
    %v3185 = vadd.f32 %v3121, %v2976
    %v3186 = vadd.f32 %v3122, %v2979
    %v3187 = vadd.f32 %v3123, %v2982
    %v3188 = vadd.f32 %v3124, %v2985
    %v3189 = vadd.f32 %v3125, %v2988
    %v3190 = vadd.f32 %v3126, %v2991
    %v3191 = vadd.f32 %v3127, %v2994
    %v3192 = vadd.f32 %v3128, %v2997
    %v3193 = vadd.f32 %v3129, %v3000
    %v3194 = vadd.f32 %v3130, %v3003
    %v3195 = vadd.f32 %v3131, %v3006
    %v3196 = vadd.f32 %v3132, %v3009
    %v3197 = vadd.f32 %v3133, %v3012
    %v3198 = vadd.f32 %v3134, %v3015
    %v3199 = vadd.f32 %v3135, %v3018
    %v3200 = vadd.f32 %v3136, %v3021
    %v3201 = vadd.f32 %v3137, %v3024
    %v3202 = vadd.f32 %v3138, %v3027
    %v3203 = vadd.f32 %v3139, %v3030
    %v3204 = vadd.f32 %v3140, %v3033
    %v3205 = vadd.f32 %v3141, %v3036
    %v3206 = vadd.f32 %v3142, %v3039
    %v3207 = vadd.f32 %v3143, %v3042
    %v3208 = vadd.f32 %v3144, %v3045
    %v3209 = vadd.f32 %v3145, %v3048
    %v3210 = vadd.f32 %v3146, %v3051
    %v3211 = vadd.f32 %v3147, %v3054
    %v3212 = vadd.f32 %v3148, %v3057
    %v3213 = vadd.f32 %v3149, %v3060
    %v3214 = vadd.f32 %v3150, %v3063
    %v3215 = vadd.f32 %v3151, %v3066
    %v3216 = vadd.f32 %v3152, %v3069
    %v3217 = vadd.f32 %v3153, %v3072
    %v3218 = vadd.f32 %v3154, %v3075
    %v3219 = vadd.f32 %v3155, %v3078
    %v3220 = vadd.f32 %v3156, %v3081
    %v3221 = vadd.f32 %v3157, %v3084
    %v3222 = vadd.f32 %v3158, %v3087
    %v3223 = vadd.f32 %v3159, %v3090
    %v3224 = vadd.f32 %v3160, %v3093
    %v3225 = vadd.f32 %v3161, %v3096
    %3226 = vst [vmem:[#allocation3] sm:$0xff] %v3162
    %3227 = vst [vmem:[#allocation3 + $0x8] sm:$0xff] %v3163
    %3228 = vst [vmem:[#allocation3 + $0x10] sm:$0xff] %v3164
    %3229 = vst [vmem:[#allocation3 + $0x18] sm:$0xff] %v3165
    %3230 = vst [vmem:[#allocation3 + $0x20] sm:$0xff] %v3166
    %3231 = vst [vmem:[#allocation3 + $0x28] sm:$0xff] %v3167
    %3232 = vst [vmem:[#allocation3 + $0x30] sm:$0xff] %v3168
    %3233 = vst [vmem:[#allocation3 + $0x38] sm:$0xff] %v3169
    %3234 = vst [vmem:[#allocation3 + $0x40] sm:$0xff] %v3170
    %3235 = vst [vmem:[#allocation3 + $0x48] sm:$0xff] %v3171
    %3236 = vst [vmem:[#allocation3 + $0x50] sm:$0xff] %v3172
    %3237 = vst [vmem:[#allocation3 + $0x58] sm:$0xff] %v3173
    %3238 = vst [vmem:[#allocation3 + $0x60] sm:$0xff] %v3174
    %3239 = vst [vmem:[#allocation3 + $0x68] sm:$0xff] %v3175
    %3240 = vst [vmem:[#allocation3 + $0x70] sm:$0xff] %v3176
    %3241 = vst [vmem:[#allocation3 + $0x78] sm:$0xff] %v3177
    %3242 = vst [vmem:[#allocation3 + $0x80] sm:$0xff] %v3178
    %3243 = vst [vmem:[#allocation3 + $0x88] sm:$0xff] %v3179
    %3244 = vst [vmem:[#allocation3 + $0x90] sm:$0xff] %v3180
    %3245 = vst [vmem:[#allocation3 + $0x98] sm:$0xff] %v3181
    %3246 = vst [vmem:[#allocation3 + $0xa0] sm:$0xff] %v3182
    %3247 = vst [vmem:[#allocation3 + $0xa8] sm:$0xff] %v3183
    %3248 = vst [vmem:[#allocation3 + $0xb0] sm:$0xff] %v3184
    %3249 = vst [vmem:[#allocation3 + $0xb8] sm:$0xff] %v3185
    %3250 = vst [vmem:[#allocation3 + $0xc0] sm:$0xff] %v3186
    %3251 = vst [vmem:[#allocation3 + $0xc8] sm:$0xff] %v3187
    %3252 = vst [vmem:[#allocation3 + $0xd0] sm:$0xff] %v3188
    %3253 = vst [vmem:[#allocation3 + $0xd8] sm:$0xff] %v3189
    %3254 = vst [vmem:[#allocation3 + $0xe0] sm:$0xff] %v3190
    %3255 = vst [vmem:[#allocation3 + $0xe8] sm:$0xff] %v3191
    %3256 = vst [vmem:[#allocation3 + $0xf0] sm:$0xff] %v3192
    %3257 = vst [vmem:[#allocation3 + $0xf8] sm:$0xff] %v3193
    %3258 = vst [vmem:[#allocation3 + $0x100] sm:$0xff] %v3194
    %3259 = vst [vmem:[#allocation3 + $0x108] sm:$0xff] %v3195
    %3260 = vst [vmem:[#allocation3 + $0x110] sm:$0xff] %v3196
    %3261 = vst [vmem:[#allocation3 + $0x118] sm:$0xff] %v3197
    %3262 = vst [vmem:[#allocation3 + $0x120] sm:$0xff] %v3198
    %3263 = vst [vmem:[#allocation3 + $0x128] sm:$0xff] %v3199
    %3264 = vst [vmem:[#allocation3 + $0x130] sm:$0xff] %v3200
    %3265 = vst [vmem:[#allocation3 + $0x138] sm:$0xff] %v3201
    %3266 = vst [vmem:[#allocation3 + $0x140] sm:$0xff] %v3202
    %3267 = vst [vmem:[#allocation3 + $0x148] sm:$0xff] %v3203
    %3268 = vst [vmem:[#allocation3 + $0x150] sm:$0xff] %v3204
    %3269 = vst [vmem:[#allocation3 + $0x158] sm:$0xff] %v3205
    %3270 = vst [vmem:[#allocation3 + $0x160] sm:$0xff] %v3206
    %3271 = vst [vmem:[#allocation3 + $0x168] sm:$0xff] %v3207
    %3272 = vst [vmem:[#allocation3 + $0x170] sm:$0xff] %v3208
    %3273 = vst [vmem:[#allocation3 + $0x178] sm:$0xff] %v3209
    %3274 = vst [vmem:[#allocation3 + $0x180] sm:$0xff] %v3210
    %3275 = vst [vmem:[#allocation3 + $0x188] sm:$0xff] %v3211
    %3276 = vst [vmem:[#allocation3 + $0x190] sm:$0xff] %v3212
    %3277 = vst [vmem:[#allocation3 + $0x198] sm:$0xff] %v3213
    %3278 = vst [vmem:[#allocation3 + $0x1a0] sm:$0xff] %v3214
    %3279 = vst [vmem:[#allocation3 + $0x1a8] sm:$0xff] %v3215
    %3280 = vst [vmem:[#allocation3 + $0x1b0] sm:$0xff] %v3216
    %3281 = vst [vmem:[#allocation3 + $0x1b8] sm:$0xff] %v3217
    %3282 = vst [vmem:[#allocation3 + $0x1c0] sm:$0xff] %v3218
    %3283 = vst [vmem:[#allocation3 + $0x1c8] sm:$0xff] %v3219
    %3284 = vst [vmem:[#allocation3 + $0x1d0] sm:$0xff] %v3220
    %3285 = vst [vmem:[#allocation3 + $0x1d8] sm:$0xff] %v3221
    %3286 = vst [vmem:[#allocation3 + $0x1e0] sm:$0xff] %v3222
    %3287 = vst [vmem:[#allocation3 + $0x1e8] sm:$0xff] %v3223
    %3288 = vst [vmem:[#allocation3 + $0x1f0] sm:$0xff] %v3224
    %3289 = vst [vmem:[#allocation3 + $0x1f8] sm:$0xff] %v3225
    %v3290 = vld [vmem:[%s2807 + $0x1] sm:$0xff]
    %v3291 = vld [vmem:[%s2807 + $0x9] sm:$0xff]
    %v3292 = vld [vmem:[%s2807 + $0x19] sm:$0xff]
    %v3293 = vld [vmem:[%s2807 + $0x21] sm:$0xff]
    %v3294 = vld [vmem:[%s2807 + $0x31] sm:$0xff]
    %v3295 = vld [vmem:[%s2807 + $0x39] sm:$0xff]
    %v3296 = vld [vmem:[%s2807 + $0x49] sm:$0xff]
    %v3297 = vld [vmem:[%s2807 + $0x51] sm:$0xff]
    %v3298 = vld [vmem:[%s2807 + $0x61] sm:$0xff]
    %v3299 = vld [vmem:[%s2807 + $0x69] sm:$0xff]
    %v3300 = vld [vmem:[%s2807 + $0x79] sm:$0xff]
    %v3301 = vld [vmem:[%s2807 + $0x81] sm:$0xff]
    %v3302 = vld [vmem:[%s2807 + $0x91] sm:$0xff]
    %v3303 = vld [vmem:[%s2807 + $0x99] sm:$0xff]
    %v3304 = vld [vmem:[%s2807 + $0xa9] sm:$0xff]
    %v3305 = vld [vmem:[%s2807 + $0xb1] sm:$0xff]
    %v3306 = vld [vmem:[%s2807 + $0xc1] sm:$0xff]
    %v3307 = vld [vmem:[%s2807 + $0xc9] sm:$0xff]
    %v3308 = vld [vmem:[%s2807 + $0xd9] sm:$0xff]
    %v3309 = vld [vmem:[%s2807 + $0xe1] sm:$0xff]
    %v3310 = vld [vmem:[%s2807 + $0xf1] sm:$0xff]
    %v3311 = vld [vmem:[%s2807 + $0xf9] sm:$0xff]
    %v3312 = vld [vmem:[%s2807 + $0x109] sm:$0xff]
    %v3313 = vld [vmem:[%s2807 + $0x111] sm:$0xff]
    %v3314 = vld [vmem:[%s2807 + $0x121] sm:$0xff]
    %v3315 = vld [vmem:[%s2807 + $0x129] sm:$0xff]
    %v3316 = vld [vmem:[%s2807 + $0x139] sm:$0xff]
    %v3317 = vld [vmem:[%s2807 + $0x141] sm:$0xff]
    %v3318 = vld [vmem:[%s2807 + $0x151] sm:$0xff]
    %v3319 = vld [vmem:[%s2807 + $0x159] sm:$0xff]
    %v3320 = vld [vmem:[%s2807 + $0x169] sm:$0xff]
    %v3321 = vld [vmem:[%s2807 + $0x171] sm:$0xff]
    %v3322 = vld [vmem:[%s2807 + $0x1b1] sm:$0xff]
    %v3323 = vld [vmem:[%s2807 + $0x1b9] sm:$0xff]
    %v3324 = vld [vmem:[%s2807 + $0x1c9] sm:$0xff]
    %v3325 = vld [vmem:[%s2807 + $0x1d1] sm:$0xff]
    %v3326 = vld [vmem:[%s2807 + $0x1e1] sm:$0xff]
    %v3327 = vld [vmem:[%s2807 + $0x1e9] sm:$0xff]
    %v3328 = vld [vmem:[%s2807 + $0x1f9] sm:$0xff]
    %v3329 = vld [vmem:[%s2807 + $0x201] sm:$0xff]
    %v3330 = vld [vmem:[%s2807 + $0x211] sm:$0xff]
    %v3331 = vld [vmem:[%s2807 + $0x219] sm:$0xff]
    %v3332 = vld [vmem:[%s2807 + $0x229] sm:$0xff]
    %v3333 = vld [vmem:[%s2807 + $0x231] sm:$0xff]
    %v3334 = vld [vmem:[%s2807 + $0x241] sm:$0xff]
    %v3335 = vld [vmem:[%s2807 + $0x249] sm:$0xff]
    %v3336 = vld [vmem:[%s2807 + $0x259] sm:$0xff]
    %v3337 = vld [vmem:[%s2807 + $0x261] sm:$0xff]
    %v3338 = vld [vmem:[%s2807 + $0x271] sm:$0xff]
    %v3339 = vld [vmem:[%s2807 + $0x279] sm:$0xff]
    %v3340 = vld [vmem:[%s2807 + $0x289] sm:$0xff]
    %v3341 = vld [vmem:[%s2807 + $0x291] sm:$0xff]
    %v3342 = vld [vmem:[%s2807 + $0x2a1] sm:$0xff]
    %v3343 = vld [vmem:[%s2807 + $0x2a9] sm:$0xff]
    %v3344 = vld [vmem:[%s2807 + $0x2b9] sm:$0xff]
    %v3345 = vld [vmem:[%s2807 + $0x2c1] sm:$0xff]
    %v3346 = vld [vmem:[%s2807 + $0x2d1] sm:$0xff]
    %v3347 = vld [vmem:[%s2807 + $0x2d9] sm:$0xff]
    %v3348 = vld [vmem:[%s2807 + $0x2e9] sm:$0xff]
    %v3349 = vld [vmem:[%s2807 + $0x2f1] sm:$0xff]
    %v3350 = vld [vmem:[%s2807 + $0x301] sm:$0xff]
    %v3351 = vld [vmem:[%s2807 + $0x309] sm:$0xff]
    %v3352 = vld [vmem:[%s2807 + $0x319] sm:$0xff]
    %v3353 = vld [vmem:[%s2807 + $0x321] sm:$0xff]
    %s3354 = scalar_lea.vmem %s1, 896
    %v3355 = vld [vmem:[%s3354] sm:$0xff]
    %v3356 = vld [vmem:[%s3354 + $0x8] sm:$0xff]
    %v3357 = vld [vmem:[%s3354 + $0x10] sm:$0xff]
    %v3358 = vld [vmem:[%s3354 + $0x18] sm:$0xff]
    %v3359 = vld [vmem:[%s3354 + $0x20] sm:$0xff]
    %v3360 = vld [vmem:[%s3354 + $0x28] sm:$0xff]
    %v3361 = vld [vmem:[%s3354 + $0x30] sm:$0xff]
    %v3362 = vld [vmem:[%s3354 + $0x38] sm:$0xff]
    %v3363 = vld [vmem:[%s3354 + $0x40] sm:$0xff]
    %v3364 = vld [vmem:[%s3354 + $0x48] sm:$0xff]
    %v3365 = vld [vmem:[%s3354 + $0x50] sm:$0xff]
    %v3366 = vld [vmem:[%s3354 + $0x58] sm:$0xff]
    %v3367 = vld [vmem:[%s3354 + $0x60] sm:$0xff]
    %v3368 = vld [vmem:[%s3354 + $0x68] sm:$0xff]
    %v3369 = vld [vmem:[%s3354 + $0x70] sm:$0xff]
    %v3370 = vld [vmem:[%s3354 + $0x78] sm:$0xff]
    %3371 = vmatpush.msra.mxu0 %v3370
    %3372 = vmatpush.msra.mxu0 %v3369
    %3373 = vmatpush.msra.mxu0 %v3368
    %3374 = vmatpush.msra.mxu0 %v3367
    %3375 = vmatpush.msra.mxu0 %v3366
    %3376 = vmatpush.msra.mxu0 %v3365
    %3377 = vmatpush.msra.mxu0 %v3364
    %3378 = vmatpush.msra.mxu0 %v3363
    %3379 = vmatpush.msra.mxu0 %v3362
    %3380 = vmatpush.msra.mxu0 %v3361
    %3381 = vmatpush.msra.mxu0 %v3360
    %3382 = vmatpush.msra.mxu0 %v3359
    %3383 = vmatpush.msra.mxu0 %v3358
    %3384 = vmatpush.msra.mxu0 %v3357
    %3385 = vmatpush.msra.mxu0 %v3356
    %3386 = vmatpush.msra.mxu0 %v3355
    %3387 = vmatmul.f32.gmra.mxu0 %v3290
    %v3388 = vpop.f32.mrf.mxu0
    %v3389 = vadd.f32 0.0, %v3388
    %3390 = vmatmul.f32.gmra.mxu0 %v3291
    %v3391 = vpop.f32.mrf.mxu0
    %v3392 = vadd.f32 0.0, %v3391
    %3393 = vmatmul.f32.gmra.mxu0 %v3292
    %v3394 = vpop.f32.mrf.mxu0
    %v3395 = vadd.f32 0.0, %v3394
    %3396 = vmatmul.f32.gmra.mxu0 %v3293
    %v3397 = vpop.f32.mrf.mxu0
    %v3398 = vadd.f32 0.0, %v3397
    %3399 = vmatmul.f32.gmra.mxu0 %v3294
    %v3400 = vpop.f32.mrf.mxu0
    %v3401 = vadd.f32 0.0, %v3400
    %3402 = vmatmul.f32.gmra.mxu0 %v3295
    %v3403 = vpop.f32.mrf.mxu0
    %v3404 = vadd.f32 0.0, %v3403
    %3405 = vmatmul.f32.gmra.mxu0 %v3296
    %v3406 = vpop.f32.mrf.mxu0
    %v3407 = vadd.f32 0.0, %v3406
    %3408 = vmatmul.f32.gmra.mxu0 %v3297
    %v3409 = vpop.f32.mrf.mxu0
    %v3410 = vadd.f32 0.0, %v3409
    %3411 = vmatmul.f32.gmra.mxu0 %v3298
    %v3412 = vpop.f32.mrf.mxu0
    %v3413 = vadd.f32 0.0, %v3412
    %3414 = vmatmul.f32.gmra.mxu0 %v3299
    %v3415 = vpop.f32.mrf.mxu0
    %v3416 = vadd.f32 0.0, %v3415
    %3417 = vmatmul.f32.gmra.mxu0 %v3300
    %v3418 = vpop.f32.mrf.mxu0
    %v3419 = vadd.f32 0.0, %v3418
    %3420 = vmatmul.f32.gmra.mxu0 %v3301
    %v3421 = vpop.f32.mrf.mxu0
    %v3422 = vadd.f32 0.0, %v3421
    %3423 = vmatmul.f32.gmra.mxu0 %v3302
    %v3424 = vpop.f32.mrf.mxu0
    %v3425 = vadd.f32 0.0, %v3424
    %3426 = vmatmul.f32.gmra.mxu0 %v3303
    %v3427 = vpop.f32.mrf.mxu0
    %v3428 = vadd.f32 0.0, %v3427
    %3429 = vmatmul.f32.gmra.mxu0 %v3304
    %v3430 = vpop.f32.mrf.mxu0
    %v3431 = vadd.f32 0.0, %v3430
    %3432 = vmatmul.f32.gmra.mxu0 %v3305
    %v3433 = vpop.f32.mrf.mxu0
    %v3434 = vadd.f32 0.0, %v3433
    %3435 = vmatmul.f32.gmra.mxu0 %v3306
    %v3436 = vpop.f32.mrf.mxu0
    %v3437 = vadd.f32 0.0, %v3436
    %3438 = vmatmul.f32.gmra.mxu0 %v3307
    %v3439 = vpop.f32.mrf.mxu0
    %v3440 = vadd.f32 0.0, %v3439
    %3441 = vmatmul.f32.gmra.mxu0 %v3308
    %v3442 = vpop.f32.mrf.mxu0
    %v3443 = vadd.f32 0.0, %v3442
    %3444 = vmatmul.f32.gmra.mxu0 %v3309
    %v3445 = vpop.f32.mrf.mxu0
    %v3446 = vadd.f32 0.0, %v3445
    %3447 = vmatmul.f32.gmra.mxu0 %v3310
    %v3448 = vpop.f32.mrf.mxu0
    %v3449 = vadd.f32 0.0, %v3448
    %3450 = vmatmul.f32.gmra.mxu0 %v3311
    %v3451 = vpop.f32.mrf.mxu0
    %v3452 = vadd.f32 0.0, %v3451
    %3453 = vmatmul.f32.gmra.mxu0 %v3312
    %v3454 = vpop.f32.mrf.mxu0
    %v3455 = vadd.f32 0.0, %v3454
    %3456 = vmatmul.f32.gmra.mxu0 %v3313
    %v3457 = vpop.f32.mrf.mxu0
    %v3458 = vadd.f32 0.0, %v3457
    %3459 = vmatmul.f32.gmra.mxu0 %v3314
    %v3460 = vpop.f32.mrf.mxu0
    %v3461 = vadd.f32 0.0, %v3460
    %3462 = vmatmul.f32.gmra.mxu0 %v3315
    %v3463 = vpop.f32.mrf.mxu0
    %v3464 = vadd.f32 0.0, %v3463
    %3465 = vmatmul.f32.gmra.mxu0 %v3316
    %v3466 = vpop.f32.mrf.mxu0
    %v3467 = vadd.f32 0.0, %v3466
    %3468 = vmatmul.f32.gmra.mxu0 %v3317
    %v3469 = vpop.f32.mrf.mxu0
    %v3470 = vadd.f32 0.0, %v3469
    %3471 = vmatmul.f32.gmra.mxu0 %v3318
    %v3472 = vpop.f32.mrf.mxu0
    %v3473 = vadd.f32 0.0, %v3472
    %3474 = vmatmul.f32.gmra.mxu0 %v3319
    %v3475 = vpop.f32.mrf.mxu0
    %v3476 = vadd.f32 0.0, %v3475
    %3477 = vmatmul.f32.gmra.mxu0 %v3320
    %v3478 = vpop.f32.mrf.mxu0
    %v3479 = vadd.f32 0.0, %v3478
    %3480 = vmatmul.f32.gmra.mxu0 %v3321
    %v3481 = vpop.f32.mrf.mxu0
    %v3482 = vadd.f32 0.0, %v3481
    %3483 = vmatmul.f32.gmra.mxu0 %v3322
    %v3484 = vpop.f32.mrf.mxu0
    %v3485 = vadd.f32 0.0, %v3484
    %3486 = vmatmul.f32.gmra.mxu0 %v3323
    %v3487 = vpop.f32.mrf.mxu0
    %v3488 = vadd.f32 0.0, %v3487
    %3489 = vmatmul.f32.gmra.mxu0 %v3324
    %v3490 = vpop.f32.mrf.mxu0
    %v3491 = vadd.f32 0.0, %v3490
    %3492 = vmatmul.f32.gmra.mxu0 %v3325
    %v3493 = vpop.f32.mrf.mxu0
    %v3494 = vadd.f32 0.0, %v3493
    %3495 = vmatmul.f32.gmra.mxu0 %v3326
    %v3496 = vpop.f32.mrf.mxu0
    %v3497 = vadd.f32 0.0, %v3496
    %3498 = vmatmul.f32.gmra.mxu0 %v3327
    %v3499 = vpop.f32.mrf.mxu0
    %v3500 = vadd.f32 0.0, %v3499
    %3501 = vmatmul.f32.gmra.mxu0 %v3328
    %v3502 = vpop.f32.mrf.mxu0
    %v3503 = vadd.f32 0.0, %v3502
    %3504 = vmatmul.f32.gmra.mxu0 %v3329
    %v3505 = vpop.f32.mrf.mxu0
    %v3506 = vadd.f32 0.0, %v3505
    %3507 = vmatmul.f32.gmra.mxu0 %v3330
    %v3508 = vpop.f32.mrf.mxu0
    %v3509 = vadd.f32 0.0, %v3508
    %3510 = vmatmul.f32.gmra.mxu0 %v3331
    %v3511 = vpop.f32.mrf.mxu0
    %v3512 = vadd.f32 0.0, %v3511
    %3513 = vmatmul.f32.gmra.mxu0 %v3332
    %v3514 = vpop.f32.mrf.mxu0
    %v3515 = vadd.f32 0.0, %v3514
    %3516 = vmatmul.f32.gmra.mxu0 %v3333
    %v3517 = vpop.f32.mrf.mxu0
    %v3518 = vadd.f32 0.0, %v3517
    %3519 = vmatmul.f32.gmra.mxu0 %v3334
    %v3520 = vpop.f32.mrf.mxu0
    %v3521 = vadd.f32 0.0, %v3520
    %3522 = vmatmul.f32.gmra.mxu0 %v3335
    %v3523 = vpop.f32.mrf.mxu0
    %v3524 = vadd.f32 0.0, %v3523
    %3525 = vmatmul.f32.gmra.mxu0 %v3336
    %v3526 = vpop.f32.mrf.mxu0
    %v3527 = vadd.f32 0.0, %v3526
    %3528 = vmatmul.f32.gmra.mxu0 %v3337
    %v3529 = vpop.f32.mrf.mxu0
    %v3530 = vadd.f32 0.0, %v3529
    %3531 = vmatmul.f32.gmra.mxu0 %v3338
    %v3532 = vpop.f32.mrf.mxu0
    %v3533 = vadd.f32 0.0, %v3532
    %3534 = vmatmul.f32.gmra.mxu0 %v3339
    %v3535 = vpop.f32.mrf.mxu0
    %v3536 = vadd.f32 0.0, %v3535
    %3537 = vmatmul.f32.gmra.mxu0 %v3340
    %v3538 = vpop.f32.mrf.mxu0
    %v3539 = vadd.f32 0.0, %v3538
    %3540 = vmatmul.f32.gmra.mxu0 %v3341
    %v3541 = vpop.f32.mrf.mxu0
    %v3542 = vadd.f32 0.0, %v3541
    %3543 = vmatmul.f32.gmra.mxu0 %v3342
    %v3544 = vpop.f32.mrf.mxu0
    %v3545 = vadd.f32 0.0, %v3544
    %3546 = vmatmul.f32.gmra.mxu0 %v3343
    %v3547 = vpop.f32.mrf.mxu0
    %v3548 = vadd.f32 0.0, %v3547
    %3549 = vmatmul.f32.gmra.mxu0 %v3344
    %v3550 = vpop.f32.mrf.mxu0
    %v3551 = vadd.f32 0.0, %v3550
    %3552 = vmatmul.f32.gmra.mxu0 %v3345
    %v3553 = vpop.f32.mrf.mxu0
    %v3554 = vadd.f32 0.0, %v3553
    %3555 = vmatmul.f32.gmra.mxu0 %v3346
    %v3556 = vpop.f32.mrf.mxu0
    %v3557 = vadd.f32 0.0, %v3556
    %3558 = vmatmul.f32.gmra.mxu0 %v3347
    %v3559 = vpop.f32.mrf.mxu0
    %v3560 = vadd.f32 0.0, %v3559
    %3561 = vmatmul.f32.gmra.mxu0 %v3348
    %v3562 = vpop.f32.mrf.mxu0
    %v3563 = vadd.f32 0.0, %v3562
    %3564 = vmatmul.f32.gmra.mxu0 %v3349
    %v3565 = vpop.f32.mrf.mxu0
    %v3566 = vadd.f32 0.0, %v3565
    %3567 = vmatmul.f32.gmra.mxu0 %v3350
    %v3568 = vpop.f32.mrf.mxu0
    %v3569 = vadd.f32 0.0, %v3568
    %3570 = vmatmul.f32.gmra.mxu0 %v3351
    %v3571 = vpop.f32.mrf.mxu0
    %v3572 = vadd.f32 0.0, %v3571
    %3573 = vmatmul.f32.gmra.mxu0 %v3352
    %v3574 = vpop.f32.mrf.mxu0
    %v3575 = vadd.f32 0.0, %v3574
    %3576 = vmatmul.f32.gmra.mxu0 %v3353
    %v3577 = vpop.f32.mrf.mxu0
    %v3578 = vadd.f32 0.0, %v3577
    %3579 = vdwg.mxu0
    %v3580 = vld [vmem:[#allocation3] sm:$0xff]
    %v3581 = vld [vmem:[#allocation3 + $0x8] sm:$0xff]
    %v3582 = vld [vmem:[#allocation3 + $0x10] sm:$0xff]
    %v3583 = vld [vmem:[#allocation3 + $0x18] sm:$0xff]
    %v3584 = vld [vmem:[#allocation3 + $0x20] sm:$0xff]
    %v3585 = vld [vmem:[#allocation3 + $0x28] sm:$0xff]
    %v3586 = vld [vmem:[#allocation3 + $0x30] sm:$0xff]
    %v3587 = vld [vmem:[#allocation3 + $0x38] sm:$0xff]
    %v3588 = vld [vmem:[#allocation3 + $0x40] sm:$0xff]
    %v3589 = vld [vmem:[#allocation3 + $0x48] sm:$0xff]
    %v3590 = vld [vmem:[#allocation3 + $0x50] sm:$0xff]
    %v3591 = vld [vmem:[#allocation3 + $0x58] sm:$0xff]
    %v3592 = vld [vmem:[#allocation3 + $0x60] sm:$0xff]
    %v3593 = vld [vmem:[#allocation3 + $0x68] sm:$0xff]
    %v3594 = vld [vmem:[#allocation3 + $0x70] sm:$0xff]
    %v3595 = vld [vmem:[#allocation3 + $0x78] sm:$0xff]
    %v3596 = vld [vmem:[#allocation3 + $0x80] sm:$0xff]
    %v3597 = vld [vmem:[#allocation3 + $0x88] sm:$0xff]
    %v3598 = vld [vmem:[#allocation3 + $0x90] sm:$0xff]
    %v3599 = vld [vmem:[#allocation3 + $0x98] sm:$0xff]
    %v3600 = vld [vmem:[#allocation3 + $0xa0] sm:$0xff]
    %v3601 = vld [vmem:[#allocation3 + $0xa8] sm:$0xff]
    %v3602 = vld [vmem:[#allocation3 + $0xb0] sm:$0xff]
    %v3603 = vld [vmem:[#allocation3 + $0xb8] sm:$0xff]
    %v3604 = vld [vmem:[#allocation3 + $0xc0] sm:$0xff]
    %v3605 = vld [vmem:[#allocation3 + $0xc8] sm:$0xff]
    %v3606 = vld [vmem:[#allocation3 + $0xd0] sm:$0xff]
    %v3607 = vld [vmem:[#allocation3 + $0xd8] sm:$0xff]
    %v3608 = vld [vmem:[#allocation3 + $0xe0] sm:$0xff]
    %v3609 = vld [vmem:[#allocation3 + $0xe8] sm:$0xff]
    %v3610 = vld [vmem:[#allocation3 + $0xf0] sm:$0xff]
    %v3611 = vld [vmem:[#allocation3 + $0xf8] sm:$0xff]
    %v3612 = vld [vmem:[#allocation3 + $0x100] sm:$0xff]
    %v3613 = vld [vmem:[#allocation3 + $0x108] sm:$0xff]
    %v3614 = vld [vmem:[#allocation3 + $0x110] sm:$0xff]
    %v3615 = vld [vmem:[#allocation3 + $0x118] sm:$0xff]
    %v3616 = vld [vmem:[#allocation3 + $0x120] sm:$0xff]
    %v3617 = vld [vmem:[#allocation3 + $0x128] sm:$0xff]
    %v3618 = vld [vmem:[#allocation3 + $0x130] sm:$0xff]
    %v3619 = vld [vmem:[#allocation3 + $0x138] sm:$0xff]
    %v3620 = vld [vmem:[#allocation3 + $0x140] sm:$0xff]
    %v3621 = vld [vmem:[#allocation3 + $0x148] sm:$0xff]
    %v3622 = vld [vmem:[#allocation3 + $0x150] sm:$0xff]
    %v3623 = vld [vmem:[#allocation3 + $0x158] sm:$0xff]
    %v3624 = vld [vmem:[#allocation3 + $0x160] sm:$0xff]
    %v3625 = vld [vmem:[#allocation3 + $0x168] sm:$0xff]
    %v3626 = vld [vmem:[#allocation3 + $0x170] sm:$0xff]
    %v3627 = vld [vmem:[#allocation3 + $0x178] sm:$0xff]
    %v3628 = vld [vmem:[#allocation3 + $0x180] sm:$0xff]
    %v3629 = vld [vmem:[#allocation3 + $0x188] sm:$0xff]
    %v3630 = vld [vmem:[#allocation3 + $0x190] sm:$0xff]
    %v3631 = vld [vmem:[#allocation3 + $0x198] sm:$0xff]
    %v3632 = vld [vmem:[#allocation3 + $0x1a0] sm:$0xff]
    %v3633 = vld [vmem:[#allocation3 + $0x1a8] sm:$0xff]
    %v3634 = vld [vmem:[#allocation3 + $0x1b0] sm:$0xff]
    %v3635 = vld [vmem:[#allocation3 + $0x1b8] sm:$0xff]
    %v3636 = vld [vmem:[#allocation3 + $0x1c0] sm:$0xff]
    %v3637 = vld [vmem:[#allocation3 + $0x1c8] sm:$0xff]
    %v3638 = vld [vmem:[#allocation3 + $0x1d0] sm:$0xff]
    %v3639 = vld [vmem:[#allocation3 + $0x1d8] sm:$0xff]
    %v3640 = vld [vmem:[#allocation3 + $0x1e0] sm:$0xff]
    %v3641 = vld [vmem:[#allocation3 + $0x1e8] sm:$0xff]
    %v3642 = vld [vmem:[#allocation3 + $0x1f0] sm:$0xff]
    %v3643 = vld [vmem:[#allocation3 + $0x1f8] sm:$0xff]
    %v3644 = vadd.f32 %v3580, %v3389
    %v3645 = vadd.f32 %v3581, %v3392
    %v3646 = vadd.f32 %v3582, %v3395
    %v3647 = vadd.f32 %v3583, %v3398
    %v3648 = vadd.f32 %v3584, %v3401
    %v3649 = vadd.f32 %v3585, %v3404
    %v3650 = vadd.f32 %v3586, %v3407
    %v3651 = vadd.f32 %v3587, %v3410
    %v3652 = vadd.f32 %v3588, %v3413
    %v3653 = vadd.f32 %v3589, %v3416
    %v3654 = vadd.f32 %v3590, %v3419
    %v3655 = vadd.f32 %v3591, %v3422
    %v3656 = vadd.f32 %v3592, %v3425
    %v3657 = vadd.f32 %v3593, %v3428
    %v3658 = vadd.f32 %v3594, %v3431
    %v3659 = vadd.f32 %v3595, %v3434
    %v3660 = vadd.f32 %v3596, %v3437
    %v3661 = vadd.f32 %v3597, %v3440
    %v3662 = vadd.f32 %v3598, %v3443
    %v3663 = vadd.f32 %v3599, %v3446
    %v3664 = vadd.f32 %v3600, %v3449
    %v3665 = vadd.f32 %v3601, %v3452
    %v3666 = vadd.f32 %v3602, %v3455
    %v3667 = vadd.f32 %v3603, %v3458
    %v3668 = vadd.f32 %v3604, %v3461
    %v3669 = vadd.f32 %v3605, %v3464
    %v3670 = vadd.f32 %v3606, %v3467
    %v3671 = vadd.f32 %v3607, %v3470
    %v3672 = vadd.f32 %v3608, %v3473
    %v3673 = vadd.f32 %v3609, %v3476
    %v3674 = vadd.f32 %v3610, %v3479
    %v3675 = vadd.f32 %v3611, %v3482
    %v3676 = vadd.f32 %v3612, %v3485
    %v3677 = vadd.f32 %v3613, %v3488
    %v3678 = vadd.f32 %v3614, %v3491
    %v3679 = vadd.f32 %v3615, %v3494
    %v3680 = vadd.f32 %v3616, %v3497
    %v3681 = vadd.f32 %v3617, %v3500
    %v3682 = vadd.f32 %v3618, %v3503
    %v3683 = vadd.f32 %v3619, %v3506
    %v3684 = vadd.f32 %v3620, %v3509
    %v3685 = vadd.f32 %v3621, %v3512
    %v3686 = vadd.f32 %v3622, %v3515
    %v3687 = vadd.f32 %v3623, %v3518
    %v3688 = vadd.f32 %v3624, %v3521
    %v3689 = vadd.f32 %v3625, %v3524
    %v3690 = vadd.f32 %v3626, %v3527
    %v3691 = vadd.f32 %v3627, %v3530
    %v3692 = vadd.f32 %v3628, %v3533
    %v3693 = vadd.f32 %v3629, %v3536
    %v3694 = vadd.f32 %v3630, %v3539
    %v3695 = vadd.f32 %v3631, %v3542
    %v3696 = vadd.f32 %v3632, %v3545
    %v3697 = vadd.f32 %v3633, %v3548
    %v3698 = vadd.f32 %v3634, %v3551
    %v3699 = vadd.f32 %v3635, %v3554
    %v3700 = vadd.f32 %v3636, %v3557
    %v3701 = vadd.f32 %v3637, %v3560
    %v3702 = vadd.f32 %v3638, %v3563
    %v3703 = vadd.f32 %v3639, %v3566
    %v3704 = vadd.f32 %v3640, %v3569
    %v3705 = vadd.f32 %v3641, %v3572
    %v3706 = vadd.f32 %v3642, %v3575
    %v3707 = vadd.f32 %v3643, %v3578
    %3708 = vst [vmem:[#allocation3] sm:$0xff] %v3644
    %3709 = vst [vmem:[#allocation3 + $0x8] sm:$0xff] %v3645
    %3710 = vst [vmem:[#allocation3 + $0x10] sm:$0xff] %v3646
    %3711 = vst [vmem:[#allocation3 + $0x18] sm:$0xff] %v3647
    %3712 = vst [vmem:[#allocation3 + $0x20] sm:$0xff] %v3648
    %3713 = vst [vmem:[#allocation3 + $0x28] sm:$0xff] %v3649
    %3714 = vst [vmem:[#allocation3 + $0x30] sm:$0xff] %v3650
    %3715 = vst [vmem:[#allocation3 + $0x38] sm:$0xff] %v3651
    %3716 = vst [vmem:[#allocation3 + $0x40] sm:$0xff] %v3652
    %3717 = vst [vmem:[#allocation3 + $0x48] sm:$0xff] %v3653
    %3718 = vst [vmem:[#allocation3 + $0x50] sm:$0xff] %v3654
    %3719 = vst [vmem:[#allocation3 + $0x58] sm:$0xff] %v3655
    %3720 = vst [vmem:[#allocation3 + $0x60] sm:$0xff] %v3656
    %3721 = vst [vmem:[#allocation3 + $0x68] sm:$0xff] %v3657
    %3722 = vst [vmem:[#allocation3 + $0x70] sm:$0xff] %v3658
    %3723 = vst [vmem:[#allocation3 + $0x78] sm:$0xff] %v3659
    %3724 = vst [vmem:[#allocation3 + $0x80] sm:$0xff] %v3660
    %3725 = vst [vmem:[#allocation3 + $0x88] sm:$0xff] %v3661
    %3726 = vst [vmem:[#allocation3 + $0x90] sm:$0xff] %v3662
    %3727 = vst [vmem:[#allocation3 + $0x98] sm:$0xff] %v3663
    %3728 = vst [vmem:[#allocation3 + $0xa0] sm:$0xff] %v3664
    %3729 = vst [vmem:[#allocation3 + $0xa8] sm:$0xff] %v3665
    %3730 = vst [vmem:[#allocation3 + $0xb0] sm:$0xff] %v3666
    %3731 = vst [vmem:[#allocation3 + $0xb8] sm:$0xff] %v3667
    %3732 = vst [vmem:[#allocation3 + $0xc0] sm:$0xff] %v3668
    %3733 = vst [vmem:[#allocation3 + $0xc8] sm:$0xff] %v3669
    %3734 = vst [vmem:[#allocation3 + $0xd0] sm:$0xff] %v3670
    %3735 = vst [vmem:[#allocation3 + $0xd8] sm:$0xff] %v3671
    %3736 = vst [vmem:[#allocation3 + $0xe0] sm:$0xff] %v3672
    %3737 = vst [vmem:[#allocation3 + $0xe8] sm:$0xff] %v3673
    %3738 = vst [vmem:[#allocation3 + $0xf0] sm:$0xff] %v3674
    %3739 = vst [vmem:[#allocation3 + $0xf8] sm:$0xff] %v3675
    %3740 = vst [vmem:[#allocation3 + $0x100] sm:$0xff] %v3676
    %3741 = vst [vmem:[#allocation3 + $0x108] sm:$0xff] %v3677
    %3742 = vst [vmem:[#allocation3 + $0x110] sm:$0xff] %v3678
    %3743 = vst [vmem:[#allocation3 + $0x118] sm:$0xff] %v3679
    %3744 = vst [vmem:[#allocation3 + $0x120] sm:$0xff] %v3680
    %3745 = vst [vmem:[#allocation3 + $0x128] sm:$0xff] %v3681
    %3746 = vst [vmem:[#allocation3 + $0x130] sm:$0xff] %v3682
    %3747 = vst [vmem:[#allocation3 + $0x138] sm:$0xff] %v3683
    %3748 = vst [vmem:[#allocation3 + $0x140] sm:$0xff] %v3684
    %3749 = vst [vmem:[#allocation3 + $0x148] sm:$0xff] %v3685
    %3750 = vst [vmem:[#allocation3 + $0x150] sm:$0xff] %v3686
    %3751 = vst [vmem:[#allocation3 + $0x158] sm:$0xff] %v3687
    %3752 = vst [vmem:[#allocation3 + $0x160] sm:$0xff] %v3688
    %3753 = vst [vmem:[#allocation3 + $0x168] sm:$0xff] %v3689
    %3754 = vst [vmem:[#allocation3 + $0x170] sm:$0xff] %v3690
    %3755 = vst [vmem:[#allocation3 + $0x178] sm:$0xff] %v3691
    %3756 = vst [vmem:[#allocation3 + $0x180] sm:$0xff] %v3692
    %3757 = vst [vmem:[#allocation3 + $0x188] sm:$0xff] %v3693
    %3758 = vst [vmem:[#allocation3 + $0x190] sm:$0xff] %v3694
    %3759 = vst [vmem:[#allocation3 + $0x198] sm:$0xff] %v3695
    %3760 = vst [vmem:[#allocation3 + $0x1a0] sm:$0xff] %v3696
    %3761 = vst [vmem:[#allocation3 + $0x1a8] sm:$0xff] %v3697
    %3762 = vst [vmem:[#allocation3 + $0x1b0] sm:$0xff] %v3698
    %3763 = vst [vmem:[#allocation3 + $0x1b8] sm:$0xff] %v3699
    %3764 = vst [vmem:[#allocation3 + $0x1c0] sm:$0xff] %v3700
    %3765 = vst [vmem:[#allocation3 + $0x1c8] sm:$0xff] %v3701
    %3766 = vst [vmem:[#allocation3 + $0x1d0] sm:$0xff] %v3702
    %3767 = vst [vmem:[#allocation3 + $0x1d8] sm:$0xff] %v3703
    %3768 = vst [vmem:[#allocation3 + $0x1e0] sm:$0xff] %v3704
    %3769 = vst [vmem:[#allocation3 + $0x1e8] sm:$0xff] %v3705
    %3770 = vst [vmem:[#allocation3 + $0x1f0] sm:$0xff] %v3706
    %3771 = vst [vmem:[#allocation3 + $0x1f8] sm:$0xff] %v3707
    %v3772 = vld [vmem:[%s2807 + $0x2] sm:$0xff]
    %v3773 = vld [vmem:[%s2807 + $0xa] sm:$0xff]
    %v3774 = vld [vmem:[%s2807 + $0x1a] sm:$0xff]
    %v3775 = vld [vmem:[%s2807 + $0x22] sm:$0xff]
    %v3776 = vld [vmem:[%s2807 + $0x32] sm:$0xff]
    %v3777 = vld [vmem:[%s2807 + $0x3a] sm:$0xff]
    %v3778 = vld [vmem:[%s2807 + $0x4a] sm:$0xff]
    %v3779 = vld [vmem:[%s2807 + $0x52] sm:$0xff]
    %v3780 = vld [vmem:[%s2807 + $0x62] sm:$0xff]
    %v3781 = vld [vmem:[%s2807 + $0x6a] sm:$0xff]
    %v3782 = vld [vmem:[%s2807 + $0x7a] sm:$0xff]
    %v3783 = vld [vmem:[%s2807 + $0x82] sm:$0xff]
    %v3784 = vld [vmem:[%s2807 + $0x92] sm:$0xff]
    %v3785 = vld [vmem:[%s2807 + $0x9a] sm:$0xff]
    %v3786 = vld [vmem:[%s2807 + $0xaa] sm:$0xff]
    %v3787 = vld [vmem:[%s2807 + $0xb2] sm:$0xff]
    %v3788 = vld [vmem:[%s2807 + $0xc2] sm:$0xff]
    %v3789 = vld [vmem:[%s2807 + $0xca] sm:$0xff]
    %v3790 = vld [vmem:[%s2807 + $0xda] sm:$0xff]
    %v3791 = vld [vmem:[%s2807 + $0xe2] sm:$0xff]
    %v3792 = vld [vmem:[%s2807 + $0xf2] sm:$0xff]
    %v3793 = vld [vmem:[%s2807 + $0xfa] sm:$0xff]
    %v3794 = vld [vmem:[%s2807 + $0x10a] sm:$0xff]
    %v3795 = vld [vmem:[%s2807 + $0x112] sm:$0xff]
    %v3796 = vld [vmem:[%s2807 + $0x122] sm:$0xff]
    %v3797 = vld [vmem:[%s2807 + $0x12a] sm:$0xff]
    %v3798 = vld [vmem:[%s2807 + $0x13a] sm:$0xff]
    %v3799 = vld [vmem:[%s2807 + $0x142] sm:$0xff]
    %v3800 = vld [vmem:[%s2807 + $0x152] sm:$0xff]
    %v3801 = vld [vmem:[%s2807 + $0x15a] sm:$0xff]
    %v3802 = vld [vmem:[%s2807 + $0x16a] sm:$0xff]
    %v3803 = vld [vmem:[%s2807 + $0x172] sm:$0xff]
    %v3804 = vld [vmem:[%s2807 + $0x1b2] sm:$0xff]
    %v3805 = vld [vmem:[%s2807 + $0x1ba] sm:$0xff]
    %v3806 = vld [vmem:[%s2807 + $0x1ca] sm:$0xff]
    %v3807 = vld [vmem:[%s2807 + $0x1d2] sm:$0xff]
    %v3808 = vld [vmem:[%s2807 + $0x1e2] sm:$0xff]
    %v3809 = vld [vmem:[%s2807 + $0x1ea] sm:$0xff]
    %v3810 = vld [vmem:[%s2807 + $0x1fa] sm:$0xff]
    %v3811 = vld [vmem:[%s2807 + $0x202] sm:$0xff]
    %v3812 = vld [vmem:[%s2807 + $0x212] sm:$0xff]
    %v3813 = vld [vmem:[%s2807 + $0x21a] sm:$0xff]
    %v3814 = vld [vmem:[%s2807 + $0x22a] sm:$0xff]
    %v3815 = vld [vmem:[%s2807 + $0x232] sm:$0xff]
    %v3816 = vld [vmem:[%s2807 + $0x242] sm:$0xff]
    %v3817 = vld [vmem:[%s2807 + $0x24a] sm:$0xff]
    %v3818 = vld [vmem:[%s2807 + $0x25a] sm:$0xff]
    %v3819 = vld [vmem:[%s2807 + $0x262] sm:$0xff]
    %v3820 = vld [vmem:[%s2807 + $0x272] sm:$0xff]
    %v3821 = vld [vmem:[%s2807 + $0x27a] sm:$0xff]
    %v3822 = vld [vmem:[%s2807 + $0x28a] sm:$0xff]
    %v3823 = vld [vmem:[%s2807 + $0x292] sm:$0xff]
    %v3824 = vld [vmem:[%s2807 + $0x2a2] sm:$0xff]
    %v3825 = vld [vmem:[%s2807 + $0x2aa] sm:$0xff]
    %v3826 = vld [vmem:[%s2807 + $0x2ba] sm:$0xff]
    %v3827 = vld [vmem:[%s2807 + $0x2c2] sm:$0xff]
    %v3828 = vld [vmem:[%s2807 + $0x2d2] sm:$0xff]
    %v3829 = vld [vmem:[%s2807 + $0x2da] sm:$0xff]
    %v3830 = vld [vmem:[%s2807 + $0x2ea] sm:$0xff]
    %v3831 = vld [vmem:[%s2807 + $0x2f2] sm:$0xff]
    %v3832 = vld [vmem:[%s2807 + $0x302] sm:$0xff]
    %v3833 = vld [vmem:[%s2807 + $0x30a] sm:$0xff]
    %v3834 = vld [vmem:[%s2807 + $0x31a] sm:$0xff]
    %v3835 = vld [vmem:[%s2807 + $0x322] sm:$0xff]
    %s3836 = scalar_lea.vmem %s1, 1024
    %v3837 = vld [vmem:[%s3836] sm:$0xff]
    %v3838 = vld [vmem:[%s3836 + $0x8] sm:$0xff]
    %v3839 = vld [vmem:[%s3836 + $0x10] sm:$0xff]
    %v3840 = vld [vmem:[%s3836 + $0x18] sm:$0xff]
    %v3841 = vld [vmem:[%s3836 + $0x20] sm:$0xff]
    %v3842 = vld [vmem:[%s3836 + $0x28] sm:$0xff]
    %v3843 = vld [vmem:[%s3836 + $0x30] sm:$0xff]
    %v3844 = vld [vmem:[%s3836 + $0x38] sm:$0xff]
    %v3845 = vld [vmem:[%s3836 + $0x40] sm:$0xff]
    %v3846 = vld [vmem:[%s3836 + $0x48] sm:$0xff]
    %v3847 = vld [vmem:[%s3836 + $0x50] sm:$0xff]
    %v3848 = vld [vmem:[%s3836 + $0x58] sm:$0xff]
    %v3849 = vld [vmem:[%s3836 + $0x60] sm:$0xff]
    %v3850 = vld [vmem:[%s3836 + $0x68] sm:$0xff]
    %v3851 = vld [vmem:[%s3836 + $0x70] sm:$0xff]
    %v3852 = vld [vmem:[%s3836 + $0x78] sm:$0xff]
    %3853 = vmatpush.msra.mxu0 %v3852
    %3854 = vmatpush.msra.mxu0 %v3851
    %3855 = vmatpush.msra.mxu0 %v3850
    %3856 = vmatpush.msra.mxu0 %v3849
    %3857 = vmatpush.msra.mxu0 %v3848
    %3858 = vmatpush.msra.mxu0 %v3847
    %3859 = vmatpush.msra.mxu0 %v3846
    %3860 = vmatpush.msra.mxu0 %v3845
    %3861 = vmatpush.msra.mxu0 %v3844
    %3862 = vmatpush.msra.mxu0 %v3843
    %3863 = vmatpush.msra.mxu0 %v3842
    %3864 = vmatpush.msra.mxu0 %v3841
    %3865 = vmatpush.msra.mxu0 %v3840
    %3866 = vmatpush.msra.mxu0 %v3839
    %3867 = vmatpush.msra.mxu0 %v3838
    %3868 = vmatpush.msra.mxu0 %v3837
    %3869 = vmatmul.f32.gmra.mxu0 %v3772
    %v3870 = vpop.f32.mrf.mxu0
    %v3871 = vadd.f32 0.0, %v3870
    %3872 = vmatmul.f32.gmra.mxu0 %v3773
    %v3873 = vpop.f32.mrf.mxu0
    %v3874 = vadd.f32 0.0, %v3873
    %3875 = vmatmul.f32.gmra.mxu0 %v3774
    %v3876 = vpop.f32.mrf.mxu0
    %v3877 = vadd.f32 0.0, %v3876
    %3878 = vmatmul.f32.gmra.mxu0 %v3775
    %v3879 = vpop.f32.mrf.mxu0
    %v3880 = vadd.f32 0.0, %v3879
    %3881 = vmatmul.f32.gmra.mxu0 %v3776
    %v3882 = vpop.f32.mrf.mxu0
    %v3883 = vadd.f32 0.0, %v3882
    %3884 = vmatmul.f32.gmra.mxu0 %v3777
    %v3885 = vpop.f32.mrf.mxu0
    %v3886 = vadd.f32 0.0, %v3885
    %3887 = vmatmul.f32.gmra.mxu0 %v3778
    %v3888 = vpop.f32.mrf.mxu0
    %v3889 = vadd.f32 0.0, %v3888
    %3890 = vmatmul.f32.gmra.mxu0 %v3779
    %v3891 = vpop.f32.mrf.mxu0
    %v3892 = vadd.f32 0.0, %v3891
    %3893 = vmatmul.f32.gmra.mxu0 %v3780
    %v3894 = vpop.f32.mrf.mxu0
    %v3895 = vadd.f32 0.0, %v3894
    %3896 = vmatmul.f32.gmra.mxu0 %v3781
    %v3897 = vpop.f32.mrf.mxu0
    %v3898 = vadd.f32 0.0, %v3897
    %3899 = vmatmul.f32.gmra.mxu0 %v3782
    %v3900 = vpop.f32.mrf.mxu0
    %v3901 = vadd.f32 0.0, %v3900
    %3902 = vmatmul.f32.gmra.mxu0 %v3783
    %v3903 = vpop.f32.mrf.mxu0
    %v3904 = vadd.f32 0.0, %v3903
    %3905 = vmatmul.f32.gmra.mxu0 %v3784
    %v3906 = vpop.f32.mrf.mxu0
    %v3907 = vadd.f32 0.0, %v3906
    %3908 = vmatmul.f32.gmra.mxu0 %v3785
    %v3909 = vpop.f32.mrf.mxu0
    %v3910 = vadd.f32 0.0, %v3909
    %3911 = vmatmul.f32.gmra.mxu0 %v3786
    %v3912 = vpop.f32.mrf.mxu0
    %v3913 = vadd.f32 0.0, %v3912
    %3914 = vmatmul.f32.gmra.mxu0 %v3787
    %v3915 = vpop.f32.mrf.mxu0
    %v3916 = vadd.f32 0.0, %v3915
    %3917 = vmatmul.f32.gmra.mxu0 %v3788
    %v3918 = vpop.f32.mrf.mxu0
    %v3919 = vadd.f32 0.0, %v3918
    %3920 = vmatmul.f32.gmra.mxu0 %v3789
    %v3921 = vpop.f32.mrf.mxu0
    %v3922 = vadd.f32 0.0, %v3921
    %3923 = vmatmul.f32.gmra.mxu0 %v3790
    %v3924 = vpop.f32.mrf.mxu0
    %v3925 = vadd.f32 0.0, %v3924
    %3926 = vmatmul.f32.gmra.mxu0 %v3791
    %v3927 = vpop.f32.mrf.mxu0
    %v3928 = vadd.f32 0.0, %v3927
    %3929 = vmatmul.f32.gmra.mxu0 %v3792
    %v3930 = vpop.f32.mrf.mxu0
    %v3931 = vadd.f32 0.0, %v3930
    %3932 = vmatmul.f32.gmra.mxu0 %v3793
    %v3933 = vpop.f32.mrf.mxu0
    %v3934 = vadd.f32 0.0, %v3933
    %3935 = vmatmul.f32.gmra.mxu0 %v3794
    %v3936 = vpop.f32.mrf.mxu0
    %v3937 = vadd.f32 0.0, %v3936
    %3938 = vmatmul.f32.gmra.mxu0 %v3795
    %v3939 = vpop.f32.mrf.mxu0
    %v3940 = vadd.f32 0.0, %v3939
    %3941 = vmatmul.f32.gmra.mxu0 %v3796
    %v3942 = vpop.f32.mrf.mxu0
    %v3943 = vadd.f32 0.0, %v3942
    %3944 = vmatmul.f32.gmra.mxu0 %v3797
    %v3945 = vpop.f32.mrf.mxu0
    %v3946 = vadd.f32 0.0, %v3945
    %3947 = vmatmul.f32.gmra.mxu0 %v3798
    %v3948 = vpop.f32.mrf.mxu0
    %v3949 = vadd.f32 0.0, %v3948
    %3950 = vmatmul.f32.gmra.mxu0 %v3799
    %v3951 = vpop.f32.mrf.mxu0
    %v3952 = vadd.f32 0.0, %v3951
    %3953 = vmatmul.f32.gmra.mxu0 %v3800
    %v3954 = vpop.f32.mrf.mxu0
    %v3955 = vadd.f32 0.0, %v3954
    %3956 = vmatmul.f32.gmra.mxu0 %v3801
    %v3957 = vpop.f32.mrf.mxu0
    %v3958 = vadd.f32 0.0, %v3957
    %3959 = vmatmul.f32.gmra.mxu0 %v3802
    %v3960 = vpop.f32.mrf.mxu0
    %v3961 = vadd.f32 0.0, %v3960
    %3962 = vmatmul.f32.gmra.mxu0 %v3803
    %v3963 = vpop.f32.mrf.mxu0
    %v3964 = vadd.f32 0.0, %v3963
    %3965 = vmatmul.f32.gmra.mxu0 %v3804
    %v3966 = vpop.f32.mrf.mxu0
    %v3967 = vadd.f32 0.0, %v3966
    %3968 = vmatmul.f32.gmra.mxu0 %v3805
    %v3969 = vpop.f32.mrf.mxu0
    %v3970 = vadd.f32 0.0, %v3969
    %3971 = vmatmul.f32.gmra.mxu0 %v3806
    %v3972 = vpop.f32.mrf.mxu0
    %v3973 = vadd.f32 0.0, %v3972
    %3974 = vmatmul.f32.gmra.mxu0 %v3807
    %v3975 = vpop.f32.mrf.mxu0
    %v3976 = vadd.f32 0.0, %v3975
    %3977 = vmatmul.f32.gmra.mxu0 %v3808
    %v3978 = vpop.f32.mrf.mxu0
    %v3979 = vadd.f32 0.0, %v3978
    %3980 = vmatmul.f32.gmra.mxu0 %v3809
    %v3981 = vpop.f32.mrf.mxu0
    %v3982 = vadd.f32 0.0, %v3981
    %3983 = vmatmul.f32.gmra.mxu0 %v3810
    %v3984 = vpop.f32.mrf.mxu0
    %v3985 = vadd.f32 0.0, %v3984
    %3986 = vmatmul.f32.gmra.mxu0 %v3811
    %v3987 = vpop.f32.mrf.mxu0
    %v3988 = vadd.f32 0.0, %v3987
    %3989 = vmatmul.f32.gmra.mxu0 %v3812
    %v3990 = vpop.f32.mrf.mxu0
    %v3991 = vadd.f32 0.0, %v3990
    %3992 = vmatmul.f32.gmra.mxu0 %v3813
    %v3993 = vpop.f32.mrf.mxu0
    %v3994 = vadd.f32 0.0, %v3993
    %3995 = vmatmul.f32.gmra.mxu0 %v3814
    %v3996 = vpop.f32.mrf.mxu0
    %v3997 = vadd.f32 0.0, %v3996
    %3998 = vmatmul.f32.gmra.mxu0 %v3815
    %v3999 = vpop.f32.mrf.mxu0
    %v4000 = vadd.f32 0.0, %v3999
    %4001 = vmatmul.f32.gmra.mxu0 %v3816
    %v4002 = vpop.f32.mrf.mxu0
    %v4003 = vadd.f32 0.0, %v4002
    %4004 = vmatmul.f32.gmra.mxu0 %v3817
    %v4005 = vpop.f32.mrf.mxu0
    %v4006 = vadd.f32 0.0, %v4005
    %4007 = vmatmul.f32.gmra.mxu0 %v3818
    %v4008 = vpop.f32.mrf.mxu0
    %v4009 = vadd.f32 0.0, %v4008
    %4010 = vmatmul.f32.gmra.mxu0 %v3819
    %v4011 = vpop.f32.mrf.mxu0
    %v4012 = vadd.f32 0.0, %v4011
    %4013 = vmatmul.f32.gmra.mxu0 %v3820
    %v4014 = vpop.f32.mrf.mxu0
    %v4015 = vadd.f32 0.0, %v4014
    %4016 = vmatmul.f32.gmra.mxu0 %v3821
    %v4017 = vpop.f32.mrf.mxu0
    %v4018 = vadd.f32 0.0, %v4017
    %4019 = vmatmul.f32.gmra.mxu0 %v3822
    %v4020 = vpop.f32.mrf.mxu0
    %v4021 = vadd.f32 0.0, %v4020
    %4022 = vmatmul.f32.gmra.mxu0 %v3823
    %v4023 = vpop.f32.mrf.mxu0
    %v4024 = vadd.f32 0.0, %v4023
    %4025 = vmatmul.f32.gmra.mxu0 %v3824
    %v4026 = vpop.f32.mrf.mxu0
    %v4027 = vadd.f32 0.0, %v4026
    %4028 = vmatmul.f32.gmra.mxu0 %v3825
    %v4029 = vpop.f32.mrf.mxu0
    %v4030 = vadd.f32 0.0, %v4029
    %4031 = vmatmul.f32.gmra.mxu0 %v3826
    %v4032 = vpop.f32.mrf.mxu0
    %v4033 = vadd.f32 0.0, %v4032
    %4034 = vmatmul.f32.gmra.mxu0 %v3827
    %v4035 = vpop.f32.mrf.mxu0
    %v4036 = vadd.f32 0.0, %v4035
    %4037 = vmatmul.f32.gmra.mxu0 %v3828
    %v4038 = vpop.f32.mrf.mxu0
    %v4039 = vadd.f32 0.0, %v4038
    %4040 = vmatmul.f32.gmra.mxu0 %v3829
    %v4041 = vpop.f32.mrf.mxu0
    %v4042 = vadd.f32 0.0, %v4041
    %4043 = vmatmul.f32.gmra.mxu0 %v3830
    %v4044 = vpop.f32.mrf.mxu0
    %v4045 = vadd.f32 0.0, %v4044
    %4046 = vmatmul.f32.gmra.mxu0 %v3831
    %v4047 = vpop.f32.mrf.mxu0
    %v4048 = vadd.f32 0.0, %v4047
    %4049 = vmatmul.f32.gmra.mxu0 %v3832
    %v4050 = vpop.f32.mrf.mxu0
    %v4051 = vadd.f32 0.0, %v4050
    %4052 = vmatmul.f32.gmra.mxu0 %v3833
    %v4053 = vpop.f32.mrf.mxu0
    %v4054 = vadd.f32 0.0, %v4053
    %4055 = vmatmul.f32.gmra.mxu0 %v3834
    %v4056 = vpop.f32.mrf.mxu0
    %v4057 = vadd.f32 0.0, %v4056
    %4058 = vmatmul.f32.gmra.mxu0 %v3835
    %v4059 = vpop.f32.mrf.mxu0
    %v4060 = vadd.f32 0.0, %v4059
    %4061 = vdwg.mxu0
    %v4062 = vld [vmem:[#allocation3] sm:$0xff]
    %v4063 = vld [vmem:[#allocation3 + $0x8] sm:$0xff]
    %v4064 = vld [vmem:[#allocation3 + $0x10] sm:$0xff]
    %v4065 = vld [vmem:[#allocation3 + $0x18] sm:$0xff]
    %v4066 = vld [vmem:[#allocation3 + $0x20] sm:$0xff]
    %v4067 = vld [vmem:[#allocation3 + $0x28] sm:$0xff]
    %v4068 = vld [vmem:[#allocation3 + $0x30] sm:$0xff]
    %v4069 = vld [vmem:[#allocation3 + $0x38] sm:$0xff]
    %v4070 = vld [vmem:[#allocation3 + $0x40] sm:$0xff]
    %v4071 = vld [vmem:[#allocation3 + $0x48] sm:$0xff]
    %v4072 = vld [vmem:[#allocation3 + $0x50] sm:$0xff]
    %v4073 = vld [vmem:[#allocation3 + $0x58] sm:$0xff]
    %v4074 = vld [vmem:[#allocation3 + $0x60] sm:$0xff]
    %v4075 = vld [vmem:[#allocation3 + $0x68] sm:$0xff]
    %v4076 = vld [vmem:[#allocation3 + $0x70] sm:$0xff]
    %v4077 = vld [vmem:[#allocation3 + $0x78] sm:$0xff]
    %v4078 = vld [vmem:[#allocation3 + $0x80] sm:$0xff]
    %v4079 = vld [vmem:[#allocation3 + $0x88] sm:$0xff]
    %v4080 = vld [vmem:[#allocation3 + $0x90] sm:$0xff]
    %v4081 = vld [vmem:[#allocation3 + $0x98] sm:$0xff]
    %v4082 = vld [vmem:[#allocation3 + $0xa0] sm:$0xff]
    %v4083 = vld [vmem:[#allocation3 + $0xa8] sm:$0xff]
    %v4084 = vld [vmem:[#allocation3 + $0xb0] sm:$0xff]
    %v4085 = vld [vmem:[#allocation3 + $0xb8] sm:$0xff]
    %v4086 = vld [vmem:[#allocation3 + $0xc0] sm:$0xff]
    %v4087 = vld [vmem:[#allocation3 + $0xc8] sm:$0xff]
    %v4088 = vld [vmem:[#allocation3 + $0xd0] sm:$0xff]
    %v4089 = vld [vmem:[#allocation3 + $0xd8] sm:$0xff]
    %v4090 = vld [vmem:[#allocation3 + $0xe0] sm:$0xff]
    %v4091 = vld [vmem:[#allocation3 + $0xe8] sm:$0xff]
    %v4092 = vld [vmem:[#allocation3 + $0xf0] sm:$0xff]
    %v4093 = vld [vmem:[#allocation3 + $0xf8] sm:$0xff]
    %v4094 = vld [vmem:[#allocation3 + $0x100] sm:$0xff]
    %v4095 = vld [vmem:[#allocation3 + $0x108] sm:$0xff]
    %v4096 = vld [vmem:[#allocation3 + $0x110] sm:$0xff]
    %v4097 = vld [vmem:[#allocation3 + $0x118] sm:$0xff]
    %v4098 = vld [vmem:[#allocation3 + $0x120] sm:$0xff]
    %v4099 = vld [vmem:[#allocation3 + $0x128] sm:$0xff]
    %v4100 = vld [vmem:[#allocation3 + $0x130] sm:$0xff]
    %v4101 = vld [vmem:[#allocation3 + $0x138] sm:$0xff]
    %v4102 = vld [vmem:[#allocation3 + $0x140] sm:$0xff]
    %v4103 = vld [vmem:[#allocation3 + $0x148] sm:$0xff]
    %v4104 = vld [vmem:[#allocation3 + $0x150] sm:$0xff]
    %v4105 = vld [vmem:[#allocation3 + $0x158] sm:$0xff]
    %v4106 = vld [vmem:[#allocation3 + $0x160] sm:$0xff]
    %v4107 = vld [vmem:[#allocation3 + $0x168] sm:$0xff]
    %v4108 = vld [vmem:[#allocation3 + $0x170] sm:$0xff]
    %v4109 = vld [vmem:[#allocation3 + $0x178] sm:$0xff]
    %v4110 = vld [vmem:[#allocation3 + $0x180] sm:$0xff]
    %v4111 = vld [vmem:[#allocation3 + $0x188] sm:$0xff]
    %v4112 = vld [vmem:[#allocation3 + $0x190] sm:$0xff]
    %v4113 = vld [vmem:[#allocation3 + $0x198] sm:$0xff]
    %v4114 = vld [vmem:[#allocation3 + $0x1a0] sm:$0xff]
    %v4115 = vld [vmem:[#allocation3 + $0x1a8] sm:$0xff]
    %v4116 = vld [vmem:[#allocation3 + $0x1b0] sm:$0xff]
    %v4117 = vld [vmem:[#allocation3 + $0x1b8] sm:$0xff]
    %v4118 = vld [vmem:[#allocation3 + $0x1c0] sm:$0xff]
    %v4119 = vld [vmem:[#allocation3 + $0x1c8] sm:$0xff]
    %v4120 = vld [vmem:[#allocation3 + $0x1d0] sm:$0xff]
    %v4121 = vld [vmem:[#allocation3 + $0x1d8] sm:$0xff]
    %v4122 = vld [vmem:[#allocation3 + $0x1e0] sm:$0xff]
    %v4123 = vld [vmem:[#allocation3 + $0x1e8] sm:$0xff]
    %v4124 = vld [vmem:[#allocation3 + $0x1f0] sm:$0xff]
    %v4125 = vld [vmem:[#allocation3 + $0x1f8] sm:$0xff]
    %v4126 = vadd.f32 %v4062, %v3871
    %v4127 = vadd.f32 %v4063, %v3874
    %v4128 = vadd.f32 %v4064, %v3877
    %v4129 = vadd.f32 %v4065, %v3880
    %v4130 = vadd.f32 %v4066, %v3883
    %v4131 = vadd.f32 %v4067, %v3886
    %v4132 = vadd.f32 %v4068, %v3889
    %v4133 = vadd.f32 %v4069, %v3892
    %v4134 = vadd.f32 %v4070, %v3895
    %v4135 = vadd.f32 %v4071, %v3898
    %v4136 = vadd.f32 %v4072, %v3901
    %v4137 = vadd.f32 %v4073, %v3904
    %v4138 = vadd.f32 %v4074, %v3907
    %v4139 = vadd.f32 %v4075, %v3910
    %v4140 = vadd.f32 %v4076, %v3913
    %v4141 = vadd.f32 %v4077, %v3916
    %v4142 = vadd.f32 %v4078, %v3919
    %v4143 = vadd.f32 %v4079, %v3922
    %v4144 = vadd.f32 %v4080, %v3925
    %v4145 = vadd.f32 %v4081, %v3928
    %v4146 = vadd.f32 %v4082, %v3931
    %v4147 = vadd.f32 %v4083, %v3934
    %v4148 = vadd.f32 %v4084, %v3937
    %v4149 = vadd.f32 %v4085, %v3940
    %v4150 = vadd.f32 %v4086, %v3943
    %v4151 = vadd.f32 %v4087, %v3946
    %v4152 = vadd.f32 %v4088, %v3949
    %v4153 = vadd.f32 %v4089, %v3952
    %v4154 = vadd.f32 %v4090, %v3955
    %v4155 = vadd.f32 %v4091, %v3958
    %v4156 = vadd.f32 %v4092, %v3961
    %v4157 = vadd.f32 %v4093, %v3964
    %v4158 = vadd.f32 %v4094, %v3967
    %v4159 = vadd.f32 %v4095, %v3970
    %v4160 = vadd.f32 %v4096, %v3973
    %v4161 = vadd.f32 %v4097, %v3976
    %v4162 = vadd.f32 %v4098, %v3979
    %v4163 = vadd.f32 %v4099, %v3982
    %v4164 = vadd.f32 %v4100, %v3985
    %v4165 = vadd.f32 %v4101, %v3988
    %v4166 = vadd.f32 %v4102, %v3991
    %v4167 = vadd.f32 %v4103, %v3994
    %v4168 = vadd.f32 %v4104, %v3997
    %v4169 = vadd.f32 %v4105, %v4000
    %v4170 = vadd.f32 %v4106, %v4003
    %v4171 = vadd.f32 %v4107, %v4006
    %v4172 = vadd.f32 %v4108, %v4009
    %v4173 = vadd.f32 %v4109, %v4012
    %v4174 = vadd.f32 %v4110, %v4015
    %v4175 = vadd.f32 %v4111, %v4018
    %v4176 = vadd.f32 %v4112, %v4021
    %v4177 = vadd.f32 %v4113, %v4024
    %v4178 = vadd.f32 %v4114, %v4027
    %v4179 = vadd.f32 %v4115, %v4030
    %v4180 = vadd.f32 %v4116, %v4033
    %v4181 = vadd.f32 %v4117, %v4036
    %v4182 = vadd.f32 %v4118, %v4039
    %v4183 = vadd.f32 %v4119, %v4042
    %v4184 = vadd.f32 %v4120, %v4045
    %v4185 = vadd.f32 %v4121, %v4048
    %v4186 = vadd.f32 %v4122, %v4051
    %v4187 = vadd.f32 %v4123, %v4054
    %v4188 = vadd.f32 %v4124, %v4057
    %v4189 = vadd.f32 %v4125, %v4060
    %4190 = vst [vmem:[#allocation3] sm:$0xff] %v4126
    %4191 = vst [vmem:[#allocation3 + $0x8] sm:$0xff] %v4127
    %4192 = vst [vmem:[#allocation3 + $0x10] sm:$0xff] %v4128
    %4193 = vst [vmem:[#allocation3 + $0x18] sm:$0xff] %v4129
    %4194 = vst [vmem:[#allocation3 + $0x20] sm:$0xff] %v4130
    %4195 = vst [vmem:[#allocation3 + $0x28] sm:$0xff] %v4131
    %4196 = vst [vmem:[#allocation3 + $0x30] sm:$0xff] %v4132
    %4197 = vst [vmem:[#allocation3 + $0x38] sm:$0xff] %v4133
    %4198 = vst [vmem:[#allocation3 + $0x40] sm:$0xff] %v4134
    %4199 = vst [vmem:[#allocation3 + $0x48] sm:$0xff] %v4135
    %4200 = vst [vmem:[#allocation3 + $0x50] sm:$0xff] %v4136
    %4201 = vst [vmem:[#allocation3 + $0x58] sm:$0xff] %v4137
    %4202 = vst [vmem:[#allocation3 + $0x60] sm:$0xff] %v4138
    %4203 = vst [vmem:[#allocation3 + $0x68] sm:$0xff] %v4139
    %4204 = vst [vmem:[#allocation3 + $0x70] sm:$0xff] %v4140
    %4205 = vst [vmem:[#allocation3 + $0x78] sm:$0xff] %v4141
    %4206 = vst [vmem:[#allocation3 + $0x80] sm:$0xff] %v4142
    %4207 = vst [vmem:[#allocation3 + $0x88] sm:$0xff] %v4143
    %4208 = vst [vmem:[#allocation3 + $0x90] sm:$0xff] %v4144
    %4209 = vst [vmem:[#allocation3 + $0x98] sm:$0xff] %v4145
    %4210 = vst [vmem:[#allocation3 + $0xa0] sm:$0xff] %v4146
    %4211 = vst [vmem:[#allocation3 + $0xa8] sm:$0xff] %v4147
    %4212 = vst [vmem:[#allocation3 + $0xb0] sm:$0xff] %v4148
    %4213 = vst [vmem:[#allocation3 + $0xb8] sm:$0xff] %v4149
    %4214 = vst [vmem:[#allocation3 + $0xc0] sm:$0xff] %v4150
    %4215 = vst [vmem:[#allocation3 + $0xc8] sm:$0xff] %v4151
    %4216 = vst [vmem:[#allocation3 + $0xd0] sm:$0xff] %v4152
    %4217 = vst [vmem:[#allocation3 + $0xd8] sm:$0xff] %v4153
    %4218 = vst [vmem:[#allocation3 + $0xe0] sm:$0xff] %v4154
    %4219 = vst [vmem:[#allocation3 + $0xe8] sm:$0xff] %v4155
    %4220 = vst [vmem:[#allocation3 + $0xf0] sm:$0xff] %v4156
    %4221 = vst [vmem:[#allocation3 + $0xf8] sm:$0xff] %v4157
    %4222 = vst [vmem:[#allocation3 + $0x100] sm:$0xff] %v4158
    %4223 = vst [vmem:[#allocation3 + $0x108] sm:$0xff] %v4159
    %4224 = vst [vmem:[#allocation3 + $0x110] sm:$0xff] %v4160
    %4225 = vst [vmem:[#allocation3 + $0x118] sm:$0xff] %v4161
    %4226 = vst [vmem:[#allocation3 + $0x120] sm:$0xff] %v4162
    %4227 = vst [vmem:[#allocation3 + $0x128] sm:$0xff] %v4163
    %4228 = vst [vmem:[#allocation3 + $0x130] sm:$0xff] %v4164
    %4229 = vst [vmem:[#allocation3 + $0x138] sm:$0xff] %v4165
    %4230 = vst [vmem:[#allocation3 + $0x140] sm:$0xff] %v4166
    %4231 = vst [vmem:[#allocation3 + $0x148] sm:$0xff] %v4167
    %4232 = vst [vmem:[#allocation3 + $0x150] sm:$0xff] %v4168
    %4233 = vst [vmem:[#allocation3 + $0x158] sm:$0xff] %v4169
    %4234 = vst [vmem:[#allocation3 + $0x160] sm:$0xff] %v4170
    %4235 = vst [vmem:[#allocation3 + $0x168] sm:$0xff] %v4171
    %4236 = vst [vmem:[#allocation3 + $0x170] sm:$0xff] %v4172
    %4237 = vst [vmem:[#allocation3 + $0x178] sm:$0xff] %v4173
    %4238 = vst [vmem:[#allocation3 + $0x180] sm:$0xff] %v4174
    %4239 = vst [vmem:[#allocation3 + $0x188] sm:$0xff] %v4175
    %4240 = vst [vmem:[#allocation3 + $0x190] sm:$0xff] %v4176
    %4241 = vst [vmem:[#allocation3 + $0x198] sm:$0xff] %v4177
    %4242 = vst [vmem:[#allocation3 + $0x1a0] sm:$0xff] %v4178
    %4243 = vst [vmem:[#allocation3 + $0x1a8] sm:$0xff] %v4179
    %4244 = vst [vmem:[#allocation3 + $0x1b0] sm:$0xff] %v4180
    %4245 = vst [vmem:[#allocation3 + $0x1b8] sm:$0xff] %v4181
    %4246 = vst [vmem:[#allocation3 + $0x1c0] sm:$0xff] %v4182
    %4247 = vst [vmem:[#allocation3 + $0x1c8] sm:$0xff] %v4183
    %4248 = vst [vmem:[#allocation3 + $0x1d0] sm:$0xff] %v4184
    %4249 = vst [vmem:[#allocation3 + $0x1d8] sm:$0xff] %v4185
    %4250 = vst [vmem:[#allocation3 + $0x1e0] sm:$0xff] %v4186
    %4251 = vst [vmem:[#allocation3 + $0x1e8] sm:$0xff] %v4187
    %4252 = vst [vmem:[#allocation3 + $0x1f0] sm:$0xff] %v4188
    %4253 = vst [vmem:[#allocation3 + $0x1f8] sm:$0xff] %v4189
    %v4254 = vld [vmem:[#allocation3] sm:$0xff]
    %v4255 = vld [vmem:[#allocation3 + $0x8] sm:$0xff]
    %v4256 = vld [vmem:[#allocation3 + $0x10] sm:$0xff]
    %v4257 = vld [vmem:[#allocation3 + $0x18] sm:$0xff]
    %v4258 = vld [vmem:[#allocation3 + $0x20] sm:$0xff]
    %v4259 = vld [vmem:[#allocation3 + $0x28] sm:$0xff]
    %v4260 = vld [vmem:[#allocation3 + $0x30] sm:$0xff]
    %v4261 = vld [vmem:[#allocation3 + $0x38] sm:$0xff]
    %v4262 = vld [vmem:[#allocation3 + $0x40] sm:$0xff]
    %v4263 = vld [vmem:[#allocation3 + $0x48] sm:$0xff]
    %v4264 = vld [vmem:[#allocation3 + $0x50] sm:$0xff]
    %v4265 = vld [vmem:[#allocation3 + $0x58] sm:$0xff]
    %v4266 = vld [vmem:[#allocation3 + $0x60] sm:$0xff]
    %v4267 = vld [vmem:[#allocation3 + $0x68] sm:$0xff]
    %v4268 = vld [vmem:[#allocation3 + $0x70] sm:$0xff]
    %v4269 = vld [vmem:[#allocation3 + $0x78] sm:$0xff]
    %v4270 = vld [vmem:[#allocation3 + $0x80] sm:$0xff]
    %v4271 = vld [vmem:[#allocation3 + $0x88] sm:$0xff]
    %v4272 = vld [vmem:[#allocation3 + $0x90] sm:$0xff]
    %v4273 = vld [vmem:[#allocation3 + $0x98] sm:$0xff]
    %v4274 = vld [vmem:[#allocation3 + $0xa0] sm:$0xff]
    %v4275 = vld [vmem:[#allocation3 + $0xa8] sm:$0xff]
    %v4276 = vld [vmem:[#allocation3 + $0xb0] sm:$0xff]
    %v4277 = vld [vmem:[#allocation3 + $0xb8] sm:$0xff]
    %v4278 = vld [vmem:[#allocation3 + $0xc0] sm:$0xff]
    %v4279 = vld [vmem:[#allocation3 + $0xc8] sm:$0xff]
    %v4280 = vld [vmem:[#allocation3 + $0xd0] sm:$0xff]
    %v4281 = vld [vmem:[#allocation3 + $0xd8] sm:$0xff]
    %v4282 = vld [vmem:[#allocation3 + $0xe0] sm:$0xff]
    %v4283 = vld [vmem:[#allocation3 + $0xe8] sm:$0xff]
    %v4284 = vld [vmem:[#allocation3 + $0xf0] sm:$0xff]
    %v4285 = vld [vmem:[#allocation3 + $0xf8] sm:$0xff]
    %v4286 = vld [vmem:[#allocation3 + $0x100] sm:$0xff]
    %v4287 = vld [vmem:[#allocation3 + $0x108] sm:$0xff]
    %v4288 = vld [vmem:[#allocation3 + $0x110] sm:$0xff]
    %v4289 = vld [vmem:[#allocation3 + $0x118] sm:$0xff]
    %v4290 = vld [vmem:[#allocation3 + $0x120] sm:$0xff]
    %v4291 = vld [vmem:[#allocation3 + $0x128] sm:$0xff]
    %v4292 = vld [vmem:[#allocation3 + $0x130] sm:$0xff]
    %v4293 = vld [vmem:[#allocation3 + $0x138] sm:$0xff]
    %v4294 = vld [vmem:[#allocation3 + $0x140] sm:$0xff]
    %v4295 = vld [vmem:[#allocation3 + $0x148] sm:$0xff]
    %v4296 = vld [vmem:[#allocation3 + $0x150] sm:$0xff]
    %v4297 = vld [vmem:[#allocation3 + $0x158] sm:$0xff]
    %v4298 = vld [vmem:[#allocation3 + $0x160] sm:$0xff]
    %v4299 = vld [vmem:[#allocation3 + $0x168] sm:$0xff]
    %v4300 = vld [vmem:[#allocation3 + $0x170] sm:$0xff]
    %v4301 = vld [vmem:[#allocation3 + $0x178] sm:$0xff]
    %v4302 = vld [vmem:[#allocation3 + $0x180] sm:$0xff]
    %v4303 = vld [vmem:[#allocation3 + $0x188] sm:$0xff]
    %v4304 = vld [vmem:[#allocation3 + $0x190] sm:$0xff]
    %v4305 = vld [vmem:[#allocation3 + $0x198] sm:$0xff]
    %v4306 = vld [vmem:[#allocation3 + $0x1a0] sm:$0xff]
    %v4307 = vld [vmem:[#allocation3 + $0x1a8] sm:$0xff]
    %v4308 = vld [vmem:[#allocation3 + $0x1b0] sm:$0xff]
    %v4309 = vld [vmem:[#allocation3 + $0x1b8] sm:$0xff]
    %v4310 = vld [vmem:[#allocation3 + $0x1c0] sm:$0xff]
    %v4311 = vld [vmem:[#allocation3 + $0x1c8] sm:$0xff]
    %v4312 = vld [vmem:[#allocation3 + $0x1d0] sm:$0xff]
    %v4313 = vld [vmem:[#allocation3 + $0x1d8] sm:$0xff]
    %v4314 = vld [vmem:[#allocation3 + $0x1e0] sm:$0xff]
    %v4315 = vld [vmem:[#allocation3 + $0x1e8] sm:$0xff]
    %v4316 = vld [vmem:[#allocation3 + $0x1f0] sm:$0xff]
    %v4317 = vld [vmem:[#allocation3 + $0x1f8] sm:$0xff]
    %v4318 = vadd.f32 %v4254, %v4255
    %v4319 = vadd.f32 %v4318, %v4256
    %v4320 = vadd.f32 %v4319, %v4257
    %v4321 = vadd.f32 %v4320, %v4258
    %v4322 = vadd.f32 %v4321, %v4259
    %v4323 = vadd.f32 %v4322, %v4260
    %v4324 = vadd.f32 %v4323, %v4261
    %v4325 = vadd.f32 %v4324, %v4262
    %v4326 = vadd.f32 %v4325, %v4263
    %v4327 = vadd.f32 %v4326, %v4264
    %v4328 = vadd.f32 %v4327, %v4265
    %v4329 = vadd.f32 %v4328, %v4266
    %v4330 = vadd.f32 %v4329, %v4267
    %v4331 = vadd.f32 %v4330, %v4268
    %v4332 = vadd.f32 %v4331, %v4269
    %v4333 = vadd.f32 %v4332, %v4270
    %v4334 = vadd.f32 %v4333, %v4271
    %v4335 = vadd.f32 %v4334, %v4272
    %v4336 = vadd.f32 %v4335, %v4273
    %v4337 = vadd.f32 %v4336, %v4274
    %v4338 = vadd.f32 %v4337, %v4275
    %v4339 = vadd.f32 %v4338, %v4276
    %v4340 = vadd.f32 %v4339, %v4277
    %v4341 = vadd.f32 %v4340, %v4278
    %v4342 = vadd.f32 %v4341, %v4279
    %v4343 = vadd.f32 %v4342, %v4280
    %v4344 = vadd.f32 %v4343, %v4281
    %v4345 = vadd.f32 %v4344, %v4282
    %v4346 = vadd.f32 %v4345, %v4283
    %v4347 = vadd.f32 %v4346, %v4284
    %v4348 = vadd.f32 %v4347, %v4285
    %v4349 = vadd.f32 %v4348, %v4286
    %v4350 = vadd.f32 %v4349, %v4287
    %v4351 = vadd.f32 %v4350, %v4288
    %v4352 = vadd.f32 %v4351, %v4289
    %v4353 = vadd.f32 %v4352, %v4290
    %v4354 = vadd.f32 %v4353, %v4291
    %v4355 = vadd.f32 %v4354, %v4292
    %v4356 = vadd.f32 %v4355, %v4293
    %v4357 = vadd.f32 %v4356, %v4294
    %v4358 = vadd.f32 %v4357, %v4295
    %v4359 = vadd.f32 %v4358, %v4296
    %v4360 = vadd.f32 %v4359, %v4297
    %v4361 = vadd.f32 %v4360, %v4298
    %v4362 = vadd.f32 %v4361, %v4299
    %v4363 = vadd.f32 %v4362, %v4300
    %v4364 = vadd.f32 %v4363, %v4301
    %v4365 = vadd.f32 %v4364, %v4302
    %v4366 = vadd.f32 %v4365, %v4303
    %v4367 = vadd.f32 %v4366, %v4304
    %v4368 = vadd.f32 %v4367, %v4305
    %v4369 = vadd.f32 %v4368, %v4306
    %v4370 = vadd.f32 %v4369, %v4307
    %v4371 = vadd.f32 %v4370, %v4308
    %v4372 = vadd.f32 %v4371, %v4309
    %v4373 = vadd.f32 %v4372, %v4310
    %v4374 = vadd.f32 %v4373, %v4311
    %v4375 = vadd.f32 %v4374, %v4312
    %v4376 = vadd.f32 %v4375, %v4313
    %v4377 = vadd.f32 %v4376, %v4314
    %v4378 = vadd.f32 %v4377, %v4315
    %v4379 = vadd.f32 %v4378, %v4316
    %v4380 = vadd.f32 %v4379, %v4317
    %v4381 = vrot.slane %v4380, 4
    %v4382 = vadd.f32 %v4380, %v4381
    %v4383 = vrot.slane %v4382, 2
    %v4384 = vadd.f32 %v4382, %v4383
    %v4385 = vrot.slane %v4384, 1
    %v4386 = vadd.f32 %v4384, %v4385
    %v4387 = vmul.f32 %v4386, 0.001953125
    %v4388 = vsub.f32 %v4254, %v4387
    %v4389 = vsub.f32 %v4255, %v4387
    %v4390 = vsub.f32 %v4256, %v4387
    %v4391 = vsub.f32 %v4257, %v4387
    %v4392 = vsub.f32 %v4258, %v4387
    %v4393 = vsub.f32 %v4259, %v4387
    %v4394 = vsub.f32 %v4260, %v4387
    %v4395 = vsub.f32 %v4261, %v4387
    %v4396 = vsub.f32 %v4262, %v4387
    %v4397 = vsub.f32 %v4263, %v4387
    %v4398 = vsub.f32 %v4264, %v4387
    %v4399 = vsub.f32 %v4265, %v4387
    %v4400 = vsub.f32 %v4266, %v4387
    %v4401 = vsub.f32 %v4267, %v4387
    %v4402 = vsub.f32 %v4268, %v4387
    %v4403 = vsub.f32 %v4269, %v4387
    %v4404 = vsub.f32 %v4270, %v4387
    %v4405 = vsub.f32 %v4271, %v4387
    %v4406 = vsub.f32 %v4272, %v4387
    %v4407 = vsub.f32 %v4273, %v4387
    %v4408 = vsub.f32 %v4274, %v4387
    %v4409 = vsub.f32 %v4275, %v4387
    %v4410 = vsub.f32 %v4276, %v4387
    %v4411 = vsub.f32 %v4277, %v4387
    %v4412 = vsub.f32 %v4278, %v4387
    %v4413 = vsub.f32 %v4279, %v4387
    %v4414 = vsub.f32 %v4280, %v4387
    %v4415 = vsub.f32 %v4281, %v4387
    %v4416 = vsub.f32 %v4282, %v4387
    %v4417 = vsub.f32 %v4283, %v4387
    %v4418 = vsub.f32 %v4284, %v4387
    %v4419 = vsub.f32 %v4285, %v4387
    %v4420 = vsub.f32 %v4286, %v4387
    %v4421 = vsub.f32 %v4287, %v4387
    %v4422 = vsub.f32 %v4288, %v4387
    %v4423 = vsub.f32 %v4289, %v4387
    %v4424 = vsub.f32 %v4290, %v4387
    %v4425 = vsub.f32 %v4291, %v4387
    %v4426 = vsub.f32 %v4292, %v4387
    %v4427 = vsub.f32 %v4293, %v4387
    %v4428 = vsub.f32 %v4294, %v4387
    %v4429 = vsub.f32 %v4295, %v4387
    %v4430 = vsub.f32 %v4296, %v4387
    %v4431 = vsub.f32 %v4297, %v4387
    %v4432 = vsub.f32 %v4298, %v4387
    %v4433 = vsub.f32 %v4299, %v4387
    %v4434 = vsub.f32 %v4300, %v4387
    %v4435 = vsub.f32 %v4301, %v4387
    %v4436 = vsub.f32 %v4302, %v4387
    %v4437 = vsub.f32 %v4303, %v4387
    %v4438 = vsub.f32 %v4304, %v4387
    %v4439 = vsub.f32 %v4305, %v4387
    %v4440 = vsub.f32 %v4306, %v4387
    %v4441 = vsub.f32 %v4307, %v4387
    %v4442 = vsub.f32 %v4308, %v4387
    %v4443 = vsub.f32 %v4309, %v4387
    %v4444 = vsub.f32 %v4310, %v4387
    %v4445 = vsub.f32 %v4311, %v4387
    %v4446 = vsub.f32 %v4312, %v4387
    %v4447 = vsub.f32 %v4313, %v4387
    %v4448 = vsub.f32 %v4314, %v4387
    %v4449 = vsub.f32 %v4315, %v4387
    %v4450 = vsub.f32 %v4316, %v4387
    %v4451 = vsub.f32 %v4317, %v4387
    %v4452 = vmul.f32 %v4388, %v4388
    %v4453 = vmul.f32 %v4389, %v4389
    %v4454 = vmul.f32 %v4390, %v4390
    %v4455 = vmul.f32 %v4391, %v4391
    %v4456 = vmul.f32 %v4392, %v4392
    %v4457 = vmul.f32 %v4393, %v4393
    %v4458 = vmul.f32 %v4394, %v4394
    %v4459 = vmul.f32 %v4395, %v4395
    %v4460 = vmul.f32 %v4396, %v4396
    %v4461 = vmul.f32 %v4397, %v4397
    %v4462 = vmul.f32 %v4398, %v4398
    %v4463 = vmul.f32 %v4399, %v4399
    %v4464 = vmul.f32 %v4400, %v4400
    %v4465 = vmul.f32 %v4401, %v4401
    %v4466 = vmul.f32 %v4402, %v4402
    %v4467 = vmul.f32 %v4403, %v4403
    %v4468 = vmul.f32 %v4404, %v4404
    %v4469 = vmul.f32 %v4405, %v4405
    %v4470 = vmul.f32 %v4406, %v4406
    %v4471 = vmul.f32 %v4407, %v4407
    %v4472 = vmul.f32 %v4408, %v4408
    %v4473 = vmul.f32 %v4409, %v4409
    %v4474 = vmul.f32 %v4410, %v4410
    %v4475 = vmul.f32 %v4411, %v4411
    %v4476 = vmul.f32 %v4412, %v4412
    %v4477 = vmul.f32 %v4413, %v4413
    %v4478 = vmul.f32 %v4414, %v4414
    %v4479 = vmul.f32 %v4415, %v4415
    %v4480 = vmul.f32 %v4416, %v4416
    %v4481 = vmul.f32 %v4417, %v4417
    %v4482 = vmul.f32 %v4418, %v4418
    %v4483 = vmul.f32 %v4419, %v4419
    %v4484 = vmul.f32 %v4420, %v4420
    %v4485 = vmul.f32 %v4421, %v4421
    %v4486 = vmul.f32 %v4422, %v4422
    %v4487 = vmul.f32 %v4423, %v4423
    %v4488 = vmul.f32 %v4424, %v4424
    %v4489 = vmul.f32 %v4425, %v4425
    %v4490 = vmul.f32 %v4426, %v4426
    %v4491 = vmul.f32 %v4427, %v4427
    %v4492 = vmul.f32 %v4428, %v4428
    %v4493 = vmul.f32 %v4429, %v4429
    %v4494 = vmul.f32 %v4430, %v4430
    %v4495 = vmul.f32 %v4431, %v4431
    %v4496 = vmul.f32 %v4432, %v4432
    %v4497 = vmul.f32 %v4433, %v4433
    %v4498 = vmul.f32 %v4434, %v4434
    %v4499 = vmul.f32 %v4435, %v4435
    %v4500 = vmul.f32 %v4436, %v4436
    %v4501 = vmul.f32 %v4437, %v4437
    %v4502 = vmul.f32 %v4438, %v4438
    %v4503 = vmul.f32 %v4439, %v4439
    %v4504 = vmul.f32 %v4440, %v4440
    %v4505 = vmul.f32 %v4441, %v4441
    %v4506 = vmul.f32 %v4442, %v4442
    %v4507 = vmul.f32 %v4443, %v4443
    %v4508 = vmul.f32 %v4444, %v4444
    %v4509 = vmul.f32 %v4445, %v4445
    %v4510 = vmul.f32 %v4446, %v4446
    %v4511 = vmul.f32 %v4447, %v4447
    %v4512 = vmul.f32 %v4448, %v4448
    %v4513 = vmul.f32 %v4449, %v4449
    %v4514 = vmul.f32 %v4450, %v4450
    %v4515 = vmul.f32 %v4451, %v4451
    %v4516 = vadd.f32 %v4452, %v4453
    %v4517 = vadd.f32 %v4516, %v4454
    %v4518 = vadd.f32 %v4517, %v4455
    %v4519 = vadd.f32 %v4518, %v4456
    %v4520 = vadd.f32 %v4519, %v4457
    %v4521 = vadd.f32 %v4520, %v4458
    %v4522 = vadd.f32 %v4521, %v4459
    %v4523 = vadd.f32 %v4522, %v4460
    %v4524 = vadd.f32 %v4523, %v4461
    %v4525 = vadd.f32 %v4524, %v4462
    %v4526 = vadd.f32 %v4525, %v4463
    %v4527 = vadd.f32 %v4526, %v4464
    %v4528 = vadd.f32 %v4527, %v4465
    %v4529 = vadd.f32 %v4528, %v4466
    %v4530 = vadd.f32 %v4529, %v4467
    %v4531 = vadd.f32 %v4530, %v4468
    %v4532 = vadd.f32 %v4531, %v4469
    %v4533 = vadd.f32 %v4532, %v4470
    %v4534 = vadd.f32 %v4533, %v4471
    %v4535 = vadd.f32 %v4534, %v4472
    %v4536 = vadd.f32 %v4535, %v4473
    %v4537 = vadd.f32 %v4536, %v4474
    %v4538 = vadd.f32 %v4537, %v4475
    %v4539 = vadd.f32 %v4538, %v4476
    %v4540 = vadd.f32 %v4539, %v4477
    %v4541 = vadd.f32 %v4540, %v4478
    %v4542 = vadd.f32 %v4541, %v4479
    %v4543 = vadd.f32 %v4542, %v4480
    %v4544 = vadd.f32 %v4543, %v4481
    %v4545 = vadd.f32 %v4544, %v4482
    %v4546 = vadd.f32 %v4545, %v4483
    %v4547 = vadd.f32 %v4546, %v4484
    %v4548 = vadd.f32 %v4547, %v4485
    %v4549 = vadd.f32 %v4548, %v4486
    %v4550 = vadd.f32 %v4549, %v4487
    %v4551 = vadd.f32 %v4550, %v4488
    %v4552 = vadd.f32 %v4551, %v4489
    %v4553 = vadd.f32 %v4552, %v4490
    %v4554 = vadd.f32 %v4553, %v4491
    %v4555 = vadd.f32 %v4554, %v4492
    %v4556 = vadd.f32 %v4555, %v4493
    %v4557 = vadd.f32 %v4556, %v4494
    %v4558 = vadd.f32 %v4557, %v4495
    %v4559 = vadd.f32 %v4558, %v4496
    %v4560 = vadd.f32 %v4559, %v4497
    %v4561 = vadd.f32 %v4560, %v4498
    %v4562 = vadd.f32 %v4561, %v4499
    %v4563 = vadd.f32 %v4562, %v4500
    %v4564 = vadd.f32 %v4563, %v4501
    %v4565 = vadd.f32 %v4564, %v4502
    %v4566 = vadd.f32 %v4565, %v4503
    %v4567 = vadd.f32 %v4566, %v4504
    %v4568 = vadd.f32 %v4567, %v4505
    %v4569 = vadd.f32 %v4568, %v4506
    %v4570 = vadd.f32 %v4569, %v4507
    %v4571 = vadd.f32 %v4570, %v4508
    %v4572 = vadd.f32 %v4571, %v4509
    %v4573 = vadd.f32 %v4572, %v4510
    %v4574 = vadd.f32 %v4573, %v4511
    %v4575 = vadd.f32 %v4574, %v4512
    %v4576 = vadd.f32 %v4575, %v4513
    %v4577 = vadd.f32 %v4576, %v4514
    %v4578 = vadd.f32 %v4577, %v4515
    %v4579 = vrot.slane %v4578, 4
    %v4580 = vadd.f32 %v4578, %v4579
    %v4581 = vrot.slane %v4580, 2
    %v4582 = vadd.f32 %v4580, %v4581
    %v4583 = vrot.slane %v4582, 1
    %v4584 = vadd.f32 %v4582, %v4583
    %v4585 = vmul.f32 %v4584, 0.001953125
    %v4586 = vld [vmem:[%s2] sm:$0x1]
    %v4587 = vadd.f32 %v4585, 1e-05
    %v4588 = vrsqrt.pop %v4587
    %v4589 = vmul.f32 %v4588, %v4587
    %v4590 = vmul.f32 %v4589, %v4588
    %v4591 = vmul.f32 0.5, %v4590
    %v4592 = vsub.f32 1.5, %v4591
    %v4593 = vmul.f32 %v4588, %v4592
    %vm4594 = vweird.f32 %v4587
    %vm4595 = vweird.f32 %v4588
    %vm4596 = vmor %vm4594, %vm4595
    %v4597 = vsel %vm4596, %v4588, %v4593
    %v4598 = vmul.f32 %v4586, %v4597
    %v4600 = vperm.slane %v4598, 0
    %v4602 = vmul.f32 %v4388, %v4600
    %v4603 = vmul.f32 %v4389, %v4600
    %v4604 = vmul.f32 %v4390, %v4600
    %v4605 = vmul.f32 %v4391, %v4600
    %v4606 = vmul.f32 %v4392, %v4600
    %v4607 = vmul.f32 %v4393, %v4600
    %v4608 = vmul.f32 %v4394, %v4600
    %v4609 = vmul.f32 %v4395, %v4600
    %v4610 = vmul.f32 %v4396, %v4600
    %v4611 = vmul.f32 %v4397, %v4600
    %v4612 = vmul.f32 %v4398, %v4600
    %v4613 = vmul.f32 %v4399, %v4600
    %v4614 = vmul.f32 %v4400, %v4600
    %v4615 = vmul.f32 %v4401, %v4600
    %v4616 = vmul.f32 %v4402, %v4600
    %v4617 = vmul.f32 %v4403, %v4600
    %v4618 = vmul.f32 %v4404, %v4600
    %v4619 = vmul.f32 %v4405, %v4600
    %v4620 = vmul.f32 %v4406, %v4600
    %v4621 = vmul.f32 %v4407, %v4600
    %v4622 = vmul.f32 %v4408, %v4600
    %v4623 = vmul.f32 %v4409, %v4600
    %v4624 = vmul.f32 %v4410, %v4600
    %v4625 = vmul.f32 %v4411, %v4600
    %v4626 = vmul.f32 %v4412, %v4600
    %v4627 = vmul.f32 %v4413, %v4600
    %v4628 = vmul.f32 %v4414, %v4600
    %v4629 = vmul.f32 %v4415, %v4600
    %v4630 = vmul.f32 %v4416, %v4600
    %v4631 = vmul.f32 %v4417, %v4600
    %v4632 = vmul.f32 %v4418, %v4600
    %v4633 = vmul.f32 %v4419, %v4600
    %v4634 = vmul.f32 %v4420, %v4600
    %v4635 = vmul.f32 %v4421, %v4600
    %v4636 = vmul.f32 %v4422, %v4600
    %v4637 = vmul.f32 %v4423, %v4600
    %v4638 = vmul.f32 %v4424, %v4600
    %v4639 = vmul.f32 %v4425, %v4600
    %v4640 = vmul.f32 %v4426, %v4600
    %v4641 = vmul.f32 %v4427, %v4600
    %v4642 = vmul.f32 %v4428, %v4600
    %v4643 = vmul.f32 %v4429, %v4600
    %v4644 = vmul.f32 %v4430, %v4600
    %v4645 = vmul.f32 %v4431, %v4600
    %v4646 = vmul.f32 %v4432, %v4600
    %v4647 = vmul.f32 %v4433, %v4600
    %v4648 = vmul.f32 %v4434, %v4600
    %v4649 = vmul.f32 %v4435, %v4600
    %v4650 = vmul.f32 %v4436, %v4600
    %v4651 = vmul.f32 %v4437, %v4600
    %v4652 = vmul.f32 %v4438, %v4600
    %v4653 = vmul.f32 %v4439, %v4600
    %v4654 = vmul.f32 %v4440, %v4600
    %v4655 = vmul.f32 %v4441, %v4600
    %v4656 = vmul.f32 %v4442, %v4600
    %v4657 = vmul.f32 %v4443, %v4600
    %v4658 = vmul.f32 %v4444, %v4600
    %v4659 = vmul.f32 %v4445, %v4600
    %v4660 = vmul.f32 %v4446, %v4600
    %v4661 = vmul.f32 %v4447, %v4600
    %v4662 = vmul.f32 %v4448, %v4600
    %v4663 = vmul.f32 %v4449, %v4600
    %v4664 = vmul.f32 %v4450, %v4600
    %v4665 = vmul.f32 %v4451, %v4600
    %v4666 = vld [vmem:[%s3] sm:$0x1]
    %v4668 = vperm.slane %v4666, 0
    %v4670 = vadd.f32 %v4602, %v4668
    %v4671 = vadd.f32 %v4603, %v4668
    %v4672 = vadd.f32 %v4604, %v4668
    %v4673 = vadd.f32 %v4605, %v4668
    %v4674 = vadd.f32 %v4606, %v4668
    %v4675 = vadd.f32 %v4607, %v4668
    %v4676 = vadd.f32 %v4608, %v4668
    %v4677 = vadd.f32 %v4609, %v4668
    %v4678 = vadd.f32 %v4610, %v4668
    %v4679 = vadd.f32 %v4611, %v4668
    %v4680 = vadd.f32 %v4612, %v4668
    %v4681 = vadd.f32 %v4613, %v4668
    %v4682 = vadd.f32 %v4614, %v4668
    %v4683 = vadd.f32 %v4615, %v4668
    %v4684 = vadd.f32 %v4616, %v4668
    %v4685 = vadd.f32 %v4617, %v4668
    %v4686 = vadd.f32 %v4618, %v4668
    %v4687 = vadd.f32 %v4619, %v4668
    %v4688 = vadd.f32 %v4620, %v4668
    %v4689 = vadd.f32 %v4621, %v4668
    %v4690 = vadd.f32 %v4622, %v4668
    %v4691 = vadd.f32 %v4623, %v4668
    %v4692 = vadd.f32 %v4624, %v4668
    %v4693 = vadd.f32 %v4625, %v4668
    %v4694 = vadd.f32 %v4626, %v4668
    %v4695 = vadd.f32 %v4627, %v4668
    %v4696 = vadd.f32 %v4628, %v4668
    %v4697 = vadd.f32 %v4629, %v4668
    %v4698 = vadd.f32 %v4630, %v4668
    %v4699 = vadd.f32 %v4631, %v4668
    %v4700 = vadd.f32 %v4632, %v4668
    %v4701 = vadd.f32 %v4633, %v4668
    %v4702 = vadd.f32 %v4634, %v4668
    %v4703 = vadd.f32 %v4635, %v4668
    %v4704 = vadd.f32 %v4636, %v4668
    %v4705 = vadd.f32 %v4637, %v4668
    %v4706 = vadd.f32 %v4638, %v4668
    %v4707 = vadd.f32 %v4639, %v4668
    %v4708 = vadd.f32 %v4640, %v4668
    %v4709 = vadd.f32 %v4641, %v4668
    %v4710 = vadd.f32 %v4642, %v4668
    %v4711 = vadd.f32 %v4643, %v4668
    %v4712 = vadd.f32 %v4644, %v4668
    %v4713 = vadd.f32 %v4645, %v4668
    %v4714 = vadd.f32 %v4646, %v4668
    %v4715 = vadd.f32 %v4647, %v4668
    %v4716 = vadd.f32 %v4648, %v4668
    %v4717 = vadd.f32 %v4649, %v4668
    %v4718 = vadd.f32 %v4650, %v4668
    %v4719 = vadd.f32 %v4651, %v4668
    %v4720 = vadd.f32 %v4652, %v4668
    %v4721 = vadd.f32 %v4653, %v4668
    %v4722 = vadd.f32 %v4654, %v4668
    %v4723 = vadd.f32 %v4655, %v4668
    %v4724 = vadd.f32 %v4656, %v4668
    %v4725 = vadd.f32 %v4657, %v4668
    %v4726 = vadd.f32 %v4658, %v4668
    %v4727 = vadd.f32 %v4659, %v4668
    %v4728 = vadd.f32 %v4660, %v4668
    %v4729 = vadd.f32 %v4661, %v4668
    %v4730 = vadd.f32 %v4662, %v4668
    %v4731 = vadd.f32 %v4663, %v4668
    %v4732 = vadd.f32 %v4664, %v4668
    %v4733 = vadd.f32 %v4665, %v4668
    %v4734 = vmax.f32 %v4670, 0.0
    %v4735 = vmax.f32 %v4671, 0.0
    %v4736 = vmax.f32 %v4672, 0.0
    %v4737 = vmax.f32 %v4673, 0.0
    %v4738 = vmax.f32 %v4674, 0.0
    %v4739 = vmax.f32 %v4675, 0.0
    %v4740 = vmax.f32 %v4676, 0.0
    %v4741 = vmax.f32 %v4677, 0.0
    %v4742 = vmax.f32 %v4678, 0.0
    %v4743 = vmax.f32 %v4679, 0.0
    %v4744 = vmax.f32 %v4680, 0.0
    %v4745 = vmax.f32 %v4681, 0.0
    %v4746 = vmax.f32 %v4682, 0.0
    %v4747 = vmax.f32 %v4683, 0.0
    %v4748 = vmax.f32 %v4684, 0.0
    %v4749 = vmax.f32 %v4685, 0.0
    %v4750 = vmax.f32 %v4686, 0.0
    %v4751 = vmax.f32 %v4687, 0.0
    %v4752 = vmax.f32 %v4688, 0.0
    %v4753 = vmax.f32 %v4689, 0.0
    %v4754 = vmax.f32 %v4690, 0.0
    %v4755 = vmax.f32 %v4691, 0.0
    %v4756 = vmax.f32 %v4692, 0.0
    %v4757 = vmax.f32 %v4693, 0.0
    %v4758 = vmax.f32 %v4694, 0.0
    %v4759 = vmax.f32 %v4695, 0.0
    %v4760 = vmax.f32 %v4696, 0.0
    %v4761 = vmax.f32 %v4697, 0.0
    %v4762 = vmax.f32 %v4698, 0.0
    %v4763 = vmax.f32 %v4699, 0.0
    %v4764 = vmax.f32 %v4700, 0.0
    %v4765 = vmax.f32 %v4701, 0.0
    %v4766 = vmax.f32 %v4702, 0.0
    %v4767 = vmax.f32 %v4703, 0.0
    %v4768 = vmax.f32 %v4704, 0.0
    %v4769 = vmax.f32 %v4705, 0.0
    %v4770 = vmax.f32 %v4706, 0.0
    %v4771 = vmax.f32 %v4707, 0.0
    %v4772 = vmax.f32 %v4708, 0.0
    %v4773 = vmax.f32 %v4709, 0.0
    %v4774 = vmax.f32 %v4710, 0.0
    %v4775 = vmax.f32 %v4711, 0.0
    %v4776 = vmax.f32 %v4712, 0.0
    %v4777 = vmax.f32 %v4713, 0.0
    %v4778 = vmax.f32 %v4714, 0.0
    %v4779 = vmax.f32 %v4715, 0.0
    %v4780 = vmax.f32 %v4716, 0.0
    %v4781 = vmax.f32 %v4717, 0.0
    %v4782 = vmax.f32 %v4718, 0.0
    %v4783 = vmax.f32 %v4719, 0.0
    %v4784 = vmax.f32 %v4720, 0.0
    %v4785 = vmax.f32 %v4721, 0.0
    %v4786 = vmax.f32 %v4722, 0.0
    %v4787 = vmax.f32 %v4723, 0.0
    %v4788 = vmax.f32 %v4724, 0.0
    %v4789 = vmax.f32 %v4725, 0.0
    %v4790 = vmax.f32 %v4726, 0.0
    %v4791 = vmax.f32 %v4727, 0.0
    %v4792 = vmax.f32 %v4728, 0.0
    %v4793 = vmax.f32 %v4729, 0.0
    %v4794 = vmax.f32 %v4730, 0.0
    %v4795 = vmax.f32 %v4731, 0.0
    %v4796 = vmax.f32 %v4732, 0.0
    %v4797 = vmax.f32 %v4733, 0.0
    %4798 = vst [vmem:[#allocation2] sm:$0xff] 0.0
    %4799 = vst [vmem:[#allocation2 + $0x8] sm:$0xff] 0.0
    %4800 = vst [vmem:[#allocation2 + $0x10] sm:$0x3] 0.0
    %4801 = vst [vmem:[#allocation2 + $0x18] sm:$0xff] 0.0
    %4802 = vst [vmem:[#allocation2 + $0x20] sm:$0xff] 0.0
    %4803 = vst [vmem:[#allocation2 + $0x28] sm:$0x3] 0.0
    %4804 = vst [vmem:[#allocation2 + $0x30] sm:$0xff] 0.0
    %4805 = vst [vmem:[#allocation2 + $0x38] sm:$0xff] 0.0
    %4806 = vst [vmem:[#allocation2 + $0x40] sm:$0x3] 0.0
    %4807 = vst [vmem:[#allocation2 + $0x48] sm:$0xff] 0.0
    %4808 = vst [vmem:[#allocation2 + $0x50] sm:$0xff] 0.0
    %4809 = vst [vmem:[#allocation2 + $0x58] sm:$0x3] 0.0
    %4810 = vst [vmem:[#allocation2 + $0x60] sm:$0xff] 0.0
    %4811 = vst [vmem:[#allocation2 + $0x68] sm:$0xff] 0.0
    %4812 = vst [vmem:[#allocation2 + $0x70] sm:$0x3] 0.0
    %4813 = vst [vmem:[#allocation2 + $0x78] sm:$0xff] 0.0
    %4814 = vst [vmem:[#allocation2 + $0x80] sm:$0xff] 0.0
    %4815 = vst [vmem:[#allocation2 + $0x88] sm:$0x3] 0.0
    %4816 = vst [vmem:[#allocation2 + $0x90] sm:$0xff] 0.0
    %4817 = vst [vmem:[#allocation2 + $0x98] sm:$0xff] 0.0
    %4818 = vst [vmem:[#allocation2 + $0xa0] sm:$0x3] 0.0
    %4819 = vst [vmem:[#allocation2 + $0xa8] sm:$0xff] 0.0
    %4820 = vst [vmem:[#allocation2 + $0xb0] sm:$0xff] 0.0
    %4821 = vst [vmem:[#allocation2 + $0xb8] sm:$0x3] 0.0
    %4822 = vst [vmem:[#allocation2 + $0xc0] sm:$0xff] 0.0
    %4823 = vst [vmem:[#allocation2 + $0xc8] sm:$0xff] 0.0
    %4824 = vst [vmem:[#allocation2 + $0xd0] sm:$0x3] 0.0
    %4825 = vst [vmem:[#allocation2 + $0xd8] sm:$0xff] 0.0
    %4826 = vst [vmem:[#allocation2 + $0xe0] sm:$0xff] 0.0
    %4827 = vst [vmem:[#allocation2 + $0xe8] sm:$0x3] 0.0
    %4828 = vst [vmem:[#allocation2 + $0xf0] sm:$0xff] 0.0
    %4829 = vst [vmem:[#allocation2 + $0xf8] sm:$0xff] 0.0
    %4830 = vst [vmem:[#allocation2 + $0x100] sm:$0x3] 0.0
    %4831 = vst [vmem:[#allocation2 + $0x108] sm:$0xff] 0.0
    %4832 = vst [vmem:[#allocation2 + $0x110] sm:$0xff] 0.0
    %4833 = vst [vmem:[#allocation2 + $0x118] sm:$0x3] 0.0
    %4834 = vst [vmem:[#allocation2 + $0x120] sm:$0xff] 0.0
    %4835 = vst [vmem:[#allocation2 + $0x128] sm:$0xff] 0.0
    %4836 = vst [vmem:[#allocation2 + $0x130] sm:$0x3] 0.0
    %4837 = vst [vmem:[#allocation2 + $0x138] sm:$0xff] 0.0
    %4838 = vst [vmem:[#allocation2 + $0x140] sm:$0xff] 0.0
    %4839 = vst [vmem:[#allocation2 + $0x148] sm:$0x3] 0.0
    %4840 = vst [vmem:[#allocation2 + $0x150] sm:$0xff] 0.0
    %4841 = vst [vmem:[#allocation2 + $0x158] sm:$0xff] 0.0
    %4842 = vst [vmem:[#allocation2 + $0x160] sm:$0x3] 0.0
    %4843 = vst [vmem:[#allocation2 + $0x168] sm:$0xff] 0.0
    %4844 = vst [vmem:[#allocation2 + $0x170] sm:$0xff] 0.0
    %4845 = vst [vmem:[#allocation2 + $0x178] sm:$0x3] 0.0
    %4846 = vst [vmem:[#allocation2 + $0x180] sm:$0xff] 0.0
    %4847 = vst [vmem:[#allocation2 + $0x188] sm:$0xff] 0.0
    %4848 = vst [vmem:[#allocation2 + $0x190] sm:$0x3] 0.0
    %4849 = vst [vmem:[#allocation2 + $0x198] sm:$0xff] 0.0
    %4850 = vst [vmem:[#allocation2 + $0x1a0] sm:$0xff] 0.0
    %4851 = vst [vmem:[#allocation2 + $0x1a8] sm:$0x3] 0.0
    %4852 = vst [vmem:[#allocation2 + $0x1b0] sm:$0xff] 0.0
    %4853 = vst [vmem:[#allocation2 + $0x1b8] sm:$0xff] 0.0
    %4854 = vst [vmem:[#allocation2 + $0x1c0] sm:$0x3] 0.0
    %4855 = vst [vmem:[#allocation2 + $0x1c8] sm:$0xff] 0.0
    %4856 = vst [vmem:[#allocation2 + $0x1d0] sm:$0xff] 0.0
    %4857 = vst [vmem:[#allocation2 + $0x1d8] sm:$0x3] 0.0
    %4858 = vst [vmem:[#allocation2 + $0x1e0] sm:$0xff] 0.0
    %4859 = vst [vmem:[#allocation2 + $0x1e8] sm:$0xff] 0.0
    %4860 = vst [vmem:[#allocation2 + $0x1f0] sm:$0x3] 0.0
    %4861 = vst [vmem:[#allocation2 + $0x1f8] sm:$0xff] 0.0
    %4862 = vst [vmem:[#allocation2 + $0x200] sm:$0xff] 0.0
    %4863 = vst [vmem:[#allocation2 + $0x208] sm:$0x3] 0.0
    %4864 = vst [vmem:[#allocation2 + $0x210] sm:$0xff] 0.0
    %4865 = vst [vmem:[#allocation2 + $0x218] sm:$0xff] 0.0
    %4866 = vst [vmem:[#allocation2 + $0x220] sm:$0x3] 0.0
    %4867 = vst [vmem:[#allocation2 + $0x228] sm:$0xff] 0.0
    %4868 = vst [vmem:[#allocation2 + $0x230] sm:$0xff] 0.0
    %4869 = vst [vmem:[#allocation2 + $0x238] sm:$0x3] 0.0
    %4870 = vst [vmem:[#allocation2 + $0x240] sm:$0xff] 0.0
    %4871 = vst [vmem:[#allocation2 + $0x248] sm:$0xff] 0.0
    %4872 = vst [vmem:[#allocation2 + $0x250] sm:$0x3] 0.0
    %4873 = vst [vmem:[#allocation2 + $0x258] sm:$0xff] 0.0
    %4874 = vst [vmem:[#allocation2 + $0x260] sm:$0xff] 0.0
    %4875 = vst [vmem:[#allocation2 + $0x268] sm:$0x3] 0.0
    %4876 = vst [vmem:[#allocation2 + $0x270] sm:$0xff] 0.0
    %4877 = vst [vmem:[#allocation2 + $0x278] sm:$0xff] 0.0
    %4878 = vst [vmem:[#allocation2 + $0x280] sm:$0x3] 0.0
    %4879 = vst [vmem:[#allocation2 + $0x288] sm:$0xff] 0.0
    %4880 = vst [vmem:[#allocation2 + $0x290] sm:$0xff] 0.0
    %4881 = vst [vmem:[#allocation2 + $0x298] sm:$0x3] 0.0
    %4882 = vst [vmem:[#allocation2 + $0x2a0] sm:$0xff] 0.0
    %4883 = vst [vmem:[#allocation2 + $0x2a8] sm:$0xff] 0.0
    %4884 = vst [vmem:[#allocation2 + $0x2b0] sm:$0x3] 0.0
    %4885 = vst [vmem:[#allocation2 + $0x2b8] sm:$0xff] 0.0
    %4886 = vst [vmem:[#allocation2 + $0x2c0] sm:$0xff] 0.0
    %4887 = vst [vmem:[#allocation2 + $0x2c8] sm:$0x3] 0.0
    %4888 = vst [vmem:[#allocation2 + $0x2d0] sm:$0xff] 0.0
    %4889 = vst [vmem:[#allocation2 + $0x2d8] sm:$0xff] 0.0
    %4890 = vst [vmem:[#allocation2 + $0x2e0] sm:$0x3] 0.0
    %4891 = vst [vmem:[#allocation2 + $0x2e8] sm:$0xff] 0.0
    %4892 = vst [vmem:[#allocation2 + $0x2f0] sm:$0xff] 0.0
    %4893 = vst [vmem:[#allocation2 + $0x2f8] sm:$0x3] 0.0
    %4894 = vst [vmem:[#allocation2 + $0x300] sm:$0xff] 0.0
    %4895 = vst [vmem:[#allocation2 + $0x308] sm:$0xff] 0.0
    %4896 = vst [vmem:[#allocation2 + $0x310] sm:$0x3] 0.0
    %4897 = vst [vmem:[#allocation2 + $0x318] sm:$0xff] 0.0
    %4898 = vst [vmem:[#allocation2 + $0x320] sm:$0xff] 0.0
    %4899 = vst [vmem:[#allocation2 + $0x328] sm:$0x3] 0.0
    %4900 = vst [vmem:[#allocation2 + $0x330] sm:$0xff] 0.0
    %4901 = vst [vmem:[#allocation2 + $0x338] sm:$0xff] 0.0
    %4902 = vst [vmem:[#allocation2 + $0x340] sm:$0x3] 0.0
    %4903 = vst [vmem:[#allocation2 + $0x348] sm:$0xff] 0.0
    %4904 = vst [vmem:[#allocation2 + $0x350] sm:$0xff] 0.0
    %4905 = vst [vmem:[#allocation2 + $0x358] sm:$0x3] 0.0
    %s4906 = scalar_lea.vmem [#allocation2], 24
    %4907 = vst [vmem:[%s4906 + $0x1] sm:$0xff] %v4734
    %4908 = vst [vmem:[%s4906 + $0x9] sm:$0xff] %v4735
    %4909 = vst [vmem:[%s4906 + $0x19] sm:$0xff] %v4736
    %4910 = vst [vmem:[%s4906 + $0x21] sm:$0xff] %v4737
    %4911 = vst [vmem:[%s4906 + $0x31] sm:$0xff] %v4738
    %4912 = vst [vmem:[%s4906 + $0x39] sm:$0xff] %v4739
    %4913 = vst [vmem:[%s4906 + $0x49] sm:$0xff] %v4740
    %4914 = vst [vmem:[%s4906 + $0x51] sm:$0xff] %v4741
    %4915 = vst [vmem:[%s4906 + $0x61] sm:$0xff] %v4742
    %4916 = vst [vmem:[%s4906 + $0x69] sm:$0xff] %v4743
    %4917 = vst [vmem:[%s4906 + $0x79] sm:$0xff] %v4744
    %4918 = vst [vmem:[%s4906 + $0x81] sm:$0xff] %v4745
    %4919 = vst [vmem:[%s4906 + $0x91] sm:$0xff] %v4746
    %4920 = vst [vmem:[%s4906 + $0x99] sm:$0xff] %v4747
    %4921 = vst [vmem:[%s4906 + $0xa9] sm:$0xff] %v4748
    %4922 = vst [vmem:[%s4906 + $0xb1] sm:$0xff] %v4749
    %4923 = vst [vmem:[%s4906 + $0xc1] sm:$0xff] %v4750
    %4924 = vst [vmem:[%s4906 + $0xc9] sm:$0xff] %v4751
    %4925 = vst [vmem:[%s4906 + $0xd9] sm:$0xff] %v4752
    %4926 = vst [vmem:[%s4906 + $0xe1] sm:$0xff] %v4753
    %4927 = vst [vmem:[%s4906 + $0xf1] sm:$0xff] %v4754
    %4928 = vst [vmem:[%s4906 + $0xf9] sm:$0xff] %v4755
    %4929 = vst [vmem:[%s4906 + $0x109] sm:$0xff] %v4756
    %4930 = vst [vmem:[%s4906 + $0x111] sm:$0xff] %v4757
    %4931 = vst [vmem:[%s4906 + $0x121] sm:$0xff] %v4758
    %4932 = vst [vmem:[%s4906 + $0x129] sm:$0xff] %v4759
    %4933 = vst [vmem:[%s4906 + $0x139] sm:$0xff] %v4760
    %4934 = vst [vmem:[%s4906 + $0x141] sm:$0xff] %v4761
    %4935 = vst [vmem:[%s4906 + $0x151] sm:$0xff] %v4762
    %4936 = vst [vmem:[%s4906 + $0x159] sm:$0xff] %v4763
    %4937 = vst [vmem:[%s4906 + $0x169] sm:$0xff] %v4764
    %4938 = vst [vmem:[%s4906 + $0x171] sm:$0xff] %v4765
    %4939 = vst [vmem:[%s4906 + $0x1b1] sm:$0xff] %v4766
    %4940 = vst [vmem:[%s4906 + $0x1b9] sm:$0xff] %v4767
    %4941 = vst [vmem:[%s4906 + $0x1c9] sm:$0xff] %v4768
    %4942 = vst [vmem:[%s4906 + $0x1d1] sm:$0xff] %v4769
    %4943 = vst [vmem:[%s4906 + $0x1e1] sm:$0xff] %v4770
    %4944 = vst [vmem:[%s4906 + $0x1e9] sm:$0xff] %v4771
    %4945 = vst [vmem:[%s4906 + $0x1f9] sm:$0xff] %v4772
    %4946 = vst [vmem:[%s4906 + $0x201] sm:$0xff] %v4773
    %4947 = vst [vmem:[%s4906 + $0x211] sm:$0xff] %v4774
    %4948 = vst [vmem:[%s4906 + $0x219] sm:$0xff] %v4775
    %4949 = vst [vmem:[%s4906 + $0x229] sm:$0xff] %v4776
    %4950 = vst [vmem:[%s4906 + $0x231] sm:$0xff] %v4777
    %4951 = vst [vmem:[%s4906 + $0x241] sm:$0xff] %v4778
    %4952 = vst [vmem:[%s4906 + $0x249] sm:$0xff] %v4779
    %4953 = vst [vmem:[%s4906 + $0x259] sm:$0xff] %v4780
    %4954 = vst [vmem:[%s4906 + $0x261] sm:$0xff] %v4781
    %4955 = vst [vmem:[%s4906 + $0x271] sm:$0xff] %v4782
    %4956 = vst [vmem:[%s4906 + $0x279] sm:$0xff] %v4783
    %4957 = vst [vmem:[%s4906 + $0x289] sm:$0xff] %v4784
    %4958 = vst [vmem:[%s4906 + $0x291] sm:$0xff] %v4785
    %4959 = vst [vmem:[%s4906 + $0x2a1] sm:$0xff] %v4786
    %4960 = vst [vmem:[%s4906 + $0x2a9] sm:$0xff] %v4787
    %4961 = vst [vmem:[%s4906 + $0x2b9] sm:$0xff] %v4788
    %4962 = vst [vmem:[%s4906 + $0x2c1] sm:$0xff] %v4789
    %4963 = vst [vmem:[%s4906 + $0x2d1] sm:$0xff] %v4790
    %4964 = vst [vmem:[%s4906 + $0x2d9] sm:$0xff] %v4791
    %4965 = vst [vmem:[%s4906 + $0x2e9] sm:$0xff] %v4792
    %4966 = vst [vmem:[%s4906 + $0x2f1] sm:$0xff] %v4793
    %4967 = vst [vmem:[%s4906 + $0x301] sm:$0xff] %v4794
    %4968 = vst [vmem:[%s4906 + $0x309] sm:$0xff] %v4795
    %4969 = vst [vmem:[%s4906 + $0x319] sm:$0xff] %v4796
    %4970 = vst [vmem:[%s4906 + $0x321] sm:$0xff] %v4797
    %v4971 = vld [vmem:[#allocation2] sm:$0xff]
    %v4972 = vld [vmem:[#allocation2 + $0x8] sm:$0xff]
    %v4973 = vld [vmem:[#allocation2 + $0x18] sm:$0xff]
    %v4974 = vld [vmem:[#allocation2 + $0x20] sm:$0xff]
    %v4975 = vld [vmem:[#allocation2 + $0x30] sm:$0xff]
    %v4976 = vld [vmem:[#allocation2 + $0x38] sm:$0xff]
    %v4977 = vld [vmem:[#allocation2 + $0x48] sm:$0xff]
    %v4978 = vld [vmem:[#allocation2 + $0x50] sm:$0xff]
    %v4979 = vld [vmem:[#allocation2 + $0x60] sm:$0xff]
    %v4980 = vld [vmem:[#allocation2 + $0x68] sm:$0xff]
    %v4981 = vld [vmem:[#allocation2 + $0x78] sm:$0xff]
    %v4982 = vld [vmem:[#allocation2 + $0x80] sm:$0xff]
    %v4983 = vld [vmem:[#allocation2 + $0x90] sm:$0xff]
    %v4984 = vld [vmem:[#allocation2 + $0x98] sm:$0xff]
    %v4985 = vld [vmem:[#allocation2 + $0xa8] sm:$0xff]
    %v4986 = vld [vmem:[#allocation2 + $0xb0] sm:$0xff]
    %v4987 = vld [vmem:[#allocation2 + $0xc0] sm:$0xff]
    %v4988 = vld [vmem:[#allocation2 + $0xc8] sm:$0xff]
    %v4989 = vld [vmem:[#allocation2 + $0xd8] sm:$0xff]
    %v4990 = vld [vmem:[#allocation2 + $0xe0] sm:$0xff]
    %v4991 = vld [vmem:[#allocation2 + $0xf0] sm:$0xff]
    %v4992 = vld [vmem:[#allocation2 + $0xf8] sm:$0xff]
    %v4993 = vld [vmem:[#allocation2 + $0x108] sm:$0xff]
    %v4994 = vld [vmem:[#allocation2 + $0x110] sm:$0xff]
    %v4995 = vld [vmem:[#allocation2 + $0x120] sm:$0xff]
    %v4996 = vld [vmem:[#allocation2 + $0x128] sm:$0xff]
    %v4997 = vld [vmem:[#allocation2 + $0x138] sm:$0xff]
    %v4998 = vld [vmem:[#allocation2 + $0x140] sm:$0xff]
    %v4999 = vld [vmem:[#allocation2 + $0x150] sm:$0xff]
    %v5000 = vld [vmem:[#allocation2 + $0x158] sm:$0xff]
    %v5001 = vld [vmem:[#allocation2 + $0x168] sm:$0xff]
    %v5002 = vld [vmem:[#allocation2 + $0x170] sm:$0xff]
    %v5003 = vld [vmem:[#allocation2 + $0x1b0] sm:$0xff]
    %v5004 = vld [vmem:[#allocation2 + $0x1b8] sm:$0xff]
    %v5005 = vld [vmem:[#allocation2 + $0x1c8] sm:$0xff]
    %v5006 = vld [vmem:[#allocation2 + $0x1d0] sm:$0xff]
    %v5007 = vld [vmem:[#allocation2 + $0x1e0] sm:$0xff]
    %v5008 = vld [vmem:[#allocation2 + $0x1e8] sm:$0xff]
    %v5009 = vld [vmem:[#allocation2 + $0x1f8] sm:$0xff]
    %v5010 = vld [vmem:[#allocation2 + $0x200] sm:$0xff]
    %v5011 = vld [vmem:[#allocation2 + $0x210] sm:$0xff]
    %v5012 = vld [vmem:[#allocation2 + $0x218] sm:$0xff]
    %v5013 = vld [vmem:[#allocation2 + $0x228] sm:$0xff]
    %v5014 = vld [vmem:[#allocation2 + $0x230] sm:$0xff]
    %v5015 = vld [vmem:[#allocation2 + $0x240] sm:$0xff]
    %v5016 = vld [vmem:[#allocation2 + $0x248] sm:$0xff]
    %v5017 = vld [vmem:[#allocation2 + $0x258] sm:$0xff]
    %v5018 = vld [vmem:[#allocation2 + $0x260] sm:$0xff]
    %v5019 = vld [vmem:[#allocation2 + $0x270] sm:$0xff]
    %v5020 = vld [vmem:[#allocation2 + $0x278] sm:$0xff]
    %v5021 = vld [vmem:[#allocation2 + $0x288] sm:$0xff]
    %v5022 = vld [vmem:[#allocation2 + $0x290] sm:$0xff]
    %v5023 = vld [vmem:[#allocation2 + $0x2a0] sm:$0xff]
    %v5024 = vld [vmem:[#allocation2 + $0x2a8] sm:$0xff]
    %v5025 = vld [vmem:[#allocation2 + $0x2b8] sm:$0xff]
    %v5026 = vld [vmem:[#allocation2 + $0x2c0] sm:$0xff]
    %v5027 = vld [vmem:[#allocation2 + $0x2d0] sm:$0xff]
    %v5028 = vld [vmem:[#allocation2 + $0x2d8] sm:$0xff]
    %v5029 = vld [vmem:[#allocation2 + $0x2e8] sm:$0xff]
    %v5030 = vld [vmem:[#allocation2 + $0x2f0] sm:$0xff]
    %v5031 = vld [vmem:[#allocation2 + $0x300] sm:$0xff]
    %v5032 = vld [vmem:[#allocation2 + $0x308] sm:$0xff]
    %v5033 = vld [vmem:[#allocation2 + $0x318] sm:$0xff]
    %v5034 = vld [vmem:[#allocation2 + $0x320] sm:$0xff]
    %v5035 = vld [vmem:[#allocation4] sm:$0xff]
    %v5036 = vld [vmem:[#allocation4 + $0x8] sm:$0xff]
    %v5037 = vld [vmem:[#allocation4 + $0x10] sm:$0xff]
    %v5038 = vld [vmem:[#allocation4 + $0x18] sm:$0xff]
    %v5039 = vld [vmem:[#allocation4 + $0x20] sm:$0xff]
    %v5040 = vld [vmem:[#allocation4 + $0x28] sm:$0xff]
    %v5041 = vld [vmem:[#allocation4 + $0x30] sm:$0xff]
    %v5042 = vld [vmem:[#allocation4 + $0x38] sm:$0xff]
    %v5043 = vld [vmem:[#allocation4 + $0x40] sm:$0xff]
    %v5044 = vld [vmem:[#allocation4 + $0x48] sm:$0xff]
    %v5045 = vld [vmem:[#allocation4 + $0x50] sm:$0xff]
    %v5046 = vld [vmem:[#allocation4 + $0x58] sm:$0xff]
    %v5047 = vld [vmem:[#allocation4 + $0x60] sm:$0xff]
    %v5048 = vld [vmem:[#allocation4 + $0x68] sm:$0xff]
    %v5049 = vld [vmem:[#allocation4 + $0x70] sm:$0xff]
    %v5050 = vld [vmem:[#allocation4 + $0x78] sm:$0xff]
    %5051 = vmatpush.msra.mxu0 %v5050
    %5052 = vmatpush.msra.mxu0 %v5049
    %5053 = vmatpush.msra.mxu0 %v5048
    %5054 = vmatpush.msra.mxu0 %v5047
    %5055 = vmatpush.msra.mxu0 %v5046
    %5056 = vmatpush.msra.mxu0 %v5045
    %5057 = vmatpush.msra.mxu0 %v5044
    %5058 = vmatpush.msra.mxu0 %v5043
    %5059 = vmatpush.msra.mxu0 %v5042
    %5060 = vmatpush.msra.mxu0 %v5041
    %5061 = vmatpush.msra.mxu0 %v5040
    %5062 = vmatpush.msra.mxu0 %v5039
    %5063 = vmatpush.msra.mxu0 %v5038
    %5064 = vmatpush.msra.mxu0 %v5037
    %5065 = vmatpush.msra.mxu0 %v5036
    %5066 = vmatpush.msra.mxu0 %v5035
    %5067 = vmatmul.f32.gmra.mxu0 %v4971
    %v5068 = vpop.f32.mrf.mxu0
    %v5069 = vadd.f32 0.0, %v5068
    %5070 = vmatmul.f32.gmra.mxu0 %v4972
    %v5071 = vpop.f32.mrf.mxu0
    %v5072 = vadd.f32 0.0, %v5071
    %5073 = vmatmul.f32.gmra.mxu0 %v4973
    %v5074 = vpop.f32.mrf.mxu0
    %v5075 = vadd.f32 0.0, %v5074
    %5076 = vmatmul.f32.gmra.mxu0 %v4974
    %v5077 = vpop.f32.mrf.mxu0
    %v5078 = vadd.f32 0.0, %v5077
    %5079 = vmatmul.f32.gmra.mxu0 %v4975
    %v5080 = vpop.f32.mrf.mxu0
    %v5081 = vadd.f32 0.0, %v5080
    %5082 = vmatmul.f32.gmra.mxu0 %v4976
    %v5083 = vpop.f32.mrf.mxu0
    %v5084 = vadd.f32 0.0, %v5083
    %5085 = vmatmul.f32.gmra.mxu0 %v4977
    %v5086 = vpop.f32.mrf.mxu0
    %v5087 = vadd.f32 0.0, %v5086
    %5088 = vmatmul.f32.gmra.mxu0 %v4978
    %v5089 = vpop.f32.mrf.mxu0
    %v5090 = vadd.f32 0.0, %v5089
    %5091 = vmatmul.f32.gmra.mxu0 %v4979
    %v5092 = vpop.f32.mrf.mxu0
    %v5093 = vadd.f32 0.0, %v5092
    %5094 = vmatmul.f32.gmra.mxu0 %v4980
    %v5095 = vpop.f32.mrf.mxu0
    %v5096 = vadd.f32 0.0, %v5095
    %5097 = vmatmul.f32.gmra.mxu0 %v4981
    %v5098 = vpop.f32.mrf.mxu0
    %v5099 = vadd.f32 0.0, %v5098
    %5100 = vmatmul.f32.gmra.mxu0 %v4982
    %v5101 = vpop.f32.mrf.mxu0
    %v5102 = vadd.f32 0.0, %v5101
    %5103 = vmatmul.f32.gmra.mxu0 %v4983
    %v5104 = vpop.f32.mrf.mxu0
    %v5105 = vadd.f32 0.0, %v5104
    %5106 = vmatmul.f32.gmra.mxu0 %v4984
    %v5107 = vpop.f32.mrf.mxu0
    %v5108 = vadd.f32 0.0, %v5107
    %5109 = vmatmul.f32.gmra.mxu0 %v4985
    %v5110 = vpop.f32.mrf.mxu0
    %v5111 = vadd.f32 0.0, %v5110
    %5112 = vmatmul.f32.gmra.mxu0 %v4986
    %v5113 = vpop.f32.mrf.mxu0
    %v5114 = vadd.f32 0.0, %v5113
    %5115 = vmatmul.f32.gmra.mxu0 %v4987
    %v5116 = vpop.f32.mrf.mxu0
    %v5117 = vadd.f32 0.0, %v5116
    %5118 = vmatmul.f32.gmra.mxu0 %v4988
    %v5119 = vpop.f32.mrf.mxu0
    %v5120 = vadd.f32 0.0, %v5119
    %5121 = vmatmul.f32.gmra.mxu0 %v4989
    %v5122 = vpop.f32.mrf.mxu0
    %v5123 = vadd.f32 0.0, %v5122
    %5124 = vmatmul.f32.gmra.mxu0 %v4990
    %v5125 = vpop.f32.mrf.mxu0
    %v5126 = vadd.f32 0.0, %v5125
    %5127 = vmatmul.f32.gmra.mxu0 %v4991
    %v5128 = vpop.f32.mrf.mxu0
    %v5129 = vadd.f32 0.0, %v5128
    %5130 = vmatmul.f32.gmra.mxu0 %v4992
    %v5131 = vpop.f32.mrf.mxu0
    %v5132 = vadd.f32 0.0, %v5131
    %5133 = vmatmul.f32.gmra.mxu0 %v4993
    %v5134 = vpop.f32.mrf.mxu0
    %v5135 = vadd.f32 0.0, %v5134
    %5136 = vmatmul.f32.gmra.mxu0 %v4994
    %v5137 = vpop.f32.mrf.mxu0
    %v5138 = vadd.f32 0.0, %v5137
    %5139 = vmatmul.f32.gmra.mxu0 %v4995
    %v5140 = vpop.f32.mrf.mxu0
    %v5141 = vadd.f32 0.0, %v5140
    %5142 = vmatmul.f32.gmra.mxu0 %v4996
    %v5143 = vpop.f32.mrf.mxu0
    %v5144 = vadd.f32 0.0, %v5143
    %5145 = vmatmul.f32.gmra.mxu0 %v4997
    %v5146 = vpop.f32.mrf.mxu0
    %v5147 = vadd.f32 0.0, %v5146
    %5148 = vmatmul.f32.gmra.mxu0 %v4998
    %v5149 = vpop.f32.mrf.mxu0
    %v5150 = vadd.f32 0.0, %v5149
    %5151 = vmatmul.f32.gmra.mxu0 %v4999
    %v5152 = vpop.f32.mrf.mxu0
    %v5153 = vadd.f32 0.0, %v5152
    %5154 = vmatmul.f32.gmra.mxu0 %v5000
    %v5155 = vpop.f32.mrf.mxu0
    %v5156 = vadd.f32 0.0, %v5155
    %5157 = vmatmul.f32.gmra.mxu0 %v5001
    %v5158 = vpop.f32.mrf.mxu0
    %v5159 = vadd.f32 0.0, %v5158
    %5160 = vmatmul.f32.gmra.mxu0 %v5002
    %v5161 = vpop.f32.mrf.mxu0
    %v5162 = vadd.f32 0.0, %v5161
    %5163 = vmatmul.f32.gmra.mxu0 %v5003
    %v5164 = vpop.f32.mrf.mxu0
    %v5165 = vadd.f32 0.0, %v5164
    %5166 = vmatmul.f32.gmra.mxu0 %v5004
    %v5167 = vpop.f32.mrf.mxu0
    %v5168 = vadd.f32 0.0, %v5167
    %5169 = vmatmul.f32.gmra.mxu0 %v5005
    %v5170 = vpop.f32.mrf.mxu0
    %v5171 = vadd.f32 0.0, %v5170
    %5172 = vmatmul.f32.gmra.mxu0 %v5006
    %v5173 = vpop.f32.mrf.mxu0
    %v5174 = vadd.f32 0.0, %v5173
    %5175 = vmatmul.f32.gmra.mxu0 %v5007
    %v5176 = vpop.f32.mrf.mxu0
    %v5177 = vadd.f32 0.0, %v5176
    %5178 = vmatmul.f32.gmra.mxu0 %v5008
    %v5179 = vpop.f32.mrf.mxu0
    %v5180 = vadd.f32 0.0, %v5179
    %5181 = vmatmul.f32.gmra.mxu0 %v5009
    %v5182 = vpop.f32.mrf.mxu0
    %v5183 = vadd.f32 0.0, %v5182
    %5184 = vmatmul.f32.gmra.mxu0 %v5010
    %v5185 = vpop.f32.mrf.mxu0
    %v5186 = vadd.f32 0.0, %v5185
    %5187 = vmatmul.f32.gmra.mxu0 %v5011
    %v5188 = vpop.f32.mrf.mxu0
    %v5189 = vadd.f32 0.0, %v5188
    %5190 = vmatmul.f32.gmra.mxu0 %v5012
    %v5191 = vpop.f32.mrf.mxu0
    %v5192 = vadd.f32 0.0, %v5191
    %5193 = vmatmul.f32.gmra.mxu0 %v5013
    %v5194 = vpop.f32.mrf.mxu0
    %v5195 = vadd.f32 0.0, %v5194
    %5196 = vmatmul.f32.gmra.mxu0 %v5014
    %v5197 = vpop.f32.mrf.mxu0
    %v5198 = vadd.f32 0.0, %v5197
    %5199 = vmatmul.f32.gmra.mxu0 %v5015
    %v5200 = vpop.f32.mrf.mxu0
    %v5201 = vadd.f32 0.0, %v5200
    %5202 = vmatmul.f32.gmra.mxu0 %v5016
    %v5203 = vpop.f32.mrf.mxu0
    %v5204 = vadd.f32 0.0, %v5203
    %5205 = vmatmul.f32.gmra.mxu0 %v5017
    %v5206 = vpop.f32.mrf.mxu0
    %v5207 = vadd.f32 0.0, %v5206
    %5208 = vmatmul.f32.gmra.mxu0 %v5018
    %v5209 = vpop.f32.mrf.mxu0
    %v5210 = vadd.f32 0.0, %v5209
    %5211 = vmatmul.f32.gmra.mxu0 %v5019
    %v5212 = vpop.f32.mrf.mxu0
    %v5213 = vadd.f32 0.0, %v5212
    %5214 = vmatmul.f32.gmra.mxu0 %v5020
    %v5215 = vpop.f32.mrf.mxu0
    %v5216 = vadd.f32 0.0, %v5215
    %5217 = vmatmul.f32.gmra.mxu0 %v5021
    %v5218 = vpop.f32.mrf.mxu0
    %v5219 = vadd.f32 0.0, %v5218
    %5220 = vmatmul.f32.gmra.mxu0 %v5022
    %v5221 = vpop.f32.mrf.mxu0
    %v5222 = vadd.f32 0.0, %v5221
    %5223 = vmatmul.f32.gmra.mxu0 %v5023
    %v5224 = vpop.f32.mrf.mxu0
    %v5225 = vadd.f32 0.0, %v5224
    %5226 = vmatmul.f32.gmra.mxu0 %v5024
    %v5227 = vpop.f32.mrf.mxu0
    %v5228 = vadd.f32 0.0, %v5227
    %5229 = vmatmul.f32.gmra.mxu0 %v5025
    %v5230 = vpop.f32.mrf.mxu0
    %v5231 = vadd.f32 0.0, %v5230
    %5232 = vmatmul.f32.gmra.mxu0 %v5026
    %v5233 = vpop.f32.mrf.mxu0
    %v5234 = vadd.f32 0.0, %v5233
    %5235 = vmatmul.f32.gmra.mxu0 %v5027
    %v5236 = vpop.f32.mrf.mxu0
    %v5237 = vadd.f32 0.0, %v5236
    %5238 = vmatmul.f32.gmra.mxu0 %v5028
    %v5239 = vpop.f32.mrf.mxu0
    %v5240 = vadd.f32 0.0, %v5239
    %5241 = vmatmul.f32.gmra.mxu0 %v5029
    %v5242 = vpop.f32.mrf.mxu0
    %v5243 = vadd.f32 0.0, %v5242
    %5244 = vmatmul.f32.gmra.mxu0 %v5030
    %v5245 = vpop.f32.mrf.mxu0
    %v5246 = vadd.f32 0.0, %v5245
    %5247 = vmatmul.f32.gmra.mxu0 %v5031
    %v5248 = vpop.f32.mrf.mxu0
    %v5249 = vadd.f32 0.0, %v5248
    %5250 = vmatmul.f32.gmra.mxu0 %v5032
    %v5251 = vpop.f32.mrf.mxu0
    %v5252 = vadd.f32 0.0, %v5251
    %5253 = vmatmul.f32.gmra.mxu0 %v5033
    %v5254 = vpop.f32.mrf.mxu0
    %v5255 = vadd.f32 0.0, %v5254
    %5256 = vmatmul.f32.gmra.mxu0 %v5034
    %v5257 = vpop.f32.mrf.mxu0
    %v5258 = vadd.f32 0.0, %v5257
    %5259 = vdwg.mxu0
    %5260 = vst [vmem:[#allocation3] sm:$0xff] %v5069
    %5261 = vst [vmem:[#allocation3 + $0x8] sm:$0xff] %v5072
    %5262 = vst [vmem:[#allocation3 + $0x10] sm:$0xff] %v5075
    %5263 = vst [vmem:[#allocation3 + $0x18] sm:$0xff] %v5078
    %5264 = vst [vmem:[#allocation3 + $0x20] sm:$0xff] %v5081
    %5265 = vst [vmem:[#allocation3 + $0x28] sm:$0xff] %v5084
    %5266 = vst [vmem:[#allocation3 + $0x30] sm:$0xff] %v5087
    %5267 = vst [vmem:[#allocation3 + $0x38] sm:$0xff] %v5090
    %5268 = vst [vmem:[#allocation3 + $0x40] sm:$0xff] %v5093
    %5269 = vst [vmem:[#allocation3 + $0x48] sm:$0xff] %v5096
    %5270 = vst [vmem:[#allocation3 + $0x50] sm:$0xff] %v5099
    %5271 = vst [vmem:[#allocation3 + $0x58] sm:$0xff] %v5102
    %5272 = vst [vmem:[#allocation3 + $0x60] sm:$0xff] %v5105
    %5273 = vst [vmem:[#allocation3 + $0x68] sm:$0xff] %v5108
    %5274 = vst [vmem:[#allocation3 + $0x70] sm:$0xff] %v5111
    %5275 = vst [vmem:[#allocation3 + $0x78] sm:$0xff] %v5114
    %5276 = vst [vmem:[#allocation3 + $0x80] sm:$0xff] %v5117
    %5277 = vst [vmem:[#allocation3 + $0x88] sm:$0xff] %v5120
    %5278 = vst [vmem:[#allocation3 + $0x90] sm:$0xff] %v5123
    %5279 = vst [vmem:[#allocation3 + $0x98] sm:$0xff] %v5126
    %5280 = vst [vmem:[#allocation3 + $0xa0] sm:$0xff] %v5129
    %5281 = vst [vmem:[#allocation3 + $0xa8] sm:$0xff] %v5132
    %5282 = vst [vmem:[#allocation3 + $0xb0] sm:$0xff] %v5135
    %5283 = vst [vmem:[#allocation3 + $0xb8] sm:$0xff] %v5138
    %5284 = vst [vmem:[#allocation3 + $0xc0] sm:$0xff] %v5141
    %5285 = vst [vmem:[#allocation3 + $0xc8] sm:$0xff] %v5144
    %5286 = vst [vmem:[#allocation3 + $0xd0] sm:$0xff] %v5147
    %5287 = vst [vmem:[#allocation3 + $0xd8] sm:$0xff] %v5150
    %5288 = vst [vmem:[#allocation3 + $0xe0] sm:$0xff] %v5153
    %5289 = vst [vmem:[#allocation3 + $0xe8] sm:$0xff] %v5156
    %5290 = vst [vmem:[#allocation3 + $0xf0] sm:$0xff] %v5159
    %5291 = vst [vmem:[#allocation3 + $0xf8] sm:$0xff] %v5162
    %5292 = vst [vmem:[#allocation3 + $0x100] sm:$0xff] %v5165
    %5293 = vst [vmem:[#allocation3 + $0x108] sm:$0xff] %v5168
    %5294 = vst [vmem:[#allocation3 + $0x110] sm:$0xff] %v5171
    %5295 = vst [vmem:[#allocation3 + $0x118] sm:$0xff] %v5174
    %5296 = vst [vmem:[#allocation3 + $0x120] sm:$0xff] %v5177
    %5297 = vst [vmem:[#allocation3 + $0x128] sm:$0xff] %v5180
    %5298 = vst [vmem:[#allocation3 + $0x130] sm:$0xff] %v5183
    %5299 = vst [vmem:[#allocation3 + $0x138] sm:$0xff] %v5186
    %5300 = vst [vmem:[#allocation3 + $0x140] sm:$0xff] %v5189
    %5301 = vst [vmem:[#allocation3 + $0x148] sm:$0xff] %v5192
    %5302 = vst [vmem:[#allocation3 + $0x150] sm:$0xff] %v5195
    %5303 = vst [vmem:[#allocation3 + $0x158] sm:$0xff] %v5198
    %5304 = vst [vmem:[#allocation3 + $0x160] sm:$0xff] %v5201
    %5305 = vst [vmem:[#allocation3 + $0x168] sm:$0xff] %v5204
    %5306 = vst [vmem:[#allocation3 + $0x170] sm:$0xff] %v5207
    %5307 = vst [vmem:[#allocation3 + $0x178] sm:$0xff] %v5210
    %5308 = vst [vmem:[#allocation3 + $0x180] sm:$0xff] %v5213
    %5309 = vst [vmem:[#allocation3 + $0x188] sm:$0xff] %v5216
    %5310 = vst [vmem:[#allocation3 + $0x190] sm:$0xff] %v5219
    %5311 = vst [vmem:[#allocation3 + $0x198] sm:$0xff] %v5222
    %5312 = vst [vmem:[#allocation3 + $0x1a0] sm:$0xff] %v5225
    %5313 = vst [vmem:[#allocation3 + $0x1a8] sm:$0xff] %v5228
    %5314 = vst [vmem:[#allocation3 + $0x1b0] sm:$0xff] %v5231
    %5315 = vst [vmem:[#allocation3 + $0x1b8] sm:$0xff] %v5234
    %5316 = vst [vmem:[#allocation3 + $0x1c0] sm:$0xff] %v5237
    %5317 = vst [vmem:[#allocation3 + $0x1c8] sm:$0xff] %v5240
    %5318 = vst [vmem:[#allocation3 + $0x1d0] sm:$0xff] %v5243
    %5319 = vst [vmem:[#allocation3 + $0x1d8] sm:$0xff] %v5246
    %5320 = vst [vmem:[#allocation3 + $0x1e0] sm:$0xff] %v5249
    %5321 = vst [vmem:[#allocation3 + $0x1e8] sm:$0xff] %v5252
    %5322 = vst [vmem:[#allocation3 + $0x1f0] sm:$0xff] %v5255
    %5323 = vst [vmem:[#allocation3 + $0x1f8] sm:$0xff] %v5258
    %v5324 = vld [vmem:[#allocation2 + $0x1] sm:$0xff]
    %v5325 = vld [vmem:[#allocation2 + $0x9] sm:$0xff]
    %v5326 = vld [vmem:[#allocation2 + $0x19] sm:$0xff]
    %v5327 = vld [vmem:[#allocation2 + $0x21] sm:$0xff]
    %v5328 = vld [vmem:[#allocation2 + $0x31] sm:$0xff]
    %v5329 = vld [vmem:[#allocation2 + $0x39] sm:$0xff]
    %v5330 = vld [vmem:[#allocation2 + $0x49] sm:$0xff]
    %v5331 = vld [vmem:[#allocation2 + $0x51] sm:$0xff]
    %v5332 = vld [vmem:[#allocation2 + $0x61] sm:$0xff]
    %v5333 = vld [vmem:[#allocation2 + $0x69] sm:$0xff]
    %v5334 = vld [vmem:[#allocation2 + $0x79] sm:$0xff]
    %v5335 = vld [vmem:[#allocation2 + $0x81] sm:$0xff]
    %v5336 = vld [vmem:[#allocation2 + $0x91] sm:$0xff]
    %v5337 = vld [vmem:[#allocation2 + $0x99] sm:$0xff]
    %v5338 = vld [vmem:[#allocation2 + $0xa9] sm:$0xff]
    %v5339 = vld [vmem:[#allocation2 + $0xb1] sm:$0xff]
    %v5340 = vld [vmem:[#allocation2 + $0xc1] sm:$0xff]
    %v5341 = vld [vmem:[#allocation2 + $0xc9] sm:$0xff]
    %v5342 = vld [vmem:[#allocation2 + $0xd9] sm:$0xff]
    %v5343 = vld [vmem:[#allocation2 + $0xe1] sm:$0xff]
    %v5344 = vld [vmem:[#allocation2 + $0xf1] sm:$0xff]
    %v5345 = vld [vmem:[#allocation2 + $0xf9] sm:$0xff]
    %v5346 = vld [vmem:[#allocation2 + $0x109] sm:$0xff]
    %v5347 = vld [vmem:[#allocation2 + $0x111] sm:$0xff]
    %v5348 = vld [vmem:[#allocation2 + $0x121] sm:$0xff]
    %v5349 = vld [vmem:[#allocation2 + $0x129] sm:$0xff]
    %v5350 = vld [vmem:[#allocation2 + $0x139] sm:$0xff]
    %v5351 = vld [vmem:[#allocation2 + $0x141] sm:$0xff]
    %v5352 = vld [vmem:[#allocation2 + $0x151] sm:$0xff]
    %v5353 = vld [vmem:[#allocation2 + $0x159] sm:$0xff]
    %v5354 = vld [vmem:[#allocation2 + $0x169] sm:$0xff]
    %v5355 = vld [vmem:[#allocation2 + $0x171] sm:$0xff]
    %v5356 = vld [vmem:[#allocation2 + $0x1b1] sm:$0xff]
    %v5357 = vld [vmem:[#allocation2 + $0x1b9] sm:$0xff]
    %v5358 = vld [vmem:[#allocation2 + $0x1c9] sm:$0xff]
    %v5359 = vld [vmem:[#allocation2 + $0x1d1] sm:$0xff]
    %v5360 = vld [vmem:[#allocation2 + $0x1e1] sm:$0xff]
    %v5361 = vld [vmem:[#allocation2 + $0x1e9] sm:$0xff]
    %v5362 = vld [vmem:[#allocation2 + $0x1f9] sm:$0xff]
    %v5363 = vld [vmem:[#allocation2 + $0x201] sm:$0xff]
    %v5364 = vld [vmem:[#allocation2 + $0x211] sm:$0xff]
    %v5365 = vld [vmem:[#allocation2 + $0x219] sm:$0xff]
    %v5366 = vld [vmem:[#allocation2 + $0x229] sm:$0xff]
    %v5367 = vld [vmem:[#allocation2 + $0x231] sm:$0xff]
    %v5368 = vld [vmem:[#allocation2 + $0x241] sm:$0xff]
    %v5369 = vld [vmem:[#allocation2 + $0x249] sm:$0xff]
    %v5370 = vld [vmem:[#allocation2 + $0x259] sm:$0xff]
    %v5371 = vld [vmem:[#allocation2 + $0x261] sm:$0xff]
    %v5372 = vld [vmem:[#allocation2 + $0x271] sm:$0xff]
    %v5373 = vld [vmem:[#allocation2 + $0x279] sm:$0xff]
    %v5374 = vld [vmem:[#allocation2 + $0x289] sm:$0xff]
    %v5375 = vld [vmem:[#allocation2 + $0x291] sm:$0xff]
    %v5376 = vld [vmem:[#allocation2 + $0x2a1] sm:$0xff]
    %v5377 = vld [vmem:[#allocation2 + $0x2a9] sm:$0xff]
    %v5378 = vld [vmem:[#allocation2 + $0x2b9] sm:$0xff]
    %v5379 = vld [vmem:[#allocation2 + $0x2c1] sm:$0xff]
    %v5380 = vld [vmem:[#allocation2 + $0x2d1] sm:$0xff]
    %v5381 = vld [vmem:[#allocation2 + $0x2d9] sm:$0xff]
    %v5382 = vld [vmem:[#allocation2 + $0x2e9] sm:$0xff]
    %v5383 = vld [vmem:[#allocation2 + $0x2f1] sm:$0xff]
    %v5384 = vld [vmem:[#allocation2 + $0x301] sm:$0xff]
    %v5385 = vld [vmem:[#allocation2 + $0x309] sm:$0xff]
    %v5386 = vld [vmem:[#allocation2 + $0x319] sm:$0xff]
    %v5387 = vld [vmem:[#allocation2 + $0x321] sm:$0xff]
    %s5388 = scalar_lea.vmem [#allocation4], 128
    %v5389 = vld [vmem:[%s5388] sm:$0xff]
    %v5390 = vld [vmem:[%s5388 + $0x8] sm:$0xff]
    %v5391 = vld [vmem:[%s5388 + $0x10] sm:$0xff]
    %v5392 = vld [vmem:[%s5388 + $0x18] sm:$0xff]
    %v5393 = vld [vmem:[%s5388 + $0x20] sm:$0xff]
    %v5394 = vld [vmem:[%s5388 + $0x28] sm:$0xff]
    %v5395 = vld [vmem:[%s5388 + $0x30] sm:$0xff]
    %v5396 = vld [vmem:[%s5388 + $0x38] sm:$0xff]
    %v5397 = vld [vmem:[%s5388 + $0x40] sm:$0xff]
    %v5398 = vld [vmem:[%s5388 + $0x48] sm:$0xff]
    %v5399 = vld [vmem:[%s5388 + $0x50] sm:$0xff]
    %v5400 = vld [vmem:[%s5388 + $0x58] sm:$0xff]
    %v5401 = vld [vmem:[%s5388 + $0x60] sm:$0xff]
    %v5402 = vld [vmem:[%s5388 + $0x68] sm:$0xff]
    %v5403 = vld [vmem:[%s5388 + $0x70] sm:$0xff]
    %v5404 = vld [vmem:[%s5388 + $0x78] sm:$0xff]
    %5405 = vmatpush.msra.mxu0 %v5404
    %5406 = vmatpush.msra.mxu0 %v5403
    %5407 = vmatpush.msra.mxu0 %v5402
    %5408 = vmatpush.msra.mxu0 %v5401
    %5409 = vmatpush.msra.mxu0 %v5400
    %5410 = vmatpush.msra.mxu0 %v5399
    %5411 = vmatpush.msra.mxu0 %v5398
    %5412 = vmatpush.msra.mxu0 %v5397
    %5413 = vmatpush.msra.mxu0 %v5396
    %5414 = vmatpush.msra.mxu0 %v5395
    %5415 = vmatpush.msra.mxu0 %v5394
    %5416 = vmatpush.msra.mxu0 %v5393
    %5417 = vmatpush.msra.mxu0 %v5392
    %5418 = vmatpush.msra.mxu0 %v5391
    %5419 = vmatpush.msra.mxu0 %v5390
    %5420 = vmatpush.msra.mxu0 %v5389
    %5421 = vmatmul.f32.gmra.mxu0 %v5324
    %v5422 = vpop.f32.mrf.mxu0
    %v5423 = vadd.f32 0.0, %v5422
    %5424 = vmatmul.f32.gmra.mxu0 %v5325
    %v5425 = vpop.f32.mrf.mxu0
    %v5426 = vadd.f32 0.0, %v5425
    %5427 = vmatmul.f32.gmra.mxu0 %v5326
    %v5428 = vpop.f32.mrf.mxu0
    %v5429 = vadd.f32 0.0, %v5428
    %5430 = vmatmul.f32.gmra.mxu0 %v5327
    %v5431 = vpop.f32.mrf.mxu0
    %v5432 = vadd.f32 0.0, %v5431
    %5433 = vmatmul.f32.gmra.mxu0 %v5328
    %v5434 = vpop.f32.mrf.mxu0
    %v5435 = vadd.f32 0.0, %v5434
    %5436 = vmatmul.f32.gmra.mxu0 %v5329
    %v5437 = vpop.f32.mrf.mxu0
    %v5438 = vadd.f32 0.0, %v5437
    %5439 = vmatmul.f32.gmra.mxu0 %v5330
    %v5440 = vpop.f32.mrf.mxu0
    %v5441 = vadd.f32 0.0, %v5440
    %5442 = vmatmul.f32.gmra.mxu0 %v5331
    %v5443 = vpop.f32.mrf.mxu0
    %v5444 = vadd.f32 0.0, %v5443
    %5445 = vmatmul.f32.gmra.mxu0 %v5332
    %v5446 = vpop.f32.mrf.mxu0
    %v5447 = vadd.f32 0.0, %v5446
    %5448 = vmatmul.f32.gmra.mxu0 %v5333
    %v5449 = vpop.f32.mrf.mxu0
    %v5450 = vadd.f32 0.0, %v5449
    %5451 = vmatmul.f32.gmra.mxu0 %v5334
    %v5452 = vpop.f32.mrf.mxu0
    %v5453 = vadd.f32 0.0, %v5452
    %5454 = vmatmul.f32.gmra.mxu0 %v5335
    %v5455 = vpop.f32.mrf.mxu0
    %v5456 = vadd.f32 0.0, %v5455
    %5457 = vmatmul.f32.gmra.mxu0 %v5336
    %v5458 = vpop.f32.mrf.mxu0
    %v5459 = vadd.f32 0.0, %v5458
    %5460 = vmatmul.f32.gmra.mxu0 %v5337
    %v5461 = vpop.f32.mrf.mxu0
    %v5462 = vadd.f32 0.0, %v5461
    %5463 = vmatmul.f32.gmra.mxu0 %v5338
    %v5464 = vpop.f32.mrf.mxu0
    %v5465 = vadd.f32 0.0, %v5464
    %5466 = vmatmul.f32.gmra.mxu0 %v5339
    %v5467 = vpop.f32.mrf.mxu0
    %v5468 = vadd.f32 0.0, %v5467
    %5469 = vmatmul.f32.gmra.mxu0 %v5340
    %v5470 = vpop.f32.mrf.mxu0
    %v5471 = vadd.f32 0.0, %v5470
    %5472 = vmatmul.f32.gmra.mxu0 %v5341
    %v5473 = vpop.f32.mrf.mxu0
    %v5474 = vadd.f32 0.0, %v5473
    %5475 = vmatmul.f32.gmra.mxu0 %v5342
    %v5476 = vpop.f32.mrf.mxu0
    %v5477 = vadd.f32 0.0, %v5476
    %5478 = vmatmul.f32.gmra.mxu0 %v5343
    %v5479 = vpop.f32.mrf.mxu0
    %v5480 = vadd.f32 0.0, %v5479
    %5481 = vmatmul.f32.gmra.mxu0 %v5344
    %v5482 = vpop.f32.mrf.mxu0
    %v5483 = vadd.f32 0.0, %v5482
    %5484 = vmatmul.f32.gmra.mxu0 %v5345
    %v5485 = vpop.f32.mrf.mxu0
    %v5486 = vadd.f32 0.0, %v5485
    %5487 = vmatmul.f32.gmra.mxu0 %v5346
    %v5488 = vpop.f32.mrf.mxu0
    %v5489 = vadd.f32 0.0, %v5488
    %5490 = vmatmul.f32.gmra.mxu0 %v5347
    %v5491 = vpop.f32.mrf.mxu0
    %v5492 = vadd.f32 0.0, %v5491
    %5493 = vmatmul.f32.gmra.mxu0 %v5348
    %v5494 = vpop.f32.mrf.mxu0
    %v5495 = vadd.f32 0.0, %v5494
    %5496 = vmatmul.f32.gmra.mxu0 %v5349
    %v5497 = vpop.f32.mrf.mxu0
    %v5498 = vadd.f32 0.0, %v5497
    %5499 = vmatmul.f32.gmra.mxu0 %v5350
    %v5500 = vpop.f32.mrf.mxu0
    %v5501 = vadd.f32 0.0, %v5500
    %5502 = vmatmul.f32.gmra.mxu0 %v5351
    %v5503 = vpop.f32.mrf.mxu0
    %v5504 = vadd.f32 0.0, %v5503
    %5505 = vmatmul.f32.gmra.mxu0 %v5352
    %v5506 = vpop.f32.mrf.mxu0
    %v5507 = vadd.f32 0.0, %v5506
    %5508 = vmatmul.f32.gmra.mxu0 %v5353
    %v5509 = vpop.f32.mrf.mxu0
    %v5510 = vadd.f32 0.0, %v5509
    %5511 = vmatmul.f32.gmra.mxu0 %v5354
    %v5512 = vpop.f32.mrf.mxu0
    %v5513 = vadd.f32 0.0, %v5512
    %5514 = vmatmul.f32.gmra.mxu0 %v5355
    %v5515 = vpop.f32.mrf.mxu0
    %v5516 = vadd.f32 0.0, %v5515
    %5517 = vmatmul.f32.gmra.mxu0 %v5356
    %v5518 = vpop.f32.mrf.mxu0
    %v5519 = vadd.f32 0.0, %v5518
    %5520 = vmatmul.f32.gmra.mxu0 %v5357
    %v5521 = vpop.f32.mrf.mxu0
    %v5522 = vadd.f32 0.0, %v5521
    %5523 = vmatmul.f32.gmra.mxu0 %v5358
    %v5524 = vpop.f32.mrf.mxu0
    %v5525 = vadd.f32 0.0, %v5524
    %5526 = vmatmul.f32.gmra.mxu0 %v5359
    %v5527 = vpop.f32.mrf.mxu0
    %v5528 = vadd.f32 0.0, %v5527
    %5529 = vmatmul.f32.gmra.mxu0 %v5360
    %v5530 = vpop.f32.mrf.mxu0
    %v5531 = vadd.f32 0.0, %v5530
    %5532 = vmatmul.f32.gmra.mxu0 %v5361
    %v5533 = vpop.f32.mrf.mxu0
    %v5534 = vadd.f32 0.0, %v5533
    %5535 = vmatmul.f32.gmra.mxu0 %v5362
    %v5536 = vpop.f32.mrf.mxu0
    %v5537 = vadd.f32 0.0, %v5536
    %5538 = vmatmul.f32.gmra.mxu0 %v5363
    %v5539 = vpop.f32.mrf.mxu0
    %v5540 = vadd.f32 0.0, %v5539
    %5541 = vmatmul.f32.gmra.mxu0 %v5364
    %v5542 = vpop.f32.mrf.mxu0
    %v5543 = vadd.f32 0.0, %v5542
    %5544 = vmatmul.f32.gmra.mxu0 %v5365
    %v5545 = vpop.f32.mrf.mxu0
    %v5546 = vadd.f32 0.0, %v5545
    %5547 = vmatmul.f32.gmra.mxu0 %v5366
    %v5548 = vpop.f32.mrf.mxu0
    %v5549 = vadd.f32 0.0, %v5548
    %5550 = vmatmul.f32.gmra.mxu0 %v5367
    %v5551 = vpop.f32.mrf.mxu0
    %v5552 = vadd.f32 0.0, %v5551
    %5553 = vmatmul.f32.gmra.mxu0 %v5368
    %v5554 = vpop.f32.mrf.mxu0
    %v5555 = vadd.f32 0.0, %v5554
    %5556 = vmatmul.f32.gmra.mxu0 %v5369
    %v5557 = vpop.f32.mrf.mxu0
    %v5558 = vadd.f32 0.0, %v5557
    %5559 = vmatmul.f32.gmra.mxu0 %v5370
    %v5560 = vpop.f32.mrf.mxu0
    %v5561 = vadd.f32 0.0, %v5560
    %5562 = vmatmul.f32.gmra.mxu0 %v5371
    %v5563 = vpop.f32.mrf.mxu0
    %v5564 = vadd.f32 0.0, %v5563
    %5565 = vmatmul.f32.gmra.mxu0 %v5372
    %v5566 = vpop.f32.mrf.mxu0
    %v5567 = vadd.f32 0.0, %v5566
    %5568 = vmatmul.f32.gmra.mxu0 %v5373
    %v5569 = vpop.f32.mrf.mxu0
    %v5570 = vadd.f32 0.0, %v5569
    %5571 = vmatmul.f32.gmra.mxu0 %v5374
    %v5572 = vpop.f32.mrf.mxu0
    %v5573 = vadd.f32 0.0, %v5572
    %5574 = vmatmul.f32.gmra.mxu0 %v5375
    %v5575 = vpop.f32.mrf.mxu0
    %v5576 = vadd.f32 0.0, %v5575
    %5577 = vmatmul.f32.gmra.mxu0 %v5376
    %v5578 = vpop.f32.mrf.mxu0
    %v5579 = vadd.f32 0.0, %v5578
    %5580 = vmatmul.f32.gmra.mxu0 %v5377
    %v5581 = vpop.f32.mrf.mxu0
    %v5582 = vadd.f32 0.0, %v5581
    %5583 = vmatmul.f32.gmra.mxu0 %v5378
    %v5584 = vpop.f32.mrf.mxu0
    %v5585 = vadd.f32 0.0, %v5584
    %5586 = vmatmul.f32.gmra.mxu0 %v5379
    %v5587 = vpop.f32.mrf.mxu0
    %v5588 = vadd.f32 0.0, %v5587
    %5589 = vmatmul.f32.gmra.mxu0 %v5380
    %v5590 = vpop.f32.mrf.mxu0
    %v5591 = vadd.f32 0.0, %v5590
    %5592 = vmatmul.f32.gmra.mxu0 %v5381
    %v5593 = vpop.f32.mrf.mxu0
    %v5594 = vadd.f32 0.0, %v5593
    %5595 = vmatmul.f32.gmra.mxu0 %v5382
    %v5596 = vpop.f32.mrf.mxu0
    %v5597 = vadd.f32 0.0, %v5596
    %5598 = vmatmul.f32.gmra.mxu0 %v5383
    %v5599 = vpop.f32.mrf.mxu0
    %v5600 = vadd.f32 0.0, %v5599
    %5601 = vmatmul.f32.gmra.mxu0 %v5384
    %v5602 = vpop.f32.mrf.mxu0
    %v5603 = vadd.f32 0.0, %v5602
    %5604 = vmatmul.f32.gmra.mxu0 %v5385
    %v5605 = vpop.f32.mrf.mxu0
    %v5606 = vadd.f32 0.0, %v5605
    %5607 = vmatmul.f32.gmra.mxu0 %v5386
    %v5608 = vpop.f32.mrf.mxu0
    %v5609 = vadd.f32 0.0, %v5608
    %5610 = vmatmul.f32.gmra.mxu0 %v5387
    %v5611 = vpop.f32.mrf.mxu0
    %v5612 = vadd.f32 0.0, %v5611
    %5613 = vdwg.mxu0
    %v5614 = vld [vmem:[#allocation3] sm:$0xff]
    %v5615 = vld [vmem:[#allocation3 + $0x8] sm:$0xff]
    %v5616 = vld [vmem:[#allocation3 + $0x10] sm:$0xff]
    %v5617 = vld [vmem:[#allocation3 + $0x18] sm:$0xff]
    %v5618 = vld [vmem:[#allocation3 + $0x20] sm:$0xff]
    %v5619 = vld [vmem:[#allocation3 + $0x28] sm:$0xff]
    %v5620 = vld [vmem:[#allocation3 + $0x30] sm:$0xff]
    %v5621 = vld [vmem:[#allocation3 + $0x38] sm:$0xff]
    %v5622 = vld [vmem:[#allocation3 + $0x40] sm:$0xff]
    %v5623 = vld [vmem:[#allocation3 + $0x48] sm:$0xff]
    %v5624 = vld [vmem:[#allocation3 + $0x50] sm:$0xff]
    %v5625 = vld [vmem:[#allocation3 + $0x58] sm:$0xff]
    %v5626 = vld [vmem:[#allocation3 + $0x60] sm:$0xff]
    %v5627 = vld [vmem:[#allocation3 + $0x68] sm:$0xff]
    %v5628 = vld [vmem:[#allocation3 + $0x70] sm:$0xff]
    %v5629 = vld [vmem:[#allocation3 + $0x78] sm:$0xff]
    %v5630 = vld [vmem:[#allocation3 + $0x80] sm:$0xff]
    %v5631 = vld [vmem:[#allocation3 + $0x88] sm:$0xff]
    %v5632 = vld [vmem:[#allocation3 + $0x90] sm:$0xff]
    %v5633 = vld [vmem:[#allocation3 + $0x98] sm:$0xff]
    %v5634 = vld [vmem:[#allocation3 + $0xa0] sm:$0xff]
    %v5635 = vld [vmem:[#allocation3 + $0xa8] sm:$0xff]
    %v5636 = vld [vmem:[#allocation3 + $0xb0] sm:$0xff]
    %v5637 = vld [vmem:[#allocation3 + $0xb8] sm:$0xff]
    %v5638 = vld [vmem:[#allocation3 + $0xc0] sm:$0xff]
    %v5639 = vld [vmem:[#allocation3 + $0xc8] sm:$0xff]
    %v5640 = vld [vmem:[#allocation3 + $0xd0] sm:$0xff]
    %v5641 = vld [vmem:[#allocation3 + $0xd8] sm:$0xff]
    %v5642 = vld [vmem:[#allocation3 + $0xe0] sm:$0xff]
    %v5643 = vld [vmem:[#allocation3 + $0xe8] sm:$0xff]
    %v5644 = vld [vmem:[#allocation3 + $0xf0] sm:$0xff]
    %v5645 = vld [vmem:[#allocation3 + $0xf8] sm:$0xff]
    %v5646 = vld [vmem:[#allocation3 + $0x100] sm:$0xff]
    %v5647 = vld [vmem:[#allocation3 + $0x108] sm:$0xff]
    %v5648 = vld [vmem:[#allocation3 + $0x110] sm:$0xff]
    %v5649 = vld [vmem:[#allocation3 + $0x118] sm:$0xff]
    %v5650 = vld [vmem:[#allocation3 + $0x120] sm:$0xff]
    %v5651 = vld [vmem:[#allocation3 + $0x128] sm:$0xff]
    %v5652 = vld [vmem:[#allocation3 + $0x130] sm:$0xff]
    %v5653 = vld [vmem:[#allocation3 + $0x138] sm:$0xff]
    %v5654 = vld [vmem:[#allocation3 + $0x140] sm:$0xff]
    %v5655 = vld [vmem:[#allocation3 + $0x148] sm:$0xff]
    %v5656 = vld [vmem:[#allocation3 + $0x150] sm:$0xff]
    %v5657 = vld [vmem:[#allocation3 + $0x158] sm:$0xff]
    %v5658 = vld [vmem:[#allocation3 + $0x160] sm:$0xff]
    %v5659 = vld [vmem:[#allocation3 + $0x168] sm:$0xff]
    %v5660 = vld [vmem:[#allocation3 + $0x170] sm:$0xff]
    %v5661 = vld [vmem:[#allocation3 + $0x178] sm:$0xff]
    %v5662 = vld [vmem:[#allocation3 + $0x180] sm:$0xff]
    %v5663 = vld [vmem:[#allocation3 + $0x188] sm:$0xff]
    %v5664 = vld [vmem:[#allocation3 + $0x190] sm:$0xff]
    %v5665 = vld [vmem:[#allocation3 + $0x198] sm:$0xff]
    %v5666 = vld [vmem:[#allocation3 + $0x1a0] sm:$0xff]
    %v5667 = vld [vmem:[#allocation3 + $0x1a8] sm:$0xff]
    %v5668 = vld [vmem:[#allocation3 + $0x1b0] sm:$0xff]
    %v5669 = vld [vmem:[#allocation3 + $0x1b8] sm:$0xff]
    %v5670 = vld [vmem:[#allocation3 + $0x1c0] sm:$0xff]
    %v5671 = vld [vmem:[#allocation3 + $0x1c8] sm:$0xff]
    %v5672 = vld [vmem:[#allocation3 + $0x1d0] sm:$0xff]
    %v5673 = vld [vmem:[#allocation3 + $0x1d8] sm:$0xff]
    %v5674 = vld [vmem:[#allocation3 + $0x1e0] sm:$0xff]
    %v5675 = vld [vmem:[#allocation3 + $0x1e8] sm:$0xff]
    %v5676 = vld [vmem:[#allocation3 + $0x1f0] sm:$0xff]
    %v5677 = vld [vmem:[#allocation3 + $0x1f8] sm:$0xff]
    %v5678 = vadd.f32 %v5614, %v5423
    %v5679 = vadd.f32 %v5615, %v5426
    %v5680 = vadd.f32 %v5616, %v5429
    %v5681 = vadd.f32 %v5617, %v5432
    %v5682 = vadd.f32 %v5618, %v5435
    %v5683 = vadd.f32 %v5619, %v5438
    %v5684 = vadd.f32 %v5620, %v5441
    %v5685 = vadd.f32 %v5621, %v5444
    %v5686 = vadd.f32 %v5622, %v5447
    %v5687 = vadd.f32 %v5623, %v5450
    %v5688 = vadd.f32 %v5624, %v5453
    %v5689 = vadd.f32 %v5625, %v5456
    %v5690 = vadd.f32 %v5626, %v5459
    %v5691 = vadd.f32 %v5627, %v5462
    %v5692 = vadd.f32 %v5628, %v5465
    %v5693 = vadd.f32 %v5629, %v5468
    %v5694 = vadd.f32 %v5630, %v5471
    %v5695 = vadd.f32 %v5631, %v5474
    %v5696 = vadd.f32 %v5632, %v5477
    %v5697 = vadd.f32 %v5633, %v5480
    %v5698 = vadd.f32 %v5634, %v5483
    %v5699 = vadd.f32 %v5635, %v5486
    %v5700 = vadd.f32 %v5636, %v5489
    %v5701 = vadd.f32 %v5637, %v5492
    %v5702 = vadd.f32 %v5638, %v5495
    %v5703 = vadd.f32 %v5639, %v5498
    %v5704 = vadd.f32 %v5640, %v5501
    %v5705 = vadd.f32 %v5641, %v5504
    %v5706 = vadd.f32 %v5642, %v5507
    %v5707 = vadd.f32 %v5643, %v5510
    %v5708 = vadd.f32 %v5644, %v5513
    %v5709 = vadd.f32 %v5645, %v5516
    %v5710 = vadd.f32 %v5646, %v5519
    %v5711 = vadd.f32 %v5647, %v5522
    %v5712 = vadd.f32 %v5648, %v5525
    %v5713 = vadd.f32 %v5649, %v5528
    %v5714 = vadd.f32 %v5650, %v5531
    %v5715 = vadd.f32 %v5651, %v5534
    %v5716 = vadd.f32 %v5652, %v5537
    %v5717 = vadd.f32 %v5653, %v5540
    %v5718 = vadd.f32 %v5654, %v5543
    %v5719 = vadd.f32 %v5655, %v5546
    %v5720 = vadd.f32 %v5656, %v5549
    %v5721 = vadd.f32 %v5657, %v5552
    %v5722 = vadd.f32 %v5658, %v5555
    %v5723 = vadd.f32 %v5659, %v5558
    %v5724 = vadd.f32 %v5660, %v5561
    %v5725 = vadd.f32 %v5661, %v5564
    %v5726 = vadd.f32 %v5662, %v5567
    %v5727 = vadd.f32 %v5663, %v5570
    %v5728 = vadd.f32 %v5664, %v5573
    %v5729 = vadd.f32 %v5665, %v5576
    %v5730 = vadd.f32 %v5666, %v5579
    %v5731 = vadd.f32 %v5667, %v5582
    %v5732 = vadd.f32 %v5668, %v5585
    %v5733 = vadd.f32 %v5669, %v5588
    %v5734 = vadd.f32 %v5670, %v5591
    %v5735 = vadd.f32 %v5671, %v5594
    %v5736 = vadd.f32 %v5672, %v5597
    %v5737 = vadd.f32 %v5673, %v5600
    %v5738 = vadd.f32 %v5674, %v5603
    %v5739 = vadd.f32 %v5675, %v5606
    %v5740 = vadd.f32 %v5676, %v5609
    %v5741 = vadd.f32 %v5677, %v5612
    %5742 = vst [vmem:[#allocation3] sm:$0xff] %v5678
    %5743 = vst [vmem:[#allocation3 + $0x8] sm:$0xff] %v5679
    %5744 = vst [vmem:[#allocation3 + $0x10] sm:$0xff] %v5680
    %5745 = vst [vmem:[#allocation3 + $0x18] sm:$0xff] %v5681
    %5746 = vst [vmem:[#allocation3 + $0x20] sm:$0xff] %v5682
    %5747 = vst [vmem:[#allocation3 + $0x28] sm:$0xff] %v5683
    %5748 = vst [vmem:[#allocation3 + $0x30] sm:$0xff] %v5684
    %5749 = vst [vmem:[#allocation3 + $0x38] sm:$0xff] %v5685
    %5750 = vst [vmem:[#allocation3 + $0x40] sm:$0xff] %v5686
    %5751 = vst [vmem:[#allocation3 + $0x48] sm:$0xff] %v5687
    %5752 = vst [vmem:[#allocation3 + $0x50] sm:$0xff] %v5688
    %5753 = vst [vmem:[#allocation3 + $0x58] sm:$0xff] %v5689
    %5754 = vst [vmem:[#allocation3 + $0x60] sm:$0xff] %v5690
    %5755 = vst [vmem:[#allocation3 + $0x68] sm:$0xff] %v5691
    %5756 = vst [vmem:[#allocation3 + $0x70] sm:$0xff] %v5692
    %5757 = vst [vmem:[#allocation3 + $0x78] sm:$0xff] %v5693
    %5758 = vst [vmem:[#allocation3 + $0x80] sm:$0xff] %v5694
    %5759 = vst [vmem:[#allocation3 + $0x88] sm:$0xff] %v5695
    %5760 = vst [vmem:[#allocation3 + $0x90] sm:$0xff] %v5696
    %5761 = vst [vmem:[#allocation3 + $0x98] sm:$0xff] %v5697
    %5762 = vst [vmem:[#allocation3 + $0xa0] sm:$0xff] %v5698
    %5763 = vst [vmem:[#allocation3 + $0xa8] sm:$0xff] %v5699
    %5764 = vst [vmem:[#allocation3 + $0xb0] sm:$0xff] %v5700
    %5765 = vst [vmem:[#allocation3 + $0xb8] sm:$0xff] %v5701
    %5766 = vst [vmem:[#allocation3 + $0xc0] sm:$0xff] %v5702
    %5767 = vst [vmem:[#allocation3 + $0xc8] sm:$0xff] %v5703
    %5768 = vst [vmem:[#allocation3 + $0xd0] sm:$0xff] %v5704
    %5769 = vst [vmem:[#allocation3 + $0xd8] sm:$0xff] %v5705
    %5770 = vst [vmem:[#allocation3 + $0xe0] sm:$0xff] %v5706
    %5771 = vst [vmem:[#allocation3 + $0xe8] sm:$0xff] %v5707
    %5772 = vst [vmem:[#allocation3 + $0xf0] sm:$0xff] %v5708
    %5773 = vst [vmem:[#allocation3 + $0xf8] sm:$0xff] %v5709
    %5774 = vst [vmem:[#allocation3 + $0x100] sm:$0xff] %v5710
    %5775 = vst [vmem:[#allocation3 + $0x108] sm:$0xff] %v5711
    %5776 = vst [vmem:[#allocation3 + $0x110] sm:$0xff] %v5712
    %5777 = vst [vmem:[#allocation3 + $0x118] sm:$0xff] %v5713
    %5778 = vst [vmem:[#allocation3 + $0x120] sm:$0xff] %v5714
    %5779 = vst [vmem:[#allocation3 + $0x128] sm:$0xff] %v5715
    %5780 = vst [vmem:[#allocation3 + $0x130] sm:$0xff] %v5716
    %5781 = vst [vmem:[#allocation3 + $0x138] sm:$0xff] %v5717
    %5782 = vst [vmem:[#allocation3 + $0x140] sm:$0xff] %v5718
    %5783 = vst [vmem:[#allocation3 + $0x148] sm:$0xff] %v5719
    %5784 = vst [vmem:[#allocation3 + $0x150] sm:$0xff] %v5720
    %5785 = vst [vmem:[#allocation3 + $0x158] sm:$0xff] %v5721
    %5786 = vst [vmem:[#allocation3 + $0x160] sm:$0xff] %v5722
    %5787 = vst [vmem:[#allocation3 + $0x168] sm:$0xff] %v5723
    %5788 = vst [vmem:[#allocation3 + $0x170] sm:$0xff] %v5724
    %5789 = vst [vmem:[#allocation3 + $0x178] sm:$0xff] %v5725
    %5790 = vst [vmem:[#allocation3 + $0x180] sm:$0xff] %v5726
    %5791 = vst [vmem:[#allocation3 + $0x188] sm:$0xff] %v5727
    %5792 = vst [vmem:[#allocation3 + $0x190] sm:$0xff] %v5728
    %5793 = vst [vmem:[#allocation3 + $0x198] sm:$0xff] %v5729
    %5794 = vst [vmem:[#allocation3 + $0x1a0] sm:$0xff] %v5730
    %5795 = vst [vmem:[#allocation3 + $0x1a8] sm:$0xff] %v5731
    %5796 = vst [vmem:[#allocation3 + $0x1b0] sm:$0xff] %v5732
    %5797 = vst [vmem:[#allocation3 + $0x1b8] sm:$0xff] %v5733
    %5798 = vst [vmem:[#allocation3 + $0x1c0] sm:$0xff] %v5734
    %5799 = vst [vmem:[#allocation3 + $0x1c8] sm:$0xff] %v5735
    %5800 = vst [vmem:[#allocation3 + $0x1d0] sm:$0xff] %v5736
    %5801 = vst [vmem:[#allocation3 + $0x1d8] sm:$0xff] %v5737
    %5802 = vst [vmem:[#allocation3 + $0x1e0] sm:$0xff] %v5738
    %5803 = vst [vmem:[#allocation3 + $0x1e8] sm:$0xff] %v5739
    %5804 = vst [vmem:[#allocation3 + $0x1f0] sm:$0xff] %v5740
    %5805 = vst [vmem:[#allocation3 + $0x1f8] sm:$0xff] %v5741
    %v5806 = vld [vmem:[#allocation2 + $0x2] sm:$0xff]
    %v5807 = vld [vmem:[#allocation2 + $0xa] sm:$0xff]
    %v5808 = vld [vmem:[#allocation2 + $0x1a] sm:$0xff]
    %v5809 = vld [vmem:[#allocation2 + $0x22] sm:$0xff]
    %v5810 = vld [vmem:[#allocation2 + $0x32] sm:$0xff]
    %v5811 = vld [vmem:[#allocation2 + $0x3a] sm:$0xff]
    %v5812 = vld [vmem:[#allocation2 + $0x4a] sm:$0xff]
    %v5813 = vld [vmem:[#allocation2 + $0x52] sm:$0xff]
    %v5814 = vld [vmem:[#allocation2 + $0x62] sm:$0xff]
    %v5815 = vld [vmem:[#allocation2 + $0x6a] sm:$0xff]
    %v5816 = vld [vmem:[#allocation2 + $0x7a] sm:$0xff]
    %v5817 = vld [vmem:[#allocation2 + $0x82] sm:$0xff]
    %v5818 = vld [vmem:[#allocation2 + $0x92] sm:$0xff]
    %v5819 = vld [vmem:[#allocation2 + $0x9a] sm:$0xff]
    %v5820 = vld [vmem:[#allocation2 + $0xaa] sm:$0xff]
    %v5821 = vld [vmem:[#allocation2 + $0xb2] sm:$0xff]
    %v5822 = vld [vmem:[#allocation2 + $0xc2] sm:$0xff]
    %v5823 = vld [vmem:[#allocation2 + $0xca] sm:$0xff]
    %v5824 = vld [vmem:[#allocation2 + $0xda] sm:$0xff]
    %v5825 = vld [vmem:[#allocation2 + $0xe2] sm:$0xff]
    %v5826 = vld [vmem:[#allocation2 + $0xf2] sm:$0xff]
    %v5827 = vld [vmem:[#allocation2 + $0xfa] sm:$0xff]
    %v5828 = vld [vmem:[#allocation2 + $0x10a] sm:$0xff]
    %v5829 = vld [vmem:[#allocation2 + $0x112] sm:$0xff]
    %v5830 = vld [vmem:[#allocation2 + $0x122] sm:$0xff]
    %v5831 = vld [vmem:[#allocation2 + $0x12a] sm:$0xff]
    %v5832 = vld [vmem:[#allocation2 + $0x13a] sm:$0xff]
    %v5833 = vld [vmem:[#allocation2 + $0x142] sm:$0xff]
    %v5834 = vld [vmem:[#allocation2 + $0x152] sm:$0xff]
    %v5835 = vld [vmem:[#allocation2 + $0x15a] sm:$0xff]
    %v5836 = vld [vmem:[#allocation2 + $0x16a] sm:$0xff]
    %v5837 = vld [vmem:[#allocation2 + $0x172] sm:$0xff]
    %v5838 = vld [vmem:[#allocation2 + $0x1b2] sm:$0xff]
    %v5839 = vld [vmem:[#allocation2 + $0x1ba] sm:$0xff]
    %v5840 = vld [vmem:[#allocation2 + $0x1ca] sm:$0xff]
    %v5841 = vld [vmem:[#allocation2 + $0x1d2] sm:$0xff]
    %v5842 = vld [vmem:[#allocation2 + $0x1e2] sm:$0xff]
    %v5843 = vld [vmem:[#allocation2 + $0x1ea] sm:$0xff]
    %v5844 = vld [vmem:[#allocation2 + $0x1fa] sm:$0xff]
    %v5845 = vld [vmem:[#allocation2 + $0x202] sm:$0xff]
    %v5846 = vld [vmem:[#allocation2 + $0x212] sm:$0xff]
    %v5847 = vld [vmem:[#allocation2 + $0x21a] sm:$0xff]
    %v5848 = vld [vmem:[#allocation2 + $0x22a] sm:$0xff]
    %v5849 = vld [vmem:[#allocation2 + $0x232] sm:$0xff]
    %v5850 = vld [vmem:[#allocation2 + $0x242] sm:$0xff]
    %v5851 = vld [vmem:[#allocation2 + $0x24a] sm:$0xff]
    %v5852 = vld [vmem:[#allocation2 + $0x25a] sm:$0xff]
    %v5853 = vld [vmem:[#allocation2 + $0x262] sm:$0xff]
    %v5854 = vld [vmem:[#allocation2 + $0x272] sm:$0xff]
    %v5855 = vld [vmem:[#allocation2 + $0x27a] sm:$0xff]
    %v5856 = vld [vmem:[#allocation2 + $0x28a] sm:$0xff]
    %v5857 = vld [vmem:[#allocation2 + $0x292] sm:$0xff]
    %v5858 = vld [vmem:[#allocation2 + $0x2a2] sm:$0xff]
    %v5859 = vld [vmem:[#allocation2 + $0x2aa] sm:$0xff]
    %v5860 = vld [vmem:[#allocation2 + $0x2ba] sm:$0xff]
    %v5861 = vld [vmem:[#allocation2 + $0x2c2] sm:$0xff]
    %v5862 = vld [vmem:[#allocation2 + $0x2d2] sm:$0xff]
    %v5863 = vld [vmem:[#allocation2 + $0x2da] sm:$0xff]
    %v5864 = vld [vmem:[#allocation2 + $0x2ea] sm:$0xff]
    %v5865 = vld [vmem:[#allocation2 + $0x2f2] sm:$0xff]
    %v5866 = vld [vmem:[#allocation2 + $0x302] sm:$0xff]
    %v5867 = vld [vmem:[#allocation2 + $0x30a] sm:$0xff]
    %v5868 = vld [vmem:[#allocation2 + $0x31a] sm:$0xff]
    %v5869 = vld [vmem:[#allocation2 + $0x322] sm:$0xff]
    %s5870 = scalar_lea.vmem [#allocation4], 256
    %v5871 = vld [vmem:[%s5870] sm:$0xff]
    %v5872 = vld [vmem:[%s5870 + $0x8] sm:$0xff]
    %v5873 = vld [vmem:[%s5870 + $0x10] sm:$0xff]
    %v5874 = vld [vmem:[%s5870 + $0x18] sm:$0xff]
    %v5875 = vld [vmem:[%s5870 + $0x20] sm:$0xff]
    %v5876 = vld [vmem:[%s5870 + $0x28] sm:$0xff]
    %v5877 = vld [vmem:[%s5870 + $0x30] sm:$0xff]
    %v5878 = vld [vmem:[%s5870 + $0x38] sm:$0xff]
    %v5879 = vld [vmem:[%s5870 + $0x40] sm:$0xff]
    %v5880 = vld [vmem:[%s5870 + $0x48] sm:$0xff]
    %v5881 = vld [vmem:[%s5870 + $0x50] sm:$0xff]
    %v5882 = vld [vmem:[%s5870 + $0x58] sm:$0xff]
    %v5883 = vld [vmem:[%s5870 + $0x60] sm:$0xff]
    %v5884 = vld [vmem:[%s5870 + $0x68] sm:$0xff]
    %v5885 = vld [vmem:[%s5870 + $0x70] sm:$0xff]
    %v5886 = vld [vmem:[%s5870 + $0x78] sm:$0xff]
    %5887 = vmatpush.msra.mxu0 %v5886
    %5888 = vmatpush.msra.mxu0 %v5885
    %5889 = vmatpush.msra.mxu0 %v5884
    %5890 = vmatpush.msra.mxu0 %v5883
    %5891 = vmatpush.msra.mxu0 %v5882
    %5892 = vmatpush.msra.mxu0 %v5881
    %5893 = vmatpush.msra.mxu0 %v5880
    %5894 = vmatpush.msra.mxu0 %v5879
    %5895 = vmatpush.msra.mxu0 %v5878
    %5896 = vmatpush.msra.mxu0 %v5877
    %5897 = vmatpush.msra.mxu0 %v5876
    %5898 = vmatpush.msra.mxu0 %v5875
    %5899 = vmatpush.msra.mxu0 %v5874
    %5900 = vmatpush.msra.mxu0 %v5873
    %5901 = vmatpush.msra.mxu0 %v5872
    %5902 = vmatpush.msra.mxu0 %v5871
    %5903 = vmatmul.f32.gmra.mxu0 %v5806
    %v5904 = vpop.f32.mrf.mxu0
    %v5905 = vadd.f32 0.0, %v5904
    %5906 = vmatmul.f32.gmra.mxu0 %v5807
    %v5907 = vpop.f32.mrf.mxu0
    %v5908 = vadd.f32 0.0, %v5907
    %5909 = vmatmul.f32.gmra.mxu0 %v5808
    %v5910 = vpop.f32.mrf.mxu0
    %v5911 = vadd.f32 0.0, %v5910
    %5912 = vmatmul.f32.gmra.mxu0 %v5809
    %v5913 = vpop.f32.mrf.mxu0
    %v5914 = vadd.f32 0.0, %v5913
    %5915 = vmatmul.f32.gmra.mxu0 %v5810
    %v5916 = vpop.f32.mrf.mxu0
    %v5917 = vadd.f32 0.0, %v5916
    %5918 = vmatmul.f32.gmra.mxu0 %v5811
    %v5919 = vpop.f32.mrf.mxu0
    %v5920 = vadd.f32 0.0, %v5919
    %5921 = vmatmul.f32.gmra.mxu0 %v5812
    %v5922 = vpop.f32.mrf.mxu0
    %v5923 = vadd.f32 0.0, %v5922
    %5924 = vmatmul.f32.gmra.mxu0 %v5813
    %v5925 = vpop.f32.mrf.mxu0
    %v5926 = vadd.f32 0.0, %v5925
    %5927 = vmatmul.f32.gmra.mxu0 %v5814
    %v5928 = vpop.f32.mrf.mxu0
    %v5929 = vadd.f32 0.0, %v5928
    %5930 = vmatmul.f32.gmra.mxu0 %v5815
    %v5931 = vpop.f32.mrf.mxu0
    %v5932 = vadd.f32 0.0, %v5931
    %5933 = vmatmul.f32.gmra.mxu0 %v5816
    %v5934 = vpop.f32.mrf.mxu0
    %v5935 = vadd.f32 0.0, %v5934
    %5936 = vmatmul.f32.gmra.mxu0 %v5817
    %v5937 = vpop.f32.mrf.mxu0
    %v5938 = vadd.f32 0.0, %v5937
    %5939 = vmatmul.f32.gmra.mxu0 %v5818
    %v5940 = vpop.f32.mrf.mxu0
    %v5941 = vadd.f32 0.0, %v5940
    %5942 = vmatmul.f32.gmra.mxu0 %v5819
    %v5943 = vpop.f32.mrf.mxu0
    %v5944 = vadd.f32 0.0, %v5943
    %5945 = vmatmul.f32.gmra.mxu0 %v5820
    %v5946 = vpop.f32.mrf.mxu0
    %v5947 = vadd.f32 0.0, %v5946
    %5948 = vmatmul.f32.gmra.mxu0 %v5821
    %v5949 = vpop.f32.mrf.mxu0
    %v5950 = vadd.f32 0.0, %v5949
    %5951 = vmatmul.f32.gmra.mxu0 %v5822
    %v5952 = vpop.f32.mrf.mxu0
    %v5953 = vadd.f32 0.0, %v5952
    %5954 = vmatmul.f32.gmra.mxu0 %v5823
    %v5955 = vpop.f32.mrf.mxu0
    %v5956 = vadd.f32 0.0, %v5955
    %5957 = vmatmul.f32.gmra.mxu0 %v5824
    %v5958 = vpop.f32.mrf.mxu0
    %v5959 = vadd.f32 0.0, %v5958
    %5960 = vmatmul.f32.gmra.mxu0 %v5825
    %v5961 = vpop.f32.mrf.mxu0
    %v5962 = vadd.f32 0.0, %v5961
    %5963 = vmatmul.f32.gmra.mxu0 %v5826
    %v5964 = vpop.f32.mrf.mxu0
    %v5965 = vadd.f32 0.0, %v5964
    %5966 = vmatmul.f32.gmra.mxu0 %v5827
    %v5967 = vpop.f32.mrf.mxu0
    %v5968 = vadd.f32 0.0, %v5967
    %5969 = vmatmul.f32.gmra.mxu0 %v5828
    %v5970 = vpop.f32.mrf.mxu0
    %v5971 = vadd.f32 0.0, %v5970
    %5972 = vmatmul.f32.gmra.mxu0 %v5829
    %v5973 = vpop.f32.mrf.mxu0
    %v5974 = vadd.f32 0.0, %v5973
    %5975 = vmatmul.f32.gmra.mxu0 %v5830
    %v5976 = vpop.f32.mrf.mxu0
    %v5977 = vadd.f32 0.0, %v5976
    %5978 = vmatmul.f32.gmra.mxu0 %v5831
    %v5979 = vpop.f32.mrf.mxu0
    %v5980 = vadd.f32 0.0, %v5979
    %5981 = vmatmul.f32.gmra.mxu0 %v5832
    %v5982 = vpop.f32.mrf.mxu0
    %v5983 = vadd.f32 0.0, %v5982
    %5984 = vmatmul.f32.gmra.mxu0 %v5833
    %v5985 = vpop.f32.mrf.mxu0
    %v5986 = vadd.f32 0.0, %v5985
    %5987 = vmatmul.f32.gmra.mxu0 %v5834
    %v5988 = vpop.f32.mrf.mxu0
    %v5989 = vadd.f32 0.0, %v5988
    %5990 = vmatmul.f32.gmra.mxu0 %v5835
    %v5991 = vpop.f32.mrf.mxu0
    %v5992 = vadd.f32 0.0, %v5991
    %5993 = vmatmul.f32.gmra.mxu0 %v5836
    %v5994 = vpop.f32.mrf.mxu0
    %v5995 = vadd.f32 0.0, %v5994
    %5996 = vmatmul.f32.gmra.mxu0 %v5837
    %v5997 = vpop.f32.mrf.mxu0
    %v5998 = vadd.f32 0.0, %v5997
    %5999 = vmatmul.f32.gmra.mxu0 %v5838
    %v6000 = vpop.f32.mrf.mxu0
    %v6001 = vadd.f32 0.0, %v6000
    %6002 = vmatmul.f32.gmra.mxu0 %v5839
    %v6003 = vpop.f32.mrf.mxu0
    %v6004 = vadd.f32 0.0, %v6003
    %6005 = vmatmul.f32.gmra.mxu0 %v5840
    %v6006 = vpop.f32.mrf.mxu0
    %v6007 = vadd.f32 0.0, %v6006
    %6008 = vmatmul.f32.gmra.mxu0 %v5841
    %v6009 = vpop.f32.mrf.mxu0
    %v6010 = vadd.f32 0.0, %v6009
    %6011 = vmatmul.f32.gmra.mxu0 %v5842
    %v6012 = vpop.f32.mrf.mxu0
    %v6013 = vadd.f32 0.0, %v6012
    %6014 = vmatmul.f32.gmra.mxu0 %v5843
    %v6015 = vpop.f32.mrf.mxu0
    %v6016 = vadd.f32 0.0, %v6015
    %6017 = vmatmul.f32.gmra.mxu0 %v5844
    %v6018 = vpop.f32.mrf.mxu0
    %v6019 = vadd.f32 0.0, %v6018
    %6020 = vmatmul.f32.gmra.mxu0 %v5845
    %v6021 = vpop.f32.mrf.mxu0
    %v6022 = vadd.f32 0.0, %v6021
    %6023 = vmatmul.f32.gmra.mxu0 %v5846
    %v6024 = vpop.f32.mrf.mxu0
    %v6025 = vadd.f32 0.0, %v6024
    %6026 = vmatmul.f32.gmra.mxu0 %v5847
    %v6027 = vpop.f32.mrf.mxu0
    %v6028 = vadd.f32 0.0, %v6027
    %6029 = vmatmul.f32.gmra.mxu0 %v5848
    %v6030 = vpop.f32.mrf.mxu0
    %v6031 = vadd.f32 0.0, %v6030
    %6032 = vmatmul.f32.gmra.mxu0 %v5849
    %v6033 = vpop.f32.mrf.mxu0
    %v6034 = vadd.f32 0.0, %v6033
    %6035 = vmatmul.f32.gmra.mxu0 %v5850
    %v6036 = vpop.f32.mrf.mxu0
    %v6037 = vadd.f32 0.0, %v6036
    %6038 = vmatmul.f32.gmra.mxu0 %v5851
    %v6039 = vpop.f32.mrf.mxu0
    %v6040 = vadd.f32 0.0, %v6039
    %6041 = vmatmul.f32.gmra.mxu0 %v5852
    %v6042 = vpop.f32.mrf.mxu0
    %v6043 = vadd.f32 0.0, %v6042
    %6044 = vmatmul.f32.gmra.mxu0 %v5853
    %v6045 = vpop.f32.mrf.mxu0
    %v6046 = vadd.f32 0.0, %v6045
    %6047 = vmatmul.f32.gmra.mxu0 %v5854
    %v6048 = vpop.f32.mrf.mxu0
    %v6049 = vadd.f32 0.0, %v6048
    %6050 = vmatmul.f32.gmra.mxu0 %v5855
    %v6051 = vpop.f32.mrf.mxu0
    %v6052 = vadd.f32 0.0, %v6051
    %6053 = vmatmul.f32.gmra.mxu0 %v5856
    %v6054 = vpop.f32.mrf.mxu0
    %v6055 = vadd.f32 0.0, %v6054
    %6056 = vmatmul.f32.gmra.mxu0 %v5857
    %v6057 = vpop.f32.mrf.mxu0
    %v6058 = vadd.f32 0.0, %v6057
    %6059 = vmatmul.f32.gmra.mxu0 %v5858
    %v6060 = vpop.f32.mrf.mxu0
    %v6061 = vadd.f32 0.0, %v6060
    %6062 = vmatmul.f32.gmra.mxu0 %v5859
    %v6063 = vpop.f32.mrf.mxu0
    %v6064 = vadd.f32 0.0, %v6063
    %6065 = vmatmul.f32.gmra.mxu0 %v5860
    %v6066 = vpop.f32.mrf.mxu0
    %v6067 = vadd.f32 0.0, %v6066
    %6068 = vmatmul.f32.gmra.mxu0 %v5861
    %v6069 = vpop.f32.mrf.mxu0
    %v6070 = vadd.f32 0.0, %v6069
    %6071 = vmatmul.f32.gmra.mxu0 %v5862
    %v6072 = vpop.f32.mrf.mxu0
    %v6073 = vadd.f32 0.0, %v6072
    %6074 = vmatmul.f32.gmra.mxu0 %v5863
    %v6075 = vpop.f32.mrf.mxu0
    %v6076 = vadd.f32 0.0, %v6075
    %6077 = vmatmul.f32.gmra.mxu0 %v5864
    %v6078 = vpop.f32.mrf.mxu0
    %v6079 = vadd.f32 0.0, %v6078
    %6080 = vmatmul.f32.gmra.mxu0 %v5865
    %v6081 = vpop.f32.mrf.mxu0
    %v6082 = vadd.f32 0.0, %v6081
    %6083 = vmatmul.f32.gmra.mxu0 %v5866
    %v6084 = vpop.f32.mrf.mxu0
    %v6085 = vadd.f32 0.0, %v6084
    %6086 = vmatmul.f32.gmra.mxu0 %v5867
    %v6087 = vpop.f32.mrf.mxu0
    %v6088 = vadd.f32 0.0, %v6087
    %6089 = vmatmul.f32.gmra.mxu0 %v5868
    %v6090 = vpop.f32.mrf.mxu0
    %v6091 = vadd.f32 0.0, %v6090
    %6092 = vmatmul.f32.gmra.mxu0 %v5869
    %v6093 = vpop.f32.mrf.mxu0
    %v6094 = vadd.f32 0.0, %v6093
    %6095 = vdwg.mxu0
    %v6096 = vld [vmem:[#allocation3] sm:$0xff]
    %v6097 = vld [vmem:[#allocation3 + $0x8] sm:$0xff]
    %v6098 = vld [vmem:[#allocation3 + $0x10] sm:$0xff]
    %v6099 = vld [vmem:[#allocation3 + $0x18] sm:$0xff]
    %v6100 = vld [vmem:[#allocation3 + $0x20] sm:$0xff]
    %v6101 = vld [vmem:[#allocation3 + $0x28] sm:$0xff]
    %v6102 = vld [vmem:[#allocation3 + $0x30] sm:$0xff]
    %v6103 = vld [vmem:[#allocation3 + $0x38] sm:$0xff]
    %v6104 = vld [vmem:[#allocation3 + $0x40] sm:$0xff]
    %v6105 = vld [vmem:[#allocation3 + $0x48] sm:$0xff]
    %v6106 = vld [vmem:[#allocation3 + $0x50] sm:$0xff]
    %v6107 = vld [vmem:[#allocation3 + $0x58] sm:$0xff]
    %v6108 = vld [vmem:[#allocation3 + $0x60] sm:$0xff]
    %v6109 = vld [vmem:[#allocation3 + $0x68] sm:$0xff]
    %v6110 = vld [vmem:[#allocation3 + $0x70] sm:$0xff]
    %v6111 = vld [vmem:[#allocation3 + $0x78] sm:$0xff]
    %v6112 = vld [vmem:[#allocation3 + $0x80] sm:$0xff]
    %v6113 = vld [vmem:[#allocation3 + $0x88] sm:$0xff]
    %v6114 = vld [vmem:[#allocation3 + $0x90] sm:$0xff]
    %v6115 = vld [vmem:[#allocation3 + $0x98] sm:$0xff]
    %v6116 = vld [vmem:[#allocation3 + $0xa0] sm:$0xff]
    %v6117 = vld [vmem:[#allocation3 + $0xa8] sm:$0xff]
    %v6118 = vld [vmem:[#allocation3 + $0xb0] sm:$0xff]
    %v6119 = vld [vmem:[#allocation3 + $0xb8] sm:$0xff]
    %v6120 = vld [vmem:[#allocation3 + $0xc0] sm:$0xff]
    %v6121 = vld [vmem:[#allocation3 + $0xc8] sm:$0xff]
    %v6122 = vld [vmem:[#allocation3 + $0xd0] sm:$0xff]
    %v6123 = vld [vmem:[#allocation3 + $0xd8] sm:$0xff]
    %v6124 = vld [vmem:[#allocation3 + $0xe0] sm:$0xff]
    %v6125 = vld [vmem:[#allocation3 + $0xe8] sm:$0xff]
    %v6126 = vld [vmem:[#allocation3 + $0xf0] sm:$0xff]
    %v6127 = vld [vmem:[#allocation3 + $0xf8] sm:$0xff]
    %v6128 = vld [vmem:[#allocation3 + $0x100] sm:$0xff]
    %v6129 = vld [vmem:[#allocation3 + $0x108] sm:$0xff]
    %v6130 = vld [vmem:[#allocation3 + $0x110] sm:$0xff]
    %v6131 = vld [vmem:[#allocation3 + $0x118] sm:$0xff]
    %v6132 = vld [vmem:[#allocation3 + $0x120] sm:$0xff]
    %v6133 = vld [vmem:[#allocation3 + $0x128] sm:$0xff]
    %v6134 = vld [vmem:[#allocation3 + $0x130] sm:$0xff]
    %v6135 = vld [vmem:[#allocation3 + $0x138] sm:$0xff]
    %v6136 = vld [vmem:[#allocation3 + $0x140] sm:$0xff]
    %v6137 = vld [vmem:[#allocation3 + $0x148] sm:$0xff]
    %v6138 = vld [vmem:[#allocation3 + $0x150] sm:$0xff]
    %v6139 = vld [vmem:[#allocation3 + $0x158] sm:$0xff]
    %v6140 = vld [vmem:[#allocation3 + $0x160] sm:$0xff]
    %v6141 = vld [vmem:[#allocation3 + $0x168] sm:$0xff]
    %v6142 = vld [vmem:[#allocation3 + $0x170] sm:$0xff]
    %v6143 = vld [vmem:[#allocation3 + $0x178] sm:$0xff]
    %v6144 = vld [vmem:[#allocation3 + $0x180] sm:$0xff]
    %v6145 = vld [vmem:[#allocation3 + $0x188] sm:$0xff]
    %v6146 = vld [vmem:[#allocation3 + $0x190] sm:$0xff]
    %v6147 = vld [vmem:[#allocation3 + $0x198] sm:$0xff]
    %v6148 = vld [vmem:[#allocation3 + $0x1a0] sm:$0xff]
    %v6149 = vld [vmem:[#allocation3 + $0x1a8] sm:$0xff]
    %v6150 = vld [vmem:[#allocation3 + $0x1b0] sm:$0xff]
    %v6151 = vld [vmem:[#allocation3 + $0x1b8] sm:$0xff]
    %v6152 = vld [vmem:[#allocation3 + $0x1c0] sm:$0xff]
    %v6153 = vld [vmem:[#allocation3 + $0x1c8] sm:$0xff]
    %v6154 = vld [vmem:[#allocation3 + $0x1d0] sm:$0xff]
    %v6155 = vld [vmem:[#allocation3 + $0x1d8] sm:$0xff]
    %v6156 = vld [vmem:[#allocation3 + $0x1e0] sm:$0xff]
    %v6157 = vld [vmem:[#allocation3 + $0x1e8] sm:$0xff]
    %v6158 = vld [vmem:[#allocation3 + $0x1f0] sm:$0xff]
    %v6159 = vld [vmem:[#allocation3 + $0x1f8] sm:$0xff]
    %v6160 = vadd.f32 %v6096, %v5905
    %v6161 = vadd.f32 %v6097, %v5908
    %v6162 = vadd.f32 %v6098, %v5911
    %v6163 = vadd.f32 %v6099, %v5914
    %v6164 = vadd.f32 %v6100, %v5917
    %v6165 = vadd.f32 %v6101, %v5920
    %v6166 = vadd.f32 %v6102, %v5923
    %v6167 = vadd.f32 %v6103, %v5926
    %v6168 = vadd.f32 %v6104, %v5929
    %v6169 = vadd.f32 %v6105, %v5932
    %v6170 = vadd.f32 %v6106, %v5935
    %v6171 = vadd.f32 %v6107, %v5938
    %v6172 = vadd.f32 %v6108, %v5941
    %v6173 = vadd.f32 %v6109, %v5944
    %v6174 = vadd.f32 %v6110, %v5947
    %v6175 = vadd.f32 %v6111, %v5950
    %v6176 = vadd.f32 %v6112, %v5953
    %v6177 = vadd.f32 %v6113, %v5956
    %v6178 = vadd.f32 %v6114, %v5959
    %v6179 = vadd.f32 %v6115, %v5962
    %v6180 = vadd.f32 %v6116, %v5965
    %v6181 = vadd.f32 %v6117, %v5968
    %v6182 = vadd.f32 %v6118, %v5971
    %v6183 = vadd.f32 %v6119, %v5974
    %v6184 = vadd.f32 %v6120, %v5977
    %v6185 = vadd.f32 %v6121, %v5980
    %v6186 = vadd.f32 %v6122, %v5983
    %v6187 = vadd.f32 %v6123, %v5986
    %v6188 = vadd.f32 %v6124, %v5989
    %v6189 = vadd.f32 %v6125, %v5992
    %v6190 = vadd.f32 %v6126, %v5995
    %v6191 = vadd.f32 %v6127, %v5998
    %v6192 = vadd.f32 %v6128, %v6001
    %v6193 = vadd.f32 %v6129, %v6004
    %v6194 = vadd.f32 %v6130, %v6007
    %v6195 = vadd.f32 %v6131, %v6010
    %v6196 = vadd.f32 %v6132, %v6013
    %v6197 = vadd.f32 %v6133, %v6016
    %v6198 = vadd.f32 %v6134, %v6019
    %v6199 = vadd.f32 %v6135, %v6022
    %v6200 = vadd.f32 %v6136, %v6025
    %v6201 = vadd.f32 %v6137, %v6028
    %v6202 = vadd.f32 %v6138, %v6031
    %v6203 = vadd.f32 %v6139, %v6034
    %v6204 = vadd.f32 %v6140, %v6037
    %v6205 = vadd.f32 %v6141, %v6040
    %v6206 = vadd.f32 %v6142, %v6043
    %v6207 = vadd.f32 %v6143, %v6046
    %v6208 = vadd.f32 %v6144, %v6049
    %v6209 = vadd.f32 %v6145, %v6052
    %v6210 = vadd.f32 %v6146, %v6055
    %v6211 = vadd.f32 %v6147, %v6058
    %v6212 = vadd.f32 %v6148, %v6061
    %v6213 = vadd.f32 %v6149, %v6064
    %v6214 = vadd.f32 %v6150, %v6067
    %v6215 = vadd.f32 %v6151, %v6070
    %v6216 = vadd.f32 %v6152, %v6073
    %v6217 = vadd.f32 %v6153, %v6076
    %v6218 = vadd.f32 %v6154, %v6079
    %v6219 = vadd.f32 %v6155, %v6082
    %v6220 = vadd.f32 %v6156, %v6085
    %v6221 = vadd.f32 %v6157, %v6088
    %v6222 = vadd.f32 %v6158, %v6091
    %v6223 = vadd.f32 %v6159, %v6094
    %6224 = vst [vmem:[#allocation3] sm:$0xff] %v6160
    %6225 = vst [vmem:[#allocation3 + $0x8] sm:$0xff] %v6161
    %6226 = vst [vmem:[#allocation3 + $0x10] sm:$0xff] %v6162
    %6227 = vst [vmem:[#allocation3 + $0x18] sm:$0xff] %v6163
    %6228 = vst [vmem:[#allocation3 + $0x20] sm:$0xff] %v6164
    %6229 = vst [vmem:[#allocation3 + $0x28] sm:$0xff] %v6165
    %6230 = vst [vmem:[#allocation3 + $0x30] sm:$0xff] %v6166
    %6231 = vst [vmem:[#allocation3 + $0x38] sm:$0xff] %v6167
    %6232 = vst [vmem:[#allocation3 + $0x40] sm:$0xff] %v6168
    %6233 = vst [vmem:[#allocation3 + $0x48] sm:$0xff] %v6169
    %6234 = vst [vmem:[#allocation3 + $0x50] sm:$0xff] %v6170
    %6235 = vst [vmem:[#allocation3 + $0x58] sm:$0xff] %v6171
    %6236 = vst [vmem:[#allocation3 + $0x60] sm:$0xff] %v6172
    %6237 = vst [vmem:[#allocation3 + $0x68] sm:$0xff] %v6173
    %6238 = vst [vmem:[#allocation3 + $0x70] sm:$0xff] %v6174
    %6239 = vst [vmem:[#allocation3 + $0x78] sm:$0xff] %v6175
    %6240 = vst [vmem:[#allocation3 + $0x80] sm:$0xff] %v6176
    %6241 = vst [vmem:[#allocation3 + $0x88] sm:$0xff] %v6177
    %6242 = vst [vmem:[#allocation3 + $0x90] sm:$0xff] %v6178
    %6243 = vst [vmem:[#allocation3 + $0x98] sm:$0xff] %v6179
    %6244 = vst [vmem:[#allocation3 + $0xa0] sm:$0xff] %v6180
    %6245 = vst [vmem:[#allocation3 + $0xa8] sm:$0xff] %v6181
    %6246 = vst [vmem:[#allocation3 + $0xb0] sm:$0xff] %v6182
    %6247 = vst [vmem:[#allocation3 + $0xb8] sm:$0xff] %v6183
    %6248 = vst [vmem:[#allocation3 + $0xc0] sm:$0xff] %v6184
    %6249 = vst [vmem:[#allocation3 + $0xc8] sm:$0xff] %v6185
    %6250 = vst [vmem:[#allocation3 + $0xd0] sm:$0xff] %v6186
    %6251 = vst [vmem:[#allocation3 + $0xd8] sm:$0xff] %v6187
    %6252 = vst [vmem:[#allocation3 + $0xe0] sm:$0xff] %v6188
    %6253 = vst [vmem:[#allocation3 + $0xe8] sm:$0xff] %v6189
    %6254 = vst [vmem:[#allocation3 + $0xf0] sm:$0xff] %v6190
    %6255 = vst [vmem:[#allocation3 + $0xf8] sm:$0xff] %v6191
    %6256 = vst [vmem:[#allocation3 + $0x100] sm:$0xff] %v6192
    %6257 = vst [vmem:[#allocation3 + $0x108] sm:$0xff] %v6193
    %6258 = vst [vmem:[#allocation3 + $0x110] sm:$0xff] %v6194
    %6259 = vst [vmem:[#allocation3 + $0x118] sm:$0xff] %v6195
    %6260 = vst [vmem:[#allocation3 + $0x120] sm:$0xff] %v6196
    %6261 = vst [vmem:[#allocation3 + $0x128] sm:$0xff] %v6197
    %6262 = vst [vmem:[#allocation3 + $0x130] sm:$0xff] %v6198
    %6263 = vst [vmem:[#allocation3 + $0x138] sm:$0xff] %v6199
    %6264 = vst [vmem:[#allocation3 + $0x140] sm:$0xff] %v6200
    %6265 = vst [vmem:[#allocation3 + $0x148] sm:$0xff] %v6201
    %6266 = vst [vmem:[#allocation3 + $0x150] sm:$0xff] %v6202
    %6267 = vst [vmem:[#allocation3 + $0x158] sm:$0xff] %v6203
    %6268 = vst [vmem:[#allocation3 + $0x160] sm:$0xff] %v6204
    %6269 = vst [vmem:[#allocation3 + $0x168] sm:$0xff] %v6205
    %6270 = vst [vmem:[#allocation3 + $0x170] sm:$0xff] %v6206
    %6271 = vst [vmem:[#allocation3 + $0x178] sm:$0xff] %v6207
    %6272 = vst [vmem:[#allocation3 + $0x180] sm:$0xff] %v6208
    %6273 = vst [vmem:[#allocation3 + $0x188] sm:$0xff] %v6209
    %6274 = vst [vmem:[#allocation3 + $0x190] sm:$0xff] %v6210
    %6275 = vst [vmem:[#allocation3 + $0x198] sm:$0xff] %v6211
    %6276 = vst [vmem:[#allocation3 + $0x1a0] sm:$0xff] %v6212
    %6277 = vst [vmem:[#allocation3 + $0x1a8] sm:$0xff] %v6213
    %6278 = vst [vmem:[#allocation3 + $0x1b0] sm:$0xff] %v6214
    %6279 = vst [vmem:[#allocation3 + $0x1b8] sm:$0xff] %v6215
    %6280 = vst [vmem:[#allocation3 + $0x1c0] sm:$0xff] %v6216
    %6281 = vst [vmem:[#allocation3 + $0x1c8] sm:$0xff] %v6217
    %6282 = vst [vmem:[#allocation3 + $0x1d0] sm:$0xff] %v6218
    %6283 = vst [vmem:[#allocation3 + $0x1d8] sm:$0xff] %v6219
    %6284 = vst [vmem:[#allocation3 + $0x1e0] sm:$0xff] %v6220
    %6285 = vst [vmem:[#allocation3 + $0x1e8] sm:$0xff] %v6221
    %6286 = vst [vmem:[#allocation3 + $0x1f0] sm:$0xff] %v6222
    %6287 = vst [vmem:[#allocation3 + $0x1f8] sm:$0xff] %v6223
    %v6288 = vld [vmem:[%s4906] sm:$0xff]
    %v6289 = vld [vmem:[%s4906 + $0x8] sm:$0xff]
    %v6290 = vld [vmem:[%s4906 + $0x18] sm:$0xff]
    %v6291 = vld [vmem:[%s4906 + $0x20] sm:$0xff]
    %v6292 = vld [vmem:[%s4906 + $0x30] sm:$0xff]
    %v6293 = vld [vmem:[%s4906 + $0x38] sm:$0xff]
    %v6294 = vld [vmem:[%s4906 + $0x48] sm:$0xff]
    %v6295 = vld [vmem:[%s4906 + $0x50] sm:$0xff]
    %v6296 = vld [vmem:[%s4906 + $0x60] sm:$0xff]
    %v6297 = vld [vmem:[%s4906 + $0x68] sm:$0xff]
    %v6298 = vld [vmem:[%s4906 + $0x78] sm:$0xff]
    %v6299 = vld [vmem:[%s4906 + $0x80] sm:$0xff]
    %v6300 = vld [vmem:[%s4906 + $0x90] sm:$0xff]
    %v6301 = vld [vmem:[%s4906 + $0x98] sm:$0xff]
    %v6302 = vld [vmem:[%s4906 + $0xa8] sm:$0xff]
    %v6303 = vld [vmem:[%s4906 + $0xb0] sm:$0xff]
    %v6304 = vld [vmem:[%s4906 + $0xc0] sm:$0xff]
    %v6305 = vld [vmem:[%s4906 + $0xc8] sm:$0xff]
    %v6306 = vld [vmem:[%s4906 + $0xd8] sm:$0xff]
    %v6307 = vld [vmem:[%s4906 + $0xe0] sm:$0xff]
    %v6308 = vld [vmem:[%s4906 + $0xf0] sm:$0xff]
    %v6309 = vld [vmem:[%s4906 + $0xf8] sm:$0xff]
    %v6310 = vld [vmem:[%s4906 + $0x108] sm:$0xff]
    %v6311 = vld [vmem:[%s4906 + $0x110] sm:$0xff]
    %v6312 = vld [vmem:[%s4906 + $0x120] sm:$0xff]
    %v6313 = vld [vmem:[%s4906 + $0x128] sm:$0xff]
    %v6314 = vld [vmem:[%s4906 + $0x138] sm:$0xff]
    %v6315 = vld [vmem:[%s4906 + $0x140] sm:$0xff]
    %v6316 = vld [vmem:[%s4906 + $0x150] sm:$0xff]
    %v6317 = vld [vmem:[%s4906 + $0x158] sm:$0xff]
    %v6318 = vld [vmem:[%s4906 + $0x168] sm:$0xff]
    %v6319 = vld [vmem:[%s4906 + $0x170] sm:$0xff]
    %v6320 = vld [vmem:[%s4906 + $0x1b0] sm:$0xff]
    %v6321 = vld [vmem:[%s4906 + $0x1b8] sm:$0xff]
    %v6322 = vld [vmem:[%s4906 + $0x1c8] sm:$0xff]
    %v6323 = vld [vmem:[%s4906 + $0x1d0] sm:$0xff]
    %v6324 = vld [vmem:[%s4906 + $0x1e0] sm:$0xff]
    %v6325 = vld [vmem:[%s4906 + $0x1e8] sm:$0xff]
    %v6326 = vld [vmem:[%s4906 + $0x1f8] sm:$0xff]
    %v6327 = vld [vmem:[%s4906 + $0x200] sm:$0xff]
    %v6328 = vld [vmem:[%s4906 + $0x210] sm:$0xff]
    %v6329 = vld [vmem:[%s4906 + $0x218] sm:$0xff]
    %v6330 = vld [vmem:[%s4906 + $0x228] sm:$0xff]
    %v6331 = vld [vmem:[%s4906 + $0x230] sm:$0xff]
    %v6332 = vld [vmem:[%s4906 + $0x240] sm:$0xff]
    %v6333 = vld [vmem:[%s4906 + $0x248] sm:$0xff]
    %v6334 = vld [vmem:[%s4906 + $0x258] sm:$0xff]
    %v6335 = vld [vmem:[%s4906 + $0x260] sm:$0xff]
    %v6336 = vld [vmem:[%s4906 + $0x270] sm:$0xff]
    %v6337 = vld [vmem:[%s4906 + $0x278] sm:$0xff]
    %v6338 = vld [vmem:[%s4906 + $0x288] sm:$0xff]
    %v6339 = vld [vmem:[%s4906 + $0x290] sm:$0xff]
    %v6340 = vld [vmem:[%s4906 + $0x2a0] sm:$0xff]
    %v6341 = vld [vmem:[%s4906 + $0x2a8] sm:$0xff]
    %v6342 = vld [vmem:[%s4906 + $0x2b8] sm:$0xff]
    %v6343 = vld [vmem:[%s4906 + $0x2c0] sm:$0xff]
    %v6344 = vld [vmem:[%s4906 + $0x2d0] sm:$0xff]
    %v6345 = vld [vmem:[%s4906 + $0x2d8] sm:$0xff]
    %v6346 = vld [vmem:[%s4906 + $0x2e8] sm:$0xff]
    %v6347 = vld [vmem:[%s4906 + $0x2f0] sm:$0xff]
    %v6348 = vld [vmem:[%s4906 + $0x300] sm:$0xff]
    %v6349 = vld [vmem:[%s4906 + $0x308] sm:$0xff]
    %v6350 = vld [vmem:[%s4906 + $0x318] sm:$0xff]
    %v6351 = vld [vmem:[%s4906 + $0x320] sm:$0xff]
    %s6352 = scalar_lea.vmem [#allocation4], 384
    %v6353 = vld [vmem:[%s6352] sm:$0xff]
    %v6354 = vld [vmem:[%s6352 + $0x8] sm:$0xff]
    %v6355 = vld [vmem:[%s6352 + $0x10] sm:$0xff]
    %v6356 = vld [vmem:[%s6352 + $0x18] sm:$0xff]
    %v6357 = vld [vmem:[%s6352 + $0x20] sm:$0xff]
    %v6358 = vld [vmem:[%s6352 + $0x28] sm:$0xff]
    %v6359 = vld [vmem:[%s6352 + $0x30] sm:$0xff]
    %v6360 = vld [vmem:[%s6352 + $0x38] sm:$0xff]
    %v6361 = vld [vmem:[%s6352 + $0x40] sm:$0xff]
    %v6362 = vld [vmem:[%s6352 + $0x48] sm:$0xff]
    %v6363 = vld [vmem:[%s6352 + $0x50] sm:$0xff]
    %v6364 = vld [vmem:[%s6352 + $0x58] sm:$0xff]
    %v6365 = vld [vmem:[%s6352 + $0x60] sm:$0xff]
    %v6366 = vld [vmem:[%s6352 + $0x68] sm:$0xff]
    %v6367 = vld [vmem:[%s6352 + $0x70] sm:$0xff]
    %v6368 = vld [vmem:[%s6352 + $0x78] sm:$0xff]
    %6369 = vmatpush.msra.mxu0 %v6368
    %6370 = vmatpush.msra.mxu0 %v6367
    %6371 = vmatpush.msra.mxu0 %v6366
    %6372 = vmatpush.msra.mxu0 %v6365
    %6373 = vmatpush.msra.mxu0 %v6364
    %6374 = vmatpush.msra.mxu0 %v6363
    %6375 = vmatpush.msra.mxu0 %v6362
    %6376 = vmatpush.msra.mxu0 %v6361
    %6377 = vmatpush.msra.mxu0 %v6360
    %6378 = vmatpush.msra.mxu0 %v6359
    %6379 = vmatpush.msra.mxu0 %v6358
    %6380 = vmatpush.msra.mxu0 %v6357
    %6381 = vmatpush.msra.mxu0 %v6356
    %6382 = vmatpush.msra.mxu0 %v6355
    %6383 = vmatpush.msra.mxu0 %v6354
    %6384 = vmatpush.msra.mxu0 %v6353
    %6385 = vmatmul.f32.gmra.mxu0 %v6288
    %v6386 = vpop.f32.mrf.mxu0
    %v6387 = vadd.f32 0.0, %v6386
    %6388 = vmatmul.f32.gmra.mxu0 %v6289
    %v6389 = vpop.f32.mrf.mxu0
    %v6390 = vadd.f32 0.0, %v6389
    %6391 = vmatmul.f32.gmra.mxu0 %v6290
    %v6392 = vpop.f32.mrf.mxu0
    %v6393 = vadd.f32 0.0, %v6392
    %6394 = vmatmul.f32.gmra.mxu0 %v6291
    %v6395 = vpop.f32.mrf.mxu0
    %v6396 = vadd.f32 0.0, %v6395
    %6397 = vmatmul.f32.gmra.mxu0 %v6292
    %v6398 = vpop.f32.mrf.mxu0
    %v6399 = vadd.f32 0.0, %v6398
    %6400 = vmatmul.f32.gmra.mxu0 %v6293
    %v6401 = vpop.f32.mrf.mxu0
    %v6402 = vadd.f32 0.0, %v6401
    %6403 = vmatmul.f32.gmra.mxu0 %v6294
    %v6404 = vpop.f32.mrf.mxu0
    %v6405 = vadd.f32 0.0, %v6404
    %6406 = vmatmul.f32.gmra.mxu0 %v6295
    %v6407 = vpop.f32.mrf.mxu0
    %v6408 = vadd.f32 0.0, %v6407
    %6409 = vmatmul.f32.gmra.mxu0 %v6296
    %v6410 = vpop.f32.mrf.mxu0
    %v6411 = vadd.f32 0.0, %v6410
    %6412 = vmatmul.f32.gmra.mxu0 %v6297
    %v6413 = vpop.f32.mrf.mxu0
    %v6414 = vadd.f32 0.0, %v6413
    %6415 = vmatmul.f32.gmra.mxu0 %v6298
    %v6416 = vpop.f32.mrf.mxu0
    %v6417 = vadd.f32 0.0, %v6416
    %6418 = vmatmul.f32.gmra.mxu0 %v6299
    %v6419 = vpop.f32.mrf.mxu0
    %v6420 = vadd.f32 0.0, %v6419
    %6421 = vmatmul.f32.gmra.mxu0 %v6300
    %v6422 = vpop.f32.mrf.mxu0
    %v6423 = vadd.f32 0.0, %v6422
    %6424 = vmatmul.f32.gmra.mxu0 %v6301
    %v6425 = vpop.f32.mrf.mxu0
    %v6426 = vadd.f32 0.0, %v6425
    %6427 = vmatmul.f32.gmra.mxu0 %v6302
    %v6428 = vpop.f32.mrf.mxu0
    %v6429 = vadd.f32 0.0, %v6428
    %6430 = vmatmul.f32.gmra.mxu0 %v6303
    %v6431 = vpop.f32.mrf.mxu0
    %v6432 = vadd.f32 0.0, %v6431
    %6433 = vmatmul.f32.gmra.mxu0 %v6304
    %v6434 = vpop.f32.mrf.mxu0
    %v6435 = vadd.f32 0.0, %v6434
    %6436 = vmatmul.f32.gmra.mxu0 %v6305
    %v6437 = vpop.f32.mrf.mxu0
    %v6438 = vadd.f32 0.0, %v6437
    %6439 = vmatmul.f32.gmra.mxu0 %v6306
    %v6440 = vpop.f32.mrf.mxu0
    %v6441 = vadd.f32 0.0, %v6440
    %6442 = vmatmul.f32.gmra.mxu0 %v6307
    %v6443 = vpop.f32.mrf.mxu0
    %v6444 = vadd.f32 0.0, %v6443
    %6445 = vmatmul.f32.gmra.mxu0 %v6308
    %v6446 = vpop.f32.mrf.mxu0
    %v6447 = vadd.f32 0.0, %v6446
    %6448 = vmatmul.f32.gmra.mxu0 %v6309
    %v6449 = vpop.f32.mrf.mxu0
    %v6450 = vadd.f32 0.0, %v6449
    %6451 = vmatmul.f32.gmra.mxu0 %v6310
    %v6452 = vpop.f32.mrf.mxu0
    %v6453 = vadd.f32 0.0, %v6452
    %6454 = vmatmul.f32.gmra.mxu0 %v6311
    %v6455 = vpop.f32.mrf.mxu0
    %v6456 = vadd.f32 0.0, %v6455
    %6457 = vmatmul.f32.gmra.mxu0 %v6312
    %v6458 = vpop.f32.mrf.mxu0
    %v6459 = vadd.f32 0.0, %v6458
    %6460 = vmatmul.f32.gmra.mxu0 %v6313
    %v6461 = vpop.f32.mrf.mxu0
    %v6462 = vadd.f32 0.0, %v6461
    %6463 = vmatmul.f32.gmra.mxu0 %v6314
    %v6464 = vpop.f32.mrf.mxu0
    %v6465 = vadd.f32 0.0, %v6464
    %6466 = vmatmul.f32.gmra.mxu0 %v6315
    %v6467 = vpop.f32.mrf.mxu0
    %v6468 = vadd.f32 0.0, %v6467
    %6469 = vmatmul.f32.gmra.mxu0 %v6316
    %v6470 = vpop.f32.mrf.mxu0
    %v6471 = vadd.f32 0.0, %v6470
    %6472 = vmatmul.f32.gmra.mxu0 %v6317
    %v6473 = vpop.f32.mrf.mxu0
    %v6474 = vadd.f32 0.0, %v6473
    %6475 = vmatmul.f32.gmra.mxu0 %v6318
    %v6476 = vpop.f32.mrf.mxu0
    %v6477 = vadd.f32 0.0, %v6476
    %6478 = vmatmul.f32.gmra.mxu0 %v6319
    %v6479 = vpop.f32.mrf.mxu0
    %v6480 = vadd.f32 0.0, %v6479
    %6481 = vmatmul.f32.gmra.mxu0 %v6320
    %v6482 = vpop.f32.mrf.mxu0
    %v6483 = vadd.f32 0.0, %v6482
    %6484 = vmatmul.f32.gmra.mxu0 %v6321
    %v6485 = vpop.f32.mrf.mxu0
    %v6486 = vadd.f32 0.0, %v6485
    %6487 = vmatmul.f32.gmra.mxu0 %v6322
    %v6488 = vpop.f32.mrf.mxu0
    %v6489 = vadd.f32 0.0, %v6488
    %6490 = vmatmul.f32.gmra.mxu0 %v6323
    %v6491 = vpop.f32.mrf.mxu0
    %v6492 = vadd.f32 0.0, %v6491
    %6493 = vmatmul.f32.gmra.mxu0 %v6324
    %v6494 = vpop.f32.mrf.mxu0
    %v6495 = vadd.f32 0.0, %v6494
    %6496 = vmatmul.f32.gmra.mxu0 %v6325
    %v6497 = vpop.f32.mrf.mxu0
    %v6498 = vadd.f32 0.0, %v6497
    %6499 = vmatmul.f32.gmra.mxu0 %v6326
    %v6500 = vpop.f32.mrf.mxu0
    %v6501 = vadd.f32 0.0, %v6500
    %6502 = vmatmul.f32.gmra.mxu0 %v6327
    %v6503 = vpop.f32.mrf.mxu0
    %v6504 = vadd.f32 0.0, %v6503
    %6505 = vmatmul.f32.gmra.mxu0 %v6328
    %v6506 = vpop.f32.mrf.mxu0
    %v6507 = vadd.f32 0.0, %v6506
    %6508 = vmatmul.f32.gmra.mxu0 %v6329
    %v6509 = vpop.f32.mrf.mxu0
    %v6510 = vadd.f32 0.0, %v6509
    %6511 = vmatmul.f32.gmra.mxu0 %v6330
    %v6512 = vpop.f32.mrf.mxu0
    %v6513 = vadd.f32 0.0, %v6512
    %6514 = vmatmul.f32.gmra.mxu0 %v6331
    %v6515 = vpop.f32.mrf.mxu0
    %v6516 = vadd.f32 0.0, %v6515
    %6517 = vmatmul.f32.gmra.mxu0 %v6332
    %v6518 = vpop.f32.mrf.mxu0
    %v6519 = vadd.f32 0.0, %v6518
    %6520 = vmatmul.f32.gmra.mxu0 %v6333
    %v6521 = vpop.f32.mrf.mxu0
    %v6522 = vadd.f32 0.0, %v6521
    %6523 = vmatmul.f32.gmra.mxu0 %v6334
    %v6524 = vpop.f32.mrf.mxu0
    %v6525 = vadd.f32 0.0, %v6524
    %6526 = vmatmul.f32.gmra.mxu0 %v6335
    %v6527 = vpop.f32.mrf.mxu0
    %v6528 = vadd.f32 0.0, %v6527
    %6529 = vmatmul.f32.gmra.mxu0 %v6336
    %v6530 = vpop.f32.mrf.mxu0
    %v6531 = vadd.f32 0.0, %v6530
    %6532 = vmatmul.f32.gmra.mxu0 %v6337
    %v6533 = vpop.f32.mrf.mxu0
    %v6534 = vadd.f32 0.0, %v6533
    %6535 = vmatmul.f32.gmra.mxu0 %v6338
    %v6536 = vpop.f32.mrf.mxu0
    %v6537 = vadd.f32 0.0, %v6536
    %6538 = vmatmul.f32.gmra.mxu0 %v6339
    %v6539 = vpop.f32.mrf.mxu0
    %v6540 = vadd.f32 0.0, %v6539
    %6541 = vmatmul.f32.gmra.mxu0 %v6340
    %v6542 = vpop.f32.mrf.mxu0
    %v6543 = vadd.f32 0.0, %v6542
    %6544 = vmatmul.f32.gmra.mxu0 %v6341
    %v6545 = vpop.f32.mrf.mxu0
    %v6546 = vadd.f32 0.0, %v6545
    %6547 = vmatmul.f32.gmra.mxu0 %v6342
    %v6548 = vpop.f32.mrf.mxu0
    %v6549 = vadd.f32 0.0, %v6548
    %6550 = vmatmul.f32.gmra.mxu0 %v6343
    %v6551 = vpop.f32.mrf.mxu0
    %v6552 = vadd.f32 0.0, %v6551
    %6553 = vmatmul.f32.gmra.mxu0 %v6344
    %v6554 = vpop.f32.mrf.mxu0
    %v6555 = vadd.f32 0.0, %v6554
    %6556 = vmatmul.f32.gmra.mxu0 %v6345
    %v6557 = vpop.f32.mrf.mxu0
    %v6558 = vadd.f32 0.0, %v6557
    %6559 = vmatmul.f32.gmra.mxu0 %v6346
    %v6560 = vpop.f32.mrf.mxu0
    %v6561 = vadd.f32 0.0, %v6560
    %6562 = vmatmul.f32.gmra.mxu0 %v6347
    %v6563 = vpop.f32.mrf.mxu0
    %v6564 = vadd.f32 0.0, %v6563
    %6565 = vmatmul.f32.gmra.mxu0 %v6348
    %v6566 = vpop.f32.mrf.mxu0
    %v6567 = vadd.f32 0.0, %v6566
    %6568 = vmatmul.f32.gmra.mxu0 %v6349
    %v6569 = vpop.f32.mrf.mxu0
    %v6570 = vadd.f32 0.0, %v6569
    %6571 = vmatmul.f32.gmra.mxu0 %v6350
    %v6572 = vpop.f32.mrf.mxu0
    %v6573 = vadd.f32 0.0, %v6572
    %6574 = vmatmul.f32.gmra.mxu0 %v6351
    %v6575 = vpop.f32.mrf.mxu0
    %v6576 = vadd.f32 0.0, %v6575
    %6577 = vdwg.mxu0
    %v6578 = vld [vmem:[#allocation3] sm:$0xff]
    %v6579 = vld [vmem:[#allocation3 + $0x8] sm:$0xff]
    %v6580 = vld [vmem:[#allocation3 + $0x10] sm:$0xff]
    %v6581 = vld [vmem:[#allocation3 + $0x18] sm:$0xff]
    %v6582 = vld [vmem:[#allocation3 + $0x20] sm:$0xff]
    %v6583 = vld [vmem:[#allocation3 + $0x28] sm:$0xff]
    %v6584 = vld [vmem:[#allocation3 + $0x30] sm:$0xff]
    %v6585 = vld [vmem:[#allocation3 + $0x38] sm:$0xff]
    %v6586 = vld [vmem:[#allocation3 + $0x40] sm:$0xff]
    %v6587 = vld [vmem:[#allocation3 + $0x48] sm:$0xff]
    %v6588 = vld [vmem:[#allocation3 + $0x50] sm:$0xff]
    %v6589 = vld [vmem:[#allocation3 + $0x58] sm:$0xff]
    %v6590 = vld [vmem:[#allocation3 + $0x60] sm:$0xff]
    %v6591 = vld [vmem:[#allocation3 + $0x68] sm:$0xff]
    %v6592 = vld [vmem:[#allocation3 + $0x70] sm:$0xff]
    %v6593 = vld [vmem:[#allocation3 + $0x78] sm:$0xff]
    %v6594 = vld [vmem:[#allocation3 + $0x80] sm:$0xff]
    %v6595 = vld [vmem:[#allocation3 + $0x88] sm:$0xff]
    %v6596 = vld [vmem:[#allocation3 + $0x90] sm:$0xff]
    %v6597 = vld [vmem:[#allocation3 + $0x98] sm:$0xff]
    %v6598 = vld [vmem:[#allocation3 + $0xa0] sm:$0xff]
    %v6599 = vld [vmem:[#allocation3 + $0xa8] sm:$0xff]
    %v6600 = vld [vmem:[#allocation3 + $0xb0] sm:$0xff]
    %v6601 = vld [vmem:[#allocation3 + $0xb8] sm:$0xff]
    %v6602 = vld [vmem:[#allocation3 + $0xc0] sm:$0xff]
    %v6603 = vld [vmem:[#allocation3 + $0xc8] sm:$0xff]
    %v6604 = vld [vmem:[#allocation3 + $0xd0] sm:$0xff]
    %v6605 = vld [vmem:[#allocation3 + $0xd8] sm:$0xff]
    %v6606 = vld [vmem:[#allocation3 + $0xe0] sm:$0xff]
    %v6607 = vld [vmem:[#allocation3 + $0xe8] sm:$0xff]
    %v6608 = vld [vmem:[#allocation3 + $0xf0] sm:$0xff]
    %v6609 = vld [vmem:[#allocation3 + $0xf8] sm:$0xff]
    %v6610 = vld [vmem:[#allocation3 + $0x100] sm:$0xff]
    %v6611 = vld [vmem:[#allocation3 + $0x108] sm:$0xff]
    %v6612 = vld [vmem:[#allocation3 + $0x110] sm:$0xff]
    %v6613 = vld [vmem:[#allocation3 + $0x118] sm:$0xff]
    %v6614 = vld [vmem:[#allocation3 + $0x120] sm:$0xff]
    %v6615 = vld [vmem:[#allocation3 + $0x128] sm:$0xff]
    %v6616 = vld [vmem:[#allocation3 + $0x130] sm:$0xff]
    %v6617 = vld [vmem:[#allocation3 + $0x138] sm:$0xff]
    %v6618 = vld [vmem:[#allocation3 + $0x140] sm:$0xff]
    %v6619 = vld [vmem:[#allocation3 + $0x148] sm:$0xff]
    %v6620 = vld [vmem:[#allocation3 + $0x150] sm:$0xff]
    %v6621 = vld [vmem:[#allocation3 + $0x158] sm:$0xff]
    %v6622 = vld [vmem:[#allocation3 + $0x160] sm:$0xff]
    %v6623 = vld [vmem:[#allocation3 + $0x168] sm:$0xff]
    %v6624 = vld [vmem:[#allocation3 + $0x170] sm:$0xff]
    %v6625 = vld [vmem:[#allocation3 + $0x178] sm:$0xff]
    %v6626 = vld [vmem:[#allocation3 + $0x180] sm:$0xff]
    %v6627 = vld [vmem:[#allocation3 + $0x188] sm:$0xff]
    %v6628 = vld [vmem:[#allocation3 + $0x190] sm:$0xff]
    %v6629 = vld [vmem:[#allocation3 + $0x198] sm:$0xff]
    %v6630 = vld [vmem:[#allocation3 + $0x1a0] sm:$0xff]
    %v6631 = vld [vmem:[#allocation3 + $0x1a8] sm:$0xff]
    %v6632 = vld [vmem:[#allocation3 + $0x1b0] sm:$0xff]
    %v6633 = vld [vmem:[#allocation3 + $0x1b8] sm:$0xff]
    %v6634 = vld [vmem:[#allocation3 + $0x1c0] sm:$0xff]
    %v6635 = vld [vmem:[#allocation3 + $0x1c8] sm:$0xff]
    %v6636 = vld [vmem:[#allocation3 + $0x1d0] sm:$0xff]
    %v6637 = vld [vmem:[#allocation3 + $0x1d8] sm:$0xff]
    %v6638 = vld [vmem:[#allocation3 + $0x1e0] sm:$0xff]
    %v6639 = vld [vmem:[#allocation3 + $0x1e8] sm:$0xff]
    %v6640 = vld [vmem:[#allocation3 + $0x1f0] sm:$0xff]
    %v6641 = vld [vmem:[#allocation3 + $0x1f8] sm:$0xff]
    %v6642 = vadd.f32 %v6578, %v6387
    %v6643 = vadd.f32 %v6579, %v6390
    %v6644 = vadd.f32 %v6580, %v6393
    %v6645 = vadd.f32 %v6581, %v6396
    %v6646 = vadd.f32 %v6582, %v6399
    %v6647 = vadd.f32 %v6583, %v6402
    %v6648 = vadd.f32 %v6584, %v6405
    %v6649 = vadd.f32 %v6585, %v6408
    %v6650 = vadd.f32 %v6586, %v6411
    %v6651 = vadd.f32 %v6587, %v6414
    %v6652 = vadd.f32 %v6588, %v6417
    %v6653 = vadd.f32 %v6589, %v6420
    %v6654 = vadd.f32 %v6590, %v6423
    %v6655 = vadd.f32 %v6591, %v6426
    %v6656 = vadd.f32 %v6592, %v6429
    %v6657 = vadd.f32 %v6593, %v6432
    %v6658 = vadd.f32 %v6594, %v6435
    %v6659 = vadd.f32 %v6595, %v6438
    %v6660 = vadd.f32 %v6596, %v6441
    %v6661 = vadd.f32 %v6597, %v6444
    %v6662 = vadd.f32 %v6598, %v6447
    %v6663 = vadd.f32 %v6599, %v6450
    %v6664 = vadd.f32 %v6600, %v6453
    %v6665 = vadd.f32 %v6601, %v6456
    %v6666 = vadd.f32 %v6602, %v6459
    %v6667 = vadd.f32 %v6603, %v6462
    %v6668 = vadd.f32 %v6604, %v6465
    %v6669 = vadd.f32 %v6605, %v6468
    %v6670 = vadd.f32 %v6606, %v6471
    %v6671 = vadd.f32 %v6607, %v6474
    %v6672 = vadd.f32 %v6608, %v6477
    %v6673 = vadd.f32 %v6609, %v6480
    %v6674 = vadd.f32 %v6610, %v6483
    %v6675 = vadd.f32 %v6611, %v6486
    %v6676 = vadd.f32 %v6612, %v6489
    %v6677 = vadd.f32 %v6613, %v6492
    %v6678 = vadd.f32 %v6614, %v6495
    %v6679 = vadd.f32 %v6615, %v6498
    %v6680 = vadd.f32 %v6616, %v6501
    %v6681 = vadd.f32 %v6617, %v6504
    %v6682 = vadd.f32 %v6618, %v6507
    %v6683 = vadd.f32 %v6619, %v6510
    %v6684 = vadd.f32 %v6620, %v6513
    %v6685 = vadd.f32 %v6621, %v6516
    %v6686 = vadd.f32 %v6622, %v6519
    %v6687 = vadd.f32 %v6623, %v6522
    %v6688 = vadd.f32 %v6624, %v6525
    %v6689 = vadd.f32 %v6625, %v6528
    %v6690 = vadd.f32 %v6626, %v6531
    %v6691 = vadd.f32 %v6627, %v6534
    %v6692 = vadd.f32 %v6628, %v6537
    %v6693 = vadd.f32 %v6629, %v6540
    %v6694 = vadd.f32 %v6630, %v6543
    %v6695 = vadd.f32 %v6631, %v6546
    %v6696 = vadd.f32 %v6632, %v6549
    %v6697 = vadd.f32 %v6633, %v6552
    %v6698 = vadd.f32 %v6634, %v6555
    %v6699 = vadd.f32 %v6635, %v6558
    %v6700 = vadd.f32 %v6636, %v6561
    %v6701 = vadd.f32 %v6637, %v6564
    %v6702 = vadd.f32 %v6638, %v6567
    %v6703 = vadd.f32 %v6639, %v6570
    %v6704 = vadd.f32 %v6640, %v6573
    %v6705 = vadd.f32 %v6641, %v6576
    %6706 = vst [vmem:[#allocation3] sm:$0xff] %v6642
    %6707 = vst [vmem:[#allocation3 + $0x8] sm:$0xff] %v6643
    %6708 = vst [vmem:[#allocation3 + $0x10] sm:$0xff] %v6644
    %6709 = vst [vmem:[#allocation3 + $0x18] sm:$0xff] %v6645
    %6710 = vst [vmem:[#allocation3 + $0x20] sm:$0xff] %v6646
    %6711 = vst [vmem:[#allocation3 + $0x28] sm:$0xff] %v6647
    %6712 = vst [vmem:[#allocation3 + $0x30] sm:$0xff] %v6648
    %6713 = vst [vmem:[#allocation3 + $0x38] sm:$0xff] %v6649
    %6714 = vst [vmem:[#allocation3 + $0x40] sm:$0xff] %v6650
    %6715 = vst [vmem:[#allocation3 + $0x48] sm:$0xff] %v6651
    %6716 = vst [vmem:[#allocation3 + $0x50] sm:$0xff] %v6652
    %6717 = vst [vmem:[#allocation3 + $0x58] sm:$0xff] %v6653
    %6718 = vst [vmem:[#allocation3 + $0x60] sm:$0xff] %v6654
    %6719 = vst [vmem:[#allocation3 + $0x68] sm:$0xff] %v6655
    %6720 = vst [vmem:[#allocation3 + $0x70] sm:$0xff] %v6656
    %6721 = vst [vmem:[#allocation3 + $0x78] sm:$0xff] %v6657
    %6722 = vst [vmem:[#allocation3 + $0x80] sm:$0xff] %v6658
    %6723 = vst [vmem:[#allocation3 + $0x88] sm:$0xff] %v6659
    %6724 = vst [vmem:[#allocation3 + $0x90] sm:$0xff] %v6660
    %6725 = vst [vmem:[#allocation3 + $0x98] sm:$0xff] %v6661
    %6726 = vst [vmem:[#allocation3 + $0xa0] sm:$0xff] %v6662
    %6727 = vst [vmem:[#allocation3 + $0xa8] sm:$0xff] %v6663
    %6728 = vst [vmem:[#allocation3 + $0xb0] sm:$0xff] %v6664
    %6729 = vst [vmem:[#allocation3 + $0xb8] sm:$0xff] %v6665
    %6730 = vst [vmem:[#allocation3 + $0xc0] sm:$0xff] %v6666
    %6731 = vst [vmem:[#allocation3 + $0xc8] sm:$0xff] %v6667
    %6732 = vst [vmem:[#allocation3 + $0xd0] sm:$0xff] %v6668
    %6733 = vst [vmem:[#allocation3 + $0xd8] sm:$0xff] %v6669
    %6734 = vst [vmem:[#allocation3 + $0xe0] sm:$0xff] %v6670
    %6735 = vst [vmem:[#allocation3 + $0xe8] sm:$0xff] %v6671
    %6736 = vst [vmem:[#allocation3 + $0xf0] sm:$0xff] %v6672
    %6737 = vst [vmem:[#allocation3 + $0xf8] sm:$0xff] %v6673
    %6738 = vst [vmem:[#allocation3 + $0x100] sm:$0xff] %v6674
    %6739 = vst [vmem:[#allocation3 + $0x108] sm:$0xff] %v6675
    %6740 = vst [vmem:[#allocation3 + $0x110] sm:$0xff] %v6676
    %6741 = vst [vmem:[#allocation3 + $0x118] sm:$0xff] %v6677
    %6742 = vst [vmem:[#allocation3 + $0x120] sm:$0xff] %v6678
    %6743 = vst [vmem:[#allocation3 + $0x128] sm:$0xff] %v6679
    %6744 = vst [vmem:[#allocation3 + $0x130] sm:$0xff] %v6680
    %6745 = vst [vmem:[#allocation3 + $0x138] sm:$0xff] %v6681
    %6746 = vst [vmem:[#allocation3 + $0x140] sm:$0xff] %v6682
    %6747 = vst [vmem:[#allocation3 + $0x148] sm:$0xff] %v6683
    %6748 = vst [vmem:[#allocation3 + $0x150] sm:$0xff] %v6684
    %6749 = vst [vmem:[#allocation3 + $0x158] sm:$0xff] %v6685
    %6750 = vst [vmem:[#allocation3 + $0x160] sm:$0xff] %v6686
    %6751 = vst [vmem:[#allocation3 + $0x168] sm:$0xff] %v6687
    %6752 = vst [vmem:[#allocation3 + $0x170] sm:$0xff] %v6688
    %6753 = vst [vmem:[#allocation3 + $0x178] sm:$0xff] %v6689
    %6754 = vst [vmem:[#allocation3 + $0x180] sm:$0xff] %v6690
    %6755 = vst [vmem:[#allocation3 + $0x188] sm:$0xff] %v6691
    %6756 = vst [vmem:[#allocation3 + $0x190] sm:$0xff] %v6692
    %6757 = vst [vmem:[#allocation3 + $0x198] sm:$0xff] %v6693
    %6758 = vst [vmem:[#allocation3 + $0x1a0] sm:$0xff] %v6694
    %6759 = vst [vmem:[#allocation3 + $0x1a8] sm:$0xff] %v6695
    %6760 = vst [vmem:[#allocation3 + $0x1b0] sm:$0xff] %v6696
    %6761 = vst [vmem:[#allocation3 + $0x1b8] sm:$0xff] %v6697
    %6762 = vst [vmem:[#allocation3 + $0x1c0] sm:$0xff] %v6698
    %6763 = vst [vmem:[#allocation3 + $0x1c8] sm:$0xff] %v6699
    %6764 = vst [vmem:[#allocation3 + $0x1d0] sm:$0xff] %v6700
    %6765 = vst [vmem:[#allocation3 + $0x1d8] sm:$0xff] %v6701
    %6766 = vst [vmem:[#allocation3 + $0x1e0] sm:$0xff] %v6702
    %6767 = vst [vmem:[#allocation3 + $0x1e8] sm:$0xff] %v6703
    %6768 = vst [vmem:[#allocation3 + $0x1f0] sm:$0xff] %v6704
    %6769 = vst [vmem:[#allocation3 + $0x1f8] sm:$0xff] %v6705
    %v6770 = vld [vmem:[%s4906 + $0x1] sm:$0xff]
    %v6771 = vld [vmem:[%s4906 + $0x9] sm:$0xff]
    %v6772 = vld [vmem:[%s4906 + $0x19] sm:$0xff]
    %v6773 = vld [vmem:[%s4906 + $0x21] sm:$0xff]
    %v6774 = vld [vmem:[%s4906 + $0x31] sm:$0xff]
    %v6775 = vld [vmem:[%s4906 + $0x39] sm:$0xff]
    %v6776 = vld [vmem:[%s4906 + $0x49] sm:$0xff]
    %v6777 = vld [vmem:[%s4906 + $0x51] sm:$0xff]
    %v6778 = vld [vmem:[%s4906 + $0x61] sm:$0xff]
    %v6779 = vld [vmem:[%s4906 + $0x69] sm:$0xff]
    %v6780 = vld [vmem:[%s4906 + $0x79] sm:$0xff]
    %v6781 = vld [vmem:[%s4906 + $0x81] sm:$0xff]
    %v6782 = vld [vmem:[%s4906 + $0x91] sm:$0xff]
    %v6783 = vld [vmem:[%s4906 + $0x99] sm:$0xff]
    %v6784 = vld [vmem:[%s4906 + $0xa9] sm:$0xff]
    %v6785 = vld [vmem:[%s4906 + $0xb1] sm:$0xff]
    %v6786 = vld [vmem:[%s4906 + $0xc1] sm:$0xff]
    %v6787 = vld [vmem:[%s4906 + $0xc9] sm:$0xff]
    %v6788 = vld [vmem:[%s4906 + $0xd9] sm:$0xff]
    %v6789 = vld [vmem:[%s4906 + $0xe1] sm:$0xff]
    %v6790 = vld [vmem:[%s4906 + $0xf1] sm:$0xff]
    %v6791 = vld [vmem:[%s4906 + $0xf9] sm:$0xff]
    %v6792 = vld [vmem:[%s4906 + $0x109] sm:$0xff]
    %v6793 = vld [vmem:[%s4906 + $0x111] sm:$0xff]
    %v6794 = vld [vmem:[%s4906 + $0x121] sm:$0xff]
    %v6795 = vld [vmem:[%s4906 + $0x129] sm:$0xff]
    %v6796 = vld [vmem:[%s4906 + $0x139] sm:$0xff]
    %v6797 = vld [vmem:[%s4906 + $0x141] sm:$0xff]
    %v6798 = vld [vmem:[%s4906 + $0x151] sm:$0xff]
    %v6799 = vld [vmem:[%s4906 + $0x159] sm:$0xff]
    %v6800 = vld [vmem:[%s4906 + $0x169] sm:$0xff]
    %v6801 = vld [vmem:[%s4906 + $0x171] sm:$0xff]
    %v6802 = vld [vmem:[%s4906 + $0x1b1] sm:$0xff]
    %v6803 = vld [vmem:[%s4906 + $0x1b9] sm:$0xff]
    %v6804 = vld [vmem:[%s4906 + $0x1c9] sm:$0xff]
    %v6805 = vld [vmem:[%s4906 + $0x1d1] sm:$0xff]
    %v6806 = vld [vmem:[%s4906 + $0x1e1] sm:$0xff]
    %v6807 = vld [vmem:[%s4906 + $0x1e9] sm:$0xff]
    %v6808 = vld [vmem:[%s4906 + $0x1f9] sm:$0xff]
    %v6809 = vld [vmem:[%s4906 + $0x201] sm:$0xff]
    %v6810 = vld [vmem:[%s4906 + $0x211] sm:$0xff]
    %v6811 = vld [vmem:[%s4906 + $0x219] sm:$0xff]
    %v6812 = vld [vmem:[%s4906 + $0x229] sm:$0xff]
    %v6813 = vld [vmem:[%s4906 + $0x231] sm:$0xff]
    %v6814 = vld [vmem:[%s4906 + $0x241] sm:$0xff]
    %v6815 = vld [vmem:[%s4906 + $0x249] sm:$0xff]
    %v6816 = vld [vmem:[%s4906 + $0x259] sm:$0xff]
    %v6817 = vld [vmem:[%s4906 + $0x261] sm:$0xff]
    %v6818 = vld [vmem:[%s4906 + $0x271] sm:$0xff]
    %v6819 = vld [vmem:[%s4906 + $0x279] sm:$0xff]
    %v6820 = vld [vmem:[%s4906 + $0x289] sm:$0xff]
    %v6821 = vld [vmem:[%s4906 + $0x291] sm:$0xff]
    %v6822 = vld [vmem:[%s4906 + $0x2a1] sm:$0xff]
    %v6823 = vld [vmem:[%s4906 + $0x2a9] sm:$0xff]
    %v6824 = vld [vmem:[%s4906 + $0x2b9] sm:$0xff]
    %v6825 = vld [vmem:[%s4906 + $0x2c1] sm:$0xff]
    %v6826 = vld [vmem:[%s4906 + $0x2d1] sm:$0xff]
    %v6827 = vld [vmem:[%s4906 + $0x2d9] sm:$0xff]
    %v6828 = vld [vmem:[%s4906 + $0x2e9] sm:$0xff]
    %v6829 = vld [vmem:[%s4906 + $0x2f1] sm:$0xff]
    %v6830 = vld [vmem:[%s4906 + $0x301] sm:$0xff]
    %v6831 = vld [vmem:[%s4906 + $0x309] sm:$0xff]
    %v6832 = vld [vmem:[%s4906 + $0x319] sm:$0xff]
    %v6833 = vld [vmem:[%s4906 + $0x321] sm:$0xff]
    %s6834 = scalar_lea.vmem [#allocation4], 512
    %v6835 = vld [vmem:[%s6834] sm:$0xff]
    %v6836 = vld [vmem:[%s6834 + $0x8] sm:$0xff]
    %v6837 = vld [vmem:[%s6834 + $0x10] sm:$0xff]
    %v6838 = vld [vmem:[%s6834 + $0x18] sm:$0xff]
    %v6839 = vld [vmem:[%s6834 + $0x20] sm:$0xff]
    %v6840 = vld [vmem:[%s6834 + $0x28] sm:$0xff]
    %v6841 = vld [vmem:[%s6834 + $0x30] sm:$0xff]
    %v6842 = vld [vmem:[%s6834 + $0x38] sm:$0xff]
    %v6843 = vld [vmem:[%s6834 + $0x40] sm:$0xff]
    %v6844 = vld [vmem:[%s6834 + $0x48] sm:$0xff]
    %v6845 = vld [vmem:[%s6834 + $0x50] sm:$0xff]
    %v6846 = vld [vmem:[%s6834 + $0x58] sm:$0xff]
    %v6847 = vld [vmem:[%s6834 + $0x60] sm:$0xff]
    %v6848 = vld [vmem:[%s6834 + $0x68] sm:$0xff]
    %v6849 = vld [vmem:[%s6834 + $0x70] sm:$0xff]
    %v6850 = vld [vmem:[%s6834 + $0x78] sm:$0xff]
    %6851 = vmatpush.msra.mxu0 %v6850
    %6852 = vmatpush.msra.mxu0 %v6849
    %6853 = vmatpush.msra.mxu0 %v6848
    %6854 = vmatpush.msra.mxu0 %v6847
    %6855 = vmatpush.msra.mxu0 %v6846
    %6856 = vmatpush.msra.mxu0 %v6845
    %6857 = vmatpush.msra.mxu0 %v6844
    %6858 = vmatpush.msra.mxu0 %v6843
    %6859 = vmatpush.msra.mxu0 %v6842
    %6860 = vmatpush.msra.mxu0 %v6841
    %6861 = vmatpush.msra.mxu0 %v6840
    %6862 = vmatpush.msra.mxu0 %v6839
    %6863 = vmatpush.msra.mxu0 %v6838
    %6864 = vmatpush.msra.mxu0 %v6837
    %6865 = vmatpush.msra.mxu0 %v6836
    %6866 = vmatpush.msra.mxu0 %v6835
    %6867 = vmatmul.f32.gmra.mxu0 %v6770
    %v6868 = vpop.f32.mrf.mxu0
    %v6869 = vadd.f32 0.0, %v6868
    %6870 = vmatmul.f32.gmra.mxu0 %v6771
    %v6871 = vpop.f32.mrf.mxu0
    %v6872 = vadd.f32 0.0, %v6871
    %6873 = vmatmul.f32.gmra.mxu0 %v6772
    %v6874 = vpop.f32.mrf.mxu0
    %v6875 = vadd.f32 0.0, %v6874
    %6876 = vmatmul.f32.gmra.mxu0 %v6773
    %v6877 = vpop.f32.mrf.mxu0
    %v6878 = vadd.f32 0.0, %v6877
    %6879 = vmatmul.f32.gmra.mxu0 %v6774
    %v6880 = vpop.f32.mrf.mxu0
    %v6881 = vadd.f32 0.0, %v6880
    %6882 = vmatmul.f32.gmra.mxu0 %v6775
    %v6883 = vpop.f32.mrf.mxu0
    %v6884 = vadd.f32 0.0, %v6883
    %6885 = vmatmul.f32.gmra.mxu0 %v6776
    %v6886 = vpop.f32.mrf.mxu0
    %v6887 = vadd.f32 0.0, %v6886
    %6888 = vmatmul.f32.gmra.mxu0 %v6777
    %v6889 = vpop.f32.mrf.mxu0
    %v6890 = vadd.f32 0.0, %v6889
    %6891 = vmatmul.f32.gmra.mxu0 %v6778
    %v6892 = vpop.f32.mrf.mxu0
    %v6893 = vadd.f32 0.0, %v6892
    %6894 = vmatmul.f32.gmra.mxu0 %v6779
    %v6895 = vpop.f32.mrf.mxu0
    %v6896 = vadd.f32 0.0, %v6895
    %6897 = vmatmul.f32.gmra.mxu0 %v6780
    %v6898 = vpop.f32.mrf.mxu0
    %v6899 = vadd.f32 0.0, %v6898
    %6900 = vmatmul.f32.gmra.mxu0 %v6781
    %v6901 = vpop.f32.mrf.mxu0
    %v6902 = vadd.f32 0.0, %v6901
    %6903 = vmatmul.f32.gmra.mxu0 %v6782
    %v6904 = vpop.f32.mrf.mxu0
    %v6905 = vadd.f32 0.0, %v6904
    %6906 = vmatmul.f32.gmra.mxu0 %v6783
    %v6907 = vpop.f32.mrf.mxu0
    %v6908 = vadd.f32 0.0, %v6907
    %6909 = vmatmul.f32.gmra.mxu0 %v6784
    %v6910 = vpop.f32.mrf.mxu0
    %v6911 = vadd.f32 0.0, %v6910
    %6912 = vmatmul.f32.gmra.mxu0 %v6785
    %v6913 = vpop.f32.mrf.mxu0
    %v6914 = vadd.f32 0.0, %v6913
    %6915 = vmatmul.f32.gmra.mxu0 %v6786
    %v6916 = vpop.f32.mrf.mxu0
    %v6917 = vadd.f32 0.0, %v6916
    %6918 = vmatmul.f32.gmra.mxu0 %v6787
    %v6919 = vpop.f32.mrf.mxu0
    %v6920 = vadd.f32 0.0, %v6919
    %6921 = vmatmul.f32.gmra.mxu0 %v6788
    %v6922 = vpop.f32.mrf.mxu0
    %v6923 = vadd.f32 0.0, %v6922
    %6924 = vmatmul.f32.gmra.mxu0 %v6789
    %v6925 = vpop.f32.mrf.mxu0
    %v6926 = vadd.f32 0.0, %v6925
    %6927 = vmatmul.f32.gmra.mxu0 %v6790
    %v6928 = vpop.f32.mrf.mxu0
    %v6929 = vadd.f32 0.0, %v6928
    %6930 = vmatmul.f32.gmra.mxu0 %v6791
    %v6931 = vpop.f32.mrf.mxu0
    %v6932 = vadd.f32 0.0, %v6931
    %6933 = vmatmul.f32.gmra.mxu0 %v6792
    %v6934 = vpop.f32.mrf.mxu0
    %v6935 = vadd.f32 0.0, %v6934
    %6936 = vmatmul.f32.gmra.mxu0 %v6793
    %v6937 = vpop.f32.mrf.mxu0
    %v6938 = vadd.f32 0.0, %v6937
    %6939 = vmatmul.f32.gmra.mxu0 %v6794
    %v6940 = vpop.f32.mrf.mxu0
    %v6941 = vadd.f32 0.0, %v6940
    %6942 = vmatmul.f32.gmra.mxu0 %v6795
    %v6943 = vpop.f32.mrf.mxu0
    %v6944 = vadd.f32 0.0, %v6943
    %6945 = vmatmul.f32.gmra.mxu0 %v6796
    %v6946 = vpop.f32.mrf.mxu0
    %v6947 = vadd.f32 0.0, %v6946
    %6948 = vmatmul.f32.gmra.mxu0 %v6797
    %v6949 = vpop.f32.mrf.mxu0
    %v6950 = vadd.f32 0.0, %v6949
    %6951 = vmatmul.f32.gmra.mxu0 %v6798
    %v6952 = vpop.f32.mrf.mxu0
    %v6953 = vadd.f32 0.0, %v6952
    %6954 = vmatmul.f32.gmra.mxu0 %v6799
    %v6955 = vpop.f32.mrf.mxu0
    %v6956 = vadd.f32 0.0, %v6955
    %6957 = vmatmul.f32.gmra.mxu0 %v6800
    %v6958 = vpop.f32.mrf.mxu0
    %v6959 = vadd.f32 0.0, %v6958
    %6960 = vmatmul.f32.gmra.mxu0 %v6801
    %v6961 = vpop.f32.mrf.mxu0
    %v6962 = vadd.f32 0.0, %v6961
    %6963 = vmatmul.f32.gmra.mxu0 %v6802
    %v6964 = vpop.f32.mrf.mxu0
    %v6965 = vadd.f32 0.0, %v6964
    %6966 = vmatmul.f32.gmra.mxu0 %v6803
    %v6967 = vpop.f32.mrf.mxu0
    %v6968 = vadd.f32 0.0, %v6967
    %6969 = vmatmul.f32.gmra.mxu0 %v6804
    %v6970 = vpop.f32.mrf.mxu0
    %v6971 = vadd.f32 0.0, %v6970
    %6972 = vmatmul.f32.gmra.mxu0 %v6805
    %v6973 = vpop.f32.mrf.mxu0
    %v6974 = vadd.f32 0.0, %v6973
    %6975 = vmatmul.f32.gmra.mxu0 %v6806
    %v6976 = vpop.f32.mrf.mxu0
    %v6977 = vadd.f32 0.0, %v6976
    %6978 = vmatmul.f32.gmra.mxu0 %v6807
    %v6979 = vpop.f32.mrf.mxu0
    %v6980 = vadd.f32 0.0, %v6979
    %6981 = vmatmul.f32.gmra.mxu0 %v6808
    %v6982 = vpop.f32.mrf.mxu0
    %v6983 = vadd.f32 0.0, %v6982
    %6984 = vmatmul.f32.gmra.mxu0 %v6809
    %v6985 = vpop.f32.mrf.mxu0
    %v6986 = vadd.f32 0.0, %v6985
    %6987 = vmatmul.f32.gmra.mxu0 %v6810
    %v6988 = vpop.f32.mrf.mxu0
    %v6989 = vadd.f32 0.0, %v6988
    %6990 = vmatmul.f32.gmra.mxu0 %v6811
    %v6991 = vpop.f32.mrf.mxu0
    %v6992 = vadd.f32 0.0, %v6991
    %6993 = vmatmul.f32.gmra.mxu0 %v6812
    %v6994 = vpop.f32.mrf.mxu0
    %v6995 = vadd.f32 0.0, %v6994
    %6996 = vmatmul.f32.gmra.mxu0 %v6813
    %v6997 = vpop.f32.mrf.mxu0
    %v6998 = vadd.f32 0.0, %v6997
    %6999 = vmatmul.f32.gmra.mxu0 %v6814
    %v7000 = vpop.f32.mrf.mxu0
    %v7001 = vadd.f32 0.0, %v7000
    %7002 = vmatmul.f32.gmra.mxu0 %v6815
    %v7003 = vpop.f32.mrf.mxu0
    %v7004 = vadd.f32 0.0, %v7003
    %7005 = vmatmul.f32.gmra.mxu0 %v6816
    %v7006 = vpop.f32.mrf.mxu0
    %v7007 = vadd.f32 0.0, %v7006
    %7008 = vmatmul.f32.gmra.mxu0 %v6817
    %v7009 = vpop.f32.mrf.mxu0
    %v7010 = vadd.f32 0.0, %v7009
    %7011 = vmatmul.f32.gmra.mxu0 %v6818
    %v7012 = vpop.f32.mrf.mxu0
    %v7013 = vadd.f32 0.0, %v7012
    %7014 = vmatmul.f32.gmra.mxu0 %v6819
    %v7015 = vpop.f32.mrf.mxu0
    %v7016 = vadd.f32 0.0, %v7015
    %7017 = vmatmul.f32.gmra.mxu0 %v6820
    %v7018 = vpop.f32.mrf.mxu0
    %v7019 = vadd.f32 0.0, %v7018
    %7020 = vmatmul.f32.gmra.mxu0 %v6821
    %v7021 = vpop.f32.mrf.mxu0
    %v7022 = vadd.f32 0.0, %v7021
    %7023 = vmatmul.f32.gmra.mxu0 %v6822
    %v7024 = vpop.f32.mrf.mxu0
    %v7025 = vadd.f32 0.0, %v7024
    %7026 = vmatmul.f32.gmra.mxu0 %v6823
    %v7027 = vpop.f32.mrf.mxu0
    %v7028 = vadd.f32 0.0, %v7027
    %7029 = vmatmul.f32.gmra.mxu0 %v6824
    %v7030 = vpop.f32.mrf.mxu0
    %v7031 = vadd.f32 0.0, %v7030
    %7032 = vmatmul.f32.gmra.mxu0 %v6825
    %v7033 = vpop.f32.mrf.mxu0
    %v7034 = vadd.f32 0.0, %v7033
    %7035 = vmatmul.f32.gmra.mxu0 %v6826
    %v7036 = vpop.f32.mrf.mxu0
    %v7037 = vadd.f32 0.0, %v7036
    %7038 = vmatmul.f32.gmra.mxu0 %v6827
    %v7039 = vpop.f32.mrf.mxu0
    %v7040 = vadd.f32 0.0, %v7039
    %7041 = vmatmul.f32.gmra.mxu0 %v6828
    %v7042 = vpop.f32.mrf.mxu0
    %v7043 = vadd.f32 0.0, %v7042
    %7044 = vmatmul.f32.gmra.mxu0 %v6829
    %v7045 = vpop.f32.mrf.mxu0
    %v7046 = vadd.f32 0.0, %v7045
    %7047 = vmatmul.f32.gmra.mxu0 %v6830
    %v7048 = vpop.f32.mrf.mxu0
    %v7049 = vadd.f32 0.0, %v7048
    %7050 = vmatmul.f32.gmra.mxu0 %v6831
    %v7051 = vpop.f32.mrf.mxu0
    %v7052 = vadd.f32 0.0, %v7051
    %7053 = vmatmul.f32.gmra.mxu0 %v6832
    %v7054 = vpop.f32.mrf.mxu0
    %v7055 = vadd.f32 0.0, %v7054
    %7056 = vmatmul.f32.gmra.mxu0 %v6833
    %v7057 = vpop.f32.mrf.mxu0
    %v7058 = vadd.f32 0.0, %v7057
    %7059 = vdwg.mxu0
    %v7060 = vld [vmem:[#allocation3] sm:$0xff]
    %v7061 = vld [vmem:[#allocation3 + $0x8] sm:$0xff]
    %v7062 = vld [vmem:[#allocation3 + $0x10] sm:$0xff]
    %v7063 = vld [vmem:[#allocation3 + $0x18] sm:$0xff]
    %v7064 = vld [vmem:[#allocation3 + $0x20] sm:$0xff]
    %v7065 = vld [vmem:[#allocation3 + $0x28] sm:$0xff]
    %v7066 = vld [vmem:[#allocation3 + $0x30] sm:$0xff]
    %v7067 = vld [vmem:[#allocation3 + $0x38] sm:$0xff]
    %v7068 = vld [vmem:[#allocation3 + $0x40] sm:$0xff]
    %v7069 = vld [vmem:[#allocation3 + $0x48] sm:$0xff]
    %v7070 = vld [vmem:[#allocation3 + $0x50] sm:$0xff]
    %v7071 = vld [vmem:[#allocation3 + $0x58] sm:$0xff]
    %v7072 = vld [vmem:[#allocation3 + $0x60] sm:$0xff]
    %v7073 = vld [vmem:[#allocation3 + $0x68] sm:$0xff]
    %v7074 = vld [vmem:[#allocation3 + $0x70] sm:$0xff]
    %v7075 = vld [vmem:[#allocation3 + $0x78] sm:$0xff]
    %v7076 = vld [vmem:[#allocation3 + $0x80] sm:$0xff]
    %v7077 = vld [vmem:[#allocation3 + $0x88] sm:$0xff]
    %v7078 = vld [vmem:[#allocation3 + $0x90] sm:$0xff]
    %v7079 = vld [vmem:[#allocation3 + $0x98] sm:$0xff]
    %v7080 = vld [vmem:[#allocation3 + $0xa0] sm:$0xff]
    %v7081 = vld [vmem:[#allocation3 + $0xa8] sm:$0xff]
    %v7082 = vld [vmem:[#allocation3 + $0xb0] sm:$0xff]
    %v7083 = vld [vmem:[#allocation3 + $0xb8] sm:$0xff]
    %v7084 = vld [vmem:[#allocation3 + $0xc0] sm:$0xff]
    %v7085 = vld [vmem:[#allocation3 + $0xc8] sm:$0xff]
    %v7086 = vld [vmem:[#allocation3 + $0xd0] sm:$0xff]
    %v7087 = vld [vmem:[#allocation3 + $0xd8] sm:$0xff]
    %v7088 = vld [vmem:[#allocation3 + $0xe0] sm:$0xff]
    %v7089 = vld [vmem:[#allocation3 + $0xe8] sm:$0xff]
    %v7090 = vld [vmem:[#allocation3 + $0xf0] sm:$0xff]
    %v7091 = vld [vmem:[#allocation3 + $0xf8] sm:$0xff]
    %v7092 = vld [vmem:[#allocation3 + $0x100] sm:$0xff]
    %v7093 = vld [vmem:[#allocation3 + $0x108] sm:$0xff]
    %v7094 = vld [vmem:[#allocation3 + $0x110] sm:$0xff]
    %v7095 = vld [vmem:[#allocation3 + $0x118] sm:$0xff]
    %v7096 = vld [vmem:[#allocation3 + $0x120] sm:$0xff]
    %v7097 = vld [vmem:[#allocation3 + $0x128] sm:$0xff]
    %v7098 = vld [vmem:[#allocation3 + $0x130] sm:$0xff]
    %v7099 = vld [vmem:[#allocation3 + $0x138] sm:$0xff]
    %v7100 = vld [vmem:[#allocation3 + $0x140] sm:$0xff]
    %v7101 = vld [vmem:[#allocation3 + $0x148] sm:$0xff]
    %v7102 = vld [vmem:[#allocation3 + $0x150] sm:$0xff]
    %v7103 = vld [vmem:[#allocation3 + $0x158] sm:$0xff]
    %v7104 = vld [vmem:[#allocation3 + $0x160] sm:$0xff]
    %v7105 = vld [vmem:[#allocation3 + $0x168] sm:$0xff]
    %v7106 = vld [vmem:[#allocation3 + $0x170] sm:$0xff]
    %v7107 = vld [vmem:[#allocation3 + $0x178] sm:$0xff]
    %v7108 = vld [vmem:[#allocation3 + $0x180] sm:$0xff]
    %v7109 = vld [vmem:[#allocation3 + $0x188] sm:$0xff]
    %v7110 = vld [vmem:[#allocation3 + $0x190] sm:$0xff]
    %v7111 = vld [vmem:[#allocation3 + $0x198] sm:$0xff]
    %v7112 = vld [vmem:[#allocation3 + $0x1a0] sm:$0xff]
    %v7113 = vld [vmem:[#allocation3 + $0x1a8] sm:$0xff]
    %v7114 = vld [vmem:[#allocation3 + $0x1b0] sm:$0xff]
    %v7115 = vld [vmem:[#allocation3 + $0x1b8] sm:$0xff]
    %v7116 = vld [vmem:[#allocation3 + $0x1c0] sm:$0xff]
    %v7117 = vld [vmem:[#allocation3 + $0x1c8] sm:$0xff]
    %v7118 = vld [vmem:[#allocation3 + $0x1d0] sm:$0xff]
    %v7119 = vld [vmem:[#allocation3 + $0x1d8] sm:$0xff]
    %v7120 = vld [vmem:[#allocation3 + $0x1e0] sm:$0xff]
    %v7121 = vld [vmem:[#allocation3 + $0x1e8] sm:$0xff]
    %v7122 = vld [vmem:[#allocation3 + $0x1f0] sm:$0xff]
    %v7123 = vld [vmem:[#allocation3 + $0x1f8] sm:$0xff]
    %v7124 = vadd.f32 %v7060, %v6869
    %v7125 = vadd.f32 %v7061, %v6872
    %v7126 = vadd.f32 %v7062, %v6875
    %v7127 = vadd.f32 %v7063, %v6878
    %v7128 = vadd.f32 %v7064, %v6881
    %v7129 = vadd.f32 %v7065, %v6884
    %v7130 = vadd.f32 %v7066, %v6887
    %v7131 = vadd.f32 %v7067, %v6890
    %v7132 = vadd.f32 %v7068, %v6893
    %v7133 = vadd.f32 %v7069, %v6896
    %v7134 = vadd.f32 %v7070, %v6899
    %v7135 = vadd.f32 %v7071, %v6902
    %v7136 = vadd.f32 %v7072, %v6905
    %v7137 = vadd.f32 %v7073, %v6908
    %v7138 = vadd.f32 %v7074, %v6911
    %v7139 = vadd.f32 %v7075, %v6914
    %v7140 = vadd.f32 %v7076, %v6917
    %v7141 = vadd.f32 %v7077, %v6920
    %v7142 = vadd.f32 %v7078, %v6923
    %v7143 = vadd.f32 %v7079, %v6926
    %v7144 = vadd.f32 %v7080, %v6929
    %v7145 = vadd.f32 %v7081, %v6932
    %v7146 = vadd.f32 %v7082, %v6935
    %v7147 = vadd.f32 %v7083, %v6938
    %v7148 = vadd.f32 %v7084, %v6941
    %v7149 = vadd.f32 %v7085, %v6944
    %v7150 = vadd.f32 %v7086, %v6947
    %v7151 = vadd.f32 %v7087, %v6950
    %v7152 = vadd.f32 %v7088, %v6953
    %v7153 = vadd.f32 %v7089, %v6956
    %v7154 = vadd.f32 %v7090, %v6959
    %v7155 = vadd.f32 %v7091, %v6962
    %v7156 = vadd.f32 %v7092, %v6965
    %v7157 = vadd.f32 %v7093, %v6968
    %v7158 = vadd.f32 %v7094, %v6971
    %v7159 = vadd.f32 %v7095, %v6974
    %v7160 = vadd.f32 %v7096, %v6977
    %v7161 = vadd.f32 %v7097, %v6980
    %v7162 = vadd.f32 %v7098, %v6983
    %v7163 = vadd.f32 %v7099, %v6986
    %v7164 = vadd.f32 %v7100, %v6989
    %v7165 = vadd.f32 %v7101, %v6992
    %v7166 = vadd.f32 %v7102, %v6995
    %v7167 = vadd.f32 %v7103, %v6998
    %v7168 = vadd.f32 %v7104, %v7001
    %v7169 = vadd.f32 %v7105, %v7004
    %v7170 = vadd.f32 %v7106, %v7007
    %v7171 = vadd.f32 %v7107, %v7010
    %v7172 = vadd.f32 %v7108, %v7013
    %v7173 = vadd.f32 %v7109, %v7016
    %v7174 = vadd.f32 %v7110, %v7019
    %v7175 = vadd.f32 %v7111, %v7022
    %v7176 = vadd.f32 %v7112, %v7025
    %v7177 = vadd.f32 %v7113, %v7028
    %v7178 = vadd.f32 %v7114, %v7031
    %v7179 = vadd.f32 %v7115, %v7034
    %v7180 = vadd.f32 %v7116, %v7037
    %v7181 = vadd.f32 %v7117, %v7040
    %v7182 = vadd.f32 %v7118, %v7043
    %v7183 = vadd.f32 %v7119, %v7046
    %v7184 = vadd.f32 %v7120, %v7049
    %v7185 = vadd.f32 %v7121, %v7052
    %v7186 = vadd.f32 %v7122, %v7055
    %v7187 = vadd.f32 %v7123, %v7058
    %7188 = vst [vmem:[#allocation3] sm:$0xff] %v7124
    %7189 = vst [vmem:[#allocation3 + $0x8] sm:$0xff] %v7125
    %7190 = vst [vmem:[#allocation3 + $0x10] sm:$0xff] %v7126
    %7191 = vst [vmem:[#allocation3 + $0x18] sm:$0xff] %v7127
    %7192 = vst [vmem:[#allocation3 + $0x20] sm:$0xff] %v7128
    %7193 = vst [vmem:[#allocation3 + $0x28] sm:$0xff] %v7129
    %7194 = vst [vmem:[#allocation3 + $0x30] sm:$0xff] %v7130
    %7195 = vst [vmem:[#allocation3 + $0x38] sm:$0xff] %v7131
    %7196 = vst [vmem:[#allocation3 + $0x40] sm:$0xff] %v7132
    %7197 = vst [vmem:[#allocation3 + $0x48] sm:$0xff] %v7133
    %7198 = vst [vmem:[#allocation3 + $0x50] sm:$0xff] %v7134
    %7199 = vst [vmem:[#allocation3 + $0x58] sm:$0xff] %v7135
    %7200 = vst [vmem:[#allocation3 + $0x60] sm:$0xff] %v7136
    %7201 = vst [vmem:[#allocation3 + $0x68] sm:$0xff] %v7137
    %7202 = vst [vmem:[#allocation3 + $0x70] sm:$0xff] %v7138
    %7203 = vst [vmem:[#allocation3 + $0x78] sm:$0xff] %v7139
    %7204 = vst [vmem:[#allocation3 + $0x80] sm:$0xff] %v7140
    %7205 = vst [vmem:[#allocation3 + $0x88] sm:$0xff] %v7141
    %7206 = vst [vmem:[#allocation3 + $0x90] sm:$0xff] %v7142
    %7207 = vst [vmem:[#allocation3 + $0x98] sm:$0xff] %v7143
    %7208 = vst [vmem:[#allocation3 + $0xa0] sm:$0xff] %v7144
    %7209 = vst [vmem:[#allocation3 + $0xa8] sm:$0xff] %v7145
    %7210 = vst [vmem:[#allocation3 + $0xb0] sm:$0xff] %v7146
    %7211 = vst [vmem:[#allocation3 + $0xb8] sm:$0xff] %v7147
    %7212 = vst [vmem:[#allocation3 + $0xc0] sm:$0xff] %v7148
    %7213 = vst [vmem:[#allocation3 + $0xc8] sm:$0xff] %v7149
    %7214 = vst [vmem:[#allocation3 + $0xd0] sm:$0xff] %v7150
    %7215 = vst [vmem:[#allocation3 + $0xd8] sm:$0xff] %v7151
    %7216 = vst [vmem:[#allocation3 + $0xe0] sm:$0xff] %v7152
    %7217 = vst [vmem:[#allocation3 + $0xe8] sm:$0xff] %v7153
    %7218 = vst [vmem:[#allocation3 + $0xf0] sm:$0xff] %v7154
    %7219 = vst [vmem:[#allocation3 + $0xf8] sm:$0xff] %v7155
    %7220 = vst [vmem:[#allocation3 + $0x100] sm:$0xff] %v7156
    %7221 = vst [vmem:[#allocation3 + $0x108] sm:$0xff] %v7157
    %7222 = vst [vmem:[#allocation3 + $0x110] sm:$0xff] %v7158
    %7223 = vst [vmem:[#allocation3 + $0x118] sm:$0xff] %v7159
    %7224 = vst [vmem:[#allocation3 + $0x120] sm:$0xff] %v7160
    %7225 = vst [vmem:[#allocation3 + $0x128] sm:$0xff] %v7161
    %7226 = vst [vmem:[#allocation3 + $0x130] sm:$0xff] %v7162
    %7227 = vst [vmem:[#allocation3 + $0x138] sm:$0xff] %v7163
    %7228 = vst [vmem:[#allocation3 + $0x140] sm:$0xff] %v7164
    %7229 = vst [vmem:[#allocation3 + $0x148] sm:$0xff] %v7165
    %7230 = vst [vmem:[#allocation3 + $0x150] sm:$0xff] %v7166
    %7231 = vst [vmem:[#allocation3 + $0x158] sm:$0xff] %v7167
    %7232 = vst [vmem:[#allocation3 + $0x160] sm:$0xff] %v7168
    %7233 = vst [vmem:[#allocation3 + $0x168] sm:$0xff] %v7169
    %7234 = vst [vmem:[#allocation3 + $0x170] sm:$0xff] %v7170
    %7235 = vst [vmem:[#allocation3 + $0x178] sm:$0xff] %v7171
    %7236 = vst [vmem:[#allocation3 + $0x180] sm:$0xff] %v7172
    %7237 = vst [vmem:[#allocation3 + $0x188] sm:$0xff] %v7173
    %7238 = vst [vmem:[#allocation3 + $0x190] sm:$0xff] %v7174
    %7239 = vst [vmem:[#allocation3 + $0x198] sm:$0xff] %v7175
    %7240 = vst [vmem:[#allocation3 + $0x1a0] sm:$0xff] %v7176
    %7241 = vst [vmem:[#allocation3 + $0x1a8] sm:$0xff] %v7177
    %7242 = vst [vmem:[#allocation3 + $0x1b0] sm:$0xff] %v7178
    %7243 = vst [vmem:[#allocation3 + $0x1b8] sm:$0xff] %v7179
    %7244 = vst [vmem:[#allocation3 + $0x1c0] sm:$0xff] %v7180
    %7245 = vst [vmem:[#allocation3 + $0x1c8] sm:$0xff] %v7181
    %7246 = vst [vmem:[#allocation3 + $0x1d0] sm:$0xff] %v7182
    %7247 = vst [vmem:[#allocation3 + $0x1d8] sm:$0xff] %v7183
    %7248 = vst [vmem:[#allocation3 + $0x1e0] sm:$0xff] %v7184
    %7249 = vst [vmem:[#allocation3 + $0x1e8] sm:$0xff] %v7185
    %7250 = vst [vmem:[#allocation3 + $0x1f0] sm:$0xff] %v7186
    %7251 = vst [vmem:[#allocation3 + $0x1f8] sm:$0xff] %v7187
    %v7252 = vld [vmem:[%s4906 + $0x2] sm:$0xff]
    %v7253 = vld [vmem:[%s4906 + $0xa] sm:$0xff]
    %v7254 = vld [vmem:[%s4906 + $0x1a] sm:$0xff]
    %v7255 = vld [vmem:[%s4906 + $0x22] sm:$0xff]
    %v7256 = vld [vmem:[%s4906 + $0x32] sm:$0xff]
    %v7257 = vld [vmem:[%s4906 + $0x3a] sm:$0xff]
    %v7258 = vld [vmem:[%s4906 + $0x4a] sm:$0xff]
    %v7259 = vld [vmem:[%s4906 + $0x52] sm:$0xff]
    %v7260 = vld [vmem:[%s4906 + $0x62] sm:$0xff]
    %v7261 = vld [vmem:[%s4906 + $0x6a] sm:$0xff]
    %v7262 = vld [vmem:[%s4906 + $0x7a] sm:$0xff]
    %v7263 = vld [vmem:[%s4906 + $0x82] sm:$0xff]
    %v7264 = vld [vmem:[%s4906 + $0x92] sm:$0xff]
    %v7265 = vld [vmem:[%s4906 + $0x9a] sm:$0xff]
    %v7266 = vld [vmem:[%s4906 + $0xaa] sm:$0xff]
    %v7267 = vld [vmem:[%s4906 + $0xb2] sm:$0xff]
    %v7268 = vld [vmem:[%s4906 + $0xc2] sm:$0xff]
    %v7269 = vld [vmem:[%s4906 + $0xca] sm:$0xff]
    %v7270 = vld [vmem:[%s4906 + $0xda] sm:$0xff]
    %v7271 = vld [vmem:[%s4906 + $0xe2] sm:$0xff]
    %v7272 = vld [vmem:[%s4906 + $0xf2] sm:$0xff]
    %v7273 = vld [vmem:[%s4906 + $0xfa] sm:$0xff]
    %v7274 = vld [vmem:[%s4906 + $0x10a] sm:$0xff]
    %v7275 = vld [vmem:[%s4906 + $0x112] sm:$0xff]
    %v7276 = vld [vmem:[%s4906 + $0x122] sm:$0xff]
    %v7277 = vld [vmem:[%s4906 + $0x12a] sm:$0xff]
    %v7278 = vld [vmem:[%s4906 + $0x13a] sm:$0xff]
    %v7279 = vld [vmem:[%s4906 + $0x142] sm:$0xff]
    %v7280 = vld [vmem:[%s4906 + $0x152] sm:$0xff]
    %v7281 = vld [vmem:[%s4906 + $0x15a] sm:$0xff]
    %v7282 = vld [vmem:[%s4906 + $0x16a] sm:$0xff]
    %v7283 = vld [vmem:[%s4906 + $0x172] sm:$0xff]
    %v7284 = vld [vmem:[%s4906 + $0x1b2] sm:$0xff]
    %v7285 = vld [vmem:[%s4906 + $0x1ba] sm:$0xff]
    %v7286 = vld [vmem:[%s4906 + $0x1ca] sm:$0xff]
    %v7287 = vld [vmem:[%s4906 + $0x1d2] sm:$0xff]
    %v7288 = vld [vmem:[%s4906 + $0x1e2] sm:$0xff]
    %v7289 = vld [vmem:[%s4906 + $0x1ea] sm:$0xff]
    %v7290 = vld [vmem:[%s4906 + $0x1fa] sm:$0xff]
    %v7291 = vld [vmem:[%s4906 + $0x202] sm:$0xff]
    %v7292 = vld [vmem:[%s4906 + $0x212] sm:$0xff]
    %v7293 = vld [vmem:[%s4906 + $0x21a] sm:$0xff]
    %v7294 = vld [vmem:[%s4906 + $0x22a] sm:$0xff]
    %v7295 = vld [vmem:[%s4906 + $0x232] sm:$0xff]
    %v7296 = vld [vmem:[%s4906 + $0x242] sm:$0xff]
    %v7297 = vld [vmem:[%s4906 + $0x24a] sm:$0xff]
    %v7298 = vld [vmem:[%s4906 + $0x25a] sm:$0xff]
    %v7299 = vld [vmem:[%s4906 + $0x262] sm:$0xff]
    %v7300 = vld [vmem:[%s4906 + $0x272] sm:$0xff]
    %v7301 = vld [vmem:[%s4906 + $0x27a] sm:$0xff]
    %v7302 = vld [vmem:[%s4906 + $0x28a] sm:$0xff]
    %v7303 = vld [vmem:[%s4906 + $0x292] sm:$0xff]
    %v7304 = vld [vmem:[%s4906 + $0x2a2] sm:$0xff]
    %v7305 = vld [vmem:[%s4906 + $0x2aa] sm:$0xff]
    %v7306 = vld [vmem:[%s4906 + $0x2ba] sm:$0xff]
    %v7307 = vld [vmem:[%s4906 + $0x2c2] sm:$0xff]
    %v7308 = vld [vmem:[%s4906 + $0x2d2] sm:$0xff]
    %v7309 = vld [vmem:[%s4906 + $0x2da] sm:$0xff]
    %v7310 = vld [vmem:[%s4906 + $0x2ea] sm:$0xff]
    %v7311 = vld [vmem:[%s4906 + $0x2f2] sm:$0xff]
    %v7312 = vld [vmem:[%s4906 + $0x302] sm:$0xff]
    %v7313 = vld [vmem:[%s4906 + $0x30a] sm:$0xff]
    %v7314 = vld [vmem:[%s4906 + $0x31a] sm:$0xff]
    %v7315 = vld [vmem:[%s4906 + $0x322] sm:$0xff]
    %s7316 = scalar_lea.vmem [#allocation4], 640
    %v7317 = vld [vmem:[%s7316] sm:$0xff]
    %v7318 = vld [vmem:[%s7316 + $0x8] sm:$0xff]
    %v7319 = vld [vmem:[%s7316 + $0x10] sm:$0xff]
    %v7320 = vld [vmem:[%s7316 + $0x18] sm:$0xff]
    %v7321 = vld [vmem:[%s7316 + $0x20] sm:$0xff]
    %v7322 = vld [vmem:[%s7316 + $0x28] sm:$0xff]
    %v7323 = vld [vmem:[%s7316 + $0x30] sm:$0xff]
    %v7324 = vld [vmem:[%s7316 + $0x38] sm:$0xff]
    %v7325 = vld [vmem:[%s7316 + $0x40] sm:$0xff]
    %v7326 = vld [vmem:[%s7316 + $0x48] sm:$0xff]
    %v7327 = vld [vmem:[%s7316 + $0x50] sm:$0xff]
    %v7328 = vld [vmem:[%s7316 + $0x58] sm:$0xff]
    %v7329 = vld [vmem:[%s7316 + $0x60] sm:$0xff]
    %v7330 = vld [vmem:[%s7316 + $0x68] sm:$0xff]
    %v7331 = vld [vmem:[%s7316 + $0x70] sm:$0xff]
    %v7332 = vld [vmem:[%s7316 + $0x78] sm:$0xff]
    %7333 = vmatpush.msra.mxu0 %v7332
    %7334 = vmatpush.msra.mxu0 %v7331
    %7335 = vmatpush.msra.mxu0 %v7330
    %7336 = vmatpush.msra.mxu0 %v7329
    %7337 = vmatpush.msra.mxu0 %v7328
    %7338 = vmatpush.msra.mxu0 %v7327
    %7339 = vmatpush.msra.mxu0 %v7326
    %7340 = vmatpush.msra.mxu0 %v7325
    %7341 = vmatpush.msra.mxu0 %v7324
    %7342 = vmatpush.msra.mxu0 %v7323
    %7343 = vmatpush.msra.mxu0 %v7322
    %7344 = vmatpush.msra.mxu0 %v7321
    %7345 = vmatpush.msra.mxu0 %v7320
    %7346 = vmatpush.msra.mxu0 %v7319
    %7347 = vmatpush.msra.mxu0 %v7318
    %7348 = vmatpush.msra.mxu0 %v7317
    %7349 = vmatmul.f32.gmra.mxu0 %v7252
    %v7350 = vpop.f32.mrf.mxu0
    %v7351 = vadd.f32 0.0, %v7350
    %7352 = vmatmul.f32.gmra.mxu0 %v7253
    %v7353 = vpop.f32.mrf.mxu0
    %v7354 = vadd.f32 0.0, %v7353
    %7355 = vmatmul.f32.gmra.mxu0 %v7254
    %v7356 = vpop.f32.mrf.mxu0
    %v7357 = vadd.f32 0.0, %v7356
    %7358 = vmatmul.f32.gmra.mxu0 %v7255
    %v7359 = vpop.f32.mrf.mxu0
    %v7360 = vadd.f32 0.0, %v7359
    %7361 = vmatmul.f32.gmra.mxu0 %v7256
    %v7362 = vpop.f32.mrf.mxu0
    %v7363 = vadd.f32 0.0, %v7362
    %7364 = vmatmul.f32.gmra.mxu0 %v7257
    %v7365 = vpop.f32.mrf.mxu0
    %v7366 = vadd.f32 0.0, %v7365
    %7367 = vmatmul.f32.gmra.mxu0 %v7258
    %v7368 = vpop.f32.mrf.mxu0
    %v7369 = vadd.f32 0.0, %v7368
    %7370 = vmatmul.f32.gmra.mxu0 %v7259
    %v7371 = vpop.f32.mrf.mxu0
    %v7372 = vadd.f32 0.0, %v7371
    %7373 = vmatmul.f32.gmra.mxu0 %v7260
    %v7374 = vpop.f32.mrf.mxu0
    %v7375 = vadd.f32 0.0, %v7374
    %7376 = vmatmul.f32.gmra.mxu0 %v7261
    %v7377 = vpop.f32.mrf.mxu0
    %v7378 = vadd.f32 0.0, %v7377
    %7379 = vmatmul.f32.gmra.mxu0 %v7262
    %v7380 = vpop.f32.mrf.mxu0
    %v7381 = vadd.f32 0.0, %v7380
    %7382 = vmatmul.f32.gmra.mxu0 %v7263
    %v7383 = vpop.f32.mrf.mxu0
    %v7384 = vadd.f32 0.0, %v7383
    %7385 = vmatmul.f32.gmra.mxu0 %v7264
    %v7386 = vpop.f32.mrf.mxu0
    %v7387 = vadd.f32 0.0, %v7386
    %7388 = vmatmul.f32.gmra.mxu0 %v7265
    %v7389 = vpop.f32.mrf.mxu0
    %v7390 = vadd.f32 0.0, %v7389
    %7391 = vmatmul.f32.gmra.mxu0 %v7266
    %v7392 = vpop.f32.mrf.mxu0
    %v7393 = vadd.f32 0.0, %v7392
    %7394 = vmatmul.f32.gmra.mxu0 %v7267
    %v7395 = vpop.f32.mrf.mxu0
    %v7396 = vadd.f32 0.0, %v7395
    %7397 = vmatmul.f32.gmra.mxu0 %v7268
    %v7398 = vpop.f32.mrf.mxu0
    %v7399 = vadd.f32 0.0, %v7398
    %7400 = vmatmul.f32.gmra.mxu0 %v7269
    %v7401 = vpop.f32.mrf.mxu0
    %v7402 = vadd.f32 0.0, %v7401
    %7403 = vmatmul.f32.gmra.mxu0 %v7270
    %v7404 = vpop.f32.mrf.mxu0
    %v7405 = vadd.f32 0.0, %v7404
    %7406 = vmatmul.f32.gmra.mxu0 %v7271
    %v7407 = vpop.f32.mrf.mxu0
    %v7408 = vadd.f32 0.0, %v7407
    %7409 = vmatmul.f32.gmra.mxu0 %v7272
    %v7410 = vpop.f32.mrf.mxu0
    %v7411 = vadd.f32 0.0, %v7410
    %7412 = vmatmul.f32.gmra.mxu0 %v7273
    %v7413 = vpop.f32.mrf.mxu0
    %v7414 = vadd.f32 0.0, %v7413
    %7415 = vmatmul.f32.gmra.mxu0 %v7274
    %v7416 = vpop.f32.mrf.mxu0
    %v7417 = vadd.f32 0.0, %v7416
    %7418 = vmatmul.f32.gmra.mxu0 %v7275
    %v7419 = vpop.f32.mrf.mxu0
    %v7420 = vadd.f32 0.0, %v7419
    %7421 = vmatmul.f32.gmra.mxu0 %v7276
    %v7422 = vpop.f32.mrf.mxu0
    %v7423 = vadd.f32 0.0, %v7422
    %7424 = vmatmul.f32.gmra.mxu0 %v7277
    %v7425 = vpop.f32.mrf.mxu0
    %v7426 = vadd.f32 0.0, %v7425
    %7427 = vmatmul.f32.gmra.mxu0 %v7278
    %v7428 = vpop.f32.mrf.mxu0
    %v7429 = vadd.f32 0.0, %v7428
    %7430 = vmatmul.f32.gmra.mxu0 %v7279
    %v7431 = vpop.f32.mrf.mxu0
    %v7432 = vadd.f32 0.0, %v7431
    %7433 = vmatmul.f32.gmra.mxu0 %v7280
    %v7434 = vpop.f32.mrf.mxu0
    %v7435 = vadd.f32 0.0, %v7434
    %7436 = vmatmul.f32.gmra.mxu0 %v7281
    %v7437 = vpop.f32.mrf.mxu0
    %v7438 = vadd.f32 0.0, %v7437
    %7439 = vmatmul.f32.gmra.mxu0 %v7282
    %v7440 = vpop.f32.mrf.mxu0
    %v7441 = vadd.f32 0.0, %v7440
    %7442 = vmatmul.f32.gmra.mxu0 %v7283
    %v7443 = vpop.f32.mrf.mxu0
    %v7444 = vadd.f32 0.0, %v7443
    %7445 = vmatmul.f32.gmra.mxu0 %v7284
    %v7446 = vpop.f32.mrf.mxu0
    %v7447 = vadd.f32 0.0, %v7446
    %7448 = vmatmul.f32.gmra.mxu0 %v7285
    %v7449 = vpop.f32.mrf.mxu0
    %v7450 = vadd.f32 0.0, %v7449
    %7451 = vmatmul.f32.gmra.mxu0 %v7286
    %v7452 = vpop.f32.mrf.mxu0
    %v7453 = vadd.f32 0.0, %v7452
    %7454 = vmatmul.f32.gmra.mxu0 %v7287
    %v7455 = vpop.f32.mrf.mxu0
    %v7456 = vadd.f32 0.0, %v7455
    %7457 = vmatmul.f32.gmra.mxu0 %v7288
    %v7458 = vpop.f32.mrf.mxu0
    %v7459 = vadd.f32 0.0, %v7458
    %7460 = vmatmul.f32.gmra.mxu0 %v7289
    %v7461 = vpop.f32.mrf.mxu0
    %v7462 = vadd.f32 0.0, %v7461
    %7463 = vmatmul.f32.gmra.mxu0 %v7290
    %v7464 = vpop.f32.mrf.mxu0
    %v7465 = vadd.f32 0.0, %v7464
    %7466 = vmatmul.f32.gmra.mxu0 %v7291
    %v7467 = vpop.f32.mrf.mxu0
    %v7468 = vadd.f32 0.0, %v7467
    %7469 = vmatmul.f32.gmra.mxu0 %v7292
    %v7470 = vpop.f32.mrf.mxu0
    %v7471 = vadd.f32 0.0, %v7470
    %7472 = vmatmul.f32.gmra.mxu0 %v7293
    %v7473 = vpop.f32.mrf.mxu0
    %v7474 = vadd.f32 0.0, %v7473
    %7475 = vmatmul.f32.gmra.mxu0 %v7294
    %v7476 = vpop.f32.mrf.mxu0
    %v7477 = vadd.f32 0.0, %v7476
    %7478 = vmatmul.f32.gmra.mxu0 %v7295
    %v7479 = vpop.f32.mrf.mxu0
    %v7480 = vadd.f32 0.0, %v7479
    %7481 = vmatmul.f32.gmra.mxu0 %v7296
    %v7482 = vpop.f32.mrf.mxu0
    %v7483 = vadd.f32 0.0, %v7482
    %7484 = vmatmul.f32.gmra.mxu0 %v7297
    %v7485 = vpop.f32.mrf.mxu0
    %v7486 = vadd.f32 0.0, %v7485
    %7487 = vmatmul.f32.gmra.mxu0 %v7298
    %v7488 = vpop.f32.mrf.mxu0
    %v7489 = vadd.f32 0.0, %v7488
    %7490 = vmatmul.f32.gmra.mxu0 %v7299
    %v7491 = vpop.f32.mrf.mxu0
    %v7492 = vadd.f32 0.0, %v7491
    %7493 = vmatmul.f32.gmra.mxu0 %v7300
    %v7494 = vpop.f32.mrf.mxu0
    %v7495 = vadd.f32 0.0, %v7494
    %7496 = vmatmul.f32.gmra.mxu0 %v7301
    %v7497 = vpop.f32.mrf.mxu0
    %v7498 = vadd.f32 0.0, %v7497
    %7499 = vmatmul.f32.gmra.mxu0 %v7302
    %v7500 = vpop.f32.mrf.mxu0
    %v7501 = vadd.f32 0.0, %v7500
    %7502 = vmatmul.f32.gmra.mxu0 %v7303
    %v7503 = vpop.f32.mrf.mxu0
    %v7504 = vadd.f32 0.0, %v7503
    %7505 = vmatmul.f32.gmra.mxu0 %v7304
    %v7506 = vpop.f32.mrf.mxu0
    %v7507 = vadd.f32 0.0, %v7506
    %7508 = vmatmul.f32.gmra.mxu0 %v7305
    %v7509 = vpop.f32.mrf.mxu0
    %v7510 = vadd.f32 0.0, %v7509
    %7511 = vmatmul.f32.gmra.mxu0 %v7306
    %v7512 = vpop.f32.mrf.mxu0
    %v7513 = vadd.f32 0.0, %v7512
    %7514 = vmatmul.f32.gmra.mxu0 %v7307
    %v7515 = vpop.f32.mrf.mxu0
    %v7516 = vadd.f32 0.0, %v7515
    %7517 = vmatmul.f32.gmra.mxu0 %v7308
    %v7518 = vpop.f32.mrf.mxu0
    %v7519 = vadd.f32 0.0, %v7518
    %7520 = vmatmul.f32.gmra.mxu0 %v7309
    %v7521 = vpop.f32.mrf.mxu0
    %v7522 = vadd.f32 0.0, %v7521
    %7523 = vmatmul.f32.gmra.mxu0 %v7310
    %v7524 = vpop.f32.mrf.mxu0
    %v7525 = vadd.f32 0.0, %v7524
    %7526 = vmatmul.f32.gmra.mxu0 %v7311
    %v7527 = vpop.f32.mrf.mxu0
    %v7528 = vadd.f32 0.0, %v7527
    %7529 = vmatmul.f32.gmra.mxu0 %v7312
    %v7530 = vpop.f32.mrf.mxu0
    %v7531 = vadd.f32 0.0, %v7530
    %7532 = vmatmul.f32.gmra.mxu0 %v7313
    %v7533 = vpop.f32.mrf.mxu0
    %v7534 = vadd.f32 0.0, %v7533
    %7535 = vmatmul.f32.gmra.mxu0 %v7314
    %v7536 = vpop.f32.mrf.mxu0
    %v7537 = vadd.f32 0.0, %v7536
    %7538 = vmatmul.f32.gmra.mxu0 %v7315
    %v7539 = vpop.f32.mrf.mxu0
    %v7540 = vadd.f32 0.0, %v7539
    %7541 = vdwg.mxu0
    %v7542 = vld [vmem:[#allocation3] sm:$0xff]
    %v7543 = vld [vmem:[#allocation3 + $0x8] sm:$0xff]
    %v7544 = vld [vmem:[#allocation3 + $0x10] sm:$0xff]
    %v7545 = vld [vmem:[#allocation3 + $0x18] sm:$0xff]
    %v7546 = vld [vmem:[#allocation3 + $0x20] sm:$0xff]
    %v7547 = vld [vmem:[#allocation3 + $0x28] sm:$0xff]
    %v7548 = vld [vmem:[#allocation3 + $0x30] sm:$0xff]
    %v7549 = vld [vmem:[#allocation3 + $0x38] sm:$0xff]
    %v7550 = vld [vmem:[#allocation3 + $0x40] sm:$0xff]
    %v7551 = vld [vmem:[#allocation3 + $0x48] sm:$0xff]
    %v7552 = vld [vmem:[#allocation3 + $0x50] sm:$0xff]
    %v7553 = vld [vmem:[#allocation3 + $0x58] sm:$0xff]
    %v7554 = vld [vmem:[#allocation3 + $0x60] sm:$0xff]
    %v7555 = vld [vmem:[#allocation3 + $0x68] sm:$0xff]
    %v7556 = vld [vmem:[#allocation3 + $0x70] sm:$0xff]
    %v7557 = vld [vmem:[#allocation3 + $0x78] sm:$0xff]
    %v7558 = vld [vmem:[#allocation3 + $0x80] sm:$0xff]
    %v7559 = vld [vmem:[#allocation3 + $0x88] sm:$0xff]
    %v7560 = vld [vmem:[#allocation3 + $0x90] sm:$0xff]
    %v7561 = vld [vmem:[#allocation3 + $0x98] sm:$0xff]
    %v7562 = vld [vmem:[#allocation3 + $0xa0] sm:$0xff]
    %v7563 = vld [vmem:[#allocation3 + $0xa8] sm:$0xff]
    %v7564 = vld [vmem:[#allocation3 + $0xb0] sm:$0xff]
    %v7565 = vld [vmem:[#allocation3 + $0xb8] sm:$0xff]
    %v7566 = vld [vmem:[#allocation3 + $0xc0] sm:$0xff]
    %v7567 = vld [vmem:[#allocation3 + $0xc8] sm:$0xff]
    %v7568 = vld [vmem:[#allocation3 + $0xd0] sm:$0xff]
    %v7569 = vld [vmem:[#allocation3 + $0xd8] sm:$0xff]
    %v7570 = vld [vmem:[#allocation3 + $0xe0] sm:$0xff]
    %v7571 = vld [vmem:[#allocation3 + $0xe8] sm:$0xff]
    %v7572 = vld [vmem:[#allocation3 + $0xf0] sm:$0xff]
    %v7573 = vld [vmem:[#allocation3 + $0xf8] sm:$0xff]
    %v7574 = vld [vmem:[#allocation3 + $0x100] sm:$0xff]
    %v7575 = vld [vmem:[#allocation3 + $0x108] sm:$0xff]
    %v7576 = vld [vmem:[#allocation3 + $0x110] sm:$0xff]
    %v7577 = vld [vmem:[#allocation3 + $0x118] sm:$0xff]
    %v7578 = vld [vmem:[#allocation3 + $0x120] sm:$0xff]
    %v7579 = vld [vmem:[#allocation3 + $0x128] sm:$0xff]
    %v7580 = vld [vmem:[#allocation3 + $0x130] sm:$0xff]
    %v7581 = vld [vmem:[#allocation3 + $0x138] sm:$0xff]
    %v7582 = vld [vmem:[#allocation3 + $0x140] sm:$0xff]
    %v7583 = vld [vmem:[#allocation3 + $0x148] sm:$0xff]
    %v7584 = vld [vmem:[#allocation3 + $0x150] sm:$0xff]
    %v7585 = vld [vmem:[#allocation3 + $0x158] sm:$0xff]
    %v7586 = vld [vmem:[#allocation3 + $0x160] sm:$0xff]
    %v7587 = vld [vmem:[#allocation3 + $0x168] sm:$0xff]
    %v7588 = vld [vmem:[#allocation3 + $0x170] sm:$0xff]
    %v7589 = vld [vmem:[#allocation3 + $0x178] sm:$0xff]
    %v7590 = vld [vmem:[#allocation3 + $0x180] sm:$0xff]
    %v7591 = vld [vmem:[#allocation3 + $0x188] sm:$0xff]
    %v7592 = vld [vmem:[#allocation3 + $0x190] sm:$0xff]
    %v7593 = vld [vmem:[#allocation3 + $0x198] sm:$0xff]
    %v7594 = vld [vmem:[#allocation3 + $0x1a0] sm:$0xff]
    %v7595 = vld [vmem:[#allocation3 + $0x1a8] sm:$0xff]
    %v7596 = vld [vmem:[#allocation3 + $0x1b0] sm:$0xff]
    %v7597 = vld [vmem:[#allocation3 + $0x1b8] sm:$0xff]
    %v7598 = vld [vmem:[#allocation3 + $0x1c0] sm:$0xff]
    %v7599 = vld [vmem:[#allocation3 + $0x1c8] sm:$0xff]
    %v7600 = vld [vmem:[#allocation3 + $0x1d0] sm:$0xff]
    %v7601 = vld [vmem:[#allocation3 + $0x1d8] sm:$0xff]
    %v7602 = vld [vmem:[#allocation3 + $0x1e0] sm:$0xff]
    %v7603 = vld [vmem:[#allocation3 + $0x1e8] sm:$0xff]
    %v7604 = vld [vmem:[#allocation3 + $0x1f0] sm:$0xff]
    %v7605 = vld [vmem:[#allocation3 + $0x1f8] sm:$0xff]
    %v7606 = vadd.f32 %v7542, %v7351
    %v7607 = vadd.f32 %v7543, %v7354
    %v7608 = vadd.f32 %v7544, %v7357
    %v7609 = vadd.f32 %v7545, %v7360
    %v7610 = vadd.f32 %v7546, %v7363
    %v7611 = vadd.f32 %v7547, %v7366
    %v7612 = vadd.f32 %v7548, %v7369
    %v7613 = vadd.f32 %v7549, %v7372
    %v7614 = vadd.f32 %v7550, %v7375
    %v7615 = vadd.f32 %v7551, %v7378
    %v7616 = vadd.f32 %v7552, %v7381
    %v7617 = vadd.f32 %v7553, %v7384
    %v7618 = vadd.f32 %v7554, %v7387
    %v7619 = vadd.f32 %v7555, %v7390
    %v7620 = vadd.f32 %v7556, %v7393
    %v7621 = vadd.f32 %v7557, %v7396
    %v7622 = vadd.f32 %v7558, %v7399
    %v7623 = vadd.f32 %v7559, %v7402
    %v7624 = vadd.f32 %v7560, %v7405
    %v7625 = vadd.f32 %v7561, %v7408
    %v7626 = vadd.f32 %v7562, %v7411
    %v7627 = vadd.f32 %v7563, %v7414
    %v7628 = vadd.f32 %v7564, %v7417
    %v7629 = vadd.f32 %v7565, %v7420
    %v7630 = vadd.f32 %v7566, %v7423
    %v7631 = vadd.f32 %v7567, %v7426
    %v7632 = vadd.f32 %v7568, %v7429
    %v7633 = vadd.f32 %v7569, %v7432
    %v7634 = vadd.f32 %v7570, %v7435
    %v7635 = vadd.f32 %v7571, %v7438
    %v7636 = vadd.f32 %v7572, %v7441
    %v7637 = vadd.f32 %v7573, %v7444
    %v7638 = vadd.f32 %v7574, %v7447
    %v7639 = vadd.f32 %v7575, %v7450
    %v7640 = vadd.f32 %v7576, %v7453
    %v7641 = vadd.f32 %v7577, %v7456
    %v7642 = vadd.f32 %v7578, %v7459
    %v7643 = vadd.f32 %v7579, %v7462
    %v7644 = vadd.f32 %v7580, %v7465
    %v7645 = vadd.f32 %v7581, %v7468
    %v7646 = vadd.f32 %v7582, %v7471
    %v7647 = vadd.f32 %v7583, %v7474
    %v7648 = vadd.f32 %v7584, %v7477
    %v7649 = vadd.f32 %v7585, %v7480
    %v7650 = vadd.f32 %v7586, %v7483
    %v7651 = vadd.f32 %v7587, %v7486
    %v7652 = vadd.f32 %v7588, %v7489
    %v7653 = vadd.f32 %v7589, %v7492
    %v7654 = vadd.f32 %v7590, %v7495
    %v7655 = vadd.f32 %v7591, %v7498
    %v7656 = vadd.f32 %v7592, %v7501
    %v7657 = vadd.f32 %v7593, %v7504
    %v7658 = vadd.f32 %v7594, %v7507
    %v7659 = vadd.f32 %v7595, %v7510
    %v7660 = vadd.f32 %v7596, %v7513
    %v7661 = vadd.f32 %v7597, %v7516
    %v7662 = vadd.f32 %v7598, %v7519
    %v7663 = vadd.f32 %v7599, %v7522
    %v7664 = vadd.f32 %v7600, %v7525
    %v7665 = vadd.f32 %v7601, %v7528
    %v7666 = vadd.f32 %v7602, %v7531
    %v7667 = vadd.f32 %v7603, %v7534
    %v7668 = vadd.f32 %v7604, %v7537
    %v7669 = vadd.f32 %v7605, %v7540
    %7670 = vst [vmem:[#allocation3] sm:$0xff] %v7606
    %7671 = vst [vmem:[#allocation3 + $0x8] sm:$0xff] %v7607
    %7672 = vst [vmem:[#allocation3 + $0x10] sm:$0xff] %v7608
    %7673 = vst [vmem:[#allocation3 + $0x18] sm:$0xff] %v7609
    %7674 = vst [vmem:[#allocation3 + $0x20] sm:$0xff] %v7610
    %7675 = vst [vmem:[#allocation3 + $0x28] sm:$0xff] %v7611
    %7676 = vst [vmem:[#allocation3 + $0x30] sm:$0xff] %v7612
    %7677 = vst [vmem:[#allocation3 + $0x38] sm:$0xff] %v7613
    %7678 = vst [vmem:[#allocation3 + $0x40] sm:$0xff] %v7614
    %7679 = vst [vmem:[#allocation3 + $0x48] sm:$0xff] %v7615
    %7680 = vst [vmem:[#allocation3 + $0x50] sm:$0xff] %v7616
    %7681 = vst [vmem:[#allocation3 + $0x58] sm:$0xff] %v7617
    %7682 = vst [vmem:[#allocation3 + $0x60] sm:$0xff] %v7618
    %7683 = vst [vmem:[#allocation3 + $0x68] sm:$0xff] %v7619
    %7684 = vst [vmem:[#allocation3 + $0x70] sm:$0xff] %v7620
    %7685 = vst [vmem:[#allocation3 + $0x78] sm:$0xff] %v7621
    %7686 = vst [vmem:[#allocation3 + $0x80] sm:$0xff] %v7622
    %7687 = vst [vmem:[#allocation3 + $0x88] sm:$0xff] %v7623
    %7688 = vst [vmem:[#allocation3 + $0x90] sm:$0xff] %v7624
    %7689 = vst [vmem:[#allocation3 + $0x98] sm:$0xff] %v7625
    %7690 = vst [vmem:[#allocation3 + $0xa0] sm:$0xff] %v7626
    %7691 = vst [vmem:[#allocation3 + $0xa8] sm:$0xff] %v7627
    %7692 = vst [vmem:[#allocation3 + $0xb0] sm:$0xff] %v7628
    %7693 = vst [vmem:[#allocation3 + $0xb8] sm:$0xff] %v7629
    %7694 = vst [vmem:[#allocation3 + $0xc0] sm:$0xff] %v7630
    %7695 = vst [vmem:[#allocation3 + $0xc8] sm:$0xff] %v7631
    %7696 = vst [vmem:[#allocation3 + $0xd0] sm:$0xff] %v7632
    %7697 = vst [vmem:[#allocation3 + $0xd8] sm:$0xff] %v7633
    %7698 = vst [vmem:[#allocation3 + $0xe0] sm:$0xff] %v7634
    %7699 = vst [vmem:[#allocation3 + $0xe8] sm:$0xff] %v7635
    %7700 = vst [vmem:[#allocation3 + $0xf0] sm:$0xff] %v7636
    %7701 = vst [vmem:[#allocation3 + $0xf8] sm:$0xff] %v7637
    %7702 = vst [vmem:[#allocation3 + $0x100] sm:$0xff] %v7638
    %7703 = vst [vmem:[#allocation3 + $0x108] sm:$0xff] %v7639
    %7704 = vst [vmem:[#allocation3 + $0x110] sm:$0xff] %v7640
    %7705 = vst [vmem:[#allocation3 + $0x118] sm:$0xff] %v7641
    %7706 = vst [vmem:[#allocation3 + $0x120] sm:$0xff] %v7642
    %7707 = vst [vmem:[#allocation3 + $0x128] sm:$0xff] %v7643
    %7708 = vst [vmem:[#allocation3 + $0x130] sm:$0xff] %v7644
    %7709 = vst [vmem:[#allocation3 + $0x138] sm:$0xff] %v7645
    %7710 = vst [vmem:[#allocation3 + $0x140] sm:$0xff] %v7646
    %7711 = vst [vmem:[#allocation3 + $0x148] sm:$0xff] %v7647
    %7712 = vst [vmem:[#allocation3 + $0x150] sm:$0xff] %v7648
    %7713 = vst [vmem:[#allocation3 + $0x158] sm:$0xff] %v7649
    %7714 = vst [vmem:[#allocation3 + $0x160] sm:$0xff] %v7650
    %7715 = vst [vmem:[#allocation3 + $0x168] sm:$0xff] %v7651
    %7716 = vst [vmem:[#allocation3 + $0x170] sm:$0xff] %v7652
    %7717 = vst [vmem:[#allocation3 + $0x178] sm:$0xff] %v7653
    %7718 = vst [vmem:[#allocation3 + $0x180] sm:$0xff] %v7654
    %7719 = vst [vmem:[#allocation3 + $0x188] sm:$0xff] %v7655
    %7720 = vst [vmem:[#allocation3 + $0x190] sm:$0xff] %v7656
    %7721 = vst [vmem:[#allocation3 + $0x198] sm:$0xff] %v7657
    %7722 = vst [vmem:[#allocation3 + $0x1a0] sm:$0xff] %v7658
    %7723 = vst [vmem:[#allocation3 + $0x1a8] sm:$0xff] %v7659
    %7724 = vst [vmem:[#allocation3 + $0x1b0] sm:$0xff] %v7660
    %7725 = vst [vmem:[#allocation3 + $0x1b8] sm:$0xff] %v7661
    %7726 = vst [vmem:[#allocation3 + $0x1c0] sm:$0xff] %v7662
    %7727 = vst [vmem:[#allocation3 + $0x1c8] sm:$0xff] %v7663
    %7728 = vst [vmem:[#allocation3 + $0x1d0] sm:$0xff] %v7664
    %7729 = vst [vmem:[#allocation3 + $0x1d8] sm:$0xff] %v7665
    %7730 = vst [vmem:[#allocation3 + $0x1e0] sm:$0xff] %v7666
    %7731 = vst [vmem:[#allocation3 + $0x1e8] sm:$0xff] %v7667
    %7732 = vst [vmem:[#allocation3 + $0x1f0] sm:$0xff] %v7668
    %7733 = vst [vmem:[#allocation3 + $0x1f8] sm:$0xff] %v7669
    %s7734 = scalar_lea.vmem [#allocation2], 48
    %v7735 = vld [vmem:[%s7734] sm:$0xff]
    %v7736 = vld [vmem:[%s7734 + $0x8] sm:$0xff]
    %v7737 = vld [vmem:[%s7734 + $0x18] sm:$0xff]
    %v7738 = vld [vmem:[%s7734 + $0x20] sm:$0xff]
    %v7739 = vld [vmem:[%s7734 + $0x30] sm:$0xff]
    %v7740 = vld [vmem:[%s7734 + $0x38] sm:$0xff]
    %v7741 = vld [vmem:[%s7734 + $0x48] sm:$0xff]
    %v7742 = vld [vmem:[%s7734 + $0x50] sm:$0xff]
    %v7743 = vld [vmem:[%s7734 + $0x60] sm:$0xff]
    %v7744 = vld [vmem:[%s7734 + $0x68] sm:$0xff]
    %v7745 = vld [vmem:[%s7734 + $0x78] sm:$0xff]
    %v7746 = vld [vmem:[%s7734 + $0x80] sm:$0xff]
    %v7747 = vld [vmem:[%s7734 + $0x90] sm:$0xff]
    %v7748 = vld [vmem:[%s7734 + $0x98] sm:$0xff]
    %v7749 = vld [vmem:[%s7734 + $0xa8] sm:$0xff]
    %v7750 = vld [vmem:[%s7734 + $0xb0] sm:$0xff]
    %v7751 = vld [vmem:[%s7734 + $0xc0] sm:$0xff]
    %v7752 = vld [vmem:[%s7734 + $0xc8] sm:$0xff]
    %v7753 = vld [vmem:[%s7734 + $0xd8] sm:$0xff]
    %v7754 = vld [vmem:[%s7734 + $0xe0] sm:$0xff]
    %v7755 = vld [vmem:[%s7734 + $0xf0] sm:$0xff]
    %v7756 = vld [vmem:[%s7734 + $0xf8] sm:$0xff]
    %v7757 = vld [vmem:[%s7734 + $0x108] sm:$0xff]
    %v7758 = vld [vmem:[%s7734 + $0x110] sm:$0xff]
    %v7759 = vld [vmem:[%s7734 + $0x120] sm:$0xff]
    %v7760 = vld [vmem:[%s7734 + $0x128] sm:$0xff]
    %v7761 = vld [vmem:[%s7734 + $0x138] sm:$0xff]
    %v7762 = vld [vmem:[%s7734 + $0x140] sm:$0xff]
    %v7763 = vld [vmem:[%s7734 + $0x150] sm:$0xff]
    %v7764 = vld [vmem:[%s7734 + $0x158] sm:$0xff]
    %v7765 = vld [vmem:[%s7734 + $0x168] sm:$0xff]
    %v7766 = vld [vmem:[%s7734 + $0x170] sm:$0xff]
    %v7767 = vld [vmem:[%s7734 + $0x1b0] sm:$0xff]
    %v7768 = vld [vmem:[%s7734 + $0x1b8] sm:$0xff]
    %v7769 = vld [vmem:[%s7734 + $0x1c8] sm:$0xff]
    %v7770 = vld [vmem:[%s7734 + $0x1d0] sm:$0xff]
    %v7771 = vld [vmem:[%s7734 + $0x1e0] sm:$0xff]
    %v7772 = vld [vmem:[%s7734 + $0x1e8] sm:$0xff]
    %v7773 = vld [vmem:[%s7734 + $0x1f8] sm:$0xff]
    %v7774 = vld [vmem:[%s7734 + $0x200] sm:$0xff]
    %v7775 = vld [vmem:[%s7734 + $0x210] sm:$0xff]
    %v7776 = vld [vmem:[%s7734 + $0x218] sm:$0xff]
    %v7777 = vld [vmem:[%s7734 + $0x228] sm:$0xff]
    %v7778 = vld [vmem:[%s7734 + $0x230] sm:$0xff]
    %v7779 = vld [vmem:[%s7734 + $0x240] sm:$0xff]
    %v7780 = vld [vmem:[%s7734 + $0x248] sm:$0xff]
    %v7781 = vld [vmem:[%s7734 + $0x258] sm:$0xff]
    %v7782 = vld [vmem:[%s7734 + $0x260] sm:$0xff]
    %v7783 = vld [vmem:[%s7734 + $0x270] sm:$0xff]
    %v7784 = vld [vmem:[%s7734 + $0x278] sm:$0xff]
    %v7785 = vld [vmem:[%s7734 + $0x288] sm:$0xff]
    %v7786 = vld [vmem:[%s7734 + $0x290] sm:$0xff]
    %v7787 = vld [vmem:[%s7734 + $0x2a0] sm:$0xff]
    %v7788 = vld [vmem:[%s7734 + $0x2a8] sm:$0xff]
    %v7789 = vld [vmem:[%s7734 + $0x2b8] sm:$0xff]
    %v7790 = vld [vmem:[%s7734 + $0x2c0] sm:$0xff]
    %v7791 = vld [vmem:[%s7734 + $0x2d0] sm:$0xff]
    %v7792 = vld [vmem:[%s7734 + $0x2d8] sm:$0xff]
    %v7793 = vld [vmem:[%s7734 + $0x2e8] sm:$0xff]
    %v7794 = vld [vmem:[%s7734 + $0x2f0] sm:$0xff]
    %v7795 = vld [vmem:[%s7734 + $0x300] sm:$0xff]
    %v7796 = vld [vmem:[%s7734 + $0x308] sm:$0xff]
    %v7797 = vld [vmem:[%s7734 + $0x318] sm:$0xff]
    %v7798 = vld [vmem:[%s7734 + $0x320] sm:$0xff]
    %s7799 = scalar_lea.vmem [#allocation4], 768
    %v7800 = vld [vmem:[%s7799] sm:$0xff]
    %v7801 = vld [vmem:[%s7799 + $0x8] sm:$0xff]
    %v7802 = vld [vmem:[%s7799 + $0x10] sm:$0xff]
    %v7803 = vld [vmem:[%s7799 + $0x18] sm:$0xff]
    %v7804 = vld [vmem:[%s7799 + $0x20] sm:$0xff]
    %v7805 = vld [vmem:[%s7799 + $0x28] sm:$0xff]
    %v7806 = vld [vmem:[%s7799 + $0x30] sm:$0xff]
    %v7807 = vld [vmem:[%s7799 + $0x38] sm:$0xff]
    %v7808 = vld [vmem:[%s7799 + $0x40] sm:$0xff]
    %v7809 = vld [vmem:[%s7799 + $0x48] sm:$0xff]
    %v7810 = vld [vmem:[%s7799 + $0x50] sm:$0xff]
    %v7811 = vld [vmem:[%s7799 + $0x58] sm:$0xff]
    %v7812 = vld [vmem:[%s7799 + $0x60] sm:$0xff]
    %v7813 = vld [vmem:[%s7799 + $0x68] sm:$0xff]
    %v7814 = vld [vmem:[%s7799 + $0x70] sm:$0xff]
    %v7815 = vld [vmem:[%s7799 + $0x78] sm:$0xff]
    %7816 = vmatpush.msra.mxu0 %v7815
    %7817 = vmatpush.msra.mxu0 %v7814
    %7818 = vmatpush.msra.mxu0 %v7813
    %7819 = vmatpush.msra.mxu0 %v7812
    %7820 = vmatpush.msra.mxu0 %v7811
    %7821 = vmatpush.msra.mxu0 %v7810
    %7822 = vmatpush.msra.mxu0 %v7809
    %7823 = vmatpush.msra.mxu0 %v7808
    %7824 = vmatpush.msra.mxu0 %v7807
    %7825 = vmatpush.msra.mxu0 %v7806
    %7826 = vmatpush.msra.mxu0 %v7805
    %7827 = vmatpush.msra.mxu0 %v7804
    %7828 = vmatpush.msra.mxu0 %v7803
    %7829 = vmatpush.msra.mxu0 %v7802
    %7830 = vmatpush.msra.mxu0 %v7801
    %7831 = vmatpush.msra.mxu0 %v7800
    %7832 = vmatmul.f32.gmra.mxu0 %v7735
    %v7833 = vpop.f32.mrf.mxu0
    %v7834 = vadd.f32 0.0, %v7833
    %7835 = vmatmul.f32.gmra.mxu0 %v7736
    %v7836 = vpop.f32.mrf.mxu0
    %v7837 = vadd.f32 0.0, %v7836
    %7838 = vmatmul.f32.gmra.mxu0 %v7737
    %v7839 = vpop.f32.mrf.mxu0
    %v7840 = vadd.f32 0.0, %v7839
    %7841 = vmatmul.f32.gmra.mxu0 %v7738
    %v7842 = vpop.f32.mrf.mxu0
    %v7843 = vadd.f32 0.0, %v7842
    %7844 = vmatmul.f32.gmra.mxu0 %v7739
    %v7845 = vpop.f32.mrf.mxu0
    %v7846 = vadd.f32 0.0, %v7845
    %7847 = vmatmul.f32.gmra.mxu0 %v7740
    %v7848 = vpop.f32.mrf.mxu0
    %v7849 = vadd.f32 0.0, %v7848
    %7850 = vmatmul.f32.gmra.mxu0 %v7741
    %v7851 = vpop.f32.mrf.mxu0
    %v7852 = vadd.f32 0.0, %v7851
    %7853 = vmatmul.f32.gmra.mxu0 %v7742
    %v7854 = vpop.f32.mrf.mxu0
    %v7855 = vadd.f32 0.0, %v7854
    %7856 = vmatmul.f32.gmra.mxu0 %v7743
    %v7857 = vpop.f32.mrf.mxu0
    %v7858 = vadd.f32 0.0, %v7857
    %7859 = vmatmul.f32.gmra.mxu0 %v7744
    %v7860 = vpop.f32.mrf.mxu0
    %v7861 = vadd.f32 0.0, %v7860
    %7862 = vmatmul.f32.gmra.mxu0 %v7745
    %v7863 = vpop.f32.mrf.mxu0
    %v7864 = vadd.f32 0.0, %v7863
    %7865 = vmatmul.f32.gmra.mxu0 %v7746
    %v7866 = vpop.f32.mrf.mxu0
    %v7867 = vadd.f32 0.0, %v7866
    %7868 = vmatmul.f32.gmra.mxu0 %v7747
    %v7869 = vpop.f32.mrf.mxu0
    %v7870 = vadd.f32 0.0, %v7869
    %7871 = vmatmul.f32.gmra.mxu0 %v7748
    %v7872 = vpop.f32.mrf.mxu0
    %v7873 = vadd.f32 0.0, %v7872
    %7874 = vmatmul.f32.gmra.mxu0 %v7749
    %v7875 = vpop.f32.mrf.mxu0
    %v7876 = vadd.f32 0.0, %v7875
    %7877 = vmatmul.f32.gmra.mxu0 %v7750
    %v7878 = vpop.f32.mrf.mxu0
    %v7879 = vadd.f32 0.0, %v7878
    %7880 = vmatmul.f32.gmra.mxu0 %v7751
    %v7881 = vpop.f32.mrf.mxu0
    %v7882 = vadd.f32 0.0, %v7881
    %7883 = vmatmul.f32.gmra.mxu0 %v7752
    %v7884 = vpop.f32.mrf.mxu0
    %v7885 = vadd.f32 0.0, %v7884
    %7886 = vmatmul.f32.gmra.mxu0 %v7753
    %v7887 = vpop.f32.mrf.mxu0
    %v7888 = vadd.f32 0.0, %v7887
    %7889 = vmatmul.f32.gmra.mxu0 %v7754
    %v7890 = vpop.f32.mrf.mxu0
    %v7891 = vadd.f32 0.0, %v7890
    %7892 = vmatmul.f32.gmra.mxu0 %v7755
    %v7893 = vpop.f32.mrf.mxu0
    %v7894 = vadd.f32 0.0, %v7893
    %7895 = vmatmul.f32.gmra.mxu0 %v7756
    %v7896 = vpop.f32.mrf.mxu0
    %v7897 = vadd.f32 0.0, %v7896
    %7898 = vmatmul.f32.gmra.mxu0 %v7757
    %v7899 = vpop.f32.mrf.mxu0
    %v7900 = vadd.f32 0.0, %v7899
    %7901 = vmatmul.f32.gmra.mxu0 %v7758
    %v7902 = vpop.f32.mrf.mxu0
    %v7903 = vadd.f32 0.0, %v7902
    %7904 = vmatmul.f32.gmra.mxu0 %v7759
    %v7905 = vpop.f32.mrf.mxu0
    %v7906 = vadd.f32 0.0, %v7905
    %7907 = vmatmul.f32.gmra.mxu0 %v7760
    %v7908 = vpop.f32.mrf.mxu0
    %v7909 = vadd.f32 0.0, %v7908
    %7910 = vmatmul.f32.gmra.mxu0 %v7761
    %v7911 = vpop.f32.mrf.mxu0
    %v7912 = vadd.f32 0.0, %v7911
    %7913 = vmatmul.f32.gmra.mxu0 %v7762
    %v7914 = vpop.f32.mrf.mxu0
    %v7915 = vadd.f32 0.0, %v7914
    %7916 = vmatmul.f32.gmra.mxu0 %v7763
    %v7917 = vpop.f32.mrf.mxu0
    %v7918 = vadd.f32 0.0, %v7917
    %7919 = vmatmul.f32.gmra.mxu0 %v7764
    %v7920 = vpop.f32.mrf.mxu0
    %v7921 = vadd.f32 0.0, %v7920
    %7922 = vmatmul.f32.gmra.mxu0 %v7765
    %v7923 = vpop.f32.mrf.mxu0
    %v7924 = vadd.f32 0.0, %v7923
    %7925 = vmatmul.f32.gmra.mxu0 %v7766
    %v7926 = vpop.f32.mrf.mxu0
    %v7927 = vadd.f32 0.0, %v7926
    %7928 = vmatmul.f32.gmra.mxu0 %v7767
    %v7929 = vpop.f32.mrf.mxu0
    %v7930 = vadd.f32 0.0, %v7929
    %7931 = vmatmul.f32.gmra.mxu0 %v7768
    %v7932 = vpop.f32.mrf.mxu0
    %v7933 = vadd.f32 0.0, %v7932
    %7934 = vmatmul.f32.gmra.mxu0 %v7769
    %v7935 = vpop.f32.mrf.mxu0
    %v7936 = vadd.f32 0.0, %v7935
    %7937 = vmatmul.f32.gmra.mxu0 %v7770
    %v7938 = vpop.f32.mrf.mxu0
    %v7939 = vadd.f32 0.0, %v7938
    %7940 = vmatmul.f32.gmra.mxu0 %v7771
    %v7941 = vpop.f32.mrf.mxu0
    %v7942 = vadd.f32 0.0, %v7941
    %7943 = vmatmul.f32.gmra.mxu0 %v7772
    %v7944 = vpop.f32.mrf.mxu0
    %v7945 = vadd.f32 0.0, %v7944
    %7946 = vmatmul.f32.gmra.mxu0 %v7773
    %v7947 = vpop.f32.mrf.mxu0
    %v7948 = vadd.f32 0.0, %v7947
    %7949 = vmatmul.f32.gmra.mxu0 %v7774
    %v7950 = vpop.f32.mrf.mxu0
    %v7951 = vadd.f32 0.0, %v7950
    %7952 = vmatmul.f32.gmra.mxu0 %v7775
    %v7953 = vpop.f32.mrf.mxu0
    %v7954 = vadd.f32 0.0, %v7953
    %7955 = vmatmul.f32.gmra.mxu0 %v7776
    %v7956 = vpop.f32.mrf.mxu0
    %v7957 = vadd.f32 0.0, %v7956
    %7958 = vmatmul.f32.gmra.mxu0 %v7777
    %v7959 = vpop.f32.mrf.mxu0
    %v7960 = vadd.f32 0.0, %v7959
    %7961 = vmatmul.f32.gmra.mxu0 %v7778
    %v7962 = vpop.f32.mrf.mxu0
    %v7963 = vadd.f32 0.0, %v7962
    %7964 = vmatmul.f32.gmra.mxu0 %v7779
    %v7965 = vpop.f32.mrf.mxu0
    %v7966 = vadd.f32 0.0, %v7965
    %7967 = vmatmul.f32.gmra.mxu0 %v7780
    %v7968 = vpop.f32.mrf.mxu0
    %v7969 = vadd.f32 0.0, %v7968
    %7970 = vmatmul.f32.gmra.mxu0 %v7781
    %v7971 = vpop.f32.mrf.mxu0
    %v7972 = vadd.f32 0.0, %v7971
    %7973 = vmatmul.f32.gmra.mxu0 %v7782
    %v7974 = vpop.f32.mrf.mxu0
    %v7975 = vadd.f32 0.0, %v7974
    %7976 = vmatmul.f32.gmra.mxu0 %v7783
    %v7977 = vpop.f32.mrf.mxu0
    %v7978 = vadd.f32 0.0, %v7977
    %7979 = vmatmul.f32.gmra.mxu0 %v7784
    %v7980 = vpop.f32.mrf.mxu0
    %v7981 = vadd.f32 0.0, %v7980
    %7982 = vmatmul.f32.gmra.mxu0 %v7785
    %v7983 = vpop.f32.mrf.mxu0
    %v7984 = vadd.f32 0.0, %v7983
    %7985 = vmatmul.f32.gmra.mxu0 %v7786
    %v7986 = vpop.f32.mrf.mxu0
    %v7987 = vadd.f32 0.0, %v7986
    %7988 = vmatmul.f32.gmra.mxu0 %v7787
    %v7989 = vpop.f32.mrf.mxu0
    %v7990 = vadd.f32 0.0, %v7989
    %7991 = vmatmul.f32.gmra.mxu0 %v7788
    %v7992 = vpop.f32.mrf.mxu0
    %v7993 = vadd.f32 0.0, %v7992
    %7994 = vmatmul.f32.gmra.mxu0 %v7789
    %v7995 = vpop.f32.mrf.mxu0
    %v7996 = vadd.f32 0.0, %v7995
    %7997 = vmatmul.f32.gmra.mxu0 %v7790
    %v7998 = vpop.f32.mrf.mxu0
    %v7999 = vadd.f32 0.0, %v7998
    %8000 = vmatmul.f32.gmra.mxu0 %v7791
    %v8001 = vpop.f32.mrf.mxu0
    %v8002 = vadd.f32 0.0, %v8001
    %8003 = vmatmul.f32.gmra.mxu0 %v7792
    %v8004 = vpop.f32.mrf.mxu0
    %v8005 = vadd.f32 0.0, %v8004
    %8006 = vmatmul.f32.gmra.mxu0 %v7793
    %v8007 = vpop.f32.mrf.mxu0
    %v8008 = vadd.f32 0.0, %v8007
    %8009 = vmatmul.f32.gmra.mxu0 %v7794
    %v8010 = vpop.f32.mrf.mxu0
    %v8011 = vadd.f32 0.0, %v8010
    %8012 = vmatmul.f32.gmra.mxu0 %v7795
    %v8013 = vpop.f32.mrf.mxu0
    %v8014 = vadd.f32 0.0, %v8013
    %8015 = vmatmul.f32.gmra.mxu0 %v7796
    %v8016 = vpop.f32.mrf.mxu0
    %v8017 = vadd.f32 0.0, %v8016
    %8018 = vmatmul.f32.gmra.mxu0 %v7797
    %v8019 = vpop.f32.mrf.mxu0
    %v8020 = vadd.f32 0.0, %v8019
    %8021 = vmatmul.f32.gmra.mxu0 %v7798
    %v8022 = vpop.f32.mrf.mxu0
    %v8023 = vadd.f32 0.0, %v8022
    %8024 = vdwg.mxu0
    %v8025 = vld [vmem:[#allocation3] sm:$0xff]
    %v8026 = vld [vmem:[#allocation3 + $0x8] sm:$0xff]
    %v8027 = vld [vmem:[#allocation3 + $0x10] sm:$0xff]
    %v8028 = vld [vmem:[#allocation3 + $0x18] sm:$0xff]
    %v8029 = vld [vmem:[#allocation3 + $0x20] sm:$0xff]
    %v8030 = vld [vmem:[#allocation3 + $0x28] sm:$0xff]
    %v8031 = vld [vmem:[#allocation3 + $0x30] sm:$0xff]
    %v8032 = vld [vmem:[#allocation3 + $0x38] sm:$0xff]
    %v8033 = vld [vmem:[#allocation3 + $0x40] sm:$0xff]
    %v8034 = vld [vmem:[#allocation3 + $0x48] sm:$0xff]
    %v8035 = vld [vmem:[#allocation3 + $0x50] sm:$0xff]
    %v8036 = vld [vmem:[#allocation3 + $0x58] sm:$0xff]
    %v8037 = vld [vmem:[#allocation3 + $0x60] sm:$0xff]
    %v8038 = vld [vmem:[#allocation3 + $0x68] sm:$0xff]
    %v8039 = vld [vmem:[#allocation3 + $0x70] sm:$0xff]
    %v8040 = vld [vmem:[#allocation3 + $0x78] sm:$0xff]
    %v8041 = vld [vmem:[#allocation3 + $0x80] sm:$0xff]
    %v8042 = vld [vmem:[#allocation3 + $0x88] sm:$0xff]
    %v8043 = vld [vmem:[#allocation3 + $0x90] sm:$0xff]
    %v8044 = vld [vmem:[#allocation3 + $0x98] sm:$0xff]
    %v8045 = vld [vmem:[#allocation3 + $0xa0] sm:$0xff]
    %v8046 = vld [vmem:[#allocation3 + $0xa8] sm:$0xff]
    %v8047 = vld [vmem:[#allocation3 + $0xb0] sm:$0xff]
    %v8048 = vld [vmem:[#allocation3 + $0xb8] sm:$0xff]
    %v8049 = vld [vmem:[#allocation3 + $0xc0] sm:$0xff]
    %v8050 = vld [vmem:[#allocation3 + $0xc8] sm:$0xff]
    %v8051 = vld [vmem:[#allocation3 + $0xd0] sm:$0xff]
    %v8052 = vld [vmem:[#allocation3 + $0xd8] sm:$0xff]
    %v8053 = vld [vmem:[#allocation3 + $0xe0] sm:$0xff]
    %v8054 = vld [vmem:[#allocation3 + $0xe8] sm:$0xff]
    %v8055 = vld [vmem:[#allocation3 + $0xf0] sm:$0xff]
    %v8056 = vld [vmem:[#allocation3 + $0xf8] sm:$0xff]
    %v8057 = vld [vmem:[#allocation3 + $0x100] sm:$0xff]
    %v8058 = vld [vmem:[#allocation3 + $0x108] sm:$0xff]
    %v8059 = vld [vmem:[#allocation3 + $0x110] sm:$0xff]
    %v8060 = vld [vmem:[#allocation3 + $0x118] sm:$0xff]
    %v8061 = vld [vmem:[#allocation3 + $0x120] sm:$0xff]
    %v8062 = vld [vmem:[#allocation3 + $0x128] sm:$0xff]
    %v8063 = vld [vmem:[#allocation3 + $0x130] sm:$0xff]
    %v8064 = vld [vmem:[#allocation3 + $0x138] sm:$0xff]
    %v8065 = vld [vmem:[#allocation3 + $0x140] sm:$0xff]
    %v8066 = vld [vmem:[#allocation3 + $0x148] sm:$0xff]
    %v8067 = vld [vmem:[#allocation3 + $0x150] sm:$0xff]
    %v8068 = vld [vmem:[#allocation3 + $0x158] sm:$0xff]
    %v8069 = vld [vmem:[#allocation3 + $0x160] sm:$0xff]
    %v8070 = vld [vmem:[#allocation3 + $0x168] sm:$0xff]
    %v8071 = vld [vmem:[#allocation3 + $0x170] sm:$0xff]
    %v8072 = vld [vmem:[#allocation3 + $0x178] sm:$0xff]
    %v8073 = vld [vmem:[#allocation3 + $0x180] sm:$0xff]
    %v8074 = vld [vmem:[#allocation3 + $0x188] sm:$0xff]
    %v8075 = vld [vmem:[#allocation3 + $0x190] sm:$0xff]
    %v8076 = vld [vmem:[#allocation3 + $0x198] sm:$0xff]
    %v8077 = vld [vmem:[#allocation3 + $0x1a0] sm:$0xff]
    %v8078 = vld [vmem:[#allocation3 + $0x1a8] sm:$0xff]
    %v8079 = vld [vmem:[#allocation3 + $0x1b0] sm:$0xff]
    %v8080 = vld [vmem:[#allocation3 + $0x1b8] sm:$0xff]
    %v8081 = vld [vmem:[#allocation3 + $0x1c0] sm:$0xff]
    %v8082 = vld [vmem:[#allocation3 + $0x1c8] sm:$0xff]
    %v8083 = vld [vmem:[#allocation3 + $0x1d0] sm:$0xff]
    %v8084 = vld [vmem:[#allocation3 + $0x1d8] sm:$0xff]
    %v8085 = vld [vmem:[#allocation3 + $0x1e0] sm:$0xff]
    %v8086 = vld [vmem:[#allocation3 + $0x1e8] sm:$0xff]
    %v8087 = vld [vmem:[#allocation3 + $0x1f0] sm:$0xff]
    %v8088 = vld [vmem:[#allocation3 + $0x1f8] sm:$0xff]
    %v8089 = vadd.f32 %v8025, %v7834
    %v8090 = vadd.f32 %v8026, %v7837
    %v8091 = vadd.f32 %v8027, %v7840
    %v8092 = vadd.f32 %v8028, %v7843
    %v8093 = vadd.f32 %v8029, %v7846
    %v8094 = vadd.f32 %v8030, %v7849
    %v8095 = vadd.f32 %v8031, %v7852
    %v8096 = vadd.f32 %v8032, %v7855
    %v8097 = vadd.f32 %v8033, %v7858
    %v8098 = vadd.f32 %v8034, %v7861
    %v8099 = vadd.f32 %v8035, %v7864
    %v8100 = vadd.f32 %v8036, %v7867
    %v8101 = vadd.f32 %v8037, %v7870
    %v8102 = vadd.f32 %v8038, %v7873
    %v8103 = vadd.f32 %v8039, %v7876
    %v8104 = vadd.f32 %v8040, %v7879
    %v8105 = vadd.f32 %v8041, %v7882
    %v8106 = vadd.f32 %v8042, %v7885
    %v8107 = vadd.f32 %v8043, %v7888
    %v8108 = vadd.f32 %v8044, %v7891
    %v8109 = vadd.f32 %v8045, %v7894
    %v8110 = vadd.f32 %v8046, %v7897
    %v8111 = vadd.f32 %v8047, %v7900
    %v8112 = vadd.f32 %v8048, %v7903
    %v8113 = vadd.f32 %v8049, %v7906
    %v8114 = vadd.f32 %v8050, %v7909
    %v8115 = vadd.f32 %v8051, %v7912
    %v8116 = vadd.f32 %v8052, %v7915
    %v8117 = vadd.f32 %v8053, %v7918
    %v8118 = vadd.f32 %v8054, %v7921
    %v8119 = vadd.f32 %v8055, %v7924
    %v8120 = vadd.f32 %v8056, %v7927
    %v8121 = vadd.f32 %v8057, %v7930
    %v8122 = vadd.f32 %v8058, %v7933
    %v8123 = vadd.f32 %v8059, %v7936
    %v8124 = vadd.f32 %v8060, %v7939
    %v8125 = vadd.f32 %v8061, %v7942
    %v8126 = vadd.f32 %v8062, %v7945
    %v8127 = vadd.f32 %v8063, %v7948
    %v8128 = vadd.f32 %v8064, %v7951
    %v8129 = vadd.f32 %v8065, %v7954
    %v8130 = vadd.f32 %v8066, %v7957
    %v8131 = vadd.f32 %v8067, %v7960
    %v8132 = vadd.f32 %v8068, %v7963
    %v8133 = vadd.f32 %v8069, %v7966
    %v8134 = vadd.f32 %v8070, %v7969
    %v8135 = vadd.f32 %v8071, %v7972
    %v8136 = vadd.f32 %v8072, %v7975
    %v8137 = vadd.f32 %v8073, %v7978
    %v8138 = vadd.f32 %v8074, %v7981
    %v8139 = vadd.f32 %v8075, %v7984
    %v8140 = vadd.f32 %v8076, %v7987
    %v8141 = vadd.f32 %v8077, %v7990
    %v8142 = vadd.f32 %v8078, %v7993
    %v8143 = vadd.f32 %v8079, %v7996
    %v8144 = vadd.f32 %v8080, %v7999
    %v8145 = vadd.f32 %v8081, %v8002
    %v8146 = vadd.f32 %v8082, %v8005
    %v8147 = vadd.f32 %v8083, %v8008
    %v8148 = vadd.f32 %v8084, %v8011
    %v8149 = vadd.f32 %v8085, %v8014
    %v8150 = vadd.f32 %v8086, %v8017
    %v8151 = vadd.f32 %v8087, %v8020
    %v8152 = vadd.f32 %v8088, %v8023
    %8153 = vst [vmem:[#allocation3] sm:$0xff] %v8089
    %8154 = vst [vmem:[#allocation3 + $0x8] sm:$0xff] %v8090
    %8155 = vst [vmem:[#allocation3 + $0x10] sm:$0xff] %v8091
    %8156 = vst [vmem:[#allocation3 + $0x18] sm:$0xff] %v8092
    %8157 = vst [vmem:[#allocation3 + $0x20] sm:$0xff] %v8093
    %8158 = vst [vmem:[#allocation3 + $0x28] sm:$0xff] %v8094
    %8159 = vst [vmem:[#allocation3 + $0x30] sm:$0xff] %v8095
    %8160 = vst [vmem:[#allocation3 + $0x38] sm:$0xff] %v8096
    %8161 = vst [vmem:[#allocation3 + $0x40] sm:$0xff] %v8097
    %8162 = vst [vmem:[#allocation3 + $0x48] sm:$0xff] %v8098
    %8163 = vst [vmem:[#allocation3 + $0x50] sm:$0xff] %v8099
    %8164 = vst [vmem:[#allocation3 + $0x58] sm:$0xff] %v8100
    %8165 = vst [vmem:[#allocation3 + $0x60] sm:$0xff] %v8101
    %8166 = vst [vmem:[#allocation3 + $0x68] sm:$0xff] %v8102
    %8167 = vst [vmem:[#allocation3 + $0x70] sm:$0xff] %v8103
    %8168 = vst [vmem:[#allocation3 + $0x78] sm:$0xff] %v8104
    %8169 = vst [vmem:[#allocation3 + $0x80] sm:$0xff] %v8105
    %8170 = vst [vmem:[#allocation3 + $0x88] sm:$0xff] %v8106
    %8171 = vst [vmem:[#allocation3 + $0x90] sm:$0xff] %v8107
    %8172 = vst [vmem:[#allocation3 + $0x98] sm:$0xff] %v8108
    %8173 = vst [vmem:[#allocation3 + $0xa0] sm:$0xff] %v8109
    %8174 = vst [vmem:[#allocation3 + $0xa8] sm:$0xff] %v8110
    %8175 = vst [vmem:[#allocation3 + $0xb0] sm:$0xff] %v8111
    %8176 = vst [vmem:[#allocation3 + $0xb8] sm:$0xff] %v8112
    %8177 = vst [vmem:[#allocation3 + $0xc0] sm:$0xff] %v8113
    %8178 = vst [vmem:[#allocation3 + $0xc8] sm:$0xff] %v8114
    %8179 = vst [vmem:[#allocation3 + $0xd0] sm:$0xff] %v8115
    %8180 = vst [vmem:[#allocation3 + $0xd8] sm:$0xff] %v8116
    %8181 = vst [vmem:[#allocation3 + $0xe0] sm:$0xff] %v8117
    %8182 = vst [vmem:[#allocation3 + $0xe8] sm:$0xff] %v8118
    %8183 = vst [vmem:[#allocation3 + $0xf0] sm:$0xff] %v8119
    %8184 = vst [vmem:[#allocation3 + $0xf8] sm:$0xff] %v8120
    %8185 = vst [vmem:[#allocation3 + $0x100] sm:$0xff] %v8121
    %8186 = vst [vmem:[#allocation3 + $0x108] sm:$0xff] %v8122
    %8187 = vst [vmem:[#allocation3 + $0x110] sm:$0xff] %v8123
    %8188 = vst [vmem:[#allocation3 + $0x118] sm:$0xff] %v8124
    %8189 = vst [vmem:[#allocation3 + $0x120] sm:$0xff] %v8125
    %8190 = vst [vmem:[#allocation3 + $0x128] sm:$0xff] %v8126
    %8191 = vst [vmem:[#allocation3 + $0x130] sm:$0xff] %v8127
    %8192 = vst [vmem:[#allocation3 + $0x138] sm:$0xff] %v8128
    %8193 = vst [vmem:[#allocation3 + $0x140] sm:$0xff] %v8129
    %8194 = vst [vmem:[#allocation3 + $0x148] sm:$0xff] %v8130
    %8195 = vst [vmem:[#allocation3 + $0x150] sm:$0xff] %v8131
    %8196 = vst [vmem:[#allocation3 + $0x158] sm:$0xff] %v8132
    %8197 = vst [vmem:[#allocation3 + $0x160] sm:$0xff] %v8133
    %8198 = vst [vmem:[#allocation3 + $0x168] sm:$0xff] %v8134
    %8199 = vst [vmem:[#allocation3 + $0x170] sm:$0xff] %v8135
    %8200 = vst [vmem:[#allocation3 + $0x178] sm:$0xff] %v8136
    %8201 = vst [vmem:[#allocation3 + $0x180] sm:$0xff] %v8137
    %8202 = vst [vmem:[#allocation3 + $0x188] sm:$0xff] %v8138
    %8203 = vst [vmem:[#allocation3 + $0x190] sm:$0xff] %v8139
    %8204 = vst [vmem:[#allocation3 + $0x198] sm:$0xff] %v8140
    %8205 = vst [vmem:[#allocation3 + $0x1a0] sm:$0xff] %v8141
    %8206 = vst [vmem:[#allocation3 + $0x1a8] sm:$0xff] %v8142
    %8207 = vst [vmem:[#allocation3 + $0x1b0] sm:$0xff] %v8143
    %8208 = vst [vmem:[#allocation3 + $0x1b8] sm:$0xff] %v8144
    %8209 = vst [vmem:[#allocation3 + $0x1c0] sm:$0xff] %v8145
    %8210 = vst [vmem:[#allocation3 + $0x1c8] sm:$0xff] %v8146
    %8211 = vst [vmem:[#allocation3 + $0x1d0] sm:$0xff] %v8147
    %8212 = vst [vmem:[#allocation3 + $0x1d8] sm:$0xff] %v8148
    %8213 = vst [vmem:[#allocation3 + $0x1e0] sm:$0xff] %v8149
    %8214 = vst [vmem:[#allocation3 + $0x1e8] sm:$0xff] %v8150
    %8215 = vst [vmem:[#allocation3 + $0x1f0] sm:$0xff] %v8151
    %8216 = vst [vmem:[#allocation3 + $0x1f8] sm:$0xff] %v8152
    %v8217 = vld [vmem:[%s7734 + $0x1] sm:$0xff]
    %v8218 = vld [vmem:[%s7734 + $0x9] sm:$0xff]
    %v8219 = vld [vmem:[%s7734 + $0x19] sm:$0xff]
    %v8220 = vld [vmem:[%s7734 + $0x21] sm:$0xff]
    %v8221 = vld [vmem:[%s7734 + $0x31] sm:$0xff]
    %v8222 = vld [vmem:[%s7734 + $0x39] sm:$0xff]
    %v8223 = vld [vmem:[%s7734 + $0x49] sm:$0xff]
    %v8224 = vld [vmem:[%s7734 + $0x51] sm:$0xff]
    %v8225 = vld [vmem:[%s7734 + $0x61] sm:$0xff]
    %v8226 = vld [vmem:[%s7734 + $0x69] sm:$0xff]
    %v8227 = vld [vmem:[%s7734 + $0x79] sm:$0xff]
    %v8228 = vld [vmem:[%s7734 + $0x81] sm:$0xff]
    %v8229 = vld [vmem:[%s7734 + $0x91] sm:$0xff]
    %v8230 = vld [vmem:[%s7734 + $0x99] sm:$0xff]
    %v8231 = vld [vmem:[%s7734 + $0xa9] sm:$0xff]
    %v8232 = vld [vmem:[%s7734 + $0xb1] sm:$0xff]
    %v8233 = vld [vmem:[%s7734 + $0xc1] sm:$0xff]
    %v8234 = vld [vmem:[%s7734 + $0xc9] sm:$0xff]
    %v8235 = vld [vmem:[%s7734 + $0xd9] sm:$0xff]
    %v8236 = vld [vmem:[%s7734 + $0xe1] sm:$0xff]
    %v8237 = vld [vmem:[%s7734 + $0xf1] sm:$0xff]
    %v8238 = vld [vmem:[%s7734 + $0xf9] sm:$0xff]
    %v8239 = vld [vmem:[%s7734 + $0x109] sm:$0xff]
    %v8240 = vld [vmem:[%s7734 + $0x111] sm:$0xff]
    %v8241 = vld [vmem:[%s7734 + $0x121] sm:$0xff]
    %v8242 = vld [vmem:[%s7734 + $0x129] sm:$0xff]
    %v8243 = vld [vmem:[%s7734 + $0x139] sm:$0xff]
    %v8244 = vld [vmem:[%s7734 + $0x141] sm:$0xff]
    %v8245 = vld [vmem:[%s7734 + $0x151] sm:$0xff]
    %v8246 = vld [vmem:[%s7734 + $0x159] sm:$0xff]
    %v8247 = vld [vmem:[%s7734 + $0x169] sm:$0xff]
    %v8248 = vld [vmem:[%s7734 + $0x171] sm:$0xff]
    %v8249 = vld [vmem:[%s7734 + $0x1b1] sm:$0xff]
    %v8250 = vld [vmem:[%s7734 + $0x1b9] sm:$0xff]
    %v8251 = vld [vmem:[%s7734 + $0x1c9] sm:$0xff]
    %v8252 = vld [vmem:[%s7734 + $0x1d1] sm:$0xff]
    %v8253 = vld [vmem:[%s7734 + $0x1e1] sm:$0xff]
    %v8254 = vld [vmem:[%s7734 + $0x1e9] sm:$0xff]
    %v8255 = vld [vmem:[%s7734 + $0x1f9] sm:$0xff]
    %v8256 = vld [vmem:[%s7734 + $0x201] sm:$0xff]
    %v8257 = vld [vmem:[%s7734 + $0x211] sm:$0xff]
    %v8258 = vld [vmem:[%s7734 + $0x219] sm:$0xff]
    %v8259 = vld [vmem:[%s7734 + $0x229] sm:$0xff]
    %v8260 = vld [vmem:[%s7734 + $0x231] sm:$0xff]
    %v8261 = vld [vmem:[%s7734 + $0x241] sm:$0xff]
    %v8262 = vld [vmem:[%s7734 + $0x249] sm:$0xff]
    %v8263 = vld [vmem:[%s7734 + $0x259] sm:$0xff]
    %v8264 = vld [vmem:[%s7734 + $0x261] sm:$0xff]
    %v8265 = vld [vmem:[%s7734 + $0x271] sm:$0xff]
    %v8266 = vld [vmem:[%s7734 + $0x279] sm:$0xff]
    %v8267 = vld [vmem:[%s7734 + $0x289] sm:$0xff]
    %v8268 = vld [vmem:[%s7734 + $0x291] sm:$0xff]
    %v8269 = vld [vmem:[%s7734 + $0x2a1] sm:$0xff]
    %v8270 = vld [vmem:[%s7734 + $0x2a9] sm:$0xff]
    %v8271 = vld [vmem:[%s7734 + $0x2b9] sm:$0xff]
    %v8272 = vld [vmem:[%s7734 + $0x2c1] sm:$0xff]
    %v8273 = vld [vmem:[%s7734 + $0x2d1] sm:$0xff]
    %v8274 = vld [vmem:[%s7734 + $0x2d9] sm:$0xff]
    %v8275 = vld [vmem:[%s7734 + $0x2e9] sm:$0xff]
    %v8276 = vld [vmem:[%s7734 + $0x2f1] sm:$0xff]
    %v8277 = vld [vmem:[%s7734 + $0x301] sm:$0xff]
    %v8278 = vld [vmem:[%s7734 + $0x309] sm:$0xff]
    %v8279 = vld [vmem:[%s7734 + $0x319] sm:$0xff]
    %v8280 = vld [vmem:[%s7734 + $0x321] sm:$0xff]
    %s8281 = scalar_lea.vmem [#allocation4], 896
    %v8282 = vld [vmem:[%s8281] sm:$0xff]
    %v8283 = vld [vmem:[%s8281 + $0x8] sm:$0xff]
    %v8284 = vld [vmem:[%s8281 + $0x10] sm:$0xff]
    %v8285 = vld [vmem:[%s8281 + $0x18] sm:$0xff]
    %v8286 = vld [vmem:[%s8281 + $0x20] sm:$0xff]
    %v8287 = vld [vmem:[%s8281 + $0x28] sm:$0xff]
    %v8288 = vld [vmem:[%s8281 + $0x30] sm:$0xff]
    %v8289 = vld [vmem:[%s8281 + $0x38] sm:$0xff]
    %v8290 = vld [vmem:[%s8281 + $0x40] sm:$0xff]
    %v8291 = vld [vmem:[%s8281 + $0x48] sm:$0xff]
    %v8292 = vld [vmem:[%s8281 + $0x50] sm:$0xff]
    %v8293 = vld [vmem:[%s8281 + $0x58] sm:$0xff]
    %v8294 = vld [vmem:[%s8281 + $0x60] sm:$0xff]
    %v8295 = vld [vmem:[%s8281 + $0x68] sm:$0xff]
    %v8296 = vld [vmem:[%s8281 + $0x70] sm:$0xff]
    %v8297 = vld [vmem:[%s8281 + $0x78] sm:$0xff]
    %8298 = vmatpush.msra.mxu0 %v8297
    %8299 = vmatpush.msra.mxu0 %v8296
    %8300 = vmatpush.msra.mxu0 %v8295
    %8301 = vmatpush.msra.mxu0 %v8294
    %8302 = vmatpush.msra.mxu0 %v8293
    %8303 = vmatpush.msra.mxu0 %v8292
    %8304 = vmatpush.msra.mxu0 %v8291
    %8305 = vmatpush.msra.mxu0 %v8290
    %8306 = vmatpush.msra.mxu0 %v8289
    %8307 = vmatpush.msra.mxu0 %v8288
    %8308 = vmatpush.msra.mxu0 %v8287
    %8309 = vmatpush.msra.mxu0 %v8286
    %8310 = vmatpush.msra.mxu0 %v8285
    %8311 = vmatpush.msra.mxu0 %v8284
    %8312 = vmatpush.msra.mxu0 %v8283
    %8313 = vmatpush.msra.mxu0 %v8282
    %8314 = vmatmul.f32.gmra.mxu0 %v8217
    %v8315 = vpop.f32.mrf.mxu0
    %v8316 = vadd.f32 0.0, %v8315
    %8317 = vmatmul.f32.gmra.mxu0 %v8218
    %v8318 = vpop.f32.mrf.mxu0
    %v8319 = vadd.f32 0.0, %v8318
    %8320 = vmatmul.f32.gmra.mxu0 %v8219
    %v8321 = vpop.f32.mrf.mxu0
    %v8322 = vadd.f32 0.0, %v8321
    %8323 = vmatmul.f32.gmra.mxu0 %v8220
    %v8324 = vpop.f32.mrf.mxu0
    %v8325 = vadd.f32 0.0, %v8324
    %8326 = vmatmul.f32.gmra.mxu0 %v8221
    %v8327 = vpop.f32.mrf.mxu0
    %v8328 = vadd.f32 0.0, %v8327
    %8329 = vmatmul.f32.gmra.mxu0 %v8222
    %v8330 = vpop.f32.mrf.mxu0
    %v8331 = vadd.f32 0.0, %v8330
    %8332 = vmatmul.f32.gmra.mxu0 %v8223
    %v8333 = vpop.f32.mrf.mxu0
    %v8334 = vadd.f32 0.0, %v8333
    %8335 = vmatmul.f32.gmra.mxu0 %v8224
    %v8336 = vpop.f32.mrf.mxu0
    %v8337 = vadd.f32 0.0, %v8336
    %8338 = vmatmul.f32.gmra.mxu0 %v8225
    %v8339 = vpop.f32.mrf.mxu0
    %v8340 = vadd.f32 0.0, %v8339
    %8341 = vmatmul.f32.gmra.mxu0 %v8226
    %v8342 = vpop.f32.mrf.mxu0
    %v8343 = vadd.f32 0.0, %v8342
    %8344 = vmatmul.f32.gmra.mxu0 %v8227
    %v8345 = vpop.f32.mrf.mxu0
    %v8346 = vadd.f32 0.0, %v8345
    %8347 = vmatmul.f32.gmra.mxu0 %v8228
    %v8348 = vpop.f32.mrf.mxu0
    %v8349 = vadd.f32 0.0, %v8348
    %8350 = vmatmul.f32.gmra.mxu0 %v8229
    %v8351 = vpop.f32.mrf.mxu0
    %v8352 = vadd.f32 0.0, %v8351
    %8353 = vmatmul.f32.gmra.mxu0 %v8230
    %v8354 = vpop.f32.mrf.mxu0
    %v8355 = vadd.f32 0.0, %v8354
    %8356 = vmatmul.f32.gmra.mxu0 %v8231
    %v8357 = vpop.f32.mrf.mxu0
    %v8358 = vadd.f32 0.0, %v8357
    %8359 = vmatmul.f32.gmra.mxu0 %v8232
    %v8360 = vpop.f32.mrf.mxu0
    %v8361 = vadd.f32 0.0, %v8360
    %8362 = vmatmul.f32.gmra.mxu0 %v8233
    %v8363 = vpop.f32.mrf.mxu0
    %v8364 = vadd.f32 0.0, %v8363
    %8365 = vmatmul.f32.gmra.mxu0 %v8234
    %v8366 = vpop.f32.mrf.mxu0
    %v8367 = vadd.f32 0.0, %v8366
    %8368 = vmatmul.f32.gmra.mxu0 %v8235
    %v8369 = vpop.f32.mrf.mxu0
    %v8370 = vadd.f32 0.0, %v8369
    %8371 = vmatmul.f32.gmra.mxu0 %v8236
    %v8372 = vpop.f32.mrf.mxu0
    %v8373 = vadd.f32 0.0, %v8372
    %8374 = vmatmul.f32.gmra.mxu0 %v8237
    %v8375 = vpop.f32.mrf.mxu0
    %v8376 = vadd.f32 0.0, %v8375
    %8377 = vmatmul.f32.gmra.mxu0 %v8238
    %v8378 = vpop.f32.mrf.mxu0
    %v8379 = vadd.f32 0.0, %v8378
    %8380 = vmatmul.f32.gmra.mxu0 %v8239
    %v8381 = vpop.f32.mrf.mxu0
    %v8382 = vadd.f32 0.0, %v8381
    %8383 = vmatmul.f32.gmra.mxu0 %v8240
    %v8384 = vpop.f32.mrf.mxu0
    %v8385 = vadd.f32 0.0, %v8384
    %8386 = vmatmul.f32.gmra.mxu0 %v8241
    %v8387 = vpop.f32.mrf.mxu0
    %v8388 = vadd.f32 0.0, %v8387
    %8389 = vmatmul.f32.gmra.mxu0 %v8242
    %v8390 = vpop.f32.mrf.mxu0
    %v8391 = vadd.f32 0.0, %v8390
    %8392 = vmatmul.f32.gmra.mxu0 %v8243
    %v8393 = vpop.f32.mrf.mxu0
    %v8394 = vadd.f32 0.0, %v8393
    %8395 = vmatmul.f32.gmra.mxu0 %v8244
    %v8396 = vpop.f32.mrf.mxu0
    %v8397 = vadd.f32 0.0, %v8396
    %8398 = vmatmul.f32.gmra.mxu0 %v8245
    %v8399 = vpop.f32.mrf.mxu0
    %v8400 = vadd.f32 0.0, %v8399
    %8401 = vmatmul.f32.gmra.mxu0 %v8246
    %v8402 = vpop.f32.mrf.mxu0
    %v8403 = vadd.f32 0.0, %v8402
    %8404 = vmatmul.f32.gmra.mxu0 %v8247
    %v8405 = vpop.f32.mrf.mxu0
    %v8406 = vadd.f32 0.0, %v8405
    %8407 = vmatmul.f32.gmra.mxu0 %v8248
    %v8408 = vpop.f32.mrf.mxu0
    %v8409 = vadd.f32 0.0, %v8408
    %8410 = vmatmul.f32.gmra.mxu0 %v8249
    %v8411 = vpop.f32.mrf.mxu0
    %v8412 = vadd.f32 0.0, %v8411
    %8413 = vmatmul.f32.gmra.mxu0 %v8250
    %v8414 = vpop.f32.mrf.mxu0
    %v8415 = vadd.f32 0.0, %v8414
    %8416 = vmatmul.f32.gmra.mxu0 %v8251
    %v8417 = vpop.f32.mrf.mxu0
    %v8418 = vadd.f32 0.0, %v8417
    %8419 = vmatmul.f32.gmra.mxu0 %v8252
    %v8420 = vpop.f32.mrf.mxu0
    %v8421 = vadd.f32 0.0, %v8420
    %8422 = vmatmul.f32.gmra.mxu0 %v8253
    %v8423 = vpop.f32.mrf.mxu0
    %v8424 = vadd.f32 0.0, %v8423
    %8425 = vmatmul.f32.gmra.mxu0 %v8254
    %v8426 = vpop.f32.mrf.mxu0
    %v8427 = vadd.f32 0.0, %v8426
    %8428 = vmatmul.f32.gmra.mxu0 %v8255
    %v8429 = vpop.f32.mrf.mxu0
    %v8430 = vadd.f32 0.0, %v8429
    %8431 = vmatmul.f32.gmra.mxu0 %v8256
    %v8432 = vpop.f32.mrf.mxu0
    %v8433 = vadd.f32 0.0, %v8432
    %8434 = vmatmul.f32.gmra.mxu0 %v8257
    %v8435 = vpop.f32.mrf.mxu0
    %v8436 = vadd.f32 0.0, %v8435
    %8437 = vmatmul.f32.gmra.mxu0 %v8258
    %v8438 = vpop.f32.mrf.mxu0
    %v8439 = vadd.f32 0.0, %v8438
    %8440 = vmatmul.f32.gmra.mxu0 %v8259
    %v8441 = vpop.f32.mrf.mxu0
    %v8442 = vadd.f32 0.0, %v8441
    %8443 = vmatmul.f32.gmra.mxu0 %v8260
    %v8444 = vpop.f32.mrf.mxu0
    %v8445 = vadd.f32 0.0, %v8444
    %8446 = vmatmul.f32.gmra.mxu0 %v8261
    %v8447 = vpop.f32.mrf.mxu0
    %v8448 = vadd.f32 0.0, %v8447
    %8449 = vmatmul.f32.gmra.mxu0 %v8262
    %v8450 = vpop.f32.mrf.mxu0
    %v8451 = vadd.f32 0.0, %v8450
    %8452 = vmatmul.f32.gmra.mxu0 %v8263
    %v8453 = vpop.f32.mrf.mxu0
    %v8454 = vadd.f32 0.0, %v8453
    %8455 = vmatmul.f32.gmra.mxu0 %v8264
    %v8456 = vpop.f32.mrf.mxu0
    %v8457 = vadd.f32 0.0, %v8456
    %8458 = vmatmul.f32.gmra.mxu0 %v8265
    %v8459 = vpop.f32.mrf.mxu0
    %v8460 = vadd.f32 0.0, %v8459
    %8461 = vmatmul.f32.gmra.mxu0 %v8266
    %v8462 = vpop.f32.mrf.mxu0
    %v8463 = vadd.f32 0.0, %v8462
    %8464 = vmatmul.f32.gmra.mxu0 %v8267
    %v8465 = vpop.f32.mrf.mxu0
    %v8466 = vadd.f32 0.0, %v8465
    %8467 = vmatmul.f32.gmra.mxu0 %v8268
    %v8468 = vpop.f32.mrf.mxu0
    %v8469 = vadd.f32 0.0, %v8468
    %8470 = vmatmul.f32.gmra.mxu0 %v8269
    %v8471 = vpop.f32.mrf.mxu0
    %v8472 = vadd.f32 0.0, %v8471
    %8473 = vmatmul.f32.gmra.mxu0 %v8270
    %v8474 = vpop.f32.mrf.mxu0
    %v8475 = vadd.f32 0.0, %v8474
    %8476 = vmatmul.f32.gmra.mxu0 %v8271
    %v8477 = vpop.f32.mrf.mxu0
    %v8478 = vadd.f32 0.0, %v8477
    %8479 = vmatmul.f32.gmra.mxu0 %v8272
    %v8480 = vpop.f32.mrf.mxu0
    %v8481 = vadd.f32 0.0, %v8480
    %8482 = vmatmul.f32.gmra.mxu0 %v8273
    %v8483 = vpop.f32.mrf.mxu0
    %v8484 = vadd.f32 0.0, %v8483
    %8485 = vmatmul.f32.gmra.mxu0 %v8274
    %v8486 = vpop.f32.mrf.mxu0
    %v8487 = vadd.f32 0.0, %v8486
    %8488 = vmatmul.f32.gmra.mxu0 %v8275
    %v8489 = vpop.f32.mrf.mxu0
    %v8490 = vadd.f32 0.0, %v8489
    %8491 = vmatmul.f32.gmra.mxu0 %v8276
    %v8492 = vpop.f32.mrf.mxu0
    %v8493 = vadd.f32 0.0, %v8492
    %8494 = vmatmul.f32.gmra.mxu0 %v8277
    %v8495 = vpop.f32.mrf.mxu0
    %v8496 = vadd.f32 0.0, %v8495
    %8497 = vmatmul.f32.gmra.mxu0 %v8278
    %v8498 = vpop.f32.mrf.mxu0
    %v8499 = vadd.f32 0.0, %v8498
    %8500 = vmatmul.f32.gmra.mxu0 %v8279
    %v8501 = vpop.f32.mrf.mxu0
    %v8502 = vadd.f32 0.0, %v8501
    %8503 = vmatmul.f32.gmra.mxu0 %v8280
    %v8504 = vpop.f32.mrf.mxu0
    %v8505 = vadd.f32 0.0, %v8504
    %8506 = vdwg.mxu0
    %v8507 = vld [vmem:[#allocation3] sm:$0xff]
    %v8508 = vld [vmem:[#allocation3 + $0x8] sm:$0xff]
    %v8509 = vld [vmem:[#allocation3 + $0x10] sm:$0xff]
    %v8510 = vld [vmem:[#allocation3 + $0x18] sm:$0xff]
    %v8511 = vld [vmem:[#allocation3 + $0x20] sm:$0xff]
    %v8512 = vld [vmem:[#allocation3 + $0x28] sm:$0xff]
    %v8513 = vld [vmem:[#allocation3 + $0x30] sm:$0xff]
    %v8514 = vld [vmem:[#allocation3 + $0x38] sm:$0xff]
    %v8515 = vld [vmem:[#allocation3 + $0x40] sm:$0xff]
    %v8516 = vld [vmem:[#allocation3 + $0x48] sm:$0xff]
    %v8517 = vld [vmem:[#allocation3 + $0x50] sm:$0xff]
    %v8518 = vld [vmem:[#allocation3 + $0x58] sm:$0xff]
    %v8519 = vld [vmem:[#allocation3 + $0x60] sm:$0xff]
    %v8520 = vld [vmem:[#allocation3 + $0x68] sm:$0xff]
    %v8521 = vld [vmem:[#allocation3 + $0x70] sm:$0xff]
    %v8522 = vld [vmem:[#allocation3 + $0x78] sm:$0xff]
    %v8523 = vld [vmem:[#allocation3 + $0x80] sm:$0xff]
    %v8524 = vld [vmem:[#allocation3 + $0x88] sm:$0xff]
    %v8525 = vld [vmem:[#allocation3 + $0x90] sm:$0xff]
    %v8526 = vld [vmem:[#allocation3 + $0x98] sm:$0xff]
    %v8527 = vld [vmem:[#allocation3 + $0xa0] sm:$0xff]
    %v8528 = vld [vmem:[#allocation3 + $0xa8] sm:$0xff]
    %v8529 = vld [vmem:[#allocation3 + $0xb0] sm:$0xff]
    %v8530 = vld [vmem:[#allocation3 + $0xb8] sm:$0xff]
    %v8531 = vld [vmem:[#allocation3 + $0xc0] sm:$0xff]
    %v8532 = vld [vmem:[#allocation3 + $0xc8] sm:$0xff]
    %v8533 = vld [vmem:[#allocation3 + $0xd0] sm:$0xff]
    %v8534 = vld [vmem:[#allocation3 + $0xd8] sm:$0xff]
    %v8535 = vld [vmem:[#allocation3 + $0xe0] sm:$0xff]
    %v8536 = vld [vmem:[#allocation3 + $0xe8] sm:$0xff]
    %v8537 = vld [vmem:[#allocation3 + $0xf0] sm:$0xff]
    %v8538 = vld [vmem:[#allocation3 + $0xf8] sm:$0xff]
    %v8539 = vld [vmem:[#allocation3 + $0x100] sm:$0xff]
    %v8540 = vld [vmem:[#allocation3 + $0x108] sm:$0xff]
    %v8541 = vld [vmem:[#allocation3 + $0x110] sm:$0xff]
    %v8542 = vld [vmem:[#allocation3 + $0x118] sm:$0xff]
    %v8543 = vld [vmem:[#allocation3 + $0x120] sm:$0xff]
    %v8544 = vld [vmem:[#allocation3 + $0x128] sm:$0xff]
    %v8545 = vld [vmem:[#allocation3 + $0x130] sm:$0xff]
    %v8546 = vld [vmem:[#allocation3 + $0x138] sm:$0xff]
    %v8547 = vld [vmem:[#allocation3 + $0x140] sm:$0xff]
    %v8548 = vld [vmem:[#allocation3 + $0x148] sm:$0xff]
    %v8549 = vld [vmem:[#allocation3 + $0x150] sm:$0xff]
    %v8550 = vld [vmem:[#allocation3 + $0x158] sm:$0xff]
    %v8551 = vld [vmem:[#allocation3 + $0x160] sm:$0xff]
    %v8552 = vld [vmem:[#allocation3 + $0x168] sm:$0xff]
    %v8553 = vld [vmem:[#allocation3 + $0x170] sm:$0xff]
    %v8554 = vld [vmem:[#allocation3 + $0x178] sm:$0xff]
    %v8555 = vld [vmem:[#allocation3 + $0x180] sm:$0xff]
    %v8556 = vld [vmem:[#allocation3 + $0x188] sm:$0xff]
    %v8557 = vld [vmem:[#allocation3 + $0x190] sm:$0xff]
    %v8558 = vld [vmem:[#allocation3 + $0x198] sm:$0xff]
    %v8559 = vld [vmem:[#allocation3 + $0x1a0] sm:$0xff]
    %v8560 = vld [vmem:[#allocation3 + $0x1a8] sm:$0xff]
    %v8561 = vld [vmem:[#allocation3 + $0x1b0] sm:$0xff]
    %v8562 = vld [vmem:[#allocation3 + $0x1b8] sm:$0xff]
    %v8563 = vld [vmem:[#allocation3 + $0x1c0] sm:$0xff]
    %v8564 = vld [vmem:[#allocation3 + $0x1c8] sm:$0xff]
    %v8565 = vld [vmem:[#allocation3 + $0x1d0] sm:$0xff]
    %v8566 = vld [vmem:[#allocation3 + $0x1d8] sm:$0xff]
    %v8567 = vld [vmem:[#allocation3 + $0x1e0] sm:$0xff]
    %v8568 = vld [vmem:[#allocation3 + $0x1e8] sm:$0xff]
    %v8569 = vld [vmem:[#allocation3 + $0x1f0] sm:$0xff]
    %v8570 = vld [vmem:[#allocation3 + $0x1f8] sm:$0xff]
    %v8571 = vadd.f32 %v8507, %v8316
    %v8572 = vadd.f32 %v8508, %v8319
    %v8573 = vadd.f32 %v8509, %v8322
    %v8574 = vadd.f32 %v8510, %v8325
    %v8575 = vadd.f32 %v8511, %v8328
    %v8576 = vadd.f32 %v8512, %v8331
    %v8577 = vadd.f32 %v8513, %v8334
    %v8578 = vadd.f32 %v8514, %v8337
    %v8579 = vadd.f32 %v8515, %v8340
    %v8580 = vadd.f32 %v8516, %v8343
    %v8581 = vadd.f32 %v8517, %v8346
    %v8582 = vadd.f32 %v8518, %v8349
    %v8583 = vadd.f32 %v8519, %v8352
    %v8584 = vadd.f32 %v8520, %v8355
    %v8585 = vadd.f32 %v8521, %v8358
    %v8586 = vadd.f32 %v8522, %v8361
    %v8587 = vadd.f32 %v8523, %v8364
    %v8588 = vadd.f32 %v8524, %v8367
    %v8589 = vadd.f32 %v8525, %v8370
    %v8590 = vadd.f32 %v8526, %v8373
    %v8591 = vadd.f32 %v8527, %v8376
    %v8592 = vadd.f32 %v8528, %v8379
    %v8593 = vadd.f32 %v8529, %v8382
    %v8594 = vadd.f32 %v8530, %v8385
    %v8595 = vadd.f32 %v8531, %v8388
    %v8596 = vadd.f32 %v8532, %v8391
    %v8597 = vadd.f32 %v8533, %v8394
    %v8598 = vadd.f32 %v8534, %v8397
    %v8599 = vadd.f32 %v8535, %v8400
    %v8600 = vadd.f32 %v8536, %v8403
    %v8601 = vadd.f32 %v8537, %v8406
    %v8602 = vadd.f32 %v8538, %v8409
    %v8603 = vadd.f32 %v8539, %v8412
    %v8604 = vadd.f32 %v8540, %v8415
    %v8605 = vadd.f32 %v8541, %v8418
    %v8606 = vadd.f32 %v8542, %v8421
    %v8607 = vadd.f32 %v8543, %v8424
    %v8608 = vadd.f32 %v8544, %v8427
    %v8609 = vadd.f32 %v8545, %v8430
    %v8610 = vadd.f32 %v8546, %v8433
    %v8611 = vadd.f32 %v8547, %v8436
    %v8612 = vadd.f32 %v8548, %v8439
    %v8613 = vadd.f32 %v8549, %v8442
    %v8614 = vadd.f32 %v8550, %v8445
    %v8615 = vadd.f32 %v8551, %v8448
    %v8616 = vadd.f32 %v8552, %v8451
    %v8617 = vadd.f32 %v8553, %v8454
    %v8618 = vadd.f32 %v8554, %v8457
    %v8619 = vadd.f32 %v8555, %v8460
    %v8620 = vadd.f32 %v8556, %v8463
    %v8621 = vadd.f32 %v8557, %v8466
    %v8622 = vadd.f32 %v8558, %v8469
    %v8623 = vadd.f32 %v8559, %v8472
    %v8624 = vadd.f32 %v8560, %v8475
    %v8625 = vadd.f32 %v8561, %v8478
    %v8626 = vadd.f32 %v8562, %v8481
    %v8627 = vadd.f32 %v8563, %v8484
    %v8628 = vadd.f32 %v8564, %v8487
    %v8629 = vadd.f32 %v8565, %v8490
    %v8630 = vadd.f32 %v8566, %v8493
    %v8631 = vadd.f32 %v8567, %v8496
    %v8632 = vadd.f32 %v8568, %v8499
    %v8633 = vadd.f32 %v8569, %v8502
    %v8634 = vadd.f32 %v8570, %v8505
    %8635 = vst [vmem:[#allocation3] sm:$0xff] %v8571
    %8636 = vst [vmem:[#allocation3 + $0x8] sm:$0xff] %v8572
    %8637 = vst [vmem:[#allocation3 + $0x10] sm:$0xff] %v8573
    %8638 = vst [vmem:[#allocation3 + $0x18] sm:$0xff] %v8574
    %8639 = vst [vmem:[#allocation3 + $0x20] sm:$0xff] %v8575
    %8640 = vst [vmem:[#allocation3 + $0x28] sm:$0xff] %v8576
    %8641 = vst [vmem:[#allocation3 + $0x30] sm:$0xff] %v8577
    %8642 = vst [vmem:[#allocation3 + $0x38] sm:$0xff] %v8578
    %8643 = vst [vmem:[#allocation3 + $0x40] sm:$0xff] %v8579
    %8644 = vst [vmem:[#allocation3 + $0x48] sm:$0xff] %v8580
    %8645 = vst [vmem:[#allocation3 + $0x50] sm:$0xff] %v8581
    %8646 = vst [vmem:[#allocation3 + $0x58] sm:$0xff] %v8582
    %8647 = vst [vmem:[#allocation3 + $0x60] sm:$0xff] %v8583
    %8648 = vst [vmem:[#allocation3 + $0x68] sm:$0xff] %v8584
    %8649 = vst [vmem:[#allocation3 + $0x70] sm:$0xff] %v8585
    %8650 = vst [vmem:[#allocation3 + $0x78] sm:$0xff] %v8586
    %8651 = vst [vmem:[#allocation3 + $0x80] sm:$0xff] %v8587
    %8652 = vst [vmem:[#allocation3 + $0x88] sm:$0xff] %v8588
    %8653 = vst [vmem:[#allocation3 + $0x90] sm:$0xff] %v8589
    %8654 = vst [vmem:[#allocation3 + $0x98] sm:$0xff] %v8590
    %8655 = vst [vmem:[#allocation3 + $0xa0] sm:$0xff] %v8591
    %8656 = vst [vmem:[#allocation3 + $0xa8] sm:$0xff] %v8592
    %8657 = vst [vmem:[#allocation3 + $0xb0] sm:$0xff] %v8593
    %8658 = vst [vmem:[#allocation3 + $0xb8] sm:$0xff] %v8594
    %8659 = vst [vmem:[#allocation3 + $0xc0] sm:$0xff] %v8595
    %8660 = vst [vmem:[#allocation3 + $0xc8] sm:$0xff] %v8596
    %8661 = vst [vmem:[#allocation3 + $0xd0] sm:$0xff] %v8597
    %8662 = vst [vmem:[#allocation3 + $0xd8] sm:$0xff] %v8598
    %8663 = vst [vmem:[#allocation3 + $0xe0] sm:$0xff] %v8599
    %8664 = vst [vmem:[#allocation3 + $0xe8] sm:$0xff] %v8600
    %8665 = vst [vmem:[#allocation3 + $0xf0] sm:$0xff] %v8601
    %8666 = vst [vmem:[#allocation3 + $0xf8] sm:$0xff] %v8602
    %8667 = vst [vmem:[#allocation3 + $0x100] sm:$0xff] %v8603
    %8668 = vst [vmem:[#allocation3 + $0x108] sm:$0xff] %v8604
    %8669 = vst [vmem:[#allocation3 + $0x110] sm:$0xff] %v8605
    %8670 = vst [vmem:[#allocation3 + $0x118] sm:$0xff] %v8606
    %8671 = vst [vmem:[#allocation3 + $0x120] sm:$0xff] %v8607
    %8672 = vst [vmem:[#allocation3 + $0x128] sm:$0xff] %v8608
    %8673 = vst [vmem:[#allocation3 + $0x130] sm:$0xff] %v8609
    %8674 = vst [vmem:[#allocation3 + $0x138] sm:$0xff] %v8610
    %8675 = vst [vmem:[#allocation3 + $0x140] sm:$0xff] %v8611
    %8676 = vst [vmem:[#allocation3 + $0x148] sm:$0xff] %v8612
    %8677 = vst [vmem:[#allocation3 + $0x150] sm:$0xff] %v8613
    %8678 = vst [vmem:[#allocation3 + $0x158] sm:$0xff] %v8614
    %8679 = vst [vmem:[#allocation3 + $0x160] sm:$0xff] %v8615
    %8680 = vst [vmem:[#allocation3 + $0x168] sm:$0xff] %v8616
    %8681 = vst [vmem:[#allocation3 + $0x170] sm:$0xff] %v8617
    %8682 = vst [vmem:[#allocation3 + $0x178] sm:$0xff] %v8618
    %8683 = vst [vmem:[#allocation3 + $0x180] sm:$0xff] %v8619
    %8684 = vst [vmem:[#allocation3 + $0x188] sm:$0xff] %v8620
    %8685 = vst [vmem:[#allocation3 + $0x190] sm:$0xff] %v8621
    %8686 = vst [vmem:[#allocation3 + $0x198] sm:$0xff] %v8622
    %8687 = vst [vmem:[#allocation3 + $0x1a0] sm:$0xff] %v8623
    %8688 = vst [vmem:[#allocation3 + $0x1a8] sm:$0xff] %v8624
    %8689 = vst [vmem:[#allocation3 + $0x1b0] sm:$0xff] %v8625
    %8690 = vst [vmem:[#allocation3 + $0x1b8] sm:$0xff] %v8626
    %8691 = vst [vmem:[#allocation3 + $0x1c0] sm:$0xff] %v8627
    %8692 = vst [vmem:[#allocation3 + $0x1c8] sm:$0xff] %v8628
    %8693 = vst [vmem:[#allocation3 + $0x1d0] sm:$0xff] %v8629
    %8694 = vst [vmem:[#allocation3 + $0x1d8] sm:$0xff] %v8630
    %8695 = vst [vmem:[#allocation3 + $0x1e0] sm:$0xff] %v8631
    %8696 = vst [vmem:[#allocation3 + $0x1e8] sm:$0xff] %v8632
    %8697 = vst [vmem:[#allocation3 + $0x1f0] sm:$0xff] %v8633
    %8698 = vst [vmem:[#allocation3 + $0x1f8] sm:$0xff] %v8634
    %v8699 = vld [vmem:[%s7734 + $0x2] sm:$0xff]
    %v8700 = vld [vmem:[%s7734 + $0xa] sm:$0xff]
    %v8701 = vld [vmem:[%s7734 + $0x1a] sm:$0xff]
    %v8702 = vld [vmem:[%s7734 + $0x22] sm:$0xff]
    %v8703 = vld [vmem:[%s7734 + $0x32] sm:$0xff]
    %v8704 = vld [vmem:[%s7734 + $0x3a] sm:$0xff]
    %v8705 = vld [vmem:[%s7734 + $0x4a] sm:$0xff]
    %v8706 = vld [vmem:[%s7734 + $0x52] sm:$0xff]
    %v8707 = vld [vmem:[%s7734 + $0x62] sm:$0xff]
    %v8708 = vld [vmem:[%s7734 + $0x6a] sm:$0xff]
    %v8709 = vld [vmem:[%s7734 + $0x7a] sm:$0xff]
    %v8710 = vld [vmem:[%s7734 + $0x82] sm:$0xff]
    %v8711 = vld [vmem:[%s7734 + $0x92] sm:$0xff]
    %v8712 = vld [vmem:[%s7734 + $0x9a] sm:$0xff]
    %v8713 = vld [vmem:[%s7734 + $0xaa] sm:$0xff]
    %v8714 = vld [vmem:[%s7734 + $0xb2] sm:$0xff]
    %v8715 = vld [vmem:[%s7734 + $0xc2] sm:$0xff]
    %v8716 = vld [vmem:[%s7734 + $0xca] sm:$0xff]
    %v8717 = vld [vmem:[%s7734 + $0xda] sm:$0xff]
    %v8718 = vld [vmem:[%s7734 + $0xe2] sm:$0xff]
    %v8719 = vld [vmem:[%s7734 + $0xf2] sm:$0xff]
    %v8720 = vld [vmem:[%s7734 + $0xfa] sm:$0xff]
    %v8721 = vld [vmem:[%s7734 + $0x10a] sm:$0xff]
    %v8722 = vld [vmem:[%s7734 + $0x112] sm:$0xff]
    %v8723 = vld [vmem:[%s7734 + $0x122] sm:$0xff]
    %v8724 = vld [vmem:[%s7734 + $0x12a] sm:$0xff]
    %v8725 = vld [vmem:[%s7734 + $0x13a] sm:$0xff]
    %v8726 = vld [vmem:[%s7734 + $0x142] sm:$0xff]
    %v8727 = vld [vmem:[%s7734 + $0x152] sm:$0xff]
    %v8728 = vld [vmem:[%s7734 + $0x15a] sm:$0xff]
    %v8729 = vld [vmem:[%s7734 + $0x16a] sm:$0xff]
    %v8730 = vld [vmem:[%s7734 + $0x172] sm:$0xff]
    %v8731 = vld [vmem:[%s7734 + $0x1b2] sm:$0xff]
    %v8732 = vld [vmem:[%s7734 + $0x1ba] sm:$0xff]
    %v8733 = vld [vmem:[%s7734 + $0x1ca] sm:$0xff]
    %v8734 = vld [vmem:[%s7734 + $0x1d2] sm:$0xff]
    %v8735 = vld [vmem:[%s7734 + $0x1e2] sm:$0xff]
    %v8736 = vld [vmem:[%s7734 + $0x1ea] sm:$0xff]
    %v8737 = vld [vmem:[%s7734 + $0x1fa] sm:$0xff]
    %v8738 = vld [vmem:[%s7734 + $0x202] sm:$0xff]
    %v8739 = vld [vmem:[%s7734 + $0x212] sm:$0xff]
    %v8740 = vld [vmem:[%s7734 + $0x21a] sm:$0xff]
    %v8741 = vld [vmem:[%s7734 + $0x22a] sm:$0xff]
    %v8742 = vld [vmem:[%s7734 + $0x232] sm:$0xff]
    %v8743 = vld [vmem:[%s7734 + $0x242] sm:$0xff]
    %v8744 = vld [vmem:[%s7734 + $0x24a] sm:$0xff]
    %v8745 = vld [vmem:[%s7734 + $0x25a] sm:$0xff]
    %v8746 = vld [vmem:[%s7734 + $0x262] sm:$0xff]
    %v8747 = vld [vmem:[%s7734 + $0x272] sm:$0xff]
    %v8748 = vld [vmem:[%s7734 + $0x27a] sm:$0xff]
    %v8749 = vld [vmem:[%s7734 + $0x28a] sm:$0xff]
    %v8750 = vld [vmem:[%s7734 + $0x292] sm:$0xff]
    %v8751 = vld [vmem:[%s7734 + $0x2a2] sm:$0xff]
    %v8752 = vld [vmem:[%s7734 + $0x2aa] sm:$0xff]
    %v8753 = vld [vmem:[%s7734 + $0x2ba] sm:$0xff]
    %v8754 = vld [vmem:[%s7734 + $0x2c2] sm:$0xff]
    %v8755 = vld [vmem:[%s7734 + $0x2d2] sm:$0xff]
    %v8756 = vld [vmem:[%s7734 + $0x2da] sm:$0xff]
    %v8757 = vld [vmem:[%s7734 + $0x2ea] sm:$0xff]
    %v8758 = vld [vmem:[%s7734 + $0x2f2] sm:$0xff]
    %v8759 = vld [vmem:[%s7734 + $0x302] sm:$0xff]
    %v8760 = vld [vmem:[%s7734 + $0x30a] sm:$0xff]
    %v8761 = vld [vmem:[%s7734 + $0x31a] sm:$0xff]
    %v8762 = vld [vmem:[%s7734 + $0x322] sm:$0xff]
    %s8763 = scalar_lea.vmem [#allocation4], 1024
    %v8764 = vld [vmem:[%s8763] sm:$0xff]
    %v8765 = vld [vmem:[%s8763 + $0x8] sm:$0xff]
    %v8766 = vld [vmem:[%s8763 + $0x10] sm:$0xff]
    %v8767 = vld [vmem:[%s8763 + $0x18] sm:$0xff]
    %v8768 = vld [vmem:[%s8763 + $0x20] sm:$0xff]
    %v8769 = vld [vmem:[%s8763 + $0x28] sm:$0xff]
    %v8770 = vld [vmem:[%s8763 + $0x30] sm:$0xff]
    %v8771 = vld [vmem:[%s8763 + $0x38] sm:$0xff]
    %v8772 = vld [vmem:[%s8763 + $0x40] sm:$0xff]
    %v8773 = vld [vmem:[%s8763 + $0x48] sm:$0xff]
    %v8774 = vld [vmem:[%s8763 + $0x50] sm:$0xff]
    %v8775 = vld [vmem:[%s8763 + $0x58] sm:$0xff]
    %v8776 = vld [vmem:[%s8763 + $0x60] sm:$0xff]
    %v8777 = vld [vmem:[%s8763 + $0x68] sm:$0xff]
    %v8778 = vld [vmem:[%s8763 + $0x70] sm:$0xff]
    %v8779 = vld [vmem:[%s8763 + $0x78] sm:$0xff]
    %8780 = vmatpush.msra.mxu0 %v8779
    %8781 = vmatpush.msra.mxu0 %v8778
    %8782 = vmatpush.msra.mxu0 %v8777
    %8783 = vmatpush.msra.mxu0 %v8776
    %8784 = vmatpush.msra.mxu0 %v8775
    %8785 = vmatpush.msra.mxu0 %v8774
    %8786 = vmatpush.msra.mxu0 %v8773
    %8787 = vmatpush.msra.mxu0 %v8772
    %8788 = vmatpush.msra.mxu0 %v8771
    %8789 = vmatpush.msra.mxu0 %v8770
    %8790 = vmatpush.msra.mxu0 %v8769
    %8791 = vmatpush.msra.mxu0 %v8768
    %8792 = vmatpush.msra.mxu0 %v8767
    %8793 = vmatpush.msra.mxu0 %v8766
    %8794 = vmatpush.msra.mxu0 %v8765
    %8795 = vmatpush.msra.mxu0 %v8764
    %8796 = vmatmul.f32.gmra.mxu0 %v8699
    %v8797 = vpop.f32.mrf.mxu0
    %v8798 = vadd.f32 0.0, %v8797
    %8799 = vmatmul.f32.gmra.mxu0 %v8700
    %v8800 = vpop.f32.mrf.mxu0
    %v8801 = vadd.f32 0.0, %v8800
    %8802 = vmatmul.f32.gmra.mxu0 %v8701
    %v8803 = vpop.f32.mrf.mxu0
    %v8804 = vadd.f32 0.0, %v8803
    %8805 = vmatmul.f32.gmra.mxu0 %v8702
    %v8806 = vpop.f32.mrf.mxu0
    %v8807 = vadd.f32 0.0, %v8806
    %8808 = vmatmul.f32.gmra.mxu0 %v8703
    %v8809 = vpop.f32.mrf.mxu0
    %v8810 = vadd.f32 0.0, %v8809
    %8811 = vmatmul.f32.gmra.mxu0 %v8704
    %v8812 = vpop.f32.mrf.mxu0
    %v8813 = vadd.f32 0.0, %v8812
    %8814 = vmatmul.f32.gmra.mxu0 %v8705
    %v8815 = vpop.f32.mrf.mxu0
    %v8816 = vadd.f32 0.0, %v8815
    %8817 = vmatmul.f32.gmra.mxu0 %v8706
    %v8818 = vpop.f32.mrf.mxu0
    %v8819 = vadd.f32 0.0, %v8818
    %8820 = vmatmul.f32.gmra.mxu0 %v8707
    %v8821 = vpop.f32.mrf.mxu0
    %v8822 = vadd.f32 0.0, %v8821
    %8823 = vmatmul.f32.gmra.mxu0 %v8708
    %v8824 = vpop.f32.mrf.mxu0
    %v8825 = vadd.f32 0.0, %v8824
    %8826 = vmatmul.f32.gmra.mxu0 %v8709
    %v8827 = vpop.f32.mrf.mxu0
    %v8828 = vadd.f32 0.0, %v8827
    %8829 = vmatmul.f32.gmra.mxu0 %v8710
    %v8830 = vpop.f32.mrf.mxu0
    %v8831 = vadd.f32 0.0, %v8830
    %8832 = vmatmul.f32.gmra.mxu0 %v8711
    %v8833 = vpop.f32.mrf.mxu0
    %v8834 = vadd.f32 0.0, %v8833
    %8835 = vmatmul.f32.gmra.mxu0 %v8712
    %v8836 = vpop.f32.mrf.mxu0
    %v8837 = vadd.f32 0.0, %v8836
    %8838 = vmatmul.f32.gmra.mxu0 %v8713
    %v8839 = vpop.f32.mrf.mxu0
    %v8840 = vadd.f32 0.0, %v8839
    %8841 = vmatmul.f32.gmra.mxu0 %v8714
    %v8842 = vpop.f32.mrf.mxu0
    %v8843 = vadd.f32 0.0, %v8842
    %8844 = vmatmul.f32.gmra.mxu0 %v8715
    %v8845 = vpop.f32.mrf.mxu0
    %v8846 = vadd.f32 0.0, %v8845
    %8847 = vmatmul.f32.gmra.mxu0 %v8716
    %v8848 = vpop.f32.mrf.mxu0
    %v8849 = vadd.f32 0.0, %v8848
    %8850 = vmatmul.f32.gmra.mxu0 %v8717
    %v8851 = vpop.f32.mrf.mxu0
    %v8852 = vadd.f32 0.0, %v8851
    %8853 = vmatmul.f32.gmra.mxu0 %v8718
    %v8854 = vpop.f32.mrf.mxu0
    %v8855 = vadd.f32 0.0, %v8854
    %8856 = vmatmul.f32.gmra.mxu0 %v8719
    %v8857 = vpop.f32.mrf.mxu0
    %v8858 = vadd.f32 0.0, %v8857
    %8859 = vmatmul.f32.gmra.mxu0 %v8720
    %v8860 = vpop.f32.mrf.mxu0
    %v8861 = vadd.f32 0.0, %v8860
    %8862 = vmatmul.f32.gmra.mxu0 %v8721
    %v8863 = vpop.f32.mrf.mxu0
    %v8864 = vadd.f32 0.0, %v8863
    %8865 = vmatmul.f32.gmra.mxu0 %v8722
    %v8866 = vpop.f32.mrf.mxu0
    %v8867 = vadd.f32 0.0, %v8866
    %8868 = vmatmul.f32.gmra.mxu0 %v8723
    %v8869 = vpop.f32.mrf.mxu0
    %v8870 = vadd.f32 0.0, %v8869
    %8871 = vmatmul.f32.gmra.mxu0 %v8724
    %v8872 = vpop.f32.mrf.mxu0
    %v8873 = vadd.f32 0.0, %v8872
    %8874 = vmatmul.f32.gmra.mxu0 %v8725
    %v8875 = vpop.f32.mrf.mxu0
    %v8876 = vadd.f32 0.0, %v8875
    %8877 = vmatmul.f32.gmra.mxu0 %v8726
    %v8878 = vpop.f32.mrf.mxu0
    %v8879 = vadd.f32 0.0, %v8878
    %8880 = vmatmul.f32.gmra.mxu0 %v8727
    %v8881 = vpop.f32.mrf.mxu0
    %v8882 = vadd.f32 0.0, %v8881
    %8883 = vmatmul.f32.gmra.mxu0 %v8728
    %v8884 = vpop.f32.mrf.mxu0
    %v8885 = vadd.f32 0.0, %v8884
    %8886 = vmatmul.f32.gmra.mxu0 %v8729
    %v8887 = vpop.f32.mrf.mxu0
    %v8888 = vadd.f32 0.0, %v8887
    %8889 = vmatmul.f32.gmra.mxu0 %v8730
    %v8890 = vpop.f32.mrf.mxu0
    %v8891 = vadd.f32 0.0, %v8890
    %8892 = vmatmul.f32.gmra.mxu0 %v8731
    %v8893 = vpop.f32.mrf.mxu0
    %v8894 = vadd.f32 0.0, %v8893
    %8895 = vmatmul.f32.gmra.mxu0 %v8732
    %v8896 = vpop.f32.mrf.mxu0
    %v8897 = vadd.f32 0.0, %v8896
    %8898 = vmatmul.f32.gmra.mxu0 %v8733
    %v8899 = vpop.f32.mrf.mxu0
    %v8900 = vadd.f32 0.0, %v8899
    %8901 = vmatmul.f32.gmra.mxu0 %v8734
    %v8902 = vpop.f32.mrf.mxu0
    %v8903 = vadd.f32 0.0, %v8902
    %8904 = vmatmul.f32.gmra.mxu0 %v8735
    %v8905 = vpop.f32.mrf.mxu0
    %v8906 = vadd.f32 0.0, %v8905
    %8907 = vmatmul.f32.gmra.mxu0 %v8736
    %v8908 = vpop.f32.mrf.mxu0
    %v8909 = vadd.f32 0.0, %v8908
    %8910 = vmatmul.f32.gmra.mxu0 %v8737
    %v8911 = vpop.f32.mrf.mxu0
    %v8912 = vadd.f32 0.0, %v8911
    %8913 = vmatmul.f32.gmra.mxu0 %v8738
    %v8914 = vpop.f32.mrf.mxu0
    %v8915 = vadd.f32 0.0, %v8914
    %8916 = vmatmul.f32.gmra.mxu0 %v8739
    %v8917 = vpop.f32.mrf.mxu0
    %v8918 = vadd.f32 0.0, %v8917
    %8919 = vmatmul.f32.gmra.mxu0 %v8740
    %v8920 = vpop.f32.mrf.mxu0
    %v8921 = vadd.f32 0.0, %v8920
    %8922 = vmatmul.f32.gmra.mxu0 %v8741
    %v8923 = vpop.f32.mrf.mxu0
    %v8924 = vadd.f32 0.0, %v8923
    %8925 = vmatmul.f32.gmra.mxu0 %v8742
    %v8926 = vpop.f32.mrf.mxu0
    %v8927 = vadd.f32 0.0, %v8926
    %8928 = vmatmul.f32.gmra.mxu0 %v8743
    %v8929 = vpop.f32.mrf.mxu0
    %v8930 = vadd.f32 0.0, %v8929
    %8931 = vmatmul.f32.gmra.mxu0 %v8744
    %v8932 = vpop.f32.mrf.mxu0
    %v8933 = vadd.f32 0.0, %v8932
    %8934 = vmatmul.f32.gmra.mxu0 %v8745
    %v8935 = vpop.f32.mrf.mxu0
    %v8936 = vadd.f32 0.0, %v8935
    %8937 = vmatmul.f32.gmra.mxu0 %v8746
    %v8938 = vpop.f32.mrf.mxu0
    %v8939 = vadd.f32 0.0, %v8938
    %8940 = vmatmul.f32.gmra.mxu0 %v8747
    %v8941 = vpop.f32.mrf.mxu0
    %v8942 = vadd.f32 0.0, %v8941
    %8943 = vmatmul.f32.gmra.mxu0 %v8748
    %v8944 = vpop.f32.mrf.mxu0
    %v8945 = vadd.f32 0.0, %v8944
    %8946 = vmatmul.f32.gmra.mxu0 %v8749
    %v8947 = vpop.f32.mrf.mxu0
    %v8948 = vadd.f32 0.0, %v8947
    %8949 = vmatmul.f32.gmra.mxu0 %v8750
    %v8950 = vpop.f32.mrf.mxu0
    %v8951 = vadd.f32 0.0, %v8950
    %8952 = vmatmul.f32.gmra.mxu0 %v8751
    %v8953 = vpop.f32.mrf.mxu0
    %v8954 = vadd.f32 0.0, %v8953
    %8955 = vmatmul.f32.gmra.mxu0 %v8752
    %v8956 = vpop.f32.mrf.mxu0
    %v8957 = vadd.f32 0.0, %v8956
    %8958 = vmatmul.f32.gmra.mxu0 %v8753
    %v8959 = vpop.f32.mrf.mxu0
    %v8960 = vadd.f32 0.0, %v8959
    %8961 = vmatmul.f32.gmra.mxu0 %v8754
    %v8962 = vpop.f32.mrf.mxu0
    %v8963 = vadd.f32 0.0, %v8962
    %8964 = vmatmul.f32.gmra.mxu0 %v8755
    %v8965 = vpop.f32.mrf.mxu0
    %v8966 = vadd.f32 0.0, %v8965
    %8967 = vmatmul.f32.gmra.mxu0 %v8756
    %v8968 = vpop.f32.mrf.mxu0
    %v8969 = vadd.f32 0.0, %v8968
    %8970 = vmatmul.f32.gmra.mxu0 %v8757
    %v8971 = vpop.f32.mrf.mxu0
    %v8972 = vadd.f32 0.0, %v8971
    %8973 = vmatmul.f32.gmra.mxu0 %v8758
    %v8974 = vpop.f32.mrf.mxu0
    %v8975 = vadd.f32 0.0, %v8974
    %8976 = vmatmul.f32.gmra.mxu0 %v8759
    %v8977 = vpop.f32.mrf.mxu0
    %v8978 = vadd.f32 0.0, %v8977
    %8979 = vmatmul.f32.gmra.mxu0 %v8760
    %v8980 = vpop.f32.mrf.mxu0
    %v8981 = vadd.f32 0.0, %v8980
    %8982 = vmatmul.f32.gmra.mxu0 %v8761
    %v8983 = vpop.f32.mrf.mxu0
    %v8984 = vadd.f32 0.0, %v8983
    %8985 = vmatmul.f32.gmra.mxu0 %v8762
    %v8986 = vpop.f32.mrf.mxu0
    %v8987 = vadd.f32 0.0, %v8986
    %8988 = vdwg.mxu0
    %v8989 = vld [vmem:[#allocation3] sm:$0xff]
    %v8990 = vld [vmem:[#allocation3 + $0x8] sm:$0xff]
    %v8991 = vld [vmem:[#allocation3 + $0x10] sm:$0xff]
    %v8992 = vld [vmem:[#allocation3 + $0x18] sm:$0xff]
    %v8993 = vld [vmem:[#allocation3 + $0x20] sm:$0xff]
    %v8994 = vld [vmem:[#allocation3 + $0x28] sm:$0xff]
    %v8995 = vld [vmem:[#allocation3 + $0x30] sm:$0xff]
    %v8996 = vld [vmem:[#allocation3 + $0x38] sm:$0xff]
    %v8997 = vld [vmem:[#allocation3 + $0x40] sm:$0xff]
    %v8998 = vld [vmem:[#allocation3 + $0x48] sm:$0xff]
    %v8999 = vld [vmem:[#allocation3 + $0x50] sm:$0xff]
    %v9000 = vld [vmem:[#allocation3 + $0x58] sm:$0xff]
    %v9001 = vld [vmem:[#allocation3 + $0x60] sm:$0xff]
    %v9002 = vld [vmem:[#allocation3 + $0x68] sm:$0xff]
    %v9003 = vld [vmem:[#allocation3 + $0x70] sm:$0xff]
    %v9004 = vld [vmem:[#allocation3 + $0x78] sm:$0xff]
    %v9005 = vld [vmem:[#allocation3 + $0x80] sm:$0xff]
    %v9006 = vld [vmem:[#allocation3 + $0x88] sm:$0xff]
    %v9007 = vld [vmem:[#allocation3 + $0x90] sm:$0xff]
    %v9008 = vld [vmem:[#allocation3 + $0x98] sm:$0xff]
    %v9009 = vld [vmem:[#allocation3 + $0xa0] sm:$0xff]
    %v9010 = vld [vmem:[#allocation3 + $0xa8] sm:$0xff]
    %v9011 = vld [vmem:[#allocation3 + $0xb0] sm:$0xff]
    %v9012 = vld [vmem:[#allocation3 + $0xb8] sm:$0xff]
    %v9013 = vld [vmem:[#allocation3 + $0xc0] sm:$0xff]
    %v9014 = vld [vmem:[#allocation3 + $0xc8] sm:$0xff]
    %v9015 = vld [vmem:[#allocation3 + $0xd0] sm:$0xff]
    %v9016 = vld [vmem:[#allocation3 + $0xd8] sm:$0xff]
    %v9017 = vld [vmem:[#allocation3 + $0xe0] sm:$0xff]
    %v9018 = vld [vmem:[#allocation3 + $0xe8] sm:$0xff]
    %v9019 = vld [vmem:[#allocation3 + $0xf0] sm:$0xff]
    %v9020 = vld [vmem:[#allocation3 + $0xf8] sm:$0xff]
    %v9021 = vld [vmem:[#allocation3 + $0x100] sm:$0xff]
    %v9022 = vld [vmem:[#allocation3 + $0x108] sm:$0xff]
    %v9023 = vld [vmem:[#allocation3 + $0x110] sm:$0xff]
    %v9024 = vld [vmem:[#allocation3 + $0x118] sm:$0xff]
    %v9025 = vld [vmem:[#allocation3 + $0x120] sm:$0xff]
    %v9026 = vld [vmem:[#allocation3 + $0x128] sm:$0xff]
    %v9027 = vld [vmem:[#allocation3 + $0x130] sm:$0xff]
    %v9028 = vld [vmem:[#allocation3 + $0x138] sm:$0xff]
    %v9029 = vld [vmem:[#allocation3 + $0x140] sm:$0xff]
    %v9030 = vld [vmem:[#allocation3 + $0x148] sm:$0xff]
    %v9031 = vld [vmem:[#allocation3 + $0x150] sm:$0xff]
    %v9032 = vld [vmem:[#allocation3 + $0x158] sm:$0xff]
    %v9033 = vld [vmem:[#allocation3 + $0x160] sm:$0xff]
    %v9034 = vld [vmem:[#allocation3 + $0x168] sm:$0xff]
    %v9035 = vld [vmem:[#allocation3 + $0x170] sm:$0xff]
    %v9036 = vld [vmem:[#allocation3 + $0x178] sm:$0xff]
    %v9037 = vld [vmem:[#allocation3 + $0x180] sm:$0xff]
    %v9038 = vld [vmem:[#allocation3 + $0x188] sm:$0xff]
    %v9039 = vld [vmem:[#allocation3 + $0x190] sm:$0xff]
    %v9040 = vld [vmem:[#allocation3 + $0x198] sm:$0xff]
    %v9041 = vld [vmem:[#allocation3 + $0x1a0] sm:$0xff]
    %v9042 = vld [vmem:[#allocation3 + $0x1a8] sm:$0xff]
    %v9043 = vld [vmem:[#allocation3 + $0x1b0] sm:$0xff]
    %v9044 = vld [vmem:[#allocation3 + $0x1b8] sm:$0xff]
    %v9045 = vld [vmem:[#allocation3 + $0x1c0] sm:$0xff]
    %v9046 = vld [vmem:[#allocation3 + $0x1c8] sm:$0xff]
    %v9047 = vld [vmem:[#allocation3 + $0x1d0] sm:$0xff]
    %v9048 = vld [vmem:[#allocation3 + $0x1d8] sm:$0xff]
    %v9049 = vld [vmem:[#allocation3 + $0x1e0] sm:$0xff]
    %v9050 = vld [vmem:[#allocation3 + $0x1e8] sm:$0xff]
    %v9051 = vld [vmem:[#allocation3 + $0x1f0] sm:$0xff]
    %v9052 = vld [vmem:[#allocation3 + $0x1f8] sm:$0xff]
    %v9053 = vadd.f32 %v8989, %v8798
    %v9054 = vadd.f32 %v8990, %v8801
    %v9055 = vadd.f32 %v8991, %v8804
    %v9056 = vadd.f32 %v8992, %v8807
    %v9057 = vadd.f32 %v8993, %v8810
    %v9058 = vadd.f32 %v8994, %v8813
    %v9059 = vadd.f32 %v8995, %v8816
    %v9060 = vadd.f32 %v8996, %v8819
    %v9061 = vadd.f32 %v8997, %v8822
    %v9062 = vadd.f32 %v8998, %v8825
    %v9063 = vadd.f32 %v8999, %v8828
    %v9064 = vadd.f32 %v9000, %v8831
    %v9065 = vadd.f32 %v9001, %v8834
    %v9066 = vadd.f32 %v9002, %v8837
    %v9067 = vadd.f32 %v9003, %v8840
    %v9068 = vadd.f32 %v9004, %v8843
    %v9069 = vadd.f32 %v9005, %v8846
    %v9070 = vadd.f32 %v9006, %v8849
    %v9071 = vadd.f32 %v9007, %v8852
    %v9072 = vadd.f32 %v9008, %v8855
    %v9073 = vadd.f32 %v9009, %v8858
    %v9074 = vadd.f32 %v9010, %v8861
    %v9075 = vadd.f32 %v9011, %v8864
    %v9076 = vadd.f32 %v9012, %v8867
    %v9077 = vadd.f32 %v9013, %v8870
    %v9078 = vadd.f32 %v9014, %v8873
    %v9079 = vadd.f32 %v9015, %v8876
    %v9080 = vadd.f32 %v9016, %v8879
    %v9081 = vadd.f32 %v9017, %v8882
    %v9082 = vadd.f32 %v9018, %v8885
    %v9083 = vadd.f32 %v9019, %v8888
    %v9084 = vadd.f32 %v9020, %v8891
    %v9085 = vadd.f32 %v9021, %v8894
    %v9086 = vadd.f32 %v9022, %v8897
    %v9087 = vadd.f32 %v9023, %v8900
    %v9088 = vadd.f32 %v9024, %v8903
    %v9089 = vadd.f32 %v9025, %v8906
    %v9090 = vadd.f32 %v9026, %v8909
    %v9091 = vadd.f32 %v9027, %v8912
    %v9092 = vadd.f32 %v9028, %v8915
    %v9093 = vadd.f32 %v9029, %v8918
    %v9094 = vadd.f32 %v9030, %v8921
    %v9095 = vadd.f32 %v9031, %v8924
    %v9096 = vadd.f32 %v9032, %v8927
    %v9097 = vadd.f32 %v9033, %v8930
    %v9098 = vadd.f32 %v9034, %v8933
    %v9099 = vadd.f32 %v9035, %v8936
    %v9100 = vadd.f32 %v9036, %v8939
    %v9101 = vadd.f32 %v9037, %v8942
    %v9102 = vadd.f32 %v9038, %v8945
    %v9103 = vadd.f32 %v9039, %v8948
    %v9104 = vadd.f32 %v9040, %v8951
    %v9105 = vadd.f32 %v9041, %v8954
    %v9106 = vadd.f32 %v9042, %v8957
    %v9107 = vadd.f32 %v9043, %v8960
    %v9108 = vadd.f32 %v9044, %v8963
    %v9109 = vadd.f32 %v9045, %v8966
    %v9110 = vadd.f32 %v9046, %v8969
    %v9111 = vadd.f32 %v9047, %v8972
    %v9112 = vadd.f32 %v9048, %v8975
    %v9113 = vadd.f32 %v9049, %v8978
    %v9114 = vadd.f32 %v9050, %v8981
    %v9115 = vadd.f32 %v9051, %v8984
    %v9116 = vadd.f32 %v9052, %v8987
    %9117 = vst [vmem:[#allocation3] sm:$0xff] %v9053
    %9118 = vst [vmem:[#allocation3 + $0x8] sm:$0xff] %v9054
    %9119 = vst [vmem:[#allocation3 + $0x10] sm:$0xff] %v9055
    %9120 = vst [vmem:[#allocation3 + $0x18] sm:$0xff] %v9056
    %9121 = vst [vmem:[#allocation3 + $0x20] sm:$0xff] %v9057
    %9122 = vst [vmem:[#allocation3 + $0x28] sm:$0xff] %v9058
    %9123 = vst [vmem:[#allocation3 + $0x30] sm:$0xff] %v9059
    %9124 = vst [vmem:[#allocation3 + $0x38] sm:$0xff] %v9060
    %9125 = vst [vmem:[#allocation3 + $0x40] sm:$0xff] %v9061
    %9126 = vst [vmem:[#allocation3 + $0x48] sm:$0xff] %v9062
    %9127 = vst [vmem:[#allocation3 + $0x50] sm:$0xff] %v9063
    %9128 = vst [vmem:[#allocation3 + $0x58] sm:$0xff] %v9064
    %9129 = vst [vmem:[#allocation3 + $0x60] sm:$0xff] %v9065
    %9130 = vst [vmem:[#allocation3 + $0x68] sm:$0xff] %v9066
    %9131 = vst [vmem:[#allocation3 + $0x70] sm:$0xff] %v9067
    %9132 = vst [vmem:[#allocation3 + $0x78] sm:$0xff] %v9068
    %9133 = vst [vmem:[#allocation3 + $0x80] sm:$0xff] %v9069
    %9134 = vst [vmem:[#allocation3 + $0x88] sm:$0xff] %v9070
    %9135 = vst [vmem:[#allocation3 + $0x90] sm:$0xff] %v9071
    %9136 = vst [vmem:[#allocation3 + $0x98] sm:$0xff] %v9072
    %9137 = vst [vmem:[#allocation3 + $0xa0] sm:$0xff] %v9073
    %9138 = vst [vmem:[#allocation3 + $0xa8] sm:$0xff] %v9074
    %9139 = vst [vmem:[#allocation3 + $0xb0] sm:$0xff] %v9075
    %9140 = vst [vmem:[#allocation3 + $0xb8] sm:$0xff] %v9076
    %9141 = vst [vmem:[#allocation3 + $0xc0] sm:$0xff] %v9077
    %9142 = vst [vmem:[#allocation3 + $0xc8] sm:$0xff] %v9078
    %9143 = vst [vmem:[#allocation3 + $0xd0] sm:$0xff] %v9079
    %9144 = vst [vmem:[#allocation3 + $0xd8] sm:$0xff] %v9080
    %9145 = vst [vmem:[#allocation3 + $0xe0] sm:$0xff] %v9081
    %9146 = vst [vmem:[#allocation3 + $0xe8] sm:$0xff] %v9082
    %9147 = vst [vmem:[#allocation3 + $0xf0] sm:$0xff] %v9083
    %9148 = vst [vmem:[#allocation3 + $0xf8] sm:$0xff] %v9084
    %9149 = vst [vmem:[#allocation3 + $0x100] sm:$0xff] %v9085
    %9150 = vst [vmem:[#allocation3 + $0x108] sm:$0xff] %v9086
    %9151 = vst [vmem:[#allocation3 + $0x110] sm:$0xff] %v9087
    %9152 = vst [vmem:[#allocation3 + $0x118] sm:$0xff] %v9088
    %9153 = vst [vmem:[#allocation3 + $0x120] sm:$0xff] %v9089
    %9154 = vst [vmem:[#allocation3 + $0x128] sm:$0xff] %v9090
    %9155 = vst [vmem:[#allocation3 + $0x130] sm:$0xff] %v9091
    %9156 = vst [vmem:[#allocation3 + $0x138] sm:$0xff] %v9092
    %9157 = vst [vmem:[#allocation3 + $0x140] sm:$0xff] %v9093
    %9158 = vst [vmem:[#allocation3 + $0x148] sm:$0xff] %v9094
    %9159 = vst [vmem:[#allocation3 + $0x150] sm:$0xff] %v9095
    %9160 = vst [vmem:[#allocation3 + $0x158] sm:$0xff] %v9096
    %9161 = vst [vmem:[#allocation3 + $0x160] sm:$0xff] %v9097
    %9162 = vst [vmem:[#allocation3 + $0x168] sm:$0xff] %v9098
    %9163 = vst [vmem:[#allocation3 + $0x170] sm:$0xff] %v9099
    %9164 = vst [vmem:[#allocation3 + $0x178] sm:$0xff] %v9100
    %9165 = vst [vmem:[#allocation3 + $0x180] sm:$0xff] %v9101
    %9166 = vst [vmem:[#allocation3 + $0x188] sm:$0xff] %v9102
    %9167 = vst [vmem:[#allocation3 + $0x190] sm:$0xff] %v9103
    %9168 = vst [vmem:[#allocation3 + $0x198] sm:$0xff] %v9104
    %9169 = vst [vmem:[#allocation3 + $0x1a0] sm:$0xff] %v9105
    %9170 = vst [vmem:[#allocation3 + $0x1a8] sm:$0xff] %v9106
    %9171 = vst [vmem:[#allocation3 + $0x1b0] sm:$0xff] %v9107
    %9172 = vst [vmem:[#allocation3 + $0x1b8] sm:$0xff] %v9108
    %9173 = vst [vmem:[#allocation3 + $0x1c0] sm:$0xff] %v9109
    %9174 = vst [vmem:[#allocation3 + $0x1c8] sm:$0xff] %v9110
    %9175 = vst [vmem:[#allocation3 + $0x1d0] sm:$0xff] %v9111
    %9176 = vst [vmem:[#allocation3 + $0x1d8] sm:$0xff] %v9112
    %9177 = vst [vmem:[#allocation3 + $0x1e0] sm:$0xff] %v9113
    %9178 = vst [vmem:[#allocation3 + $0x1e8] sm:$0xff] %v9114
    %9179 = vst [vmem:[#allocation3 + $0x1f0] sm:$0xff] %v9115
    %9180 = vst [vmem:[#allocation3 + $0x1f8] sm:$0xff] %v9116
    %v9181 = vld [vmem:[#allocation3] sm:$0xff]
    %v9182 = vld [vmem:[#allocation3 + $0x8] sm:$0xff]
    %v9183 = vld [vmem:[#allocation3 + $0x10] sm:$0xff]
    %v9184 = vld [vmem:[#allocation3 + $0x18] sm:$0xff]
    %v9185 = vld [vmem:[#allocation3 + $0x20] sm:$0xff]
    %v9186 = vld [vmem:[#allocation3 + $0x28] sm:$0xff]
    %v9187 = vld [vmem:[#allocation3 + $0x30] sm:$0xff]
    %v9188 = vld [vmem:[#allocation3 + $0x38] sm:$0xff]
    %v9189 = vld [vmem:[#allocation3 + $0x40] sm:$0xff]
    %v9190 = vld [vmem:[#allocation3 + $0x48] sm:$0xff]
    %v9191 = vld [vmem:[#allocation3 + $0x50] sm:$0xff]
    %v9192 = vld [vmem:[#allocation3 + $0x58] sm:$0xff]
    %v9193 = vld [vmem:[#allocation3 + $0x60] sm:$0xff]
    %v9194 = vld [vmem:[#allocation3 + $0x68] sm:$0xff]
    %v9195 = vld [vmem:[#allocation3 + $0x70] sm:$0xff]
    %v9196 = vld [vmem:[#allocation3 + $0x78] sm:$0xff]
    %v9197 = vld [vmem:[#allocation3 + $0x80] sm:$0xff]
    %v9198 = vld [vmem:[#allocation3 + $0x88] sm:$0xff]
    %v9199 = vld [vmem:[#allocation3 + $0x90] sm:$0xff]
    %v9200 = vld [vmem:[#allocation3 + $0x98] sm:$0xff]
    %v9201 = vld [vmem:[#allocation3 + $0xa0] sm:$0xff]
    %v9202 = vld [vmem:[#allocation3 + $0xa8] sm:$0xff]
    %v9203 = vld [vmem:[#allocation3 + $0xb0] sm:$0xff]
    %v9204 = vld [vmem:[#allocation3 + $0xb8] sm:$0xff]
    %v9205 = vld [vmem:[#allocation3 + $0xc0] sm:$0xff]
    %v9206 = vld [vmem:[#allocation3 + $0xc8] sm:$0xff]
    %v9207 = vld [vmem:[#allocation3 + $0xd0] sm:$0xff]
    %v9208 = vld [vmem:[#allocation3 + $0xd8] sm:$0xff]
    %v9209 = vld [vmem:[#allocation3 + $0xe0] sm:$0xff]
    %v9210 = vld [vmem:[#allocation3 + $0xe8] sm:$0xff]
    %v9211 = vld [vmem:[#allocation3 + $0xf0] sm:$0xff]
    %v9212 = vld [vmem:[#allocation3 + $0xf8] sm:$0xff]
    %v9213 = vld [vmem:[#allocation3 + $0x100] sm:$0xff]
    %v9214 = vld [vmem:[#allocation3 + $0x108] sm:$0xff]
    %v9215 = vld [vmem:[#allocation3 + $0x110] sm:$0xff]
    %v9216 = vld [vmem:[#allocation3 + $0x118] sm:$0xff]
    %v9217 = vld [vmem:[#allocation3 + $0x120] sm:$0xff]
    %v9218 = vld [vmem:[#allocation3 + $0x128] sm:$0xff]
    %v9219 = vld [vmem:[#allocation3 + $0x130] sm:$0xff]
    %v9220 = vld [vmem:[#allocation3 + $0x138] sm:$0xff]
    %v9221 = vld [vmem:[#allocation3 + $0x140] sm:$0xff]
    %v9222 = vld [vmem:[#allocation3 + $0x148] sm:$0xff]
    %v9223 = vld [vmem:[#allocation3 + $0x150] sm:$0xff]
    %v9224 = vld [vmem:[#allocation3 + $0x158] sm:$0xff]
    %v9225 = vld [vmem:[#allocation3 + $0x160] sm:$0xff]
    %v9226 = vld [vmem:[#allocation3 + $0x168] sm:$0xff]
    %v9227 = vld [vmem:[#allocation3 + $0x170] sm:$0xff]
    %v9228 = vld [vmem:[#allocation3 + $0x178] sm:$0xff]
    %v9229 = vld [vmem:[#allocation3 + $0x180] sm:$0xff]
    %v9230 = vld [vmem:[#allocation3 + $0x188] sm:$0xff]
    %v9231 = vld [vmem:[#allocation3 + $0x190] sm:$0xff]
    %v9232 = vld [vmem:[#allocation3 + $0x198] sm:$0xff]
    %v9233 = vld [vmem:[#allocation3 + $0x1a0] sm:$0xff]
    %v9234 = vld [vmem:[#allocation3 + $0x1a8] sm:$0xff]
    %v9235 = vld [vmem:[#allocation3 + $0x1b0] sm:$0xff]
    %v9236 = vld [vmem:[#allocation3 + $0x1b8] sm:$0xff]
    %v9237 = vld [vmem:[#allocation3 + $0x1c0] sm:$0xff]
    %v9238 = vld [vmem:[#allocation3 + $0x1c8] sm:$0xff]
    %v9239 = vld [vmem:[#allocation3 + $0x1d0] sm:$0xff]
    %v9240 = vld [vmem:[#allocation3 + $0x1d8] sm:$0xff]
    %v9241 = vld [vmem:[#allocation3 + $0x1e0] sm:$0xff]
    %v9242 = vld [vmem:[#allocation3 + $0x1e8] sm:$0xff]
    %v9243 = vld [vmem:[#allocation3 + $0x1f0] sm:$0xff]
    %v9244 = vld [vmem:[#allocation3 + $0x1f8] sm:$0xff]
    %v9245 = vadd.f32 %v9181, %v9182
    %v9246 = vadd.f32 %v9245, %v9183
    %v9247 = vadd.f32 %v9246, %v9184
    %v9248 = vadd.f32 %v9247, %v9185
    %v9249 = vadd.f32 %v9248, %v9186
    %v9250 = vadd.f32 %v9249, %v9187
    %v9251 = vadd.f32 %v9250, %v9188
    %v9252 = vadd.f32 %v9251, %v9189
    %v9253 = vadd.f32 %v9252, %v9190
    %v9254 = vadd.f32 %v9253, %v9191
    %v9255 = vadd.f32 %v9254, %v9192
    %v9256 = vadd.f32 %v9255, %v9193
    %v9257 = vadd.f32 %v9256, %v9194
    %v9258 = vadd.f32 %v9257, %v9195
    %v9259 = vadd.f32 %v9258, %v9196
    %v9260 = vadd.f32 %v9259, %v9197
    %v9261 = vadd.f32 %v9260, %v9198
    %v9262 = vadd.f32 %v9261, %v9199
    %v9263 = vadd.f32 %v9262, %v9200
    %v9264 = vadd.f32 %v9263, %v9201
    %v9265 = vadd.f32 %v9264, %v9202
    %v9266 = vadd.f32 %v9265, %v9203
    %v9267 = vadd.f32 %v9266, %v9204
    %v9268 = vadd.f32 %v9267, %v9205
    %v9269 = vadd.f32 %v9268, %v9206
    %v9270 = vadd.f32 %v9269, %v9207
    %v9271 = vadd.f32 %v9270, %v9208
    %v9272 = vadd.f32 %v9271, %v9209
    %v9273 = vadd.f32 %v9272, %v9210
    %v9274 = vadd.f32 %v9273, %v9211
    %v9275 = vadd.f32 %v9274, %v9212
    %v9276 = vadd.f32 %v9275, %v9213
    %v9277 = vadd.f32 %v9276, %v9214
    %v9278 = vadd.f32 %v9277, %v9215
    %v9279 = vadd.f32 %v9278, %v9216
    %v9280 = vadd.f32 %v9279, %v9217
    %v9281 = vadd.f32 %v9280, %v9218
    %v9282 = vadd.f32 %v9281, %v9219
    %v9283 = vadd.f32 %v9282, %v9220
    %v9284 = vadd.f32 %v9283, %v9221
    %v9285 = vadd.f32 %v9284, %v9222
    %v9286 = vadd.f32 %v9285, %v9223
    %v9287 = vadd.f32 %v9286, %v9224
    %v9288 = vadd.f32 %v9287, %v9225
    %v9289 = vadd.f32 %v9288, %v9226
    %v9290 = vadd.f32 %v9289, %v9227
    %v9291 = vadd.f32 %v9290, %v9228
    %v9292 = vadd.f32 %v9291, %v9229
    %v9293 = vadd.f32 %v9292, %v9230
    %v9294 = vadd.f32 %v9293, %v9231
    %v9295 = vadd.f32 %v9294, %v9232
    %v9296 = vadd.f32 %v9295, %v9233
    %v9297 = vadd.f32 %v9296, %v9234
    %v9298 = vadd.f32 %v9297, %v9235
    %v9299 = vadd.f32 %v9298, %v9236
    %v9300 = vadd.f32 %v9299, %v9237
    %v9301 = vadd.f32 %v9300, %v9238
    %v9302 = vadd.f32 %v9301, %v9239
    %v9303 = vadd.f32 %v9302, %v9240
    %v9304 = vadd.f32 %v9303, %v9241
    %v9305 = vadd.f32 %v9304, %v9242
    %v9306 = vadd.f32 %v9305, %v9243
    %v9307 = vadd.f32 %v9306, %v9244
    %v9308 = vrot.slane %v9307, 4
    %v9309 = vadd.f32 %v9307, %v9308
    %v9310 = vrot.slane %v9309, 2
    %v9311 = vadd.f32 %v9309, %v9310
    %v9312 = vrot.slane %v9311, 1
    %v9313 = vadd.f32 %v9311, %v9312
    %v9314 = vmul.f32 %v9313, 0.001953125
    %v9315 = vsub.f32 %v9181, %v9314
    %v9316 = vsub.f32 %v9182, %v9314
    %v9317 = vsub.f32 %v9183, %v9314
    %v9318 = vsub.f32 %v9184, %v9314
    %v9319 = vsub.f32 %v9185, %v9314
    %v9320 = vsub.f32 %v9186, %v9314
    %v9321 = vsub.f32 %v9187, %v9314
    %v9322 = vsub.f32 %v9188, %v9314
    %v9323 = vsub.f32 %v9189, %v9314
    %v9324 = vsub.f32 %v9190, %v9314
    %v9325 = vsub.f32 %v9191, %v9314
    %v9326 = vsub.f32 %v9192, %v9314
    %v9327 = vsub.f32 %v9193, %v9314
    %v9328 = vsub.f32 %v9194, %v9314
    %v9329 = vsub.f32 %v9195, %v9314
    %v9330 = vsub.f32 %v9196, %v9314
    %v9331 = vsub.f32 %v9197, %v9314
    %v9332 = vsub.f32 %v9198, %v9314
    %v9333 = vsub.f32 %v9199, %v9314
    %v9334 = vsub.f32 %v9200, %v9314
    %v9335 = vsub.f32 %v9201, %v9314
    %v9336 = vsub.f32 %v9202, %v9314
    %v9337 = vsub.f32 %v9203, %v9314
    %v9338 = vsub.f32 %v9204, %v9314
    %v9339 = vsub.f32 %v9205, %v9314
    %v9340 = vsub.f32 %v9206, %v9314
    %v9341 = vsub.f32 %v9207, %v9314
    %v9342 = vsub.f32 %v9208, %v9314
    %v9343 = vsub.f32 %v9209, %v9314
    %v9344 = vsub.f32 %v9210, %v9314
    %v9345 = vsub.f32 %v9211, %v9314
    %v9346 = vsub.f32 %v9212, %v9314
    %v9347 = vsub.f32 %v9213, %v9314
    %v9348 = vsub.f32 %v9214, %v9314
    %v9349 = vsub.f32 %v9215, %v9314
    %v9350 = vsub.f32 %v9216, %v9314
    %v9351 = vsub.f32 %v9217, %v9314
    %v9352 = vsub.f32 %v9218, %v9314
    %v9353 = vsub.f32 %v9219, %v9314
    %v9354 = vsub.f32 %v9220, %v9314
    %v9355 = vsub.f32 %v9221, %v9314
    %v9356 = vsub.f32 %v9222, %v9314
    %v9357 = vsub.f32 %v9223, %v9314
    %v9358 = vsub.f32 %v9224, %v9314
    %v9359 = vsub.f32 %v9225, %v9314
    %v9360 = vsub.f32 %v9226, %v9314
    %v9361 = vsub.f32 %v9227, %v9314
    %v9362 = vsub.f32 %v9228, %v9314
    %v9363 = vsub.f32 %v9229, %v9314
    %v9364 = vsub.f32 %v9230, %v9314
    %v9365 = vsub.f32 %v9231, %v9314
    %v9366 = vsub.f32 %v9232, %v9314
    %v9367 = vsub.f32 %v9233, %v9314
    %v9368 = vsub.f32 %v9234, %v9314
    %v9369 = vsub.f32 %v9235, %v9314
    %v9370 = vsub.f32 %v9236, %v9314
    %v9371 = vsub.f32 %v9237, %v9314
    %v9372 = vsub.f32 %v9238, %v9314
    %v9373 = vsub.f32 %v9239, %v9314
    %v9374 = vsub.f32 %v9240, %v9314
    %v9375 = vsub.f32 %v9241, %v9314
    %v9376 = vsub.f32 %v9242, %v9314
    %v9377 = vsub.f32 %v9243, %v9314
    %v9378 = vsub.f32 %v9244, %v9314
    %v9379 = vmul.f32 %v9315, %v9315
    %v9380 = vmul.f32 %v9316, %v9316
    %v9381 = vmul.f32 %v9317, %v9317
    %v9382 = vmul.f32 %v9318, %v9318
    %v9383 = vmul.f32 %v9319, %v9319
    %v9384 = vmul.f32 %v9320, %v9320
    %v9385 = vmul.f32 %v9321, %v9321
    %v9386 = vmul.f32 %v9322, %v9322
    %v9387 = vmul.f32 %v9323, %v9323
    %v9388 = vmul.f32 %v9324, %v9324
    %v9389 = vmul.f32 %v9325, %v9325
    %v9390 = vmul.f32 %v9326, %v9326
    %v9391 = vmul.f32 %v9327, %v9327
    %v9392 = vmul.f32 %v9328, %v9328
    %v9393 = vmul.f32 %v9329, %v9329
    %v9394 = vmul.f32 %v9330, %v9330
    %v9395 = vmul.f32 %v9331, %v9331
    %v9396 = vmul.f32 %v9332, %v9332
    %v9397 = vmul.f32 %v9333, %v9333
    %v9398 = vmul.f32 %v9334, %v9334
    %v9399 = vmul.f32 %v9335, %v9335
    %v9400 = vmul.f32 %v9336, %v9336
    %v9401 = vmul.f32 %v9337, %v9337
    %v9402 = vmul.f32 %v9338, %v9338
    %v9403 = vmul.f32 %v9339, %v9339
    %v9404 = vmul.f32 %v9340, %v9340
    %v9405 = vmul.f32 %v9341, %v9341
    %v9406 = vmul.f32 %v9342, %v9342
    %v9407 = vmul.f32 %v9343, %v9343
    %v9408 = vmul.f32 %v9344, %v9344
    %v9409 = vmul.f32 %v9345, %v9345
    %v9410 = vmul.f32 %v9346, %v9346
    %v9411 = vmul.f32 %v9347, %v9347
    %v9412 = vmul.f32 %v9348, %v9348
    %v9413 = vmul.f32 %v9349, %v9349
    %v9414 = vmul.f32 %v9350, %v9350
    %v9415 = vmul.f32 %v9351, %v9351
    %v9416 = vmul.f32 %v9352, %v9352
    %v9417 = vmul.f32 %v9353, %v9353
    %v9418 = vmul.f32 %v9354, %v9354
    %v9419 = vmul.f32 %v9355, %v9355
    %v9420 = vmul.f32 %v9356, %v9356
    %v9421 = vmul.f32 %v9357, %v9357
    %v9422 = vmul.f32 %v9358, %v9358
    %v9423 = vmul.f32 %v9359, %v9359
    %v9424 = vmul.f32 %v9360, %v9360
    %v9425 = vmul.f32 %v9361, %v9361
    %v9426 = vmul.f32 %v9362, %v9362
    %v9427 = vmul.f32 %v9363, %v9363
    %v9428 = vmul.f32 %v9364, %v9364
    %v9429 = vmul.f32 %v9365, %v9365
    %v9430 = vmul.f32 %v9366, %v9366
    %v9431 = vmul.f32 %v9367, %v9367
    %v9432 = vmul.f32 %v9368, %v9368
    %v9433 = vmul.f32 %v9369, %v9369
    %v9434 = vmul.f32 %v9370, %v9370
    %v9435 = vmul.f32 %v9371, %v9371
    %v9436 = vmul.f32 %v9372, %v9372
    %v9437 = vmul.f32 %v9373, %v9373
    %v9438 = vmul.f32 %v9374, %v9374
    %v9439 = vmul.f32 %v9375, %v9375
    %v9440 = vmul.f32 %v9376, %v9376
    %v9441 = vmul.f32 %v9377, %v9377
    %v9442 = vmul.f32 %v9378, %v9378
    %v9443 = vadd.f32 %v9379, %v9380
    %v9444 = vadd.f32 %v9443, %v9381
    %v9445 = vadd.f32 %v9444, %v9382
    %v9446 = vadd.f32 %v9445, %v9383
    %v9447 = vadd.f32 %v9446, %v9384
    %v9448 = vadd.f32 %v9447, %v9385
    %v9449 = vadd.f32 %v9448, %v9386
    %v9450 = vadd.f32 %v9449, %v9387
    %v9451 = vadd.f32 %v9450, %v9388
    %v9452 = vadd.f32 %v9451, %v9389
    %v9453 = vadd.f32 %v9452, %v9390
    %v9454 = vadd.f32 %v9453, %v9391
    %v9455 = vadd.f32 %v9454, %v9392
    %v9456 = vadd.f32 %v9455, %v9393
    %v9457 = vadd.f32 %v9456, %v9394
    %v9458 = vadd.f32 %v9457, %v9395
    %v9459 = vadd.f32 %v9458, %v9396
    %v9460 = vadd.f32 %v9459, %v9397
    %v9461 = vadd.f32 %v9460, %v9398
    %v9462 = vadd.f32 %v9461, %v9399
    %v9463 = vadd.f32 %v9462, %v9400
    %v9464 = vadd.f32 %v9463, %v9401
    %v9465 = vadd.f32 %v9464, %v9402
    %v9466 = vadd.f32 %v9465, %v9403
    %v9467 = vadd.f32 %v9466, %v9404
    %v9468 = vadd.f32 %v9467, %v9405
    %v9469 = vadd.f32 %v9468, %v9406
    %v9470 = vadd.f32 %v9469, %v9407
    %v9471 = vadd.f32 %v9470, %v9408
    %v9472 = vadd.f32 %v9471, %v9409
    %v9473 = vadd.f32 %v9472, %v9410
    %v9474 = vadd.f32 %v9473, %v9411
    %v9475 = vadd.f32 %v9474, %v9412
    %v9476 = vadd.f32 %v9475, %v9413
    %v9477 = vadd.f32 %v9476, %v9414
    %v9478 = vadd.f32 %v9477, %v9415
    %v9479 = vadd.f32 %v9478, %v9416
    %v9480 = vadd.f32 %v9479, %v9417
    %v9481 = vadd.f32 %v9480, %v9418
    %v9482 = vadd.f32 %v9481, %v9419
    %v9483 = vadd.f32 %v9482, %v9420
    %v9484 = vadd.f32 %v9483, %v9421
    %v9485 = vadd.f32 %v9484, %v9422
    %v9486 = vadd.f32 %v9485, %v9423
    %v9487 = vadd.f32 %v9486, %v9424
    %v9488 = vadd.f32 %v9487, %v9425
    %v9489 = vadd.f32 %v9488, %v9426
    %v9490 = vadd.f32 %v9489, %v9427
    %v9491 = vadd.f32 %v9490, %v9428
    %v9492 = vadd.f32 %v9491, %v9429
    %v9493 = vadd.f32 %v9492, %v9430
    %v9494 = vadd.f32 %v9493, %v9431
    %v9495 = vadd.f32 %v9494, %v9432
    %v9496 = vadd.f32 %v9495, %v9433
    %v9497 = vadd.f32 %v9496, %v9434
    %v9498 = vadd.f32 %v9497, %v9435
    %v9499 = vadd.f32 %v9498, %v9436
    %v9500 = vadd.f32 %v9499, %v9437
    %v9501 = vadd.f32 %v9500, %v9438
    %v9502 = vadd.f32 %v9501, %v9439
    %v9503 = vadd.f32 %v9502, %v9440
    %v9504 = vadd.f32 %v9503, %v9441
    %v9505 = vadd.f32 %v9504, %v9442
    %v9506 = vrot.slane %v9505, 4
    %v9507 = vadd.f32 %v9505, %v9506
    %v9508 = vrot.slane %v9507, 2
    %v9509 = vadd.f32 %v9507, %v9508
    %v9510 = vrot.slane %v9509, 1
    %v9511 = vadd.f32 %v9509, %v9510
    %v9512 = vmul.f32 %v9511, 0.001953125
    %v9513 = vld [vmem:[%s5] sm:$0x1]
    %v9514 = vadd.f32 %v9512, 1e-05
    %v9515 = vrsqrt.pop %v9514
    %v9516 = vmul.f32 %v9515, %v9514
    %v9517 = vmul.f32 %v9516, %v9515
    %v9518 = vmul.f32 0.5, %v9517
    %v9519 = vsub.f32 1.5, %v9518
    %v9520 = vmul.f32 %v9515, %v9519
    %vm9521 = vweird.f32 %v9514
    %vm9522 = vweird.f32 %v9515
    %vm9523 = vmor %vm9521, %vm9522
    %v9524 = vsel %vm9523, %v9515, %v9520
    %v9525 = vmul.f32 %v9513, %v9524
    %v9527 = vperm.slane %v9525, 0
    %v9529 = vmul.f32 %v9315, %v9527
    %v9530 = vmul.f32 %v9316, %v9527
    %v9531 = vmul.f32 %v9317, %v9527
    %v9532 = vmul.f32 %v9318, %v9527
    %v9533 = vmul.f32 %v9319, %v9527
    %v9534 = vmul.f32 %v9320, %v9527
    %v9535 = vmul.f32 %v9321, %v9527
    %v9536 = vmul.f32 %v9322, %v9527
    %v9537 = vmul.f32 %v9323, %v9527
    %v9538 = vmul.f32 %v9324, %v9527
    %v9539 = vmul.f32 %v9325, %v9527
    %v9540 = vmul.f32 %v9326, %v9527
    %v9541 = vmul.f32 %v9327, %v9527
    %v9542 = vmul.f32 %v9328, %v9527
    %v9543 = vmul.f32 %v9329, %v9527
    %v9544 = vmul.f32 %v9330, %v9527
    %v9545 = vmul.f32 %v9331, %v9527
    %v9546 = vmul.f32 %v9332, %v9527
    %v9547 = vmul.f32 %v9333, %v9527
    %v9548 = vmul.f32 %v9334, %v9527
    %v9549 = vmul.f32 %v9335, %v9527
    %v9550 = vmul.f32 %v9336, %v9527
    %v9551 = vmul.f32 %v9337, %v9527
    %v9552 = vmul.f32 %v9338, %v9527
    %v9553 = vmul.f32 %v9339, %v9527
    %v9554 = vmul.f32 %v9340, %v9527
    %v9555 = vmul.f32 %v9341, %v9527
    %v9556 = vmul.f32 %v9342, %v9527
    %v9557 = vmul.f32 %v9343, %v9527
    %v9558 = vmul.f32 %v9344, %v9527
    %v9559 = vmul.f32 %v9345, %v9527
    %v9560 = vmul.f32 %v9346, %v9527
    %v9561 = vmul.f32 %v9347, %v9527
    %v9562 = vmul.f32 %v9348, %v9527
    %v9563 = vmul.f32 %v9349, %v9527
    %v9564 = vmul.f32 %v9350, %v9527
    %v9565 = vmul.f32 %v9351, %v9527
    %v9566 = vmul.f32 %v9352, %v9527
    %v9567 = vmul.f32 %v9353, %v9527
    %v9568 = vmul.f32 %v9354, %v9527
    %v9569 = vmul.f32 %v9355, %v9527
    %v9570 = vmul.f32 %v9356, %v9527
    %v9571 = vmul.f32 %v9357, %v9527
    %v9572 = vmul.f32 %v9358, %v9527
    %v9573 = vmul.f32 %v9359, %v9527
    %v9574 = vmul.f32 %v9360, %v9527
    %v9575 = vmul.f32 %v9361, %v9527
    %v9576 = vmul.f32 %v9362, %v9527
    %v9577 = vmul.f32 %v9363, %v9527
    %v9578 = vmul.f32 %v9364, %v9527
    %v9579 = vmul.f32 %v9365, %v9527
    %v9580 = vmul.f32 %v9366, %v9527
    %v9581 = vmul.f32 %v9367, %v9527
    %v9582 = vmul.f32 %v9368, %v9527
    %v9583 = vmul.f32 %v9369, %v9527
    %v9584 = vmul.f32 %v9370, %v9527
    %v9585 = vmul.f32 %v9371, %v9527
    %v9586 = vmul.f32 %v9372, %v9527
    %v9587 = vmul.f32 %v9373, %v9527
    %v9588 = vmul.f32 %v9374, %v9527
    %v9589 = vmul.f32 %v9375, %v9527
    %v9590 = vmul.f32 %v9376, %v9527
    %v9591 = vmul.f32 %v9377, %v9527
    %v9592 = vmul.f32 %v9378, %v9527
    %v9593 = vld [vmem:[%s6] sm:$0x1]
    %v9595 = vperm.slane %v9593, 0
    %v9597 = vadd.f32 %v9529, %v9595
    %v9598 = vadd.f32 %v9530, %v9595
    %v9599 = vadd.f32 %v9531, %v9595
    %v9600 = vadd.f32 %v9532, %v9595
    %v9601 = vadd.f32 %v9533, %v9595
    %v9602 = vadd.f32 %v9534, %v9595
    %v9603 = vadd.f32 %v9535, %v9595
    %v9604 = vadd.f32 %v9536, %v9595
    %v9605 = vadd.f32 %v9537, %v9595
    %v9606 = vadd.f32 %v9538, %v9595
    %v9607 = vadd.f32 %v9539, %v9595
    %v9608 = vadd.f32 %v9540, %v9595
    %v9609 = vadd.f32 %v9541, %v9595
    %v9610 = vadd.f32 %v9542, %v9595
    %v9611 = vadd.f32 %v9543, %v9595
    %v9612 = vadd.f32 %v9544, %v9595
    %v9613 = vadd.f32 %v9545, %v9595
    %v9614 = vadd.f32 %v9546, %v9595
    %v9615 = vadd.f32 %v9547, %v9595
    %v9616 = vadd.f32 %v9548, %v9595
    %v9617 = vadd.f32 %v9549, %v9595
    %v9618 = vadd.f32 %v9550, %v9595
    %v9619 = vadd.f32 %v9551, %v9595
    %v9620 = vadd.f32 %v9552, %v9595
    %v9621 = vadd.f32 %v9553, %v9595
    %v9622 = vadd.f32 %v9554, %v9595
    %v9623 = vadd.f32 %v9555, %v9595
    %v9624 = vadd.f32 %v9556, %v9595
    %v9625 = vadd.f32 %v9557, %v9595
    %v9626 = vadd.f32 %v9558, %v9595
    %v9627 = vadd.f32 %v9559, %v9595
    %v9628 = vadd.f32 %v9560, %v9595
    %v9629 = vadd.f32 %v9561, %v9595
    %v9630 = vadd.f32 %v9562, %v9595
    %v9631 = vadd.f32 %v9563, %v9595
    %v9632 = vadd.f32 %v9564, %v9595
    %v9633 = vadd.f32 %v9565, %v9595
    %v9634 = vadd.f32 %v9566, %v9595
    %v9635 = vadd.f32 %v9567, %v9595
    %v9636 = vadd.f32 %v9568, %v9595
    %v9637 = vadd.f32 %v9569, %v9595
    %v9638 = vadd.f32 %v9570, %v9595
    %v9639 = vadd.f32 %v9571, %v9595
    %v9640 = vadd.f32 %v9572, %v9595
    %v9641 = vadd.f32 %v9573, %v9595
    %v9642 = vadd.f32 %v9574, %v9595
    %v9643 = vadd.f32 %v9575, %v9595
    %v9644 = vadd.f32 %v9576, %v9595
    %v9645 = vadd.f32 %v9577, %v9595
    %v9646 = vadd.f32 %v9578, %v9595
    %v9647 = vadd.f32 %v9579, %v9595
    %v9648 = vadd.f32 %v9580, %v9595
    %v9649 = vadd.f32 %v9581, %v9595
    %v9650 = vadd.f32 %v9582, %v9595
    %v9651 = vadd.f32 %v9583, %v9595
    %v9652 = vadd.f32 %v9584, %v9595
    %v9653 = vadd.f32 %v9585, %v9595
    %v9654 = vadd.f32 %v9586, %v9595
    %v9655 = vadd.f32 %v9587, %v9595
    %v9656 = vadd.f32 %v9588, %v9595
    %v9657 = vadd.f32 %v9589, %v9595
    %v9658 = vadd.f32 %v9590, %v9595
    %v9659 = vadd.f32 %v9591, %v9595
    %v9660 = vadd.f32 %v9592, %v9595
    %v9661 = vld [vmem:[%s1360 + $0x1] sm:$0xff]
    %v9662 = vld [vmem:[%s1360 + $0x9] sm:$0xff]
    %v9663 = vld [vmem:[%s1360 + $0x19] sm:$0xff]
    %v9664 = vld [vmem:[%s1360 + $0x21] sm:$0xff]
    %v9665 = vld [vmem:[%s1360 + $0x31] sm:$0xff]
    %v9666 = vld [vmem:[%s1360 + $0x39] sm:$0xff]
    %v9667 = vld [vmem:[%s1360 + $0x49] sm:$0xff]
    %v9668 = vld [vmem:[%s1360 + $0x51] sm:$0xff]
    %v9669 = vld [vmem:[%s1360 + $0x61] sm:$0xff]
    %v9670 = vld [vmem:[%s1360 + $0x69] sm:$0xff]
    %v9671 = vld [vmem:[%s1360 + $0x79] sm:$0xff]
    %v9672 = vld [vmem:[%s1360 + $0x81] sm:$0xff]
    %v9673 = vld [vmem:[%s1360 + $0x91] sm:$0xff]
    %v9674 = vld [vmem:[%s1360 + $0x99] sm:$0xff]
    %v9675 = vld [vmem:[%s1360 + $0xa9] sm:$0xff]
    %v9676 = vld [vmem:[%s1360 + $0xb1] sm:$0xff]
    %v9677 = vld [vmem:[%s1360 + $0xc1] sm:$0xff]
    %v9678 = vld [vmem:[%s1360 + $0xc9] sm:$0xff]
    %v9679 = vld [vmem:[%s1360 + $0xd9] sm:$0xff]
    %v9680 = vld [vmem:[%s1360 + $0xe1] sm:$0xff]
    %v9681 = vld [vmem:[%s1360 + $0xf1] sm:$0xff]
    %v9682 = vld [vmem:[%s1360 + $0xf9] sm:$0xff]
    %v9683 = vld [vmem:[%s1360 + $0x109] sm:$0xff]
    %v9684 = vld [vmem:[%s1360 + $0x111] sm:$0xff]
    %v9685 = vld [vmem:[%s1360 + $0x121] sm:$0xff]
    %v9686 = vld [vmem:[%s1360 + $0x129] sm:$0xff]
    %v9687 = vld [vmem:[%s1360 + $0x139] sm:$0xff]
    %v9688 = vld [vmem:[%s1360 + $0x141] sm:$0xff]
    %v9689 = vld [vmem:[%s1360 + $0x151] sm:$0xff]
    %v9690 = vld [vmem:[%s1360 + $0x159] sm:$0xff]
    %v9691 = vld [vmem:[%s1360 + $0x169] sm:$0xff]
    %v9692 = vld [vmem:[%s1360 + $0x171] sm:$0xff]
    %v9693 = vld [vmem:[%s1360 + $0x1b1] sm:$0xff]
    %v9694 = vld [vmem:[%s1360 + $0x1b9] sm:$0xff]
    %v9695 = vld [vmem:[%s1360 + $0x1c9] sm:$0xff]
    %v9696 = vld [vmem:[%s1360 + $0x1d1] sm:$0xff]
    %v9697 = vld [vmem:[%s1360 + $0x1e1] sm:$0xff]
    %v9698 = vld [vmem:[%s1360 + $0x1e9] sm:$0xff]
    %v9699 = vld [vmem:[%s1360 + $0x1f9] sm:$0xff]
    %v9700 = vld [vmem:[%s1360 + $0x201] sm:$0xff]
    %v9701 = vld [vmem:[%s1360 + $0x211] sm:$0xff]
    %v9702 = vld [vmem:[%s1360 + $0x219] sm:$0xff]
    %v9703 = vld [vmem:[%s1360 + $0x229] sm:$0xff]
    %v9704 = vld [vmem:[%s1360 + $0x231] sm:$0xff]
    %v9705 = vld [vmem:[%s1360 + $0x241] sm:$0xff]
    %v9706 = vld [vmem:[%s1360 + $0x249] sm:$0xff]
    %v9707 = vld [vmem:[%s1360 + $0x259] sm:$0xff]
    %v9708 = vld [vmem:[%s1360 + $0x261] sm:$0xff]
    %v9709 = vld [vmem:[%s1360 + $0x271] sm:$0xff]
    %v9710 = vld [vmem:[%s1360 + $0x279] sm:$0xff]
    %v9711 = vld [vmem:[%s1360 + $0x289] sm:$0xff]
    %v9712 = vld [vmem:[%s1360 + $0x291] sm:$0xff]
    %v9713 = vld [vmem:[%s1360 + $0x2a1] sm:$0xff]
    %v9714 = vld [vmem:[%s1360 + $0x2a9] sm:$0xff]
    %v9715 = vld [vmem:[%s1360 + $0x2b9] sm:$0xff]
    %v9716 = vld [vmem:[%s1360 + $0x2c1] sm:$0xff]
    %v9717 = vld [vmem:[%s1360 + $0x2d1] sm:$0xff]
    %v9718 = vld [vmem:[%s1360 + $0x2d9] sm:$0xff]
    %v9719 = vld [vmem:[%s1360 + $0x2e9] sm:$0xff]
    %v9720 = vld [vmem:[%s1360 + $0x2f1] sm:$0xff]
    %v9721 = vld [vmem:[%s1360 + $0x301] sm:$0xff]
    %v9722 = vld [vmem:[%s1360 + $0x309] sm:$0xff]
    %v9723 = vld [vmem:[%s1360 + $0x319] sm:$0xff]
    %v9724 = vld [vmem:[%s1360 + $0x321] sm:$0xff]
    %v9725 = vadd.f32 %v9597, %v9661
    %v9726 = vadd.f32 %v9598, %v9662
    %v9727 = vadd.f32 %v9599, %v9663
    %v9728 = vadd.f32 %v9600, %v9664
    %v9729 = vadd.f32 %v9601, %v9665
    %v9730 = vadd.f32 %v9602, %v9666
    %v9731 = vadd.f32 %v9603, %v9667
    %v9732 = vadd.f32 %v9604, %v9668
    %v9733 = vadd.f32 %v9605, %v9669
    %v9734 = vadd.f32 %v9606, %v9670
    %v9735 = vadd.f32 %v9607, %v9671
    %v9736 = vadd.f32 %v9608, %v9672
    %v9737 = vadd.f32 %v9609, %v9673
    %v9738 = vadd.f32 %v9610, %v9674
    %v9739 = vadd.f32 %v9611, %v9675
    %v9740 = vadd.f32 %v9612, %v9676
    %v9741 = vadd.f32 %v9613, %v9677
    %v9742 = vadd.f32 %v9614, %v9678
    %v9743 = vadd.f32 %v9615, %v9679
    %v9744 = vadd.f32 %v9616, %v9680
    %v9745 = vadd.f32 %v9617, %v9681
    %v9746 = vadd.f32 %v9618, %v9682
    %v9747 = vadd.f32 %v9619, %v9683
    %v9748 = vadd.f32 %v9620, %v9684
    %v9749 = vadd.f32 %v9621, %v9685
    %v9750 = vadd.f32 %v9622, %v9686
    %v9751 = vadd.f32 %v9623, %v9687
    %v9752 = vadd.f32 %v9624, %v9688
    %v9753 = vadd.f32 %v9625, %v9689
    %v9754 = vadd.f32 %v9626, %v9690
    %v9755 = vadd.f32 %v9627, %v9691
    %v9756 = vadd.f32 %v9628, %v9692
    %v9757 = vadd.f32 %v9629, %v9693
    %v9758 = vadd.f32 %v9630, %v9694
    %v9759 = vadd.f32 %v9631, %v9695
    %v9760 = vadd.f32 %v9632, %v9696
    %v9761 = vadd.f32 %v9633, %v9697
    %v9762 = vadd.f32 %v9634, %v9698
    %v9763 = vadd.f32 %v9635, %v9699
    %v9764 = vadd.f32 %v9636, %v9700
    %v9765 = vadd.f32 %v9637, %v9701
    %v9766 = vadd.f32 %v9638, %v9702
    %v9767 = vadd.f32 %v9639, %v9703
    %v9768 = vadd.f32 %v9640, %v9704
    %v9769 = vadd.f32 %v9641, %v9705
    %v9770 = vadd.f32 %v9642, %v9706
    %v9771 = vadd.f32 %v9643, %v9707
    %v9772 = vadd.f32 %v9644, %v9708
    %v9773 = vadd.f32 %v9645, %v9709
    %v9774 = vadd.f32 %v9646, %v9710
    %v9775 = vadd.f32 %v9647, %v9711
    %v9776 = vadd.f32 %v9648, %v9712
    %v9777 = vadd.f32 %v9649, %v9713
    %v9778 = vadd.f32 %v9650, %v9714
    %v9779 = vadd.f32 %v9651, %v9715
    %v9780 = vadd.f32 %v9652, %v9716
    %v9781 = vadd.f32 %v9653, %v9717
    %v9782 = vadd.f32 %v9654, %v9718
    %v9783 = vadd.f32 %v9655, %v9719
    %v9784 = vadd.f32 %v9656, %v9720
    %v9785 = vadd.f32 %v9657, %v9721
    %v9786 = vadd.f32 %v9658, %v9722
    %v9787 = vadd.f32 %v9659, %v9723
    %v9788 = vadd.f32 %v9660, %v9724
    %v9789 = vmax.f32 %v9725, 0.0
    %v9790 = vmax.f32 %v9726, 0.0
    %v9791 = vmax.f32 %v9727, 0.0
    %v9792 = vmax.f32 %v9728, 0.0
    %v9793 = vmax.f32 %v9729, 0.0
    %v9794 = vmax.f32 %v9730, 0.0
    %v9795 = vmax.f32 %v9731, 0.0
    %v9796 = vmax.f32 %v9732, 0.0
    %v9797 = vmax.f32 %v9733, 0.0
    %v9798 = vmax.f32 %v9734, 0.0
    %v9799 = vmax.f32 %v9735, 0.0
    %v9800 = vmax.f32 %v9736, 0.0
    %v9801 = vmax.f32 %v9737, 0.0
    %v9802 = vmax.f32 %v9738, 0.0
    %v9803 = vmax.f32 %v9739, 0.0
    %v9804 = vmax.f32 %v9740, 0.0
    %v9805 = vmax.f32 %v9741, 0.0
    %v9806 = vmax.f32 %v9742, 0.0
    %v9807 = vmax.f32 %v9743, 0.0
    %v9808 = vmax.f32 %v9744, 0.0
    %v9809 = vmax.f32 %v9745, 0.0
    %v9810 = vmax.f32 %v9746, 0.0
    %v9811 = vmax.f32 %v9747, 0.0
    %v9812 = vmax.f32 %v9748, 0.0
    %v9813 = vmax.f32 %v9749, 0.0
    %v9814 = vmax.f32 %v9750, 0.0
    %v9815 = vmax.f32 %v9751, 0.0
    %v9816 = vmax.f32 %v9752, 0.0
    %v9817 = vmax.f32 %v9753, 0.0
    %v9818 = vmax.f32 %v9754, 0.0
    %v9819 = vmax.f32 %v9755, 0.0
    %v9820 = vmax.f32 %v9756, 0.0
    %v9821 = vmax.f32 %v9757, 0.0
    %v9822 = vmax.f32 %v9758, 0.0
    %v9823 = vmax.f32 %v9759, 0.0
    %v9824 = vmax.f32 %v9760, 0.0
    %v9825 = vmax.f32 %v9761, 0.0
    %v9826 = vmax.f32 %v9762, 0.0
    %v9827 = vmax.f32 %v9763, 0.0
    %v9828 = vmax.f32 %v9764, 0.0
    %v9829 = vmax.f32 %v9765, 0.0
    %v9830 = vmax.f32 %v9766, 0.0
    %v9831 = vmax.f32 %v9767, 0.0
    %v9832 = vmax.f32 %v9768, 0.0
    %v9833 = vmax.f32 %v9769, 0.0
    %v9834 = vmax.f32 %v9770, 0.0
    %v9835 = vmax.f32 %v9771, 0.0
    %v9836 = vmax.f32 %v9772, 0.0
    %v9837 = vmax.f32 %v9773, 0.0
    %v9838 = vmax.f32 %v9774, 0.0
    %v9839 = vmax.f32 %v9775, 0.0
    %v9840 = vmax.f32 %v9776, 0.0
    %v9841 = vmax.f32 %v9777, 0.0
    %v9842 = vmax.f32 %v9778, 0.0
    %v9843 = vmax.f32 %v9779, 0.0
    %v9844 = vmax.f32 %v9780, 0.0
    %v9845 = vmax.f32 %v9781, 0.0
    %v9846 = vmax.f32 %v9782, 0.0
    %v9847 = vmax.f32 %v9783, 0.0
    %v9848 = vmax.f32 %v9784, 0.0
    %v9849 = vmax.f32 %v9785, 0.0
    %v9850 = vmax.f32 %v9786, 0.0
    %v9851 = vmax.f32 %v9787, 0.0
    %v9852 = vmax.f32 %v9788, 0.0
    %9853 = vst [vmem:[#allocation7] sm:$0xff] %v9789
    %9854 = vst [vmem:[#allocation7 + $0x8] sm:$0xff] %v9790
    %9855 = vst [vmem:[#allocation7 + $0x10] sm:$0xff] %v9791
    %9856 = vst [vmem:[#allocation7 + $0x18] sm:$0xff] %v9792
    %9857 = vst [vmem:[#allocation7 + $0x20] sm:$0xff] %v9793
    %9858 = vst [vmem:[#allocation7 + $0x28] sm:$0xff] %v9794
    %9859 = vst [vmem:[#allocation7 + $0x30] sm:$0xff] %v9795
    %9860 = vst [vmem:[#allocation7 + $0x38] sm:$0xff] %v9796
    %9861 = vst [vmem:[#allocation7 + $0x40] sm:$0xff] %v9797
    %9862 = vst [vmem:[#allocation7 + $0x48] sm:$0xff] %v9798
    %9863 = vst [vmem:[#allocation7 + $0x50] sm:$0xff] %v9799
    %9864 = vst [vmem:[#allocation7 + $0x58] sm:$0xff] %v9800
    %9865 = vst [vmem:[#allocation7 + $0x60] sm:$0xff] %v9801
    %9866 = vst [vmem:[#allocation7 + $0x68] sm:$0xff] %v9802
    %9867 = vst [vmem:[#allocation7 + $0x70] sm:$0xff] %v9803
    %9868 = vst [vmem:[#allocation7 + $0x78] sm:$0xff] %v9804
    %9869 = vst [vmem:[#allocation7 + $0x80] sm:$0xff] %v9805
    %9870 = vst [vmem:[#allocation7 + $0x88] sm:$0xff] %v9806
    %9871 = vst [vmem:[#allocation7 + $0x90] sm:$0xff] %v9807
    %9872 = vst [vmem:[#allocation7 + $0x98] sm:$0xff] %v9808
    %9873 = vst [vmem:[#allocation7 + $0xa0] sm:$0xff] %v9809
    %9874 = vst [vmem:[#allocation7 + $0xa8] sm:$0xff] %v9810
    %9875 = vst [vmem:[#allocation7 + $0xb0] sm:$0xff] %v9811
    %9876 = vst [vmem:[#allocation7 + $0xb8] sm:$0xff] %v9812
    %9877 = vst [vmem:[#allocation7 + $0xc0] sm:$0xff] %v9813
    %9878 = vst [vmem:[#allocation7 + $0xc8] sm:$0xff] %v9814
    %9879 = vst [vmem:[#allocation7 + $0xd0] sm:$0xff] %v9815
    %9880 = vst [vmem:[#allocation7 + $0xd8] sm:$0xff] %v9816
    %9881 = vst [vmem:[#allocation7 + $0xe0] sm:$0xff] %v9817
    %9882 = vst [vmem:[#allocation7 + $0xe8] sm:$0xff] %v9818
    %9883 = vst [vmem:[#allocation7 + $0xf0] sm:$0xff] %v9819
    %9884 = vst [vmem:[#allocation7 + $0xf8] sm:$0xff] %v9820
    %9885 = vst [vmem:[#allocation7 + $0x100] sm:$0xff] %v9821
    %9886 = vst [vmem:[#allocation7 + $0x108] sm:$0xff] %v9822
    %9887 = vst [vmem:[#allocation7 + $0x110] sm:$0xff] %v9823
    %9888 = vst [vmem:[#allocation7 + $0x118] sm:$0xff] %v9824
    %9889 = vst [vmem:[#allocation7 + $0x120] sm:$0xff] %v9825
    %9890 = vst [vmem:[#allocation7 + $0x128] sm:$0xff] %v9826
    %9891 = vst [vmem:[#allocation7 + $0x130] sm:$0xff] %v9827
    %9892 = vst [vmem:[#allocation7 + $0x138] sm:$0xff] %v9828
    %9893 = vst [vmem:[#allocation7 + $0x140] sm:$0xff] %v9829
    %9894 = vst [vmem:[#allocation7 + $0x148] sm:$0xff] %v9830
    %9895 = vst [vmem:[#allocation7 + $0x150] sm:$0xff] %v9831
    %9896 = vst [vmem:[#allocation7 + $0x158] sm:$0xff] %v9832
    %9897 = vst [vmem:[#allocation7 + $0x160] sm:$0xff] %v9833
    %9898 = vst [vmem:[#allocation7 + $0x168] sm:$0xff] %v9834
    %9899 = vst [vmem:[#allocation7 + $0x170] sm:$0xff] %v9835
    %9900 = vst [vmem:[#allocation7 + $0x178] sm:$0xff] %v9836
    %9901 = vst [vmem:[#allocation7 + $0x180] sm:$0xff] %v9837
    %9902 = vst [vmem:[#allocation7 + $0x188] sm:$0xff] %v9838
    %9903 = vst [vmem:[#allocation7 + $0x190] sm:$0xff] %v9839
    %9904 = vst [vmem:[#allocation7 + $0x198] sm:$0xff] %v9840
    %9905 = vst [vmem:[#allocation7 + $0x1a0] sm:$0xff] %v9841
    %9906 = vst [vmem:[#allocation7 + $0x1a8] sm:$0xff] %v9842
    %9907 = vst [vmem:[#allocation7 + $0x1b0] sm:$0xff] %v9843
    %9908 = vst [vmem:[#allocation7 + $0x1b8] sm:$0xff] %v9844
    %9909 = vst [vmem:[#allocation7 + $0x1c0] sm:$0xff] %v9845
    %9910 = vst [vmem:[#allocation7 + $0x1c8] sm:$0xff] %v9846
    %9911 = vst [vmem:[#allocation7 + $0x1d0] sm:$0xff] %v9847
    %9912 = vst [vmem:[#allocation7 + $0x1d8] sm:$0xff] %v9848
    %9913 = vst [vmem:[#allocation7 + $0x1e0] sm:$0xff] %v9849
    %9914 = vst [vmem:[#allocation7 + $0x1e8] sm:$0xff] %v9850
    %9915 = vst [vmem:[#allocation7 + $0x1f0] sm:$0xff] %v9851
    %9916 = vst [vmem:[#allocation7 + $0x1f8] sm:$0xff] %v9852
    // Predicated region
    $region34: #{tpu_custom_call.1} parent=1 // pred_check
      _
    $region35: #{tpu_custom_call.1} parent=1 // pred_check_branch
      %9918 = sbr.rel (0) target = $region37
    $region36: #{tpu_custom_call.1} parent=1 // pred_region
      %9920 = vsyncadd [#allocation6], 0
      %s9921 = sshll.u32 [#allocation7], 4
      %s9922 = int_to_ptr.vmem [resolvable:$true] %s9921
      %s9923 = sshll.u32 %s7, 4
      %s9924 = int_to_ptr.hbm [resolvable:$true] %s9923
      %9929 = dma.vmem_to_hbm [thread:$0]  %s9922, 8192, %s9924, [#allocation6], 128, 128, 8
    $region37: #{tpu_custom_call.1} parent=1 // pred_fallthru
      _
    // Predicated region
    $region38: #{tpu_custom_call.1} parent=1 // pred_check
      _
    $region39: #{tpu_custom_call.1} parent=1 // pred_check_branch
      %9931 = sbr.rel (0) target = $region41
    $region40: #{tpu_custom_call.1} parent=1 // pred_region
      %9933 = dma.done [#allocation6], 8192
    $region41: #{tpu_custom_call.1} parent=1 // pred_fallthru
      _
    %9934 = vsyncpa [#allocation5], 1
    %9935 = vsyncpa [#allocation6], 1

</llo_original>
